<compile_context>
chip_gen: v5e
topology: v5e:2x2
jax: 0.10.0
libtpu: 0.0.40
codegen_flags: <defaults>
</compile_context>

<pallas_src>
import numpy as np

import jax
import jax.numpy as jnp
from jax.experimental import pallas as pl
from jax.experimental.pallas import tpu as pltpu


TB = 32          # samples per grid step (batch tile)
RB1 = 32         # rows per sample in the conv1 stage (28 valid + 4 pad rows)
RB2 = 16         # rows per sample in the conv2 stage (14 valid pool1 rows)

NR1 = TB * RB1   # conv1-stage slab rows per grid step
NR2 = TB * RB2   # conv2-stage slab rows per grid step

_OP_ORDER = ("m1", "b1", "s1c", "m2", "b2", "s2c",
             "g", "bfc1", "wfc2", "bfc2", "wout", "bout")


# --------------------------------------------------------------------------- #
# Pallas kernel: full LeNet-5 forward for one batch tile of TB samples.       #
# --------------------------------------------------------------------------- #
def _lenet5_kernel(x_ref,
                   m1_ref, b1_ref, s1c_ref,
                   m2_ref, b2_ref, s2c_ref,
                   g_ref, bfc1_ref, wfc2_ref, bfc2_ref, wout_ref, bout_ref,
                   o_ref,
                   t1_ref, p1_ref, h2_ref, t2_ref):
    f32, bf16 = jnp.float32, jnp.bfloat16

    def mm(a, b):                                   # bf16 x bf16 -> f32 (MXU)
        return jnp.dot(a, b, preferred_element_type=f32)

    # ---- conv1 (5x5, pad 2) + bias + ReLU -----------------------------------
    # The 5 ky-shifted copies of the input are pre-concatenated along lanes in
    # the wrapper, so this is a single K=160 matmul.
    h1 = mm(x_ref[...], m1_ref[...])                           # (NR1, 168) f32
    h1 = jnp.maximum(h1 + b1_ref[...], 0.0).astype(bf16)

    # ---- maxpool1, column direction (0/1 lane-select matmuls) ---------------
    t1_ref[...] = jnp.maximum(mm(h1, s1c_ref[0]), mm(h1, s1c_ref[1]))  # (NR1, 84) f32

    # ---- maxpool1, row direction: stride-2 sublane reads --------------------
    # p1 row (s*16 + i) = max(t1 rows s*32 + 2i, s*32 + 2i + 1).  Rows 14,15 of
    # each 16-row block are garbage (from t1 rows 28..31) but never read below.
    p1_ref[pl.ds(0, NR2), :] = jnp.maximum(
        t1_ref[pl.ds(0, NR2, stride=2), :],
        t1_ref[pl.ds(1, NR2, stride=2), :])
    # Keep the 8 tail rows defined (they are touched by the ky>0 offset reads
    # of the last sample's invalid output rows only).
    p1_ref[pl.ds(NR2, 8), :] = jnp.zeros((8, 84), f32)

    # ---- conv2 (5x5 valid) + bias + ReLU -------------------------------------
    # The ky-th tap is a unit-stride sublane-offset read; output row s*16+j
    # (valid j <= 9) reads p1 rows s*16+j .. s*16+j+4 <= s*16+13 (same sample).
    h2_ref[...] = mm(p1_ref[pl.ds(0, NR2), :].astype(bf16), m2_ref[0])
    for ky in range(1, 5):
        h2_ref[...] += mm(p1_ref[pl.ds(ky, NR2), :].astype(bf16), m2_ref[ky])
    h2 = jnp.maximum(h2_ref[...] + b2_ref[...], 0.0).astype(bf16)    # (NR2, 160)

    # ---- maxpool2, column direction ------------------------------------------
    t2_ref[...] = jnp.maximum(mm(h2, s2c_ref[0]), mm(h2, s2c_ref[1]))  # (NR2, 80) f32

    # ---- maxpool2 rows + PyTorch NCHW flatten + fc1 ---------------------------
    # Pooled row h of every sample is gathered with a stride-16 sublane read;
    # the flatten permutation is folded into g (built once in prepare_operands).
    y = jnp.zeros((TB, 120), f32)
    for h in range(5):
        p2h = jnp.maximum(t2_ref[pl.ds(2 * h, TB, stride=16), :],
                          t2_ref[pl.ds(2 * h + 1, TB, stride=16), :]).astype(bf16)
        y = y + mm(p2h, g_ref[h])
    y = jnp.maximum(y + bfc1_ref[...], 0.0).astype(bf16)

    # ---- fc2 + ReLU, output layer (lane-padded to 128) ------------------------
    y = jnp.maximum(mm(y, wfc2_ref[...]) + bfc2_ref[...], 0.0).astype(bf16)
    o_ref[...] = mm(y, wout_ref[...]) + bout_ref[...]                  # (TB, 128) f32


# --------------------------------------------------------------------------- #
# One-time construction of the constant operands (wrapper side).              #
# --------------------------------------------------------------------------- #
def _conv_lane_matrices(w, w_in, w_out):
    """PyTorch conv weight (Cout, Cin, K, K) -> per-ky lane-Toeplitz matrices.

    Result[ky][(j + kx) * Cin + ci, j * Cout + co] = w[co, ci, ky, kx]
    so that  h[i, j*Cout+co] = sum_ky (x_row[i+ky] @ Result[ky])[j*Cout+co]
    reproduces nn.Conv2d's 5x5 cross-correlation.
    """
    cout, cin, kh, kw = w.shape
    mats = []
    for ky in range(kh):
        m = jnp.zeros((w_in * cin, w_out * cout), jnp.float32)
        for kx in range(kw):
            e = np.zeros((w_in, w_out), np.float32)
            e[np.arange(w_out) + kx, np.arange(w_out)] = 1.0
            m = m + jnp.kron(jnp.asarray(e), jnp.transpose(w[:, :, ky, kx]))
        mats.append(m)
    return jnp.stack(mats)


def _pool_col_select(w_in, c):
    """(2, w_in*c, (w_in//2)*c) 0/1 matrices selecting column 2*j+dx per channel."""
    wo = w_in // 2
    sel = []
    for dx in range(2):
        e = np.zeros((w_in, wo), np.float32)
        e[2 * np.arange(wo) + dx, np.arange(wo)] = 1.0
        sel.append(np.kron(e, np.eye(c, dtype=np.float32)))
    return np.stack(sel)


def prepare_operands(params):
    """Build the (TB-independent) kernel operands once from PyTorch parameters."""
    bf16, f32 = jnp.bfloat16, jnp.float32
    ops = {}
    # conv1: 1x28x28 (pad 2 -> 32x32) -> 6x28x28.  The 5 ky taps are stacked
    # along K; the wrapper concatenates the matching shifted input copies.
    m1 = _conv_lane_matrices(params["w_conv1"], 32, 28)                 # (5, 32, 168)
    ops["m1"] = m1.reshape(5 * 32, 28 * 6).astype(bf16)                 # (160, 168)
    ops["b1"] = jnp.tile(params["b_conv1"], 28).reshape(1, 168).astype(f32)
    # pool1 column direction (row direction is done with strided sublane reads)
    ops["s1c"] = jnp.asarray(_pool_col_select(28, 6), bf16)             # (2, 168, 84)
    # conv2: 6x14x14 -> 16x10x10 (5 K=84 matmuls against sublane-offset reads)
    ops["m2"] = _conv_lane_matrices(params["w_conv2"], 14, 10).astype(bf16)  # (5, 84, 160)
    ops["b2"] = jnp.tile(params["b_conv2"], 10).reshape(1, 160).astype(f32)
    ops["s2c"] = jnp.asarray(_pool_col_select(10, 16), bf16)            # (2, 160, 80)
    # fc1: PyTorch NCHW flatten folded into the permuted weight, split by the
    # 5 pooled rows h (each gathered in-kernel with a stride-16 sublane read).
    g = params["w_fc1"].reshape(120, 16, 5, 5)                          # [n, c, h, w]
    g = jnp.transpose(g, (2, 3, 1, 0)).reshape(5, 80, 120)              # [h][w*16+c, n]
    ops["g"] = g.astype(bf16)
    ops["bfc1"] = params["b_fc1"].reshape(1, 120).astype(f32)
    ops["wfc2"] = jnp.transpose(params["w_fc2"]).astype(bf16)           # (120, 84)
    ops["bfc2"] = params["b_fc2"].reshape(1, 84).astype(f32)
    # output layer, lane-padded to 128 so the store path is lane-dense
    wout = jnp.zeros((84, 128), f32).at[:, :10].set(jnp.transpose(params["w_out"]))
    bout = jnp.zeros((1, 128), f32).at[:, :10].set(params["b_out"].reshape(1, 10))
    ops["wout"] = wout.astype(bf16)
    ops["bout"] = bout
    return ops


# --------------------------------------------------------------------------- #
# Forward pass.                                                               #
# --------------------------------------------------------------------------- #
def _const_index_map(ndim):
    return lambda b: (0,) * ndim


@jax.jit
def lenet5_forward(ops, x_nchw):
    n = x_nchw.shape[0]
    n_pad = ((n + TB - 1) // TB) * TB
    # Pad batch to a multiple of TB, apply conv1's spatial padding of 2, and
    # pre-concatenate the 5 ky-shifted copies along lanes:
    #   row (sample*32 + r), lane (ky*32 + c)  ==  padded_image[sample, r+ky, c]
    # (zero-filled past the image bottom; never read by a valid output row).
    x = x_nchw.astype(jnp.float32).reshape(n, 28, 28)
    x = jnp.pad(x, ((0, n_pad - n), (2, 2), (2, 2)))                   # (n_pad, 32, 32)
    shifted = [jnp.pad(x[:, ky:, :], ((0, 0), (0, ky), (0, 0))) for ky in range(5)]
    x2d = jnp.concatenate(shifted, axis=-1).reshape(n_pad * RB1, 5 * 32)
    x2d = x2d.astype(jnp.bfloat16)                                     # (n_pad*32, 160)

    in_specs = [pl.BlockSpec((TB * RB1, 5 * 32), lambda b: (b, 0))]
    # Constant operands: full-array blocks at a fixed block index (fetched once).
    # Total ~1.5 MiB even double-buffered, so single-buffering (pl.Buffered(1))
    # is unnecessary at this footprint.
    for name in _OP_ORDER:
        a = ops[name]
        in_specs.append(pl.BlockSpec(a.shape, _const_index_map(a.ndim)))

    out = pl.pallas_call(
        _lenet5_kernel,
        out_shape=jax.ShapeDtypeStruct((n_pad, 128), jnp.float32),
        grid=(n_pad // TB,),
        in_specs=in_specs,
        out_specs=pl.BlockSpec((TB, 128), lambda b: (b, 0)),
        scratch_shapes=[
            pltpu.VMEM((NR1, 84), jnp.float32),       # t1: col-pooled conv1
            pltpu.VMEM((NR2 + 8, 84), jnp.float32),   # p1: pool1 output (+8 tail rows)
            pltpu.VMEM((NR2, 160), jnp.float32),      # h2: conv2 accumulator
            pltpu.VMEM((NR2, 80), jnp.float32),       # t2: col-pooled conv2
        ],
        compiler_params=pltpu.CompilerParams(
            dimension_semantics=("parallel",),
            vmem_limit_bytes=32 * 1024 * 1024,
        ),
    )(x2d, *[ops[name] for name in _OP_ORDER])
    return out[:n, :10]


# --------------------------------------------------------------------------- #
# Pure-JAX reference (numerical self-check) and parameter init.               #
# --------------------------------------------------------------------------- #
def lenet5_reference(params, x_nchw):
    x = x_nchw.astype(jnp.float32)
    dn = ("NCHW", "OIHW", "NCHW")

    def pool(h):
        return jnp.maximum(jnp.maximum(h[:, :, 0::2, 0::2], h[:, :, 0::2, 1::2]),
                           jnp.maximum(h[:, :, 1::2, 0::2], h[:, :, 1::2, 1::2]))

    h = jax.lax.conv_general_dilated(x, params["w_conv1"], (1, 1),
                                     [(2, 2), (2, 2)], dimension_numbers=dn)
    h = pool(jax.nn.relu(h + params["b_conv1"][None, :, None, None]))
    h = jax.lax.conv_general_dilated(h, params["w_conv2"], (1, 1), "VALID",
                                     dimension_numbers=dn)
    h = pool(jax.nn.relu(h + params["b_conv2"][None, :, None, None]))
    h = h.reshape(h.shape[0], -1)
    h = jax.nn.relu(h @ params["w_fc1"].T + params["b_fc1"])
    h = jax.nn.relu(h @ params["w_fc2"].T + params["b_fc2"])
    return h @ params["w_out"].T + params["b_out"]


def init_params(key):
    ks = jax.random.split(key, 10)

    def u(k, shape, fan_in):
        bound = 1.0 / jnp.sqrt(jnp.float32(fan_in))
        return jax.random.uniform(k, shape, jnp.float32, -bound, bound)

    return {
        "w_conv1": u(ks[0], (6, 1, 5, 5), 1 * 25),
        "b_conv1": u(ks[1], (6,), 1 * 25),
        "w_conv2": u(ks[2], (16, 6, 5, 5), 6 * 25),
        "b_conv2": u(ks[3], (16,), 6 * 25),
        "w_fc1":   u(ks[4], (120, 400), 400),
        "b_fc1":   u(ks[5], (120,), 400),
        "w_fc2":   u(ks[6], (84, 120), 120),
        "b_fc2":   u(ks[7], (84,), 120),
        "w_out":   u(ks[8], (10, 84), 84),
        "b_out":   u(ks[9], (10,), 84),
    }


if __name__ == "__main__":
    key = jax.random.PRNGKey(0)
    pkey, xkey = jax.random.split(key)
    params = init_params(pkey)
    ops = prepare_operands(params)                   # built once, reused per call

    # LeNet-5 requires 28x28 single-channel inputs; batch=2.
    x = jax.random.normal(xkey, (2, 1, 28, 28), jnp.float32)

    out = lenet5_forward(ops, x)
    jax.block_until_ready(out)
    assert out.shape == (2, 10), out.shape
    assert out.dtype == jnp.float32

    # Loose check vs. a pure-JAX reference (bf16 MXU inputs -> small tolerance).
    ref = lenet5_reference(params, x)
    max_err = float(jnp.max(jnp.abs(out - ref)))
    assert max_err < 0.1, f"max abs error vs reference: {max_err}"

    print("KERNEL_OK")
</pallas_src>

<mosaic_0001>
module attributes {stable_mosaic.version = 11 : i64} {
  func.func @_lenet5_kernel(%arg0: i32, %arg1: memref<1024x160xbf16, #tpu.memory_space<vmem>>, %arg2: memref<160x168xbf16, #tpu.memory_space<vmem>>, %arg3: memref<1x168xf32, #tpu.memory_space<vmem>>, %arg4: memref<2x168x84xbf16, #tpu.memory_space<vmem>>, %arg5: memref<5x84x160xbf16, #tpu.memory_space<vmem>>, %arg6: memref<1x160xf32, #tpu.memory_space<vmem>>, %arg7: memref<2x160x80xbf16, #tpu.memory_space<vmem>>, %arg8: memref<5x80x120xbf16, #tpu.memory_space<vmem>>, %arg9: memref<1x120xf32, #tpu.memory_space<vmem>>, %arg10: memref<120x84xbf16, #tpu.memory_space<vmem>>, %arg11: memref<1x84xf32, #tpu.memory_space<vmem>>, %arg12: memref<84x128xbf16, #tpu.memory_space<vmem>>, %arg13: memref<1x128xf32, #tpu.memory_space<vmem>>, %arg14: memref<32x128xf32, #tpu.memory_space<vmem>>, %arg15: memref<1024x84xf32, #tpu.memory_space<vmem>>, %arg16: memref<520x84xf32, #tpu.memory_space<vmem>>, %arg17: memref<512x160xf32, #tpu.memory_space<vmem>>, %arg18: memref<512x80xf32, #tpu.memory_space<vmem>>) attributes {dimension_semantics = [#tpu.dimension_semantics<parallel>], iteration_bounds = array<i64: 1>, scalar_prefetch = 0 : i64, scratch_operands = 4 : i64, tpu.core_type = #tpu.core_type<tc>, window_params = [{transform_indices = @transform_0, window_bounds = array<i64: 1024, 160>}, {pipeline_mode = #tpu.pipeline_mode<synchronous>, transform_indices = @transform_1, window_bounds = array<i64: 160, 168>}, {pipeline_mode = #tpu.pipeline_mode<synchronous>, transform_indices = @transform_2, window_bounds = array<i64: 1, 168>}, {pipeline_mode = #tpu.pipeline_mode<synchronous>, transform_indices = @transform_3, window_bounds = array<i64: 2, 168, 84>}, {pipeline_mode = #tpu.pipeline_mode<synchronous>, transform_indices = @transform_4, window_bounds = array<i64: 5, 84, 160>}, {pipeline_mode = #tpu.pipeline_mode<synchronous>, transform_indices = @transform_5, window_bounds = array<i64: 1, 160>}, {pipeline_mode = #tpu.pipeline_mode<synchronous>, transform_indices = @transform_6, window_bounds = array<i64: 2, 160, 80>}, {pipeline_mode = #tpu.pipeline_mode<synchronous>, transform_indices = @transform_7, window_bounds = array<i64: 5, 80, 120>}, {pipeline_mode = #tpu.pipeline_mode<synchronous>, transform_indices = @transform_8, window_bounds = array<i64: 1, 120>}, {pipeline_mode = #tpu.pipeline_mode<synchronous>, transform_indices = @transform_9, window_bounds = array<i64: 120, 84>}, {pipeline_mode = #tpu.pipeline_mode<synchronous>, transform_indices = @transform_10, window_bounds = array<i64: 1, 84>}, {pipeline_mode = #tpu.pipeline_mode<synchronous>, transform_indices = @transform_11, window_bounds = array<i64: 84, 128>}, {pipeline_mode = #tpu.pipeline_mode<synchronous>, transform_indices = @transform_12, window_bounds = array<i64: 1, 128>}, {transform_indices = @transform_13, window_bounds = array<i64: 32, 128>}]} {
    %c0 = arith.constant 0 : index
    %c0_0 = arith.constant 0 : index
    %0 = vector.load %arg1[%c0, %c0_0] : memref<1024x160xbf16, #tpu.memory_space<vmem>>, vector<1024x160xbf16>
    %c0_1 = arith.constant 0 : index
    %c0_2 = arith.constant 0 : index
    %1 = vector.load %arg2[%c0_1, %c0_2] : memref<160x168xbf16, #tpu.memory_space<vmem>>, vector<160x168xbf16>
    %cst = arith.constant dense<0.000000e+00> : vector<1024x168xf32>
    %2 = tpu.matmul %0, %1, %cst {dimension_numbers = #tpu.dot_dimension_numbers<[1], [0], [0], [1], [0, 0, 1, 1], [], []>} : vector<1024x160xbf16>, vector<160x168xbf16>, vector<1024x168xf32> -> vector<1024x168xf32>
    %c0_3 = arith.constant 0 : index
    %c0_4 = arith.constant 0 : index
    %3 = vector.load %arg3[%c0_3, %c0_4] : memref<1x168xf32, #tpu.memory_space<vmem>>, vector<1x168xf32>
    %4 = vector.broadcast %3 : vector<1x168xf32> to vector<1024x168xf32>
    %5 = arith.addf %2, %4 : vector<1024x168xf32>
    %cst_5 = arith.constant 0.000000e+00 : f32
    %6 = vector.broadcast %cst_5 : f32 to vector<1024x168xf32>
    %7 = arith.maximumf %5, %6 : vector<1024x168xf32>
    %8 = arith.truncf %7 : vector<1024x168xf32> to vector<1024x168xbf16>
    %c0_6 = arith.constant 0 : index
    %c0_7 = arith.constant 0 : index
    %c0_8 = arith.constant 0 : index
    %9 = vector.load %arg4[%c0_6, %c0_7, %c0_8] : memref<2x168x84xbf16, #tpu.memory_space<vmem>>, vector<1x168x84xbf16>
    %10 = vector.shape_cast %9 : vector<1x168x84xbf16> to vector<168x84xbf16>
    %cst_9 = arith.constant dense<0.000000e+00> : vector<1024x84xf32>
    %11 = tpu.matmul %8, %10, %cst_9 {dimension_numbers = #tpu.dot_dimension_numbers<[1], [0], [0], [1], [0, 0, 1, 1], [], []>} : vector<1024x168xbf16>, vector<168x84xbf16>, vector<1024x84xf32> -> vector<1024x84xf32>
    %c1 = arith.constant 1 : index
    %c0_10 = arith.constant 0 : index
    %c0_11 = arith.constant 0 : index
    %12 = vector.load %arg4[%c1, %c0_10, %c0_11] : memref<2x168x84xbf16, #tpu.memory_space<vmem>>, vector<1x168x84xbf16>
    %13 = vector.shape_cast %12 : vector<1x168x84xbf16> to vector<168x84xbf16>
    %cst_12 = arith.constant dense<0.000000e+00> : vector<1024x84xf32>
    %14 = tpu.matmul %8, %13, %cst_12 {dimension_numbers = #tpu.dot_dimension_numbers<[1], [0], [0], [1], [0, 0, 1, 1], [], []>} : vector<1024x168xbf16>, vector<168x84xbf16>, vector<1024x84xf32> -> vector<1024x84xf32>
    %15 = arith.maximumf %11, %14 : vector<1024x84xf32>
    %c0_13 = arith.constant 0 : index
    %c0_14 = arith.constant 0 : index
    %16 = vector.load %arg15[%c0_13, %c0_14] : memref<1024x84xf32, #tpu.memory_space<vmem>>, vector<1024x84xf32>
    tpu.vector_store %arg15[%c0_13, %c0_14], %15 {strides = array<i32>} : memref<1024x84xf32, #tpu.memory_space<vmem>>, vector<1024x84xf32>,
    %c0_15 = arith.constant 0 : index
    %c0_16 = arith.constant 0 : index
    %17 = tpu.strided_load %arg15[%c0_15, %c0_16] {strides = array<i32: 2, 1>} : memref<1024x84xf32, #tpu.memory_space<vmem>>, vector<512x84xf32>
    %c1_17 = arith.constant 1 : index
    %c0_18 = arith.constant 0 : index
    %18 = tpu.strided_load %arg15[%c1_17, %c0_18] {strides = array<i32: 2, 1>} : memref<1024x84xf32, #tpu.memory_space<vmem>>, vector<512x84xf32>
    %19 = arith.maximumf %17, %18 : vector<512x84xf32>
    %c0_19 = arith.constant 0 : index
    %c0_20 = arith.constant 0 : index
    %20 = vector.load %arg16[%c0_19, %c0_20] : memref<520x84xf32, #tpu.memory_space<vmem>>, vector<512x84xf32>
    tpu.vector_store %arg16[%c0_19, %c0_20], %19 {strides = array<i32>} : memref<520x84xf32, #tpu.memory_space<vmem>>, vector<512x84xf32>,
    %cst_21 = arith.constant 0.000000e+00 : f32
    %21 = vector.broadcast %cst_21 : f32 to vector<8x84xf32>
    %c512 = arith.constant 512 : index
    %c0_22 = arith.constant 0 : index
    %22 = vector.load %arg16[%c512, %c0_22] : memref<520x84xf32, #tpu.memory_space<vmem>>, vector<8x84xf32>
    tpu.vector_store %arg16[%c512, %c0_22], %21 {strides = array<i32>} : memref<520x84xf32, #tpu.memory_space<vmem>>, vector<8x84xf32>,
    %c0_23 = arith.constant 0 : index
    %c0_24 = arith.constant 0 : index
    %23 = vector.load %arg16[%c0_23, %c0_24] : memref<520x84xf32, #tpu.memory_space<vmem>>, vector<512x84xf32>
    %24 = arith.truncf %23 : vector<512x84xf32> to vector<512x84xbf16>
    %c0_25 = arith.constant 0 : index
    %c0_26 = arith.constant 0 : index
    %c0_27 = arith.constant 0 : index
    %25 = vector.load %arg5[%c0_25, %c0_26, %c0_27] : memref<5x84x160xbf16, #tpu.memory_space<vmem>>, vector<1x84x160xbf16>
    %26 = vector.shape_cast %25 : vector<1x84x160xbf16> to vector<84x160xbf16>
    %cst_28 = arith.constant dense<0.000000e+00> : vector<512x160xf32>
    %27 = tpu.matmul %24, %26, %cst_28 {dimension_numbers = #tpu.dot_dimension_numbers<[1], [0], [0], [1], [0, 0, 1, 1], [], []>} : vector<512x84xbf16>, vector<84x160xbf16>, vector<512x160xf32> -> vector<512x160xf32>
    %c0_29 = arith.constant 0 : index
    %c0_30 = arith.constant 0 : index
    %28 = vector.load %arg17[%c0_29, %c0_30] : memref<512x160xf32, #tpu.memory_space<vmem>>, vector<512x160xf32>
    tpu.vector_store %arg17[%c0_29, %c0_30], %27 {strides = array<i32>} : memref<512x160xf32, #tpu.memory_space<vmem>>, vector<512x160xf32>,
    %c0_31 = arith.constant 0 : index
    %c0_32 = arith.constant 0 : index
    %29 = vector.load %arg17[%c0_31, %c0_32] : memref<512x160xf32, #tpu.memory_space<vmem>>, vector<512x160xf32>
    %c1_33 = arith.constant 1 : index
    %c0_34 = arith.constant 0 : index
    %30 = vector.load %arg16[%c1_33, %c0_34] : memref<520x84xf32, #tpu.memory_space<vmem>>, vector<512x84xf32>
    %31 = arith.truncf %30 : vector<512x84xf32> to vector<512x84xbf16>
    %c1_35 = arith.constant 1 : index
    %c0_36 = arith.constant 0 : index
    %c0_37 = arith.constant 0 : index
    %32 = vector.load %arg5[%c1_35, %c0_36, %c0_37] : memref<5x84x160xbf16, #tpu.memory_space<vmem>>, vector<1x84x160xbf16>
    %33 = vector.shape_cast %32 : vector<1x84x160xbf16> to vector<84x160xbf16>
    %cst_38 = arith.constant dense<0.000000e+00> : vector<512x160xf32>
    %34 = tpu.matmul %31, %33, %cst_38 {dimension_numbers = #tpu.dot_dimension_numbers<[1], [0], [0], [1], [0, 0, 1, 1], [], []>} : vector<512x84xbf16>, vector<84x160xbf16>, vector<512x160xf32> -> vector<512x160xf32>
    %35 = arith.addf %29, %34 : vector<512x160xf32>
    %c0_39 = arith.constant 0 : index
    %c0_40 = arith.constant 0 : index
    %36 = vector.load %arg17[%c0_39, %c0_40] : memref<512x160xf32, #tpu.memory_space<vmem>>, vector<512x160xf32>
    tpu.vector_store %arg17[%c0_39, %c0_40], %35 {strides = array<i32>} : memref<512x160xf32, #tpu.memory_space<vmem>>, vector<512x160xf32>,
    %c0_41 = arith.constant 0 : index
    %c0_42 = arith.constant 0 : index
    %37 = vector.load %arg17[%c0_41, %c0_42] : memref<512x160xf32, #tpu.memory_space<vmem>>, vector<512x160xf32>
    %c2 = arith.constant 2 : index
    %c0_43 = arith.constant 0 : index
    %38 = vector.load %arg16[%c2, %c0_43] : memref<520x84xf32, #tpu.memory_space<vmem>>, vector<512x84xf32>
    %39 = arith.truncf %38 : vector<512x84xf32> to vector<512x84xbf16>
    %c2_44 = arith.constant 2 : index
    %c0_45 = arith.constant 0 : index
    %c0_46 = arith.constant 0 : index
    %40 = vector.load %arg5[%c2_44, %c0_45, %c0_46] : memref<5x84x160xbf16, #tpu.memory_space<vmem>>, vector<1x84x160xbf16>
    %41 = vector.shape_cast %40 : vector<1x84x160xbf16> to vector<84x160xbf16>
    %cst_47 = arith.constant dense<0.000000e+00> : vector<512x160xf32>
    %42 = tpu.matmul %39, %41, %cst_47 {dimension_numbers = #tpu.dot_dimension_numbers<[1], [0], [0], [1], [0, 0, 1, 1], [], []>} : vector<512x84xbf16>, vector<84x160xbf16>, vector<512x160xf32> -> vector<512x160xf32>
    %43 = arith.addf %37, %42 : vector<512x160xf32>
    %c0_48 = arith.constant 0 : index
    %c0_49 = arith.constant 0 : index
    %44 = vector.load %arg17[%c0_48, %c0_49] : memref<512x160xf32, #tpu.memory_space<vmem>>, vector<512x160xf32>
    tpu.vector_store %arg17[%c0_48, %c0_49], %43 {strides = array<i32>} : memref<512x160xf32, #tpu.memory_space<vmem>>, vector<512x160xf32>,
    %c0_50 = arith.constant 0 : index
    %c0_51 = arith.constant 0 : index
    %45 = vector.load %arg17[%c0_50, %c0_51] : memref<512x160xf32, #tpu.memory_space<vmem>>, vector<512x160xf32>
    %c3 = arith.constant 3 : index
    %c0_52 = arith.constant 0 : index
    %46 = vector.load %arg16[%c3, %c0_52] : memref<520x84xf32, #tpu.memory_space<vmem>>, vector<512x84xf32>
    %47 = arith.truncf %46 : vector<512x84xf32> to vector<512x84xbf16>
    %c3_53 = arith.constant 3 : index
    %c0_54 = arith.constant 0 : index
    %c0_55 = arith.constant 0 : index
    %48 = vector.load %arg5[%c3_53, %c0_54, %c0_55] : memref<5x84x160xbf16, #tpu.memory_space<vmem>>, vector<1x84x160xbf16>
    %49 = vector.shape_cast %48 : vector<1x84x160xbf16> to vector<84x160xbf16>
    %cst_56 = arith.constant dense<0.000000e+00> : vector<512x160xf32>
    %50 = tpu.matmul %47, %49, %cst_56 {dimension_numbers = #tpu.dot_dimension_numbers<[1], [0], [0], [1], [0, 0, 1, 1], [], []>} : vector<512x84xbf16>, vector<84x160xbf16>, vector<512x160xf32> -> vector<512x160xf32>
    %51 = arith.addf %45, %50 : vector<512x160xf32>
    %c0_57 = arith.constant 0 : index
    %c0_58 = arith.constant 0 : index
    %52 = vector.load %arg17[%c0_57, %c0_58] : memref<512x160xf32, #tpu.memory_space<vmem>>, vector<512x160xf32>
    tpu.vector_store %arg17[%c0_57, %c0_58], %51 {strides = array<i32>} : memref<512x160xf32, #tpu.memory_space<vmem>>, vector<512x160xf32>,
    %c0_59 = arith.constant 0 : index
    %c0_60 = arith.constant 0 : index
    %53 = vector.load %arg17[%c0_59, %c0_60] : memref<512x160xf32, #tpu.memory_space<vmem>>, vector<512x160xf32>
    %c4 = arith.constant 4 : index
    %c0_61 = arith.constant 0 : index
    %54 = vector.load %arg16[%c4, %c0_61] : memref<520x84xf32, #tpu.memory_space<vmem>>, vector<512x84xf32>
    %55 = arith.truncf %54 : vector<512x84xf32> to vector<512x84xbf16>
    %c4_62 = arith.constant 4 : index
    %c0_63 = arith.constant 0 : index
    %c0_64 = arith.constant 0 : index
    %56 = vector.load %arg5[%c4_62, %c0_63, %c0_64] : memref<5x84x160xbf16, #tpu.memory_space<vmem>>, vector<1x84x160xbf16>
    %57 = vector.shape_cast %56 : vector<1x84x160xbf16> to vector<84x160xbf16>
    %cst_65 = arith.constant dense<0.000000e+00> : vector<512x160xf32>
    %58 = tpu.matmul %55, %57, %cst_65 {dimension_numbers = #tpu.dot_dimension_numbers<[1], [0], [0], [1], [0, 0, 1, 1], [], []>} : vector<512x84xbf16>, vector<84x160xbf16>, vector<512x160xf32> -> vector<512x160xf32>
    %59 = arith.addf %53, %58 : vector<512x160xf32>
    %c0_66 = arith.constant 0 : index
    %c0_67 = arith.constant 0 : index
    %60 = vector.load %arg17[%c0_66, %c0_67] : memref<512x160xf32, #tpu.memory_space<vmem>>, vector<512x160xf32>
    tpu.vector_store %arg17[%c0_66, %c0_67], %59 {strides = array<i32>} : memref<512x160xf32, #tpu.memory_space<vmem>>, vector<512x160xf32>,
    %c0_68 = arith.constant 0 : index
    %c0_69 = arith.constant 0 : index
    %61 = vector.load %arg17[%c0_68, %c0_69] : memref<512x160xf32, #tpu.memory_space<vmem>>, vector<512x160xf32>
    %c0_70 = arith.constant 0 : index
    %c0_71 = arith.constant 0 : index
    %62 = vector.load %arg6[%c0_70, %c0_71] : memref<1x160xf32, #tpu.memory_space<vmem>>, vector<1x160xf32>
    %63 = vector.broadcast %62 : vector<1x160xf32> to vector<512x160xf32>
    %64 = arith.addf %61, %63 : vector<512x160xf32>
    %cst_72 = arith.constant 0.000000e+00 : f32
    %65 = vector.broadcast %cst_72 : f32 to vector<512x160xf32>
    %66 = arith.maximumf %64, %65 : vector<512x160xf32>
    %67 = arith.truncf %66 : vector<512x160xf32> to vector<512x160xbf16>
    %c0_73 = arith.constant 0 : index
    %c0_74 = arith.constant 0 : index
    %c0_75 = arith.constant 0 : index
    %68 = vector.load %arg7[%c0_73, %c0_74, %c0_75] : memref<2x160x80xbf16, #tpu.memory_space<vmem>>, vector<1x160x80xbf16>
    %69 = vector.shape_cast %68 : vector<1x160x80xbf16> to vector<160x80xbf16>
    %cst_76 = arith.constant dense<0.000000e+00> : vector<512x80xf32>
    %70 = tpu.matmul %67, %69, %cst_76 {dimension_numbers = #tpu.dot_dimension_numbers<[1], [0], [0], [1], [0, 0, 1, 1], [], []>} : vector<512x160xbf16>, vector<160x80xbf16>, vector<512x80xf32> -> vector<512x80xf32>
    %c1_77 = arith.constant 1 : index
    %c0_78 = arith.constant 0 : index
    %c0_79 = arith.constant 0 : index
    %71 = vector.load %arg7[%c1_77, %c0_78, %c0_79] : memref<2x160x80xbf16, #tpu.memory_space<vmem>>, vector<1x160x80xbf16>
    %72 = vector.shape_cast %71 : vector<1x160x80xbf16> to vector<160x80xbf16>
    %cst_80 = arith.constant dense<0.000000e+00> : vector<512x80xf32>
    %73 = tpu.matmul %67, %72, %cst_80 {dimension_numbers = #tpu.dot_dimension_numbers<[1], [0], [0], [1], [0, 0, 1, 1], [], []>} : vector<512x160xbf16>, vector<160x80xbf16>, vector<512x80xf32> -> vector<512x80xf32>
    %74 = arith.maximumf %70, %73 : vector<512x80xf32>
    %c0_81 = arith.constant 0 : index
    %c0_82 = arith.constant 0 : index
    %75 = vector.load %arg18[%c0_81, %c0_82] : memref<512x80xf32, #tpu.memory_space<vmem>>, vector<512x80xf32>
    tpu.vector_store %arg18[%c0_81, %c0_82], %74 {strides = array<i32>} : memref<512x80xf32, #tpu.memory_space<vmem>>, vector<512x80xf32>,
    %cst_83 = arith.constant 0.000000e+00 : f32
    %76 = vector.broadcast %cst_83 : f32 to vector<32x120xf32>
    %c0_84 = arith.constant 0 : index
    %c0_85 = arith.constant 0 : index
    %77 = tpu.strided_load %arg18[%c0_84, %c0_85] {strides = array<i32: 16, 1>} : memref<512x80xf32, #tpu.memory_space<vmem>>, vector<32x80xf32>
    %c1_86 = arith.constant 1 : index
    %c0_87 = arith.constant 0 : index
    %78 = tpu.strided_load %arg18[%c1_86, %c0_87] {strides = array<i32: 16, 1>} : memref<512x80xf32, #tpu.memory_space<vmem>>, vector<32x80xf32>
    %79 = arith.maximumf %77, %78 : vector<32x80xf32>
    %80 = arith.truncf %79 : vector<32x80xf32> to vector<32x80xbf16>
    %c0_88 = arith.constant 0 : index
    %c0_89 = arith.constant 0 : index
    %c0_90 = arith.constant 0 : index
    %81 = vector.load %arg8[%c0_88, %c0_89, %c0_90] : memref<5x80x120xbf16, #tpu.memory_space<vmem>>, vector<1x80x120xbf16>
    %82 = vector.shape_cast %81 : vector<1x80x120xbf16> to vector<80x120xbf16>
    %cst_91 = arith.constant dense<0.000000e+00> : vector<32x120xf32>
    %83 = tpu.matmul %80, %82, %cst_91 {dimension_numbers = #tpu.dot_dimension_numbers<[1], [0], [0], [1], [0, 0, 1, 1], [], []>} : vector<32x80xbf16>, vector<80x120xbf16>, vector<32x120xf32> -> vector<32x120xf32>
    %84 = arith.addf %76, %83 : vector<32x120xf32>
    %c2_92 = arith.constant 2 : index
    %c0_93 = arith.constant 0 : index
    %85 = tpu.strided_load %arg18[%c2_92, %c0_93] {strides = array<i32: 16, 1>} : memref<512x80xf32, #tpu.memory_space<vmem>>, vector<32x80xf32>
    %c3_94 = arith.constant 3 : index
    %c0_95 = arith.constant 0 : index
    %86 = tpu.strided_load %arg18[%c3_94, %c0_95] {strides = array<i32: 16, 1>} : memref<512x80xf32, #tpu.memory_space<vmem>>, vector<32x80xf32>
    %87 = arith.maximumf %85, %86 : vector<32x80xf32>
    %88 = arith.truncf %87 : vector<32x80xf32> to vector<32x80xbf16>
    %c1_96 = arith.constant 1 : index
    %c0_97 = arith.constant 0 : index
    %c0_98 = arith.constant 0 : index
    %89 = vector.load %arg8[%c1_96, %c0_97, %c0_98] : memref<5x80x120xbf16, #tpu.memory_space<vmem>>, vector<1x80x120xbf16>
    %90 = vector.shape_cast %89 : vector<1x80x120xbf16> to vector<80x120xbf16>
    %cst_99 = arith.constant dense<0.000000e+00> : vector<32x120xf32>
    %91 = tpu.matmul %88, %90, %cst_99 {dimension_numbers = #tpu.dot_dimension_numbers<[1], [0], [0], [1], [0, 0, 1, 1], [], []>} : vector<32x80xbf16>, vector<80x120xbf16>, vector<32x120xf32> -> vector<32x120xf32>
    %92 = arith.addf %84, %91 : vector<32x120xf32>
    %c4_100 = arith.constant 4 : index
    %c0_101 = arith.constant 0 : index
    %93 = tpu.strided_load %arg18[%c4_100, %c0_101] {strides = array<i32: 16, 1>} : memref<512x80xf32, #tpu.memory_space<vmem>>, vector<32x80xf32>
    %c5 = arith.constant 5 : index
    %c0_102 = arith.constant 0 : index
    %94 = tpu.strided_load %arg18[%c5, %c0_102] {strides = array<i32: 16, 1>} : memref<512x80xf32, #tpu.memory_space<vmem>>, vector<32x80xf32>
    %95 = arith.maximumf %93, %94 : vector<32x80xf32>
    %96 = arith.truncf %95 : vector<32x80xf32> to vector<32x80xbf16>
    %c2_103 = arith.constant 2 : index
    %c0_104 = arith.constant 0 : index
    %c0_105 = arith.constant 0 : index
    %97 = vector.load %arg8[%c2_103, %c0_104, %c0_105] : memref<5x80x120xbf16, #tpu.memory_space<vmem>>, vector<1x80x120xbf16>
    %98 = vector.shape_cast %97 : vector<1x80x120xbf16> to vector<80x120xbf16>
    %cst_106 = arith.constant dense<0.000000e+00> : vector<32x120xf32>
    %99 = tpu.matmul %96, %98, %cst_106 {dimension_numbers = #tpu.dot_dimension_numbers<[1], [0], [0], [1], [0, 0, 1, 1], [], []>} : vector<32x80xbf16>, vector<80x120xbf16>, vector<32x120xf32> -> vector<32x120xf32>
    %100 = arith.addf %92, %99 : vector<32x120xf32>
    %c6 = arith.constant 6 : index
    %c0_107 = arith.constant 0 : index
    %101 = tpu.strided_load %arg18[%c6, %c0_107] {strides = array<i32: 16, 1>} : memref<512x80xf32, #tpu.memory_space<vmem>>, vector<32x80xf32>
    %c7 = arith.constant 7 : index
    %c0_108 = arith.constant 0 : index
    %102 = tpu.strided_load %arg18[%c7, %c0_108] {strides = array<i32: 16, 1>} : memref<512x80xf32, #tpu.memory_space<vmem>>, vector<32x80xf32>
    %103 = arith.maximumf %101, %102 : vector<32x80xf32>
    %104 = arith.truncf %103 : vector<32x80xf32> to vector<32x80xbf16>
    %c3_109 = arith.constant 3 : index
    %c0_110 = arith.constant 0 : index
    %c0_111 = arith.constant 0 : index
    %105 = vector.load %arg8[%c3_109, %c0_110, %c0_111] : memref<5x80x120xbf16, #tpu.memory_space<vmem>>, vector<1x80x120xbf16>
    %106 = vector.shape_cast %105 : vector<1x80x120xbf16> to vector<80x120xbf16>
    %cst_112 = arith.constant dense<0.000000e+00> : vector<32x120xf32>
    %107 = tpu.matmul %104, %106, %cst_112 {dimension_numbers = #tpu.dot_dimension_numbers<[1], [0], [0], [1], [0, 0, 1, 1], [], []>} : vector<32x80xbf16>, vector<80x120xbf16>, vector<32x120xf32> -> vector<32x120xf32>
    %108 = arith.addf %100, %107 : vector<32x120xf32>
    %c8 = arith.constant 8 : index
    %c0_113 = arith.constant 0 : index
    %109 = tpu.strided_load %arg18[%c8, %c0_113] {strides = array<i32: 16, 1>} : memref<512x80xf32, #tpu.memory_space<vmem>>, vector<32x80xf32>
    %c9 = arith.constant 9 : index
    %c0_114 = arith.constant 0 : index
    %110 = tpu.strided_load %arg18[%c9, %c0_114] {strides = array<i32: 16, 1>} : memref<512x80xf32, #tpu.memory_space<vmem>>, vector<32x80xf32>
    %111 = arith.maximumf %109, %110 : vector<32x80xf32>
    %112 = arith.truncf %111 : vector<32x80xf32> to vector<32x80xbf16>
    %c4_115 = arith.constant 4 : index
    %c0_116 = arith.constant 0 : index
    %c0_117 = arith.constant 0 : index
    %113 = vector.load %arg8[%c4_115, %c0_116, %c0_117] : memref<5x80x120xbf16, #tpu.memory_space<vmem>>, vector<1x80x120xbf16>
    %114 = vector.shape_cast %113 : vector<1x80x120xbf16> to vector<80x120xbf16>
    %cst_118 = arith.constant dense<0.000000e+00> : vector<32x120xf32>
    %115 = tpu.matmul %112, %114, %cst_118 {dimension_numbers = #tpu.dot_dimension_numbers<[1], [0], [0], [1], [0, 0, 1, 1], [], []>} : vector<32x80xbf16>, vector<80x120xbf16>, vector<32x120xf32> -> vector<32x120xf32>
    %116 = arith.addf %108, %115 : vector<32x120xf32>
    %c0_119 = arith.constant 0 : index
    %c0_120 = arith.constant 0 : index
    %117 = vector.load %arg9[%c0_119, %c0_120] : memref<1x120xf32, #tpu.memory_space<vmem>>, vector<1x120xf32>
    %118 = vector.broadcast %117 : vector<1x120xf32> to vector<32x120xf32>
    %119 = arith.addf %116, %118 : vector<32x120xf32>
    %cst_121 = arith.constant 0.000000e+00 : f32
    %120 = vector.broadcast %cst_121 : f32 to vector<32x120xf32>
    %121 = arith.maximumf %119, %120 : vector<32x120xf32>
    %122 = arith.truncf %121 : vector<32x120xf32> to vector<32x120xbf16>
    %c0_122 = arith.constant 0 : index
    %c0_123 = arith.constant 0 : index
    %123 = vector.load %arg10[%c0_122, %c0_123] : memref<120x84xbf16, #tpu.memory_space<vmem>>, vector<120x84xbf16>
    %cst_124 = arith.constant dense<0.000000e+00> : vector<32x84xf32>
    %124 = tpu.matmul %122, %123, %cst_124 {dimension_numbers = #tpu.dot_dimension_numbers<[1], [0], [0], [1], [0, 0, 1, 1], [], []>} : vector<32x120xbf16>, vector<120x84xbf16>, vector<32x84xf32> -> vector<32x84xf32>
    %c0_125 = arith.constant 0 : index
    %c0_126 = arith.constant 0 : index
    %125 = vector.load %arg11[%c0_125, %c0_126] : memref<1x84xf32, #tpu.memory_space<vmem>>, vector<1x84xf32>
    %126 = vector.broadcast %125 : vector<1x84xf32> to vector<32x84xf32>
    %127 = arith.addf %124, %126 : vector<32x84xf32>
    %cst_127 = arith.constant 0.000000e+00 : f32
    %128 = vector.broadcast %cst_127 : f32 to vector<32x84xf32>
    %129 = arith.maximumf %127, %128 : vector<32x84xf32>
    %130 = arith.truncf %129 : vector<32x84xf32> to vector<32x84xbf16>
    %c0_128 = arith.constant 0 : index
    %c0_129 = arith.constant 0 : index
    %131 = vector.load %arg12[%c0_128, %c0_129] : memref<84x128xbf16, #tpu.memory_space<vmem>>, vector<84x128xbf16>
    %cst_130 = arith.constant dense<0.000000e+00> : vector<32x128xf32>
    %132 = tpu.matmul %130, %131, %cst_130 {dimension_numbers = #tpu.dot_dimension_numbers<[1], [0], [0], [1], [0, 0, 1, 1], [], []>} : vector<32x84xbf16>, vector<84x128xbf16>, vector<32x128xf32> -> vector<32x128xf32>
    %c0_131 = arith.constant 0 : index
    %c0_132 = arith.constant 0 : index
    %133 = vector.load %arg13[%c0_131, %c0_132] : memref<1x128xf32, #tpu.memory_space<vmem>>, vector<1x128xf32>
    %134 = vector.broadcast %133 : vector<1x128xf32> to vector<32x128xf32>
    %135 = arith.addf %132, %134 : vector<32x128xf32>
    %c0_133 = arith.constant 0 : index
    %c0_134 = arith.constant 0 : index
    %136 = vector.load %arg14[%c0_133, %c0_134] : memref<32x128xf32, #tpu.memory_space<vmem>>, vector<32x128xf32>
    tpu.vector_store %arg14[%c0_133, %c0_134], %135 {strides = array<i32>} : memref<32x128xf32, #tpu.memory_space<vmem>>, vector<32x128xf32>,
    return
  }
  func.func @transform_0(%arg0: i32) -> (i32, i32) {
    %c0_i32 = arith.constant 0 : i32
    %c0_i32_0 = arith.constant 0 : i32
    return %arg0, %c0_i32 : i32, i32
  }
  func.func @transform_1(%arg0: i32) -> (i32, i32) {
    %c0_i32 = arith.constant 0 : i32
    %c0_i32_0 = arith.constant 0 : i32
    %c0_i32_1 = arith.constant 0 : i32
    return %c0_i32, %c0_i32_0 : i32, i32
  }
  func.func @transform_2(%arg0: i32) -> (i32, i32) {
    %c0_i32 = arith.constant 0 : i32
    %c0_i32_0 = arith.constant 0 : i32
    %c0_i32_1 = arith.constant 0 : i32
    return %c0_i32, %c0_i32_0 : i32, i32
  }
  func.func @transform_3(%arg0: i32) -> (i32, i32, i32) {
    %c0_i32 = arith.constant 0 : i32
    %c0_i32_0 = arith.constant 0 : i32
    %c0_i32_1 = arith.constant 0 : i32
    %c0_i32_2 = arith.constant 0 : i32
    return %c0_i32, %c0_i32_0, %c0_i32_1 : i32, i32, i32
  }
  func.func @transform_4(%arg0: i32) -> (i32, i32, i32) {
    %c0_i32 = arith.constant 0 : i32
    %c0_i32_0 = arith.constant 0 : i32
    %c0_i32_1 = arith.constant 0 : i32
    %c0_i32_2 = arith.constant 0 : i32
    return %c0_i32, %c0_i32_0, %c0_i32_1 : i32, i32, i32
  }
  func.func @transform_5(%arg0: i32) -> (i32, i32) {
    %c0_i32 = arith.constant 0 : i32
    %c0_i32_0 = arith.constant 0 : i32
    %c0_i32_1 = arith.constant 0 : i32
    return %c0_i32, %c0_i32_0 : i32, i32
  }
  func.func @transform_6(%arg0: i32) -> (i32, i32, i32) {
    %c0_i32 = arith.constant 0 : i32
    %c0_i32_0 = arith.constant 0 : i32
    %c0_i32_1 = arith.constant 0 : i32
    %c0_i32_2 = arith.constant 0 : i32
    return %c0_i32, %c0_i32_0, %c0_i32_1 : i32, i32, i32
  }
  func.func @transform_7(%arg0: i32) -> (i32, i32, i32) {
    %c0_i32 = arith.constant 0 : i32
    %c0_i32_0 = arith.constant 0 : i32
    %c0_i32_1 = arith.constant 0 : i32
    %c0_i32_2 = arith.constant 0 : i32
    return %c0_i32, %c0_i32_0, %c0_i32_1 : i32, i32, i32
  }
  func.func @transform_8(%arg0: i32) -> (i32, i32) {
    %c0_i32 = arith.constant 0 : i32
    %c0_i32_0 = arith.constant 0 : i32
    %c0_i32_1 = arith.constant 0 : i32
    return %c0_i32, %c0_i32_0 : i32, i32
  }
  func.func @transform_9(%arg0: i32) -> (i32, i32) {
    %c0_i32 = arith.constant 0 : i32
    %c0_i32_0 = arith.constant 0 : i32
    %c0_i32_1 = arith.constant 0 : i32
    return %c0_i32, %c0_i32_0 : i32, i32
  }
  func.func @transform_10(%arg0: i32) -> (i32, i32) {
    %c0_i32 = arith.constant 0 : i32
    %c0_i32_0 = arith.constant 0 : i32
    %c0_i32_1 = arith.constant 0 : i32
    return %c0_i32, %c0_i32_0 : i32, i32
  }
  func.func @transform_11(%arg0: i32) -> (i32, i32) {
    %c0_i32 = arith.constant 0 : i32
    %c0_i32_0 = arith.constant 0 : i32
    %c0_i32_1 = arith.constant 0 : i32
    return %c0_i32, %c0_i32_0 : i32, i32
  }
  func.func @transform_12(%arg0: i32) -> (i32, i32) {
    %c0_i32 = arith.constant 0 : i32
    %c0_i32_0 = arith.constant 0 : i32
    %c0_i32_1 = arith.constant 0 : i32
    return %c0_i32, %c0_i32_0 : i32, i32
  }
  func.func @transform_13(%arg0: i32) -> (i32, i32) {
    %c0_i32 = arith.constant 0 : i32
    %c0_i32_0 = arith.constant 0 : i32
    return %arg0, %c0_i32 : i32, i32
  }
}

</mosaic_0001>

<llo_original>
// kernel: lenet5_forward.1
$region0: #{lenet5_forward.1}
  #allocation0 [shape = 'u32[]', space=smem, size = 0x4, offset = 0x4, fixed_abs, tag = 'smem constant byte address 0x4 - core index']
  #allocation1 [shape = 'u32[72,128]{1,0:T(1,128)}', space=vmem, size = 0x9000, scoped, tag = 'internal scratch']
  #allocation2 [shape = 'f32[1024,84]{1,0:T(8,128)}', space=vmem, size = 0x80000, scoped, tag = 'scratch operand']
  #allocation3 [shape = 'f32[520,84]{1,0:T(8,128)}', space=vmem, size = 0x41000, scoped, tag = 'scratch operand']
  #allocation4 [shape = 'f32[512,160]{1,0:T(8,128)}', space=vmem, size = 0x80000, scoped, tag = 'scratch operand']
  #allocation5 [shape = 'f32[512,80]{1,0:T(8,128)}', space=vmem, size = 0x40000, scoped, tag = 'scratch operand']
  %s0 = inlined_call_operand.vmem [shape: bf16[1024,160], index: 0, kind: input, shape index: {}]
  %s1 = inlined_call_operand.vmem [shape: bf16[160,168], index: 1, kind: input, shape index: {}]
  %s2 = inlined_call_operand.vmem [shape: f32[1,168], index: 2, kind: input, shape index: {}]
  %s3 = inlined_call_operand.vmem [shape: bf16[2,168,84], index: 3, kind: input, shape index: {}]
  %s4 = inlined_call_operand.vmem [shape: bf16[5,84,160], index: 4, kind: input, shape index: {}]
  %s5 = inlined_call_operand.vmem [shape: f32[1,160], index: 5, kind: input, shape index: {}]
  %s6 = inlined_call_operand.vmem [shape: bf16[2,160,80], index: 6, kind: input, shape index: {}]
  %s7 = inlined_call_operand.vmem [shape: bf16[5,80,120], index: 7, kind: input, shape index: {}]
  %s8 = inlined_call_operand.vmem [shape: f32[1,120], index: 8, kind: input, shape index: {}]
  %s9 = inlined_call_operand.vmem [shape: bf16[120,84], index: 9, kind: input, shape index: {}]
  %s10 = inlined_call_operand.vmem [shape: f32[1,84], index: 10, kind: input, shape index: {}]
  %s11 = inlined_call_operand.vmem [shape: bf16[84,128], index: 11, kind: input, shape index: {}]
  %s12 = inlined_call_operand.vmem [shape: f32[1,128], index: 12, kind: input, shape index: {}]
  %s13 = inlined_call_operand.vmem [shape: f32[32,128], index: 13, kind: output, shape index: {}]
  %s14 = sld [smem:[#allocation0]]
  $region62: #{lenet5_forward.1} parent=0
    _
  %s16 = ssub.s32 1, %s14
  %s17 = scalar_select 0, %s16, %s14
  // Predicated region
  $region2: #{lenet5_forward.1} parent=0 // pred_check
    _
  $region3: #{lenet5_forward.1} parent=0 // pred_check_branch
    %19 = sbr.rel (0) target = $region5
  $region4: #{lenet5_forward.1} parent=0 // pred_region
    _
  $region5: #{lenet5_forward.1} parent=0 // pred_fallthru
    _
  // Predicated region
  $region6: #{lenet5_forward.1} parent=0 // pred_check
    _
  $region7: #{lenet5_forward.1} parent=0 // pred_check_branch
    %21 = sbr.rel (0) target = $region9
  $region8: #{lenet5_forward.1} parent=0 // pred_region
    _
  $region9: #{lenet5_forward.1} parent=0 // pred_fallthru
    _
  // Predicated region
  $region10: #{lenet5_forward.1} parent=0 // pred_check
    _
  $region11: #{lenet5_forward.1} parent=0 // pred_check_branch
    %23 = sbr.rel (0) target = $region13
  $region12: #{lenet5_forward.1} parent=0 // pred_region
    _
  $region13: #{lenet5_forward.1} parent=0 // pred_fallthru
    _
  // Predicated region
  $region14: #{lenet5_forward.1} parent=0 // pred_check
    _
  $region15: #{lenet5_forward.1} parent=0 // pred_check_branch
    %25 = sbr.rel (0) target = $region17
  $region16: #{lenet5_forward.1} parent=0 // pred_region
    _
  $region17: #{lenet5_forward.1} parent=0 // pred_fallthru
    _
  // Predicated region
  $region18: #{lenet5_forward.1} parent=0 // pred_check
    _
  $region19: #{lenet5_forward.1} parent=0 // pred_check_branch
    %27 = sbr.rel (0) target = $region21
  $region20: #{lenet5_forward.1} parent=0 // pred_region
    _
  $region21: #{lenet5_forward.1} parent=0 // pred_fallthru
    _
  // Predicated region
  $region22: #{lenet5_forward.1} parent=0 // pred_check
    _
  $region23: #{lenet5_forward.1} parent=0 // pred_check_branch
    %29 = sbr.rel (0) target = $region25
  $region24: #{lenet5_forward.1} parent=0 // pred_region
    _
  $region25: #{lenet5_forward.1} parent=0 // pred_fallthru
    _
  // Predicated region
  $region26: #{lenet5_forward.1} parent=0 // pred_check
    _
  $region27: #{lenet5_forward.1} parent=0 // pred_check_branch
    %31 = sbr.rel (0) target = $region29
  $region28: #{lenet5_forward.1} parent=0 // pred_region
    _
  $region29: #{lenet5_forward.1} parent=0 // pred_fallthru
    _
  // Predicated region
  $region30: #{lenet5_forward.1} parent=0 // pred_check
    _
  $region31: #{lenet5_forward.1} parent=0 // pred_check_branch
    %33 = sbr.rel (0) target = $region33
  $region32: #{lenet5_forward.1} parent=0 // pred_region
    _
  $region33: #{lenet5_forward.1} parent=0 // pred_fallthru
    _
  // Predicated region
  $region34: #{lenet5_forward.1} parent=0 // pred_check
    _
  $region35: #{lenet5_forward.1} parent=0 // pred_check_branch
    %35 = sbr.rel (0) target = $region37
  $region36: #{lenet5_forward.1} parent=0 // pred_region
    _
  $region37: #{lenet5_forward.1} parent=0 // pred_fallthru
    _
  // Predicated region
  $region38: #{lenet5_forward.1} parent=0 // pred_check
    _
  $region39: #{lenet5_forward.1} parent=0 // pred_check_branch
    %37 = sbr.rel (0) target = $region41
  $region40: #{lenet5_forward.1} parent=0 // pred_region
    _
  $region41: #{lenet5_forward.1} parent=0 // pred_fallthru
    _
  // Predicated region
  $region42: #{lenet5_forward.1} parent=0 // pred_check
    _
  $region43: #{lenet5_forward.1} parent=0 // pred_check_branch
    %39 = sbr.rel (0) target = $region45
  $region44: #{lenet5_forward.1} parent=0 // pred_region
    _
  $region45: #{lenet5_forward.1} parent=0 // pred_fallthru
    _
  // Predicated region
  $region46: #{lenet5_forward.1} parent=0 // pred_check
    _
  $region47: #{lenet5_forward.1} parent=0 // pred_check_branch
    %41 = sbr.rel (0) target = $region49
  $region48: #{lenet5_forward.1} parent=0 // pred_region
    _
  $region49: #{lenet5_forward.1} parent=0 // pred_fallthru
    _
  // Predicated region
  $region50: #{lenet5_forward.1} parent=0 // pred_check
    _
  $region51: #{lenet5_forward.1} parent=0 // pred_check_branch
    %43 = sbr.rel (0) target = $region53
  $region52: #{lenet5_forward.1} parent=0 // pred_region
    _
  $region53: #{lenet5_forward.1} parent=0 // pred_fallthru
    _
  %v45 = vld [vmem:[%s0] sm:$0xff]
  %v46 = vld [vmem:[%s0 + $0x8] sm:$0xff]
  %v47 = vld [vmem:[%s0 + $0x10] sm:$0xff]
  %v48 = vld [vmem:[%s0 + $0x18] sm:$0xff]
  %v49 = vld [vmem:[%s0 + $0x20] sm:$0xff]
  %v50 = vld [vmem:[%s0 + $0x28] sm:$0xff]
  %v51 = vld [vmem:[%s0 + $0x30] sm:$0xff]
  %v52 = vld [vmem:[%s0 + $0x38] sm:$0xff]
  %v53 = vld [vmem:[%s0 + $0x40] sm:$0xff]
  %v54 = vld [vmem:[%s0 + $0x48] sm:$0xff]
  %v55 = vld [vmem:[%s0 + $0x50] sm:$0xff]
  %v56 = vld [vmem:[%s0 + $0x58] sm:$0xff]
  %v57 = vld [vmem:[%s0 + $0x60] sm:$0xff]
  %v58 = vld [vmem:[%s0 + $0x68] sm:$0xff]
  %v59 = vld [vmem:[%s0 + $0x70] sm:$0xff]
  %v60 = vld [vmem:[%s0 + $0x78] sm:$0xff]
  %v61 = vld [vmem:[%s0 + $0x80] sm:$0xff]
  %v62 = vld [vmem:[%s0 + $0x88] sm:$0xff]
  %v63 = vld [vmem:[%s0 + $0x90] sm:$0xff]
  %v64 = vld [vmem:[%s0 + $0x98] sm:$0xff]
  %v65 = vld [vmem:[%s0 + $0xa0] sm:$0xff]
  %v66 = vld [vmem:[%s0 + $0xa8] sm:$0xff]
  %v67 = vld [vmem:[%s0 + $0xb0] sm:$0xff]
  %v68 = vld [vmem:[%s0 + $0xb8] sm:$0xff]
  %v69 = vld [vmem:[%s0 + $0xc0] sm:$0xff]
  %v70 = vld [vmem:[%s0 + $0xc8] sm:$0xff]
  %v71 = vld [vmem:[%s0 + $0xd0] sm:$0xff]
  %v72 = vld [vmem:[%s0 + $0xd8] sm:$0xff]
  %v73 = vld [vmem:[%s0 + $0xe0] sm:$0xff]
  %v74 = vld [vmem:[%s0 + $0xe8] sm:$0xff]
  %v75 = vld [vmem:[%s0 + $0xf0] sm:$0xff]
  %v76 = vld [vmem:[%s0 + $0xf8] sm:$0xff]
  %v77 = vld [vmem:[%s0 + $0x100] sm:$0xff]
  %v78 = vld [vmem:[%s0 + $0x108] sm:$0xff]
  %v79 = vld [vmem:[%s0 + $0x110] sm:$0xff]
  %v80 = vld [vmem:[%s0 + $0x118] sm:$0xff]
  %v81 = vld [vmem:[%s0 + $0x120] sm:$0xff]
  %v82 = vld [vmem:[%s0 + $0x128] sm:$0xff]
  %v83 = vld [vmem:[%s0 + $0x130] sm:$0xff]
  %v84 = vld [vmem:[%s0 + $0x138] sm:$0xff]
  %v85 = vld [vmem:[%s0 + $0x140] sm:$0xff]
  %v86 = vld [vmem:[%s0 + $0x148] sm:$0xff]
  %v87 = vld [vmem:[%s0 + $0x150] sm:$0xff]
  %v88 = vld [vmem:[%s0 + $0x158] sm:$0xff]
  %v89 = vld [vmem:[%s0 + $0x160] sm:$0xff]
  %v90 = vld [vmem:[%s0 + $0x168] sm:$0xff]
  %v91 = vld [vmem:[%s0 + $0x170] sm:$0xff]
  %v92 = vld [vmem:[%s0 + $0x178] sm:$0xff]
  %v93 = vld [vmem:[%s0 + $0x180] sm:$0xff]
  %v94 = vld [vmem:[%s0 + $0x188] sm:$0xff]
  %v95 = vld [vmem:[%s0 + $0x190] sm:$0xff]
  %v96 = vld [vmem:[%s0 + $0x198] sm:$0xff]
  %v97 = vld [vmem:[%s0 + $0x1a0] sm:$0xff]
  %v98 = vld [vmem:[%s0 + $0x1a8] sm:$0xff]
  %v99 = vld [vmem:[%s0 + $0x1b0] sm:$0xff]
  %v100 = vld [vmem:[%s0 + $0x1b8] sm:$0xff]
  %v101 = vld [vmem:[%s0 + $0x1c0] sm:$0xff]
  %v102 = vld [vmem:[%s0 + $0x1c8] sm:$0xff]
  %v103 = vld [vmem:[%s0 + $0x1d0] sm:$0xff]
  %v104 = vld [vmem:[%s0 + $0x1d8] sm:$0xff]
  %v105 = vld [vmem:[%s0 + $0x1e0] sm:$0xff]
  %v106 = vld [vmem:[%s0 + $0x1e8] sm:$0xff]
  %v107 = vld [vmem:[%s0 + $0x1f0] sm:$0xff]
  %v108 = vld [vmem:[%s0 + $0x1f8] sm:$0xff]
  %v109 = vld [vmem:[%s0 + $0x200] sm:$0xff]
  %v110 = vld [vmem:[%s0 + $0x208] sm:$0xff]
  %v111 = vld [vmem:[%s0 + $0x210] sm:$0xff]
  %v112 = vld [vmem:[%s0 + $0x218] sm:$0xff]
  %v113 = vld [vmem:[%s0 + $0x220] sm:$0xff]
  %v114 = vld [vmem:[%s0 + $0x228] sm:$0xff]
  %v115 = vld [vmem:[%s0 + $0x230] sm:$0xff]
  %v116 = vld [vmem:[%s0 + $0x238] sm:$0xff]
  %v117 = vld [vmem:[%s0 + $0x240] sm:$0xff]
  %v118 = vld [vmem:[%s0 + $0x248] sm:$0xff]
  %v119 = vld [vmem:[%s0 + $0x250] sm:$0xff]
  %v120 = vld [vmem:[%s0 + $0x258] sm:$0xff]
  %v121 = vld [vmem:[%s0 + $0x260] sm:$0xff]
  %v122 = vld [vmem:[%s0 + $0x268] sm:$0xff]
  %v123 = vld [vmem:[%s0 + $0x270] sm:$0xff]
  %v124 = vld [vmem:[%s0 + $0x278] sm:$0xff]
  %v125 = vld [vmem:[%s0 + $0x280] sm:$0xff]
  %v126 = vld [vmem:[%s0 + $0x288] sm:$0xff]
  %v127 = vld [vmem:[%s0 + $0x290] sm:$0xff]
  %v128 = vld [vmem:[%s0 + $0x298] sm:$0xff]
  %v129 = vld [vmem:[%s0 + $0x2a0] sm:$0xff]
  %v130 = vld [vmem:[%s0 + $0x2a8] sm:$0xff]
  %v131 = vld [vmem:[%s0 + $0x2b0] sm:$0xff]
  %v132 = vld [vmem:[%s0 + $0x2b8] sm:$0xff]
  %v133 = vld [vmem:[%s0 + $0x2c0] sm:$0xff]
  %v134 = vld [vmem:[%s0 + $0x2c8] sm:$0xff]
  %v135 = vld [vmem:[%s0 + $0x2d0] sm:$0xff]
  %v136 = vld [vmem:[%s0 + $0x2d8] sm:$0xff]
  %v137 = vld [vmem:[%s0 + $0x2e0] sm:$0xff]
  %v138 = vld [vmem:[%s0 + $0x2e8] sm:$0xff]
  %v139 = vld [vmem:[%s0 + $0x2f0] sm:$0xff]
  %v140 = vld [vmem:[%s0 + $0x2f8] sm:$0xff]
  %v141 = vld [vmem:[%s0 + $0x300] sm:$0xff]
  %v142 = vld [vmem:[%s0 + $0x308] sm:$0xff]
  %v143 = vld [vmem:[%s0 + $0x310] sm:$0xff]
  %v144 = vld [vmem:[%s0 + $0x318] sm:$0xff]
  %v145 = vld [vmem:[%s0 + $0x320] sm:$0xff]
  %v146 = vld [vmem:[%s0 + $0x328] sm:$0xff]
  %v147 = vld [vmem:[%s0 + $0x330] sm:$0xff]
  %v148 = vld [vmem:[%s0 + $0x338] sm:$0xff]
  %v149 = vld [vmem:[%s0 + $0x340] sm:$0xff]
  %v150 = vld [vmem:[%s0 + $0x348] sm:$0xff]
  %v151 = vld [vmem:[%s0 + $0x350] sm:$0xff]
  %v152 = vld [vmem:[%s0 + $0x358] sm:$0xff]
  %v153 = vld [vmem:[%s0 + $0x360] sm:$0xff]
  %v154 = vld [vmem:[%s0 + $0x368] sm:$0xff]
  %v155 = vld [vmem:[%s0 + $0x370] sm:$0xff]
  %v156 = vld [vmem:[%s0 + $0x378] sm:$0xff]
  %v157 = vld [vmem:[%s0 + $0x380] sm:$0xff]
  %v158 = vld [vmem:[%s0 + $0x388] sm:$0xff]
  %v159 = vld [vmem:[%s0 + $0x390] sm:$0xff]
  %v160 = vld [vmem:[%s0 + $0x398] sm:$0xff]
  %v161 = vld [vmem:[%s0 + $0x3a0] sm:$0xff]
  %v162 = vld [vmem:[%s0 + $0x3a8] sm:$0xff]
  %v163 = vld [vmem:[%s0 + $0x3b0] sm:$0xff]
  %v164 = vld [vmem:[%s0 + $0x3b8] sm:$0xff]
  %v165 = vld [vmem:[%s0 + $0x3c0] sm:$0xff]
  %v166 = vld [vmem:[%s0 + $0x3c8] sm:$0xff]
  %v167 = vld [vmem:[%s0 + $0x3d0] sm:$0xff]
  %v168 = vld [vmem:[%s0 + $0x3d8] sm:$0xff]
  %v169 = vld [vmem:[%s0 + $0x3e0] sm:$0xff]
  %v170 = vld [vmem:[%s0 + $0x3e8] sm:$0xff]
  %v171 = vld [vmem:[%s0 + $0x3f0] sm:$0xff]
  %v172 = vld [vmem:[%s0 + $0x3f8] sm:$0xff]
  %v173 = vld [vmem:[%s1] sm:$0xff]
  %v174 = vld [vmem:[%s1 + $0x8] sm:$0xff]
  %v175 = vld [vmem:[%s1 + $0x10] sm:$0xff]
  %v176 = vld [vmem:[%s1 + $0x18] sm:$0xff]
  %v177 = vld [vmem:[%s1 + $0x20] sm:$0xff]
  %v178 = vld [vmem:[%s1 + $0x28] sm:$0xff]
  %v179 = vld [vmem:[%s1 + $0x30] sm:$0xff]
  %v180 = vld [vmem:[%s1 + $0x38] sm:$0xff]
  %v181 = vld [vmem:[%s1 + $0x40] sm:$0xff]
  %v182 = vld [vmem:[%s1 + $0x48] sm:$0xff]
  %v183 = vld [vmem:[%s1 + $0x50] sm:$0xff]
  %v184 = vld [vmem:[%s1 + $0x58] sm:$0xff]
  %v185 = vld [vmem:[%s1 + $0x60] sm:$0xff]
  %v186 = vld [vmem:[%s1 + $0x68] sm:$0xff]
  %v187 = vld [vmem:[%s1 + $0x70] sm:$0xff]
  %v188 = vld [vmem:[%s1 + $0x78] sm:$0xff]
  %v189 = vld [vmem:[%s1 + $0x80] sm:$0xff]
  %v190 = vld [vmem:[%s1 + $0x88] sm:$0xff]
  %v191 = vld [vmem:[%s1 + $0x90] sm:$0xff]
  %v192 = vld [vmem:[%s1 + $0x98] sm:$0xff]
  %v193 = vld [vmem:[%s2] sm:$0x3]
  %v195 = vperm.slane %v193, 0
  %v196 = vperm.slane %v193, 1
  %v327 = vunpack.c.l.b16 %v45
  %v328 = vunpack.c.h.b16 %v45
  %v329 = vunpack.c.l.b16 %v46
  %v330 = vunpack.c.h.b16 %v46
  %v331 = vunpack.c.l.b16 %v47
  %v332 = vunpack.c.h.b16 %v47
  %v333 = vunpack.c.l.b16 %v48
  %v334 = vunpack.c.h.b16 %v48
  %v335 = vunpack.c.l.b16 %v49
  %v336 = vunpack.c.h.b16 %v49
  %v337 = vunpack.c.l.b16 %v50
  %v338 = vunpack.c.h.b16 %v50
  %v339 = vunpack.c.l.b16 %v51
  %v340 = vunpack.c.h.b16 %v51
  %v341 = vunpack.c.l.b16 %v52
  %v342 = vunpack.c.h.b16 %v52
  %v343 = vunpack.c.l.b16 %v53
  %v344 = vunpack.c.h.b16 %v53
  %v345 = vunpack.c.l.b16 %v54
  %v346 = vunpack.c.h.b16 %v54
  %v347 = vunpack.c.l.b16 %v55
  %v348 = vunpack.c.h.b16 %v55
  %v349 = vunpack.c.l.b16 %v56
  %v350 = vunpack.c.h.b16 %v56
  %v351 = vunpack.c.l.b16 %v57
  %v352 = vunpack.c.h.b16 %v57
  %v353 = vunpack.c.l.b16 %v58
  %v354 = vunpack.c.h.b16 %v58
  %v355 = vunpack.c.l.b16 %v59
  %v356 = vunpack.c.h.b16 %v59
  %v357 = vunpack.c.l.b16 %v60
  %v358 = vunpack.c.h.b16 %v60
  %v359 = vunpack.c.l.b16 %v61
  %v360 = vunpack.c.h.b16 %v61
  %v361 = vunpack.c.l.b16 %v62
  %v362 = vunpack.c.h.b16 %v62
  %v363 = vunpack.c.l.b16 %v63
  %v364 = vunpack.c.h.b16 %v63
  %v365 = vunpack.c.l.b16 %v64
  %v366 = vunpack.c.h.b16 %v64
  %v367 = vunpack.c.l.b16 %v65
  %v368 = vunpack.c.h.b16 %v65
  %v369 = vunpack.c.l.b16 %v66
  %v370 = vunpack.c.h.b16 %v66
  %v371 = vunpack.c.l.b16 %v67
  %v372 = vunpack.c.h.b16 %v67
  %v373 = vunpack.c.l.b16 %v68
  %v374 = vunpack.c.h.b16 %v68
  %v375 = vunpack.c.l.b16 %v69
  %v376 = vunpack.c.h.b16 %v69
  %v377 = vunpack.c.l.b16 %v70
  %v378 = vunpack.c.h.b16 %v70
  %v379 = vunpack.c.l.b16 %v71
  %v380 = vunpack.c.h.b16 %v71
  %v381 = vunpack.c.l.b16 %v72
  %v382 = vunpack.c.h.b16 %v72
  %v383 = vunpack.c.l.b16 %v73
  %v384 = vunpack.c.h.b16 %v73
  %v385 = vunpack.c.l.b16 %v74
  %v386 = vunpack.c.h.b16 %v74
  %v387 = vunpack.c.l.b16 %v75
  %v388 = vunpack.c.h.b16 %v75
  %v389 = vunpack.c.l.b16 %v76
  %v390 = vunpack.c.h.b16 %v76
  %v391 = vunpack.c.l.b16 %v77
  %v392 = vunpack.c.h.b16 %v77
  %v393 = vunpack.c.l.b16 %v78
  %v394 = vunpack.c.h.b16 %v78
  %v395 = vunpack.c.l.b16 %v79
  %v396 = vunpack.c.h.b16 %v79
  %v397 = vunpack.c.l.b16 %v80
  %v398 = vunpack.c.h.b16 %v80
  %v399 = vunpack.c.l.b16 %v81
  %v400 = vunpack.c.h.b16 %v81
  %v401 = vunpack.c.l.b16 %v82
  %v402 = vunpack.c.h.b16 %v82
  %v403 = vunpack.c.l.b16 %v83
  %v404 = vunpack.c.h.b16 %v83
  %v405 = vunpack.c.l.b16 %v84
  %v406 = vunpack.c.h.b16 %v84
  %v407 = vunpack.c.l.b16 %v85
  %v408 = vunpack.c.h.b16 %v85
  %v409 = vunpack.c.l.b16 %v86
  %v410 = vunpack.c.h.b16 %v86
  %v411 = vunpack.c.l.b16 %v87
  %v412 = vunpack.c.h.b16 %v87
  %v413 = vunpack.c.l.b16 %v88
  %v414 = vunpack.c.h.b16 %v88
  %v415 = vunpack.c.l.b16 %v89
  %v416 = vunpack.c.h.b16 %v89
  %v417 = vunpack.c.l.b16 %v90
  %v418 = vunpack.c.h.b16 %v90
  %v419 = vunpack.c.l.b16 %v91
  %v420 = vunpack.c.h.b16 %v91
  %v421 = vunpack.c.l.b16 %v92
  %v422 = vunpack.c.h.b16 %v92
  %v423 = vunpack.c.l.b16 %v93
  %v424 = vunpack.c.h.b16 %v93
  %v425 = vunpack.c.l.b16 %v94
  %v426 = vunpack.c.h.b16 %v94
  %v427 = vunpack.c.l.b16 %v95
  %v428 = vunpack.c.h.b16 %v95
  %v429 = vunpack.c.l.b16 %v96
  %v430 = vunpack.c.h.b16 %v96
  %v431 = vunpack.c.l.b16 %v97
  %v432 = vunpack.c.h.b16 %v97
  %v433 = vunpack.c.l.b16 %v98
  %v434 = vunpack.c.h.b16 %v98
  %v435 = vunpack.c.l.b16 %v99
  %v436 = vunpack.c.h.b16 %v99
  %v437 = vunpack.c.l.b16 %v100
  %v438 = vunpack.c.h.b16 %v100
  %v439 = vunpack.c.l.b16 %v101
  %v440 = vunpack.c.h.b16 %v101
  %v441 = vunpack.c.l.b16 %v102
  %v442 = vunpack.c.h.b16 %v102
  %v443 = vunpack.c.l.b16 %v103
  %v444 = vunpack.c.h.b16 %v103
  %v445 = vunpack.c.l.b16 %v104
  %v446 = vunpack.c.h.b16 %v104
  %v447 = vunpack.c.l.b16 %v105
  %v448 = vunpack.c.h.b16 %v105
  %v449 = vunpack.c.l.b16 %v106
  %v450 = vunpack.c.h.b16 %v106
  %v451 = vunpack.c.l.b16 %v107
  %v452 = vunpack.c.h.b16 %v107
  %v453 = vunpack.c.l.b16 %v108
  %v454 = vunpack.c.h.b16 %v108
  %v455 = vunpack.c.l.b16 %v109
  %v456 = vunpack.c.h.b16 %v109
  %v457 = vunpack.c.l.b16 %v110
  %v458 = vunpack.c.h.b16 %v110
  %v459 = vunpack.c.l.b16 %v111
  %v460 = vunpack.c.h.b16 %v111
  %v461 = vunpack.c.l.b16 %v112
  %v462 = vunpack.c.h.b16 %v112
  %v463 = vunpack.c.l.b16 %v113
  %v464 = vunpack.c.h.b16 %v113
  %v465 = vunpack.c.l.b16 %v114
  %v466 = vunpack.c.h.b16 %v114
  %v467 = vunpack.c.l.b16 %v115
  %v468 = vunpack.c.h.b16 %v115
  %v469 = vunpack.c.l.b16 %v116
  %v470 = vunpack.c.h.b16 %v116
  %v471 = vunpack.c.l.b16 %v117
  %v472 = vunpack.c.h.b16 %v117
  %v473 = vunpack.c.l.b16 %v118
  %v474 = vunpack.c.h.b16 %v118
  %v475 = vunpack.c.l.b16 %v119
  %v476 = vunpack.c.h.b16 %v119
  %v477 = vunpack.c.l.b16 %v120
  %v478 = vunpack.c.h.b16 %v120
  %v479 = vunpack.c.l.b16 %v121
  %v480 = vunpack.c.h.b16 %v121
  %v481 = vunpack.c.l.b16 %v122
  %v482 = vunpack.c.h.b16 %v122
  %v483 = vunpack.c.l.b16 %v123
  %v484 = vunpack.c.h.b16 %v123
  %v485 = vunpack.c.l.b16 %v124
  %v486 = vunpack.c.h.b16 %v124
  %v487 = vunpack.c.l.b16 %v125
  %v488 = vunpack.c.h.b16 %v125
  %v489 = vunpack.c.l.b16 %v126
  %v490 = vunpack.c.h.b16 %v126
  %v491 = vunpack.c.l.b16 %v127
  %v492 = vunpack.c.h.b16 %v127
  %v493 = vunpack.c.l.b16 %v128
  %v494 = vunpack.c.h.b16 %v128
  %v495 = vunpack.c.l.b16 %v129
  %v496 = vunpack.c.h.b16 %v129
  %v497 = vunpack.c.l.b16 %v130
  %v498 = vunpack.c.h.b16 %v130
  %v499 = vunpack.c.l.b16 %v131
  %v500 = vunpack.c.h.b16 %v131
  %v501 = vunpack.c.l.b16 %v132
  %v502 = vunpack.c.h.b16 %v132
  %v503 = vunpack.c.l.b16 %v133
  %v504 = vunpack.c.h.b16 %v133
  %v505 = vunpack.c.l.b16 %v134
  %v506 = vunpack.c.h.b16 %v134
  %v507 = vunpack.c.l.b16 %v135
  %v508 = vunpack.c.h.b16 %v135
  %v509 = vunpack.c.l.b16 %v136
  %v510 = vunpack.c.h.b16 %v136
  %v511 = vunpack.c.l.b16 %v137
  %v512 = vunpack.c.h.b16 %v137
  %v513 = vunpack.c.l.b16 %v138
  %v514 = vunpack.c.h.b16 %v138
  %v515 = vunpack.c.l.b16 %v139
  %v516 = vunpack.c.h.b16 %v139
  %v517 = vunpack.c.l.b16 %v140
  %v518 = vunpack.c.h.b16 %v140
  %v519 = vunpack.c.l.b16 %v141
  %v520 = vunpack.c.h.b16 %v141
  %v521 = vunpack.c.l.b16 %v142
  %v522 = vunpack.c.h.b16 %v142
  %v523 = vunpack.c.l.b16 %v143
  %v524 = vunpack.c.h.b16 %v143
  %v525 = vunpack.c.l.b16 %v144
  %v526 = vunpack.c.h.b16 %v144
  %v527 = vunpack.c.l.b16 %v145
  %v528 = vunpack.c.h.b16 %v145
  %v529 = vunpack.c.l.b16 %v146
  %v530 = vunpack.c.h.b16 %v146
  %v531 = vunpack.c.l.b16 %v147
  %v532 = vunpack.c.h.b16 %v147
  %v533 = vunpack.c.l.b16 %v148
  %v534 = vunpack.c.h.b16 %v148
  %v535 = vunpack.c.l.b16 %v149
  %v536 = vunpack.c.h.b16 %v149
  %v537 = vunpack.c.l.b16 %v150
  %v538 = vunpack.c.h.b16 %v150
  %v539 = vunpack.c.l.b16 %v151
  %v540 = vunpack.c.h.b16 %v151
  %v541 = vunpack.c.l.b16 %v152
  %v542 = vunpack.c.h.b16 %v152
  %v543 = vunpack.c.l.b16 %v153
  %v544 = vunpack.c.h.b16 %v153
  %v545 = vunpack.c.l.b16 %v154
  %v546 = vunpack.c.h.b16 %v154
  %v547 = vunpack.c.l.b16 %v155
  %v548 = vunpack.c.h.b16 %v155
  %v549 = vunpack.c.l.b16 %v156
  %v550 = vunpack.c.h.b16 %v156
  %v551 = vunpack.c.l.b16 %v157
  %v552 = vunpack.c.h.b16 %v157
  %v553 = vunpack.c.l.b16 %v158
  %v554 = vunpack.c.h.b16 %v158
  %v555 = vunpack.c.l.b16 %v159
  %v556 = vunpack.c.h.b16 %v159
  %v557 = vunpack.c.l.b16 %v160
  %v558 = vunpack.c.h.b16 %v160
  %v559 = vunpack.c.l.b16 %v161
  %v560 = vunpack.c.h.b16 %v161
  %v561 = vunpack.c.l.b16 %v162
  %v562 = vunpack.c.h.b16 %v162
  %v563 = vunpack.c.l.b16 %v163
  %v564 = vunpack.c.h.b16 %v163
  %v565 = vunpack.c.l.b16 %v164
  %v566 = vunpack.c.h.b16 %v164
  %v567 = vunpack.c.l.b16 %v165
  %v568 = vunpack.c.h.b16 %v165
  %v569 = vunpack.c.l.b16 %v166
  %v570 = vunpack.c.h.b16 %v166
  %v571 = vunpack.c.l.b16 %v167
  %v572 = vunpack.c.h.b16 %v167
  %v573 = vunpack.c.l.b16 %v168
  %v574 = vunpack.c.h.b16 %v168
  %v575 = vunpack.c.l.b16 %v169
  %v576 = vunpack.c.h.b16 %v169
  %v577 = vunpack.c.l.b16 %v170
  %v578 = vunpack.c.h.b16 %v170
  %v579 = vunpack.c.l.b16 %v171
  %v580 = vunpack.c.h.b16 %v171
  %v581 = vunpack.c.l.b16 %v172
  %v582 = vunpack.c.h.b16 %v172
  %v583 = vpack.c.b16 %v329, %v327
  %v584 = vpack.c.b16 %v330, %v328
  %v585 = vpack.c.b16 %v333, %v331
  %v586 = vpack.c.b16 %v334, %v332
  %v587 = vpack.c.b16 %v337, %v335
  %v588 = vpack.c.b16 %v338, %v336
  %v589 = vpack.c.b16 %v341, %v339
  %v590 = vpack.c.b16 %v342, %v340
  %v591 = vpack.c.b16 %v345, %v343
  %v592 = vpack.c.b16 %v346, %v344
  %v593 = vpack.c.b16 %v349, %v347
  %v594 = vpack.c.b16 %v350, %v348
  %v595 = vpack.c.b16 %v353, %v351
  %v596 = vpack.c.b16 %v354, %v352
  %v597 = vpack.c.b16 %v357, %v355
  %v598 = vpack.c.b16 %v358, %v356
  %v599 = vpack.c.b16 %v361, %v359
  %v600 = vpack.c.b16 %v362, %v360
  %v601 = vpack.c.b16 %v365, %v363
  %v602 = vpack.c.b16 %v366, %v364
  %v603 = vpack.c.b16 %v369, %v367
  %v604 = vpack.c.b16 %v370, %v368
  %v605 = vpack.c.b16 %v373, %v371
  %v606 = vpack.c.b16 %v374, %v372
  %v607 = vpack.c.b16 %v377, %v375
  %v608 = vpack.c.b16 %v378, %v376
  %v609 = vpack.c.b16 %v381, %v379
  %v610 = vpack.c.b16 %v382, %v380
  %v611 = vpack.c.b16 %v385, %v383
  %v612 = vpack.c.b16 %v386, %v384
  %v613 = vpack.c.b16 %v389, %v387
  %v614 = vpack.c.b16 %v390, %v388
  %v615 = vpack.c.b16 %v393, %v391
  %v616 = vpack.c.b16 %v394, %v392
  %v617 = vpack.c.b16 %v397, %v395
  %v618 = vpack.c.b16 %v398, %v396
  %v619 = vpack.c.b16 %v401, %v399
  %v620 = vpack.c.b16 %v402, %v400
  %v621 = vpack.c.b16 %v405, %v403
  %v622 = vpack.c.b16 %v406, %v404
  %v623 = vpack.c.b16 %v409, %v407
  %v624 = vpack.c.b16 %v410, %v408
  %v625 = vpack.c.b16 %v413, %v411
  %v626 = vpack.c.b16 %v414, %v412
  %v627 = vpack.c.b16 %v417, %v415
  %v628 = vpack.c.b16 %v418, %v416
  %v629 = vpack.c.b16 %v421, %v419
  %v630 = vpack.c.b16 %v422, %v420
  %v631 = vpack.c.b16 %v425, %v423
  %v632 = vpack.c.b16 %v426, %v424
  %v633 = vpack.c.b16 %v429, %v427
  %v634 = vpack.c.b16 %v430, %v428
  %v635 = vpack.c.b16 %v433, %v431
  %v636 = vpack.c.b16 %v434, %v432
  %v637 = vpack.c.b16 %v437, %v435
  %v638 = vpack.c.b16 %v438, %v436
  %v639 = vpack.c.b16 %v441, %v439
  %v640 = vpack.c.b16 %v442, %v440
  %v641 = vpack.c.b16 %v445, %v443
  %v642 = vpack.c.b16 %v446, %v444
  %v643 = vpack.c.b16 %v449, %v447
  %v644 = vpack.c.b16 %v450, %v448
  %v645 = vpack.c.b16 %v453, %v451
  %v646 = vpack.c.b16 %v454, %v452
  %v647 = vpack.c.b16 %v457, %v455
  %v648 = vpack.c.b16 %v458, %v456
  %v649 = vpack.c.b16 %v461, %v459
  %v650 = vpack.c.b16 %v462, %v460
  %v651 = vpack.c.b16 %v465, %v463
  %v652 = vpack.c.b16 %v466, %v464
  %v653 = vpack.c.b16 %v469, %v467
  %v654 = vpack.c.b16 %v470, %v468
  %v655 = vpack.c.b16 %v473, %v471
  %v656 = vpack.c.b16 %v474, %v472
  %v657 = vpack.c.b16 %v477, %v475
  %v658 = vpack.c.b16 %v478, %v476
  %v659 = vpack.c.b16 %v481, %v479
  %v660 = vpack.c.b16 %v482, %v480
  %v661 = vpack.c.b16 %v485, %v483
  %v662 = vpack.c.b16 %v486, %v484
  %v663 = vpack.c.b16 %v489, %v487
  %v664 = vpack.c.b16 %v490, %v488
  %v665 = vpack.c.b16 %v493, %v491
  %v666 = vpack.c.b16 %v494, %v492
  %v667 = vpack.c.b16 %v497, %v495
  %v668 = vpack.c.b16 %v498, %v496
  %v669 = vpack.c.b16 %v501, %v499
  %v670 = vpack.c.b16 %v502, %v500
  %v671 = vpack.c.b16 %v505, %v503
  %v672 = vpack.c.b16 %v506, %v504
  %v673 = vpack.c.b16 %v509, %v507
  %v674 = vpack.c.b16 %v510, %v508
  %v675 = vpack.c.b16 %v513, %v511
  %v676 = vpack.c.b16 %v514, %v512
  %v677 = vpack.c.b16 %v517, %v515
  %v678 = vpack.c.b16 %v518, %v516
  %v679 = vpack.c.b16 %v521, %v519
  %v680 = vpack.c.b16 %v522, %v520
  %v681 = vpack.c.b16 %v525, %v523
  %v682 = vpack.c.b16 %v526, %v524
  %v683 = vpack.c.b16 %v529, %v527
  %v684 = vpack.c.b16 %v530, %v528
  %v685 = vpack.c.b16 %v533, %v531
  %v686 = vpack.c.b16 %v534, %v532
  %v687 = vpack.c.b16 %v537, %v535
  %v688 = vpack.c.b16 %v538, %v536
  %v689 = vpack.c.b16 %v541, %v539
  %v690 = vpack.c.b16 %v542, %v540
  %v691 = vpack.c.b16 %v545, %v543
  %v692 = vpack.c.b16 %v546, %v544
  %v693 = vpack.c.b16 %v549, %v547
  %v694 = vpack.c.b16 %v550, %v548
  %v695 = vpack.c.b16 %v553, %v551
  %v696 = vpack.c.b16 %v554, %v552
  %v697 = vpack.c.b16 %v557, %v555
  %v698 = vpack.c.b16 %v558, %v556
  %v699 = vpack.c.b16 %v561, %v559
  %v700 = vpack.c.b16 %v562, %v560
  %v701 = vpack.c.b16 %v565, %v563
  %v702 = vpack.c.b16 %v566, %v564
  %v703 = vpack.c.b16 %v569, %v567
  %v704 = vpack.c.b16 %v570, %v568
  %v705 = vpack.c.b16 %v573, %v571
  %v706 = vpack.c.b16 %v574, %v572
  %v707 = vpack.c.b16 %v577, %v575
  %v708 = vpack.c.b16 %v578, %v576
  %v709 = vpack.c.b16 %v581, %v579
  %v710 = vpack.c.b16 %v582, %v580
  %v795 = vunpack.c.l.b16 %v173
  %v796 = vunpack.c.h.b16 %v173
  %v797 = vunpack.c.l.b16 %v174
  %v798 = vunpack.c.h.b16 %v174
  %v799 = vunpack.c.l.b16 %v175
  %v800 = vunpack.c.h.b16 %v175
  %v801 = vunpack.c.l.b16 %v176
  %v802 = vunpack.c.h.b16 %v176
  %v803 = vunpack.c.l.b16 %v177
  %v804 = vunpack.c.h.b16 %v177
  %v805 = vunpack.c.l.b16 %v178
  %v806 = vunpack.c.h.b16 %v178
  %v807 = vunpack.c.l.b16 %v179
  %v808 = vunpack.c.h.b16 %v179
  %v809 = vunpack.c.l.b16 %v180
  %v810 = vunpack.c.h.b16 %v180
  %v811 = vunpack.c.l.b16 %v181
  %v812 = vunpack.c.h.b16 %v181
  %v813 = vunpack.c.l.b16 %v182
  %v814 = vunpack.c.h.b16 %v182
  %v815 = vunpack.c.l.b16 %v183
  %v816 = vunpack.c.h.b16 %v183
  %v817 = vunpack.c.l.b16 %v184
  %v818 = vunpack.c.h.b16 %v184
  %v819 = vunpack.c.l.b16 %v185
  %v820 = vunpack.c.h.b16 %v185
  %v821 = vunpack.c.l.b16 %v186
  %v822 = vunpack.c.h.b16 %v186
  %v823 = vunpack.c.l.b16 %v187
  %v824 = vunpack.c.h.b16 %v187
  %v825 = vunpack.c.l.b16 %v188
  %v826 = vunpack.c.h.b16 %v188
  %v827 = vunpack.c.l.b16 %v189
  %v828 = vunpack.c.h.b16 %v189
  %v829 = vunpack.c.l.b16 %v190
  %v830 = vunpack.c.h.b16 %v190
  %v831 = vunpack.c.l.b16 %v191
  %v832 = vunpack.c.h.b16 %v191
  %v833 = vunpack.c.l.b16 %v192
  %v834 = vunpack.c.h.b16 %v192
  %v835 = vpack.c.b16 %v797, %v795
  %v836 = vpack.c.b16 %v798, %v796
  %v837 = vpack.c.b16 %v801, %v799
  %v838 = vpack.c.b16 %v802, %v800
  %v839 = vpack.c.b16 %v805, %v803
  %v840 = vpack.c.b16 %v806, %v804
  %v841 = vpack.c.b16 %v809, %v807
  %v842 = vpack.c.b16 %v810, %v808
  %v843 = vpack.c.b16 %v813, %v811
  %v844 = vpack.c.b16 %v814, %v812
  %v845 = vpack.c.b16 %v817, %v815
  %v846 = vpack.c.b16 %v818, %v816
  %v847 = vpack.c.b16 %v821, %v819
  %v848 = vpack.c.b16 %v822, %v820
  %v849 = vpack.c.b16 %v825, %v823
  %v850 = vpack.c.b16 %v826, %v824
  %v851 = vpack.c.b16 %v829, %v827
  %v852 = vpack.c.b16 %v830, %v828
  %v853 = vpack.c.b16 %v833, %v831
  %v854 = vpack.c.b16 %v834, %v832
  %vm875 = vcmask 261120
  %v877 = vsel %vm875, %v584, 0
  %v880 = vsel %vm875, %v586, 0
  %v883 = vsel %vm875, %v588, 0
  %v886 = vsel %vm875, %v590, 0
  %v889 = vsel %vm875, %v592, 0
  %v892 = vsel %vm875, %v594, 0
  %v895 = vsel %vm875, %v596, 0
  %v898 = vsel %vm875, %v598, 0
  %v901 = vsel %vm875, %v600, 0
  %v904 = vsel %vm875, %v602, 0
  %v907 = vsel %vm875, %v604, 0
  %v910 = vsel %vm875, %v606, 0
  %v913 = vsel %vm875, %v608, 0
  %v916 = vsel %vm875, %v610, 0
  %v919 = vsel %vm875, %v612, 0
  %v922 = vsel %vm875, %v614, 0
  %v925 = vsel %vm875, %v616, 0
  %v928 = vsel %vm875, %v618, 0
  %v931 = vsel %vm875, %v620, 0
  %v934 = vsel %vm875, %v622, 0
  %v937 = vsel %vm875, %v624, 0
  %v940 = vsel %vm875, %v626, 0
  %v943 = vsel %vm875, %v628, 0
  %v946 = vsel %vm875, %v630, 0
  %v949 = vsel %vm875, %v632, 0
  %v952 = vsel %vm875, %v634, 0
  %v955 = vsel %vm875, %v636, 0
  %v958 = vsel %vm875, %v638, 0
  %v961 = vsel %vm875, %v640, 0
  %v964 = vsel %vm875, %v642, 0
  %v967 = vsel %vm875, %v644, 0
  %v970 = vsel %vm875, %v646, 0
  %v973 = vsel %vm875, %v648, 0
  %v976 = vsel %vm875, %v650, 0
  %v979 = vsel %vm875, %v652, 0
  %v982 = vsel %vm875, %v654, 0
  %v985 = vsel %vm875, %v656, 0
  %v988 = vsel %vm875, %v658, 0
  %v991 = vsel %vm875, %v660, 0
  %v994 = vsel %vm875, %v662, 0
  %v997 = vsel %vm875, %v664, 0
  %v1000 = vsel %vm875, %v666, 0
  %v1003 = vsel %vm875, %v668, 0
  %v1006 = vsel %vm875, %v670, 0
  %v1009 = vsel %vm875, %v672, 0
  %v1012 = vsel %vm875, %v674, 0
  %v1015 = vsel %vm875, %v676, 0
  %v1018 = vsel %vm875, %v678, 0
  %v1021 = vsel %vm875, %v680, 0
  %v1024 = vsel %vm875, %v682, 0
  %v1027 = vsel %vm875, %v684, 0
  %v1030 = vsel %vm875, %v686, 0
  %v1033 = vsel %vm875, %v688, 0
  %v1036 = vsel %vm875, %v690, 0
  %v1039 = vsel %vm875, %v692, 0
  %v1042 = vsel %vm875, %v694, 0
  %v1045 = vsel %vm875, %v696, 0
  %v1048 = vsel %vm875, %v698, 0
  %v1051 = vsel %vm875, %v700, 0
  %v1054 = vsel %vm875, %v702, 0
  %v1057 = vsel %vm875, %v704, 0
  %v1060 = vsel %vm875, %v706, 0
  %v1063 = vsel %vm875, %v708, 0
  %v1066 = vsel %vm875, %v710, 0
  %1068 = vmatpush.bf16.msra.mxu0 %v849
  %1069 = vmatpush.bf16.msra.mxu0 %v847
  %1070 = vmatpush.bf16.msra.mxu0 %v845
  %1071 = vmatpush.bf16.msra.mxu0 %v843
  %1072 = vmatpush.bf16.msra.mxu0 %v841
  %1073 = vmatpush.bf16.msra.mxu0 %v839
  %1074 = vmatpush.bf16.msra.mxu0 %v837
  %1075 = vmatpush.bf16.msra.mxu0 %v835
  %1076 = vmatmul.bf16.gmra.mxu0 %v583
  %v1077 = vpop.f32.mrf.mxu0
  %v1078 = vadd.f32 %v195, %v1077
  %v1079 = vpop.f32.mrf.mxu0
  %v1080 = vadd.f32 %v195, %v1079
  %1081 = vmatmul.bf16.gmra.mxu0 %v585
  %v1082 = vpop.f32.mrf.mxu0
  %v1083 = vadd.f32 %v195, %v1082
  %v1084 = vpop.f32.mrf.mxu0
  %v1085 = vadd.f32 %v195, %v1084
  %1086 = vmatmul.bf16.gmra.mxu0 %v587
  %v1087 = vpop.f32.mrf.mxu0
  %v1088 = vadd.f32 %v195, %v1087
  %v1089 = vpop.f32.mrf.mxu0
  %v1090 = vadd.f32 %v195, %v1089
  %1091 = vmatmul.bf16.gmra.mxu0 %v589
  %v1092 = vpop.f32.mrf.mxu0
  %v1093 = vadd.f32 %v195, %v1092
  %v1094 = vpop.f32.mrf.mxu0
  %v1095 = vadd.f32 %v195, %v1094
  %1096 = vmatmul.bf16.gmra.mxu0 %v591
  %v1097 = vpop.f32.mrf.mxu0
  %v1098 = vadd.f32 %v195, %v1097
  %v1099 = vpop.f32.mrf.mxu0
  %v1100 = vadd.f32 %v195, %v1099
  %1101 = vmatmul.bf16.gmra.mxu0 %v593
  %v1102 = vpop.f32.mrf.mxu0
  %v1103 = vadd.f32 %v195, %v1102
  %v1104 = vpop.f32.mrf.mxu0
  %v1105 = vadd.f32 %v195, %v1104
  %1106 = vmatmul.bf16.gmra.mxu0 %v595
  %v1107 = vpop.f32.mrf.mxu0
  %v1108 = vadd.f32 %v195, %v1107
  %v1109 = vpop.f32.mrf.mxu0
  %v1110 = vadd.f32 %v195, %v1109
  %1111 = vmatmul.bf16.gmra.mxu0 %v597
  %v1112 = vpop.f32.mrf.mxu0
  %v1113 = vadd.f32 %v195, %v1112
  %v1114 = vpop.f32.mrf.mxu0
  %v1115 = vadd.f32 %v195, %v1114
  %1116 = vmatmul.bf16.gmra.mxu0 %v599
  %v1117 = vpop.f32.mrf.mxu0
  %v1118 = vadd.f32 %v195, %v1117
  %v1119 = vpop.f32.mrf.mxu0
  %v1120 = vadd.f32 %v195, %v1119
  %1121 = vmatmul.bf16.gmra.mxu0 %v601
  %v1122 = vpop.f32.mrf.mxu0
  %v1123 = vadd.f32 %v195, %v1122
  %v1124 = vpop.f32.mrf.mxu0
  %v1125 = vadd.f32 %v195, %v1124
  %1126 = vmatmul.bf16.gmra.mxu0 %v603
  %v1127 = vpop.f32.mrf.mxu0
  %v1128 = vadd.f32 %v195, %v1127
  %v1129 = vpop.f32.mrf.mxu0
  %v1130 = vadd.f32 %v195, %v1129
  %1131 = vmatmul.bf16.gmra.mxu0 %v605
  %v1132 = vpop.f32.mrf.mxu0
  %v1133 = vadd.f32 %v195, %v1132
  %v1134 = vpop.f32.mrf.mxu0
  %v1135 = vadd.f32 %v195, %v1134
  %1136 = vmatmul.bf16.gmra.mxu0 %v607
  %v1137 = vpop.f32.mrf.mxu0
  %v1138 = vadd.f32 %v195, %v1137
  %v1139 = vpop.f32.mrf.mxu0
  %v1140 = vadd.f32 %v195, %v1139
  %1141 = vmatmul.bf16.gmra.mxu0 %v609
  %v1142 = vpop.f32.mrf.mxu0
  %v1143 = vadd.f32 %v195, %v1142
  %v1144 = vpop.f32.mrf.mxu0
  %v1145 = vadd.f32 %v195, %v1144
  %1146 = vmatmul.bf16.gmra.mxu0 %v611
  %v1147 = vpop.f32.mrf.mxu0
  %v1148 = vadd.f32 %v195, %v1147
  %v1149 = vpop.f32.mrf.mxu0
  %v1150 = vadd.f32 %v195, %v1149
  %1151 = vmatmul.bf16.gmra.mxu0 %v613
  %v1152 = vpop.f32.mrf.mxu0
  %v1153 = vadd.f32 %v195, %v1152
  %v1154 = vpop.f32.mrf.mxu0
  %v1155 = vadd.f32 %v195, %v1154
  %1156 = vmatmul.bf16.gmra.mxu0 %v615
  %v1157 = vpop.f32.mrf.mxu0
  %v1158 = vadd.f32 %v195, %v1157
  %v1159 = vpop.f32.mrf.mxu0
  %v1160 = vadd.f32 %v195, %v1159
  %1161 = vmatmul.bf16.gmra.mxu0 %v617
  %v1162 = vpop.f32.mrf.mxu0
  %v1163 = vadd.f32 %v195, %v1162
  %v1164 = vpop.f32.mrf.mxu0
  %v1165 = vadd.f32 %v195, %v1164
  %1166 = vmatmul.bf16.gmra.mxu0 %v619
  %v1167 = vpop.f32.mrf.mxu0
  %v1168 = vadd.f32 %v195, %v1167
  %v1169 = vpop.f32.mrf.mxu0
  %v1170 = vadd.f32 %v195, %v1169
  %1171 = vmatmul.bf16.gmra.mxu0 %v621
  %v1172 = vpop.f32.mrf.mxu0
  %v1173 = vadd.f32 %v195, %v1172
  %v1174 = vpop.f32.mrf.mxu0
  %v1175 = vadd.f32 %v195, %v1174
  %1176 = vmatmul.bf16.gmra.mxu0 %v623
  %v1177 = vpop.f32.mrf.mxu0
  %v1178 = vadd.f32 %v195, %v1177
  %v1179 = vpop.f32.mrf.mxu0
  %v1180 = vadd.f32 %v195, %v1179
  %1181 = vmatmul.bf16.gmra.mxu0 %v625
  %v1182 = vpop.f32.mrf.mxu0
  %v1183 = vadd.f32 %v195, %v1182
  %v1184 = vpop.f32.mrf.mxu0
  %v1185 = vadd.f32 %v195, %v1184
  %1186 = vmatmul.bf16.gmra.mxu0 %v627
  %v1187 = vpop.f32.mrf.mxu0
  %v1188 = vadd.f32 %v195, %v1187
  %v1189 = vpop.f32.mrf.mxu0
  %v1190 = vadd.f32 %v195, %v1189
  %1191 = vmatmul.bf16.gmra.mxu0 %v629
  %v1192 = vpop.f32.mrf.mxu0
  %v1193 = vadd.f32 %v195, %v1192
  %v1194 = vpop.f32.mrf.mxu0
  %v1195 = vadd.f32 %v195, %v1194
  %1196 = vmatmul.bf16.gmra.mxu0 %v631
  %v1197 = vpop.f32.mrf.mxu0
  %v1198 = vadd.f32 %v195, %v1197
  %v1199 = vpop.f32.mrf.mxu0
  %v1200 = vadd.f32 %v195, %v1199
  %1201 = vmatmul.bf16.gmra.mxu0 %v633
  %v1202 = vpop.f32.mrf.mxu0
  %v1203 = vadd.f32 %v195, %v1202
  %v1204 = vpop.f32.mrf.mxu0
  %v1205 = vadd.f32 %v195, %v1204
  %1206 = vmatmul.bf16.gmra.mxu0 %v635
  %v1207 = vpop.f32.mrf.mxu0
  %v1208 = vadd.f32 %v195, %v1207
  %v1209 = vpop.f32.mrf.mxu0
  %v1210 = vadd.f32 %v195, %v1209
  %1211 = vmatmul.bf16.gmra.mxu0 %v637
  %v1212 = vpop.f32.mrf.mxu0
  %v1213 = vadd.f32 %v195, %v1212
  %v1214 = vpop.f32.mrf.mxu0
  %v1215 = vadd.f32 %v195, %v1214
  %1216 = vmatmul.bf16.gmra.mxu0 %v639
  %v1217 = vpop.f32.mrf.mxu0
  %v1218 = vadd.f32 %v195, %v1217
  %v1219 = vpop.f32.mrf.mxu0
  %v1220 = vadd.f32 %v195, %v1219
  %1221 = vmatmul.bf16.gmra.mxu0 %v641
  %v1222 = vpop.f32.mrf.mxu0
  %v1223 = vadd.f32 %v195, %v1222
  %v1224 = vpop.f32.mrf.mxu0
  %v1225 = vadd.f32 %v195, %v1224
  %1226 = vmatmul.bf16.gmra.mxu0 %v643
  %v1227 = vpop.f32.mrf.mxu0
  %v1228 = vadd.f32 %v195, %v1227
  %v1229 = vpop.f32.mrf.mxu0
  %v1230 = vadd.f32 %v195, %v1229
  %1231 = vmatmul.bf16.gmra.mxu0 %v645
  %v1232 = vpop.f32.mrf.mxu0
  %v1233 = vadd.f32 %v195, %v1232
  %v1234 = vpop.f32.mrf.mxu0
  %v1235 = vadd.f32 %v195, %v1234
  %1236 = vmatmul.bf16.gmra.mxu0 %v647
  %v1237 = vpop.f32.mrf.mxu0
  %v1238 = vadd.f32 %v195, %v1237
  %v1239 = vpop.f32.mrf.mxu0
  %v1240 = vadd.f32 %v195, %v1239
  %1241 = vmatmul.bf16.gmra.mxu0 %v649
  %v1242 = vpop.f32.mrf.mxu0
  %v1243 = vadd.f32 %v195, %v1242
  %v1244 = vpop.f32.mrf.mxu0
  %v1245 = vadd.f32 %v195, %v1244
  %1246 = vmatmul.bf16.gmra.mxu0 %v651
  %v1247 = vpop.f32.mrf.mxu0
  %v1248 = vadd.f32 %v195, %v1247
  %v1249 = vpop.f32.mrf.mxu0
  %v1250 = vadd.f32 %v195, %v1249
  %1251 = vmatmul.bf16.gmra.mxu0 %v653
  %v1252 = vpop.f32.mrf.mxu0
  %v1253 = vadd.f32 %v195, %v1252
  %v1254 = vpop.f32.mrf.mxu0
  %v1255 = vadd.f32 %v195, %v1254
  %1256 = vmatmul.bf16.gmra.mxu0 %v655
  %v1257 = vpop.f32.mrf.mxu0
  %v1258 = vadd.f32 %v195, %v1257
  %v1259 = vpop.f32.mrf.mxu0
  %v1260 = vadd.f32 %v195, %v1259
  %1261 = vmatmul.bf16.gmra.mxu0 %v657
  %v1262 = vpop.f32.mrf.mxu0
  %v1263 = vadd.f32 %v195, %v1262
  %v1264 = vpop.f32.mrf.mxu0
  %v1265 = vadd.f32 %v195, %v1264
  %1266 = vmatmul.bf16.gmra.mxu0 %v659
  %v1267 = vpop.f32.mrf.mxu0
  %v1268 = vadd.f32 %v195, %v1267
  %v1269 = vpop.f32.mrf.mxu0
  %v1270 = vadd.f32 %v195, %v1269
  %1271 = vmatmul.bf16.gmra.mxu0 %v661
  %v1272 = vpop.f32.mrf.mxu0
  %v1273 = vadd.f32 %v195, %v1272
  %v1274 = vpop.f32.mrf.mxu0
  %v1275 = vadd.f32 %v195, %v1274
  %1276 = vmatmul.bf16.gmra.mxu0 %v663
  %v1277 = vpop.f32.mrf.mxu0
  %v1278 = vadd.f32 %v195, %v1277
  %v1279 = vpop.f32.mrf.mxu0
  %v1280 = vadd.f32 %v195, %v1279
  %1281 = vmatmul.bf16.gmra.mxu0 %v665
  %v1282 = vpop.f32.mrf.mxu0
  %v1283 = vadd.f32 %v195, %v1282
  %v1284 = vpop.f32.mrf.mxu0
  %v1285 = vadd.f32 %v195, %v1284
  %1286 = vmatmul.bf16.gmra.mxu0 %v667
  %v1287 = vpop.f32.mrf.mxu0
  %v1288 = vadd.f32 %v195, %v1287
  %v1289 = vpop.f32.mrf.mxu0
  %v1290 = vadd.f32 %v195, %v1289
  %1291 = vmatmul.bf16.gmra.mxu0 %v669
  %v1292 = vpop.f32.mrf.mxu0
  %v1293 = vadd.f32 %v195, %v1292
  %v1294 = vpop.f32.mrf.mxu0
  %v1295 = vadd.f32 %v195, %v1294
  %1296 = vmatmul.bf16.gmra.mxu0 %v671
  %v1297 = vpop.f32.mrf.mxu0
  %v1298 = vadd.f32 %v195, %v1297
  %v1299 = vpop.f32.mrf.mxu0
  %v1300 = vadd.f32 %v195, %v1299
  %1301 = vmatmul.bf16.gmra.mxu0 %v673
  %v1302 = vpop.f32.mrf.mxu0
  %v1303 = vadd.f32 %v195, %v1302
  %v1304 = vpop.f32.mrf.mxu0
  %v1305 = vadd.f32 %v195, %v1304
  %1306 = vmatmul.bf16.gmra.mxu0 %v675
  %v1307 = vpop.f32.mrf.mxu0
  %v1308 = vadd.f32 %v195, %v1307
  %v1309 = vpop.f32.mrf.mxu0
  %v1310 = vadd.f32 %v195, %v1309
  %1311 = vmatmul.bf16.gmra.mxu0 %v677
  %v1312 = vpop.f32.mrf.mxu0
  %v1313 = vadd.f32 %v195, %v1312
  %v1314 = vpop.f32.mrf.mxu0
  %v1315 = vadd.f32 %v195, %v1314
  %1316 = vmatmul.bf16.gmra.mxu0 %v679
  %v1317 = vpop.f32.mrf.mxu0
  %v1318 = vadd.f32 %v195, %v1317
  %v1319 = vpop.f32.mrf.mxu0
  %v1320 = vadd.f32 %v195, %v1319
  %1321 = vmatmul.bf16.gmra.mxu0 %v681
  %v1322 = vpop.f32.mrf.mxu0
  %v1323 = vadd.f32 %v195, %v1322
  %v1324 = vpop.f32.mrf.mxu0
  %v1325 = vadd.f32 %v195, %v1324
  %1326 = vmatmul.bf16.gmra.mxu0 %v683
  %v1327 = vpop.f32.mrf.mxu0
  %v1328 = vadd.f32 %v195, %v1327
  %v1329 = vpop.f32.mrf.mxu0
  %v1330 = vadd.f32 %v195, %v1329
  %1331 = vmatmul.bf16.gmra.mxu0 %v685
  %v1332 = vpop.f32.mrf.mxu0
  %v1333 = vadd.f32 %v195, %v1332
  %v1334 = vpop.f32.mrf.mxu0
  %v1335 = vadd.f32 %v195, %v1334
  %1336 = vmatmul.bf16.gmra.mxu0 %v687
  %v1337 = vpop.f32.mrf.mxu0
  %v1338 = vadd.f32 %v195, %v1337
  %v1339 = vpop.f32.mrf.mxu0
  %v1340 = vadd.f32 %v195, %v1339
  %1341 = vmatmul.bf16.gmra.mxu0 %v689
  %v1342 = vpop.f32.mrf.mxu0
  %v1343 = vadd.f32 %v195, %v1342
  %v1344 = vpop.f32.mrf.mxu0
  %v1345 = vadd.f32 %v195, %v1344
  %1346 = vmatmul.bf16.gmra.mxu0 %v691
  %v1347 = vpop.f32.mrf.mxu0
  %v1348 = vadd.f32 %v195, %v1347
  %v1349 = vpop.f32.mrf.mxu0
  %v1350 = vadd.f32 %v195, %v1349
  %1351 = vmatmul.bf16.gmra.mxu0 %v693
  %v1352 = vpop.f32.mrf.mxu0
  %v1353 = vadd.f32 %v195, %v1352
  %v1354 = vpop.f32.mrf.mxu0
  %v1355 = vadd.f32 %v195, %v1354
  %1356 = vmatmul.bf16.gmra.mxu0 %v695
  %v1357 = vpop.f32.mrf.mxu0
  %v1358 = vadd.f32 %v195, %v1357
  %v1359 = vpop.f32.mrf.mxu0
  %v1360 = vadd.f32 %v195, %v1359
  %1361 = vmatmul.bf16.gmra.mxu0 %v697
  %v1362 = vpop.f32.mrf.mxu0
  %v1363 = vadd.f32 %v195, %v1362
  %v1364 = vpop.f32.mrf.mxu0
  %v1365 = vadd.f32 %v195, %v1364
  %1366 = vmatmul.bf16.gmra.mxu0 %v699
  %v1367 = vpop.f32.mrf.mxu0
  %v1368 = vadd.f32 %v195, %v1367
  %v1369 = vpop.f32.mrf.mxu0
  %v1370 = vadd.f32 %v195, %v1369
  %1371 = vmatmul.bf16.gmra.mxu0 %v701
  %v1372 = vpop.f32.mrf.mxu0
  %v1373 = vadd.f32 %v195, %v1372
  %v1374 = vpop.f32.mrf.mxu0
  %v1375 = vadd.f32 %v195, %v1374
  %1376 = vmatmul.bf16.gmra.mxu0 %v703
  %v1377 = vpop.f32.mrf.mxu0
  %v1378 = vadd.f32 %v195, %v1377
  %v1379 = vpop.f32.mrf.mxu0
  %v1380 = vadd.f32 %v195, %v1379
  %1381 = vmatmul.bf16.gmra.mxu0 %v705
  %v1382 = vpop.f32.mrf.mxu0
  %v1383 = vadd.f32 %v195, %v1382
  %v1384 = vpop.f32.mrf.mxu0
  %v1385 = vadd.f32 %v195, %v1384
  %1386 = vmatmul.bf16.gmra.mxu0 %v707
  %v1387 = vpop.f32.mrf.mxu0
  %v1388 = vadd.f32 %v195, %v1387
  %v1389 = vpop.f32.mrf.mxu0
  %v1390 = vadd.f32 %v195, %v1389
  %1391 = vmatmul.bf16.gmra.mxu0 %v709
  %v1392 = vpop.f32.mrf.mxu0
  %v1393 = vadd.f32 %v195, %v1392
  %v1394 = vpop.f32.mrf.mxu0
  %v1395 = vadd.f32 %v195, %v1394
  %1396 = vdwg.mxu0
  %1397 = vmatpush.bf16.msra.mxu0 0
  %1398 = vmatpush.bf16.msra.mxu0 0
  %1399 = vmatpush.bf16.msra.mxu0 0
  %1400 = vmatpush.bf16.msra.mxu0 0
  %1401 = vmatpush.bf16.msra.mxu0 0
  %1402 = vmatpush.bf16.msra.mxu0 0
  %1403 = vmatpush.bf16.msra.mxu0 %v853
  %1404 = vmatpush.bf16.msra.mxu0 %v851
  %1405 = vmatmul.bf16.gmra.mxu0 %v877
  %v1406 = vpop.f32.mrf.mxu0
  %v1407 = vadd.f32 %v1078, %v1406
  %v1408 = vpop.f32.mrf.mxu0
  %v1409 = vadd.f32 %v1080, %v1408
  %1410 = vmatmul.bf16.gmra.mxu0 %v880
  %v1411 = vpop.f32.mrf.mxu0
  %v1412 = vadd.f32 %v1083, %v1411
  %v1413 = vpop.f32.mrf.mxu0
  %v1414 = vadd.f32 %v1085, %v1413
  %1415 = vmatmul.bf16.gmra.mxu0 %v883
  %v1416 = vpop.f32.mrf.mxu0
  %v1417 = vadd.f32 %v1088, %v1416
  %v1418 = vpop.f32.mrf.mxu0
  %v1419 = vadd.f32 %v1090, %v1418
  %1420 = vmatmul.bf16.gmra.mxu0 %v886
  %v1421 = vpop.f32.mrf.mxu0
  %v1422 = vadd.f32 %v1093, %v1421
  %v1423 = vpop.f32.mrf.mxu0
  %v1424 = vadd.f32 %v1095, %v1423
  %1425 = vmatmul.bf16.gmra.mxu0 %v889
  %v1426 = vpop.f32.mrf.mxu0
  %v1427 = vadd.f32 %v1098, %v1426
  %v1428 = vpop.f32.mrf.mxu0
  %v1429 = vadd.f32 %v1100, %v1428
  %1430 = vmatmul.bf16.gmra.mxu0 %v892
  %v1431 = vpop.f32.mrf.mxu0
  %v1432 = vadd.f32 %v1103, %v1431
  %v1433 = vpop.f32.mrf.mxu0
  %v1434 = vadd.f32 %v1105, %v1433
  %1435 = vmatmul.bf16.gmra.mxu0 %v895
  %v1436 = vpop.f32.mrf.mxu0
  %v1437 = vadd.f32 %v1108, %v1436
  %v1438 = vpop.f32.mrf.mxu0
  %v1439 = vadd.f32 %v1110, %v1438
  %1440 = vmatmul.bf16.gmra.mxu0 %v898
  %v1441 = vpop.f32.mrf.mxu0
  %v1442 = vadd.f32 %v1113, %v1441
  %v1443 = vpop.f32.mrf.mxu0
  %v1444 = vadd.f32 %v1115, %v1443
  %1445 = vmatmul.bf16.gmra.mxu0 %v901
  %v1446 = vpop.f32.mrf.mxu0
  %v1447 = vadd.f32 %v1118, %v1446
  %v1448 = vpop.f32.mrf.mxu0
  %v1449 = vadd.f32 %v1120, %v1448
  %1450 = vmatmul.bf16.gmra.mxu0 %v904
  %v1451 = vpop.f32.mrf.mxu0
  %v1452 = vadd.f32 %v1123, %v1451
  %v1453 = vpop.f32.mrf.mxu0
  %v1454 = vadd.f32 %v1125, %v1453
  %1455 = vmatmul.bf16.gmra.mxu0 %v907
  %v1456 = vpop.f32.mrf.mxu0
  %v1457 = vadd.f32 %v1128, %v1456
  %v1458 = vpop.f32.mrf.mxu0
  %v1459 = vadd.f32 %v1130, %v1458
  %1460 = vmatmul.bf16.gmra.mxu0 %v910
  %v1461 = vpop.f32.mrf.mxu0
  %v1462 = vadd.f32 %v1133, %v1461
  %v1463 = vpop.f32.mrf.mxu0
  %v1464 = vadd.f32 %v1135, %v1463
  %1465 = vmatmul.bf16.gmra.mxu0 %v913
  %v1466 = vpop.f32.mrf.mxu0
  %v1467 = vadd.f32 %v1138, %v1466
  %v1468 = vpop.f32.mrf.mxu0
  %v1469 = vadd.f32 %v1140, %v1468
  %1470 = vmatmul.bf16.gmra.mxu0 %v916
  %v1471 = vpop.f32.mrf.mxu0
  %v1472 = vadd.f32 %v1143, %v1471
  %v1473 = vpop.f32.mrf.mxu0
  %v1474 = vadd.f32 %v1145, %v1473
  %1475 = vmatmul.bf16.gmra.mxu0 %v919
  %v1476 = vpop.f32.mrf.mxu0
  %v1477 = vadd.f32 %v1148, %v1476
  %v1478 = vpop.f32.mrf.mxu0
  %v1479 = vadd.f32 %v1150, %v1478
  %1480 = vmatmul.bf16.gmra.mxu0 %v922
  %v1481 = vpop.f32.mrf.mxu0
  %v1482 = vadd.f32 %v1153, %v1481
  %v1483 = vpop.f32.mrf.mxu0
  %v1484 = vadd.f32 %v1155, %v1483
  %1485 = vmatmul.bf16.gmra.mxu0 %v925
  %v1486 = vpop.f32.mrf.mxu0
  %v1487 = vadd.f32 %v1158, %v1486
  %v1488 = vpop.f32.mrf.mxu0
  %v1489 = vadd.f32 %v1160, %v1488
  %1490 = vmatmul.bf16.gmra.mxu0 %v928
  %v1491 = vpop.f32.mrf.mxu0
  %v1492 = vadd.f32 %v1163, %v1491
  %v1493 = vpop.f32.mrf.mxu0
  %v1494 = vadd.f32 %v1165, %v1493
  %1495 = vmatmul.bf16.gmra.mxu0 %v931
  %v1496 = vpop.f32.mrf.mxu0
  %v1497 = vadd.f32 %v1168, %v1496
  %v1498 = vpop.f32.mrf.mxu0
  %v1499 = vadd.f32 %v1170, %v1498
  %1500 = vmatmul.bf16.gmra.mxu0 %v934
  %v1501 = vpop.f32.mrf.mxu0
  %v1502 = vadd.f32 %v1173, %v1501
  %v1503 = vpop.f32.mrf.mxu0
  %v1504 = vadd.f32 %v1175, %v1503
  %1505 = vmatmul.bf16.gmra.mxu0 %v937
  %v1506 = vpop.f32.mrf.mxu0
  %v1507 = vadd.f32 %v1178, %v1506
  %v1508 = vpop.f32.mrf.mxu0
  %v1509 = vadd.f32 %v1180, %v1508
  %1510 = vmatmul.bf16.gmra.mxu0 %v940
  %v1511 = vpop.f32.mrf.mxu0
  %v1512 = vadd.f32 %v1183, %v1511
  %v1513 = vpop.f32.mrf.mxu0
  %v1514 = vadd.f32 %v1185, %v1513
  %1515 = vmatmul.bf16.gmra.mxu0 %v943
  %v1516 = vpop.f32.mrf.mxu0
  %v1517 = vadd.f32 %v1188, %v1516
  %v1518 = vpop.f32.mrf.mxu0
  %v1519 = vadd.f32 %v1190, %v1518
  %1520 = vmatmul.bf16.gmra.mxu0 %v946
  %v1521 = vpop.f32.mrf.mxu0
  %v1522 = vadd.f32 %v1193, %v1521
  %v1523 = vpop.f32.mrf.mxu0
  %v1524 = vadd.f32 %v1195, %v1523
  %1525 = vmatmul.bf16.gmra.mxu0 %v949
  %v1526 = vpop.f32.mrf.mxu0
  %v1527 = vadd.f32 %v1198, %v1526
  %v1528 = vpop.f32.mrf.mxu0
  %v1529 = vadd.f32 %v1200, %v1528
  %1530 = vmatmul.bf16.gmra.mxu0 %v952
  %v1531 = vpop.f32.mrf.mxu0
  %v1532 = vadd.f32 %v1203, %v1531
  %v1533 = vpop.f32.mrf.mxu0
  %v1534 = vadd.f32 %v1205, %v1533
  %1535 = vmatmul.bf16.gmra.mxu0 %v955
  %v1536 = vpop.f32.mrf.mxu0
  %v1537 = vadd.f32 %v1208, %v1536
  %v1538 = vpop.f32.mrf.mxu0
  %v1539 = vadd.f32 %v1210, %v1538
  %1540 = vmatmul.bf16.gmra.mxu0 %v958
  %v1541 = vpop.f32.mrf.mxu0
  %v1542 = vadd.f32 %v1213, %v1541
  %v1543 = vpop.f32.mrf.mxu0
  %v1544 = vadd.f32 %v1215, %v1543
  %1545 = vmatmul.bf16.gmra.mxu0 %v961
  %v1546 = vpop.f32.mrf.mxu0
  %v1547 = vadd.f32 %v1218, %v1546
  %v1548 = vpop.f32.mrf.mxu0
  %v1549 = vadd.f32 %v1220, %v1548
  %1550 = vmatmul.bf16.gmra.mxu0 %v964
  %v1551 = vpop.f32.mrf.mxu0
  %v1552 = vadd.f32 %v1223, %v1551
  %v1553 = vpop.f32.mrf.mxu0
  %v1554 = vadd.f32 %v1225, %v1553
  %1555 = vmatmul.bf16.gmra.mxu0 %v967
  %v1556 = vpop.f32.mrf.mxu0
  %v1557 = vadd.f32 %v1228, %v1556
  %v1558 = vpop.f32.mrf.mxu0
  %v1559 = vadd.f32 %v1230, %v1558
  %1560 = vmatmul.bf16.gmra.mxu0 %v970
  %v1561 = vpop.f32.mrf.mxu0
  %v1562 = vadd.f32 %v1233, %v1561
  %v1563 = vpop.f32.mrf.mxu0
  %v1564 = vadd.f32 %v1235, %v1563
  %1565 = vmatmul.bf16.gmra.mxu0 %v973
  %v1566 = vpop.f32.mrf.mxu0
  %v1567 = vadd.f32 %v1238, %v1566
  %v1568 = vpop.f32.mrf.mxu0
  %v1569 = vadd.f32 %v1240, %v1568
  %1570 = vmatmul.bf16.gmra.mxu0 %v976
  %v1571 = vpop.f32.mrf.mxu0
  %v1572 = vadd.f32 %v1243, %v1571
  %v1573 = vpop.f32.mrf.mxu0
  %v1574 = vadd.f32 %v1245, %v1573
  %1575 = vmatmul.bf16.gmra.mxu0 %v979
  %v1576 = vpop.f32.mrf.mxu0
  %v1577 = vadd.f32 %v1248, %v1576
  %v1578 = vpop.f32.mrf.mxu0
  %v1579 = vadd.f32 %v1250, %v1578
  %1580 = vmatmul.bf16.gmra.mxu0 %v982
  %v1581 = vpop.f32.mrf.mxu0
  %v1582 = vadd.f32 %v1253, %v1581
  %v1583 = vpop.f32.mrf.mxu0
  %v1584 = vadd.f32 %v1255, %v1583
  %1585 = vmatmul.bf16.gmra.mxu0 %v985
  %v1586 = vpop.f32.mrf.mxu0
  %v1587 = vadd.f32 %v1258, %v1586
  %v1588 = vpop.f32.mrf.mxu0
  %v1589 = vadd.f32 %v1260, %v1588
  %1590 = vmatmul.bf16.gmra.mxu0 %v988
  %v1591 = vpop.f32.mrf.mxu0
  %v1592 = vadd.f32 %v1263, %v1591
  %v1593 = vpop.f32.mrf.mxu0
  %v1594 = vadd.f32 %v1265, %v1593
  %1595 = vmatmul.bf16.gmra.mxu0 %v991
  %v1596 = vpop.f32.mrf.mxu0
  %v1597 = vadd.f32 %v1268, %v1596
  %v1598 = vpop.f32.mrf.mxu0
  %v1599 = vadd.f32 %v1270, %v1598
  %1600 = vmatmul.bf16.gmra.mxu0 %v994
  %v1601 = vpop.f32.mrf.mxu0
  %v1602 = vadd.f32 %v1273, %v1601
  %v1603 = vpop.f32.mrf.mxu0
  %v1604 = vadd.f32 %v1275, %v1603
  %1605 = vmatmul.bf16.gmra.mxu0 %v997
  %v1606 = vpop.f32.mrf.mxu0
  %v1607 = vadd.f32 %v1278, %v1606
  %v1608 = vpop.f32.mrf.mxu0
  %v1609 = vadd.f32 %v1280, %v1608
  %1610 = vmatmul.bf16.gmra.mxu0 %v1000
  %v1611 = vpop.f32.mrf.mxu0
  %v1612 = vadd.f32 %v1283, %v1611
  %v1613 = vpop.f32.mrf.mxu0
  %v1614 = vadd.f32 %v1285, %v1613
  %1615 = vmatmul.bf16.gmra.mxu0 %v1003
  %v1616 = vpop.f32.mrf.mxu0
  %v1617 = vadd.f32 %v1288, %v1616
  %v1618 = vpop.f32.mrf.mxu0
  %v1619 = vadd.f32 %v1290, %v1618
  %1620 = vmatmul.bf16.gmra.mxu0 %v1006
  %v1621 = vpop.f32.mrf.mxu0
  %v1622 = vadd.f32 %v1293, %v1621
  %v1623 = vpop.f32.mrf.mxu0
  %v1624 = vadd.f32 %v1295, %v1623
  %1625 = vmatmul.bf16.gmra.mxu0 %v1009
  %v1626 = vpop.f32.mrf.mxu0
  %v1627 = vadd.f32 %v1298, %v1626
  %v1628 = vpop.f32.mrf.mxu0
  %v1629 = vadd.f32 %v1300, %v1628
  %1630 = vmatmul.bf16.gmra.mxu0 %v1012
  %v1631 = vpop.f32.mrf.mxu0
  %v1632 = vadd.f32 %v1303, %v1631
  %v1633 = vpop.f32.mrf.mxu0
  %v1634 = vadd.f32 %v1305, %v1633
  %1635 = vmatmul.bf16.gmra.mxu0 %v1015
  %v1636 = vpop.f32.mrf.mxu0
  %v1637 = vadd.f32 %v1308, %v1636
  %v1638 = vpop.f32.mrf.mxu0
  %v1639 = vadd.f32 %v1310, %v1638
  %1640 = vmatmul.bf16.gmra.mxu0 %v1018
  %v1641 = vpop.f32.mrf.mxu0
  %v1642 = vadd.f32 %v1313, %v1641
  %v1643 = vpop.f32.mrf.mxu0
  %v1644 = vadd.f32 %v1315, %v1643
  %1645 = vmatmul.bf16.gmra.mxu0 %v1021
  %v1646 = vpop.f32.mrf.mxu0
  %v1647 = vadd.f32 %v1318, %v1646
  %v1648 = vpop.f32.mrf.mxu0
  %v1649 = vadd.f32 %v1320, %v1648
  %1650 = vmatmul.bf16.gmra.mxu0 %v1024
  %v1651 = vpop.f32.mrf.mxu0
  %v1652 = vadd.f32 %v1323, %v1651
  %v1653 = vpop.f32.mrf.mxu0
  %v1654 = vadd.f32 %v1325, %v1653
  %1655 = vmatmul.bf16.gmra.mxu0 %v1027
  %v1656 = vpop.f32.mrf.mxu0
  %v1657 = vadd.f32 %v1328, %v1656
  %v1658 = vpop.f32.mrf.mxu0
  %v1659 = vadd.f32 %v1330, %v1658
  %1660 = vmatmul.bf16.gmra.mxu0 %v1030
  %v1661 = vpop.f32.mrf.mxu0
  %v1662 = vadd.f32 %v1333, %v1661
  %v1663 = vpop.f32.mrf.mxu0
  %v1664 = vadd.f32 %v1335, %v1663
  %1665 = vmatmul.bf16.gmra.mxu0 %v1033
  %v1666 = vpop.f32.mrf.mxu0
  %v1667 = vadd.f32 %v1338, %v1666
  %v1668 = vpop.f32.mrf.mxu0
  %v1669 = vadd.f32 %v1340, %v1668
  %1670 = vmatmul.bf16.gmra.mxu0 %v1036
  %v1671 = vpop.f32.mrf.mxu0
  %v1672 = vadd.f32 %v1343, %v1671
  %v1673 = vpop.f32.mrf.mxu0
  %v1674 = vadd.f32 %v1345, %v1673
  %1675 = vmatmul.bf16.gmra.mxu0 %v1039
  %v1676 = vpop.f32.mrf.mxu0
  %v1677 = vadd.f32 %v1348, %v1676
  %v1678 = vpop.f32.mrf.mxu0
  %v1679 = vadd.f32 %v1350, %v1678
  %1680 = vmatmul.bf16.gmra.mxu0 %v1042
  %v1681 = vpop.f32.mrf.mxu0
  %v1682 = vadd.f32 %v1353, %v1681
  %v1683 = vpop.f32.mrf.mxu0
  %v1684 = vadd.f32 %v1355, %v1683
  %1685 = vmatmul.bf16.gmra.mxu0 %v1045
  %v1686 = vpop.f32.mrf.mxu0
  %v1687 = vadd.f32 %v1358, %v1686
  %v1688 = vpop.f32.mrf.mxu0
  %v1689 = vadd.f32 %v1360, %v1688
  %1690 = vmatmul.bf16.gmra.mxu0 %v1048
  %v1691 = vpop.f32.mrf.mxu0
  %v1692 = vadd.f32 %v1363, %v1691
  %v1693 = vpop.f32.mrf.mxu0
  %v1694 = vadd.f32 %v1365, %v1693
  %1695 = vmatmul.bf16.gmra.mxu0 %v1051
  %v1696 = vpop.f32.mrf.mxu0
  %v1697 = vadd.f32 %v1368, %v1696
  %v1698 = vpop.f32.mrf.mxu0
  %v1699 = vadd.f32 %v1370, %v1698
  %1700 = vmatmul.bf16.gmra.mxu0 %v1054
  %v1701 = vpop.f32.mrf.mxu0
  %v1702 = vadd.f32 %v1373, %v1701
  %v1703 = vpop.f32.mrf.mxu0
  %v1704 = vadd.f32 %v1375, %v1703
  %1705 = vmatmul.bf16.gmra.mxu0 %v1057
  %v1706 = vpop.f32.mrf.mxu0
  %v1707 = vadd.f32 %v1378, %v1706
  %v1708 = vpop.f32.mrf.mxu0
  %v1709 = vadd.f32 %v1380, %v1708
  %1710 = vmatmul.bf16.gmra.mxu0 %v1060
  %v1711 = vpop.f32.mrf.mxu0
  %v1712 = vadd.f32 %v1383, %v1711
  %v1713 = vpop.f32.mrf.mxu0
  %v1714 = vadd.f32 %v1385, %v1713
  %1715 = vmatmul.bf16.gmra.mxu0 %v1063
  %v1716 = vpop.f32.mrf.mxu0
  %v1717 = vadd.f32 %v1388, %v1716
  %v1718 = vpop.f32.mrf.mxu0
  %v1719 = vadd.f32 %v1390, %v1718
  %1720 = vmatmul.bf16.gmra.mxu0 %v1066
  %v1721 = vpop.f32.mrf.mxu0
  %v1722 = vadd.f32 %v1393, %v1721
  %v1723 = vpop.f32.mrf.mxu0
  %v1724 = vadd.f32 %v1395, %v1723
  %1725 = vdwg.mxu0
  %1726 = vmatpush.bf16.msra.mxu0 %v850
  %1727 = vmatpush.bf16.msra.mxu0 %v848
  %1728 = vmatpush.bf16.msra.mxu0 %v846
  %1729 = vmatpush.bf16.msra.mxu0 %v844
  %1730 = vmatpush.bf16.msra.mxu0 %v842
  %1731 = vmatpush.bf16.msra.mxu0 %v840
  %1732 = vmatpush.bf16.msra.mxu0 %v838
  %1733 = vmatpush.bf16.msra.mxu0 %v836
  %1734 = vmatmul.bf16.gmra.mxu0 %v583
  %v1735 = vpop.f32.mrf.mxu0
  %v1736 = vadd.f32 %v196, %v1735
  %v1737 = vpop.f32.mrf.mxu0
  %v1738 = vadd.f32 %v196, %v1737
  %1739 = vmatmul.bf16.gmra.mxu0 %v585
  %v1740 = vpop.f32.mrf.mxu0
  %v1741 = vadd.f32 %v196, %v1740
  %v1742 = vpop.f32.mrf.mxu0
  %v1743 = vadd.f32 %v196, %v1742
  %1744 = vmatmul.bf16.gmra.mxu0 %v587
  %v1745 = vpop.f32.mrf.mxu0
  %v1746 = vadd.f32 %v196, %v1745
  %v1747 = vpop.f32.mrf.mxu0
  %v1748 = vadd.f32 %v196, %v1747
  %1749 = vmatmul.bf16.gmra.mxu0 %v589
  %v1750 = vpop.f32.mrf.mxu0
  %v1751 = vadd.f32 %v196, %v1750
  %v1752 = vpop.f32.mrf.mxu0
  %v1753 = vadd.f32 %v196, %v1752
  %1754 = vmatmul.bf16.gmra.mxu0 %v591
  %v1755 = vpop.f32.mrf.mxu0
  %v1756 = vadd.f32 %v196, %v1755
  %v1757 = vpop.f32.mrf.mxu0
  %v1758 = vadd.f32 %v196, %v1757
  %1759 = vmatmul.bf16.gmra.mxu0 %v593
  %v1760 = vpop.f32.mrf.mxu0
  %v1761 = vadd.f32 %v196, %v1760
  %v1762 = vpop.f32.mrf.mxu0
  %v1763 = vadd.f32 %v196, %v1762
  %1764 = vmatmul.bf16.gmra.mxu0 %v595
  %v1765 = vpop.f32.mrf.mxu0
  %v1766 = vadd.f32 %v196, %v1765
  %v1767 = vpop.f32.mrf.mxu0
  %v1768 = vadd.f32 %v196, %v1767
  %1769 = vmatmul.bf16.gmra.mxu0 %v597
  %v1770 = vpop.f32.mrf.mxu0
  %v1771 = vadd.f32 %v196, %v1770
  %v1772 = vpop.f32.mrf.mxu0
  %v1773 = vadd.f32 %v196, %v1772
  %1774 = vmatmul.bf16.gmra.mxu0 %v599
  %v1775 = vpop.f32.mrf.mxu0
  %v1776 = vadd.f32 %v196, %v1775
  %v1777 = vpop.f32.mrf.mxu0
  %v1778 = vadd.f32 %v196, %v1777
  %1779 = vmatmul.bf16.gmra.mxu0 %v601
  %v1780 = vpop.f32.mrf.mxu0
  %v1781 = vadd.f32 %v196, %v1780
  %v1782 = vpop.f32.mrf.mxu0
  %v1783 = vadd.f32 %v196, %v1782
  %1784 = vmatmul.bf16.gmra.mxu0 %v603
  %v1785 = vpop.f32.mrf.mxu0
  %v1786 = vadd.f32 %v196, %v1785
  %v1787 = vpop.f32.mrf.mxu0
  %v1788 = vadd.f32 %v196, %v1787
  %1789 = vmatmul.bf16.gmra.mxu0 %v605
  %v1790 = vpop.f32.mrf.mxu0
  %v1791 = vadd.f32 %v196, %v1790
  %v1792 = vpop.f32.mrf.mxu0
  %v1793 = vadd.f32 %v196, %v1792
  %1794 = vmatmul.bf16.gmra.mxu0 %v607
  %v1795 = vpop.f32.mrf.mxu0
  %v1796 = vadd.f32 %v196, %v1795
  %v1797 = vpop.f32.mrf.mxu0
  %v1798 = vadd.f32 %v196, %v1797
  %1799 = vmatmul.bf16.gmra.mxu0 %v609
  %v1800 = vpop.f32.mrf.mxu0
  %v1801 = vadd.f32 %v196, %v1800
  %v1802 = vpop.f32.mrf.mxu0
  %v1803 = vadd.f32 %v196, %v1802
  %1804 = vmatmul.bf16.gmra.mxu0 %v611
  %v1805 = vpop.f32.mrf.mxu0
  %v1806 = vadd.f32 %v196, %v1805
  %v1807 = vpop.f32.mrf.mxu0
  %v1808 = vadd.f32 %v196, %v1807
  %1809 = vmatmul.bf16.gmra.mxu0 %v613
  %v1810 = vpop.f32.mrf.mxu0
  %v1811 = vadd.f32 %v196, %v1810
  %v1812 = vpop.f32.mrf.mxu0
  %v1813 = vadd.f32 %v196, %v1812
  %1814 = vmatmul.bf16.gmra.mxu0 %v615
  %v1815 = vpop.f32.mrf.mxu0
  %v1816 = vadd.f32 %v196, %v1815
  %v1817 = vpop.f32.mrf.mxu0
  %v1818 = vadd.f32 %v196, %v1817
  %1819 = vmatmul.bf16.gmra.mxu0 %v617
  %v1820 = vpop.f32.mrf.mxu0
  %v1821 = vadd.f32 %v196, %v1820
  %v1822 = vpop.f32.mrf.mxu0
  %v1823 = vadd.f32 %v196, %v1822
  %1824 = vmatmul.bf16.gmra.mxu0 %v619
  %v1825 = vpop.f32.mrf.mxu0
  %v1826 = vadd.f32 %v196, %v1825
  %v1827 = vpop.f32.mrf.mxu0
  %v1828 = vadd.f32 %v196, %v1827
  %1829 = vmatmul.bf16.gmra.mxu0 %v621
  %v1830 = vpop.f32.mrf.mxu0
  %v1831 = vadd.f32 %v196, %v1830
  %v1832 = vpop.f32.mrf.mxu0
  %v1833 = vadd.f32 %v196, %v1832
  %1834 = vmatmul.bf16.gmra.mxu0 %v623
  %v1835 = vpop.f32.mrf.mxu0
  %v1836 = vadd.f32 %v196, %v1835
  %v1837 = vpop.f32.mrf.mxu0
  %v1838 = vadd.f32 %v196, %v1837
  %1839 = vmatmul.bf16.gmra.mxu0 %v625
  %v1840 = vpop.f32.mrf.mxu0
  %v1841 = vadd.f32 %v196, %v1840
  %v1842 = vpop.f32.mrf.mxu0
  %v1843 = vadd.f32 %v196, %v1842
  %1844 = vmatmul.bf16.gmra.mxu0 %v627
  %v1845 = vpop.f32.mrf.mxu0
  %v1846 = vadd.f32 %v196, %v1845
  %v1847 = vpop.f32.mrf.mxu0
  %v1848 = vadd.f32 %v196, %v1847
  %1849 = vmatmul.bf16.gmra.mxu0 %v629
  %v1850 = vpop.f32.mrf.mxu0
  %v1851 = vadd.f32 %v196, %v1850
  %v1852 = vpop.f32.mrf.mxu0
  %v1853 = vadd.f32 %v196, %v1852
  %1854 = vmatmul.bf16.gmra.mxu0 %v631
  %v1855 = vpop.f32.mrf.mxu0
  %v1856 = vadd.f32 %v196, %v1855
  %v1857 = vpop.f32.mrf.mxu0
  %v1858 = vadd.f32 %v196, %v1857
  %1859 = vmatmul.bf16.gmra.mxu0 %v633
  %v1860 = vpop.f32.mrf.mxu0
  %v1861 = vadd.f32 %v196, %v1860
  %v1862 = vpop.f32.mrf.mxu0
  %v1863 = vadd.f32 %v196, %v1862
  %1864 = vmatmul.bf16.gmra.mxu0 %v635
  %v1865 = vpop.f32.mrf.mxu0
  %v1866 = vadd.f32 %v196, %v1865
  %v1867 = vpop.f32.mrf.mxu0
  %v1868 = vadd.f32 %v196, %v1867
  %1869 = vmatmul.bf16.gmra.mxu0 %v637
  %v1870 = vpop.f32.mrf.mxu0
  %v1871 = vadd.f32 %v196, %v1870
  %v1872 = vpop.f32.mrf.mxu0
  %v1873 = vadd.f32 %v196, %v1872
  %1874 = vmatmul.bf16.gmra.mxu0 %v639
  %v1875 = vpop.f32.mrf.mxu0
  %v1876 = vadd.f32 %v196, %v1875
  %v1877 = vpop.f32.mrf.mxu0
  %v1878 = vadd.f32 %v196, %v1877
  %1879 = vmatmul.bf16.gmra.mxu0 %v641
  %v1880 = vpop.f32.mrf.mxu0
  %v1881 = vadd.f32 %v196, %v1880
  %v1882 = vpop.f32.mrf.mxu0
  %v1883 = vadd.f32 %v196, %v1882
  %1884 = vmatmul.bf16.gmra.mxu0 %v643
  %v1885 = vpop.f32.mrf.mxu0
  %v1886 = vadd.f32 %v196, %v1885
  %v1887 = vpop.f32.mrf.mxu0
  %v1888 = vadd.f32 %v196, %v1887
  %1889 = vmatmul.bf16.gmra.mxu0 %v645
  %v1890 = vpop.f32.mrf.mxu0
  %v1891 = vadd.f32 %v196, %v1890
  %v1892 = vpop.f32.mrf.mxu0
  %v1893 = vadd.f32 %v196, %v1892
  %1894 = vmatmul.bf16.gmra.mxu0 %v647
  %v1895 = vpop.f32.mrf.mxu0
  %v1896 = vadd.f32 %v196, %v1895
  %v1897 = vpop.f32.mrf.mxu0
  %v1898 = vadd.f32 %v196, %v1897
  %1899 = vmatmul.bf16.gmra.mxu0 %v649
  %v1900 = vpop.f32.mrf.mxu0
  %v1901 = vadd.f32 %v196, %v1900
  %v1902 = vpop.f32.mrf.mxu0
  %v1903 = vadd.f32 %v196, %v1902
  %1904 = vmatmul.bf16.gmra.mxu0 %v651
  %v1905 = vpop.f32.mrf.mxu0
  %v1906 = vadd.f32 %v196, %v1905
  %v1907 = vpop.f32.mrf.mxu0
  %v1908 = vadd.f32 %v196, %v1907
  %1909 = vmatmul.bf16.gmra.mxu0 %v653
  %v1910 = vpop.f32.mrf.mxu0
  %v1911 = vadd.f32 %v196, %v1910
  %v1912 = vpop.f32.mrf.mxu0
  %v1913 = vadd.f32 %v196, %v1912
  %1914 = vmatmul.bf16.gmra.mxu0 %v655
  %v1915 = vpop.f32.mrf.mxu0
  %v1916 = vadd.f32 %v196, %v1915
  %v1917 = vpop.f32.mrf.mxu0
  %v1918 = vadd.f32 %v196, %v1917
  %1919 = vmatmul.bf16.gmra.mxu0 %v657
  %v1920 = vpop.f32.mrf.mxu0
  %v1921 = vadd.f32 %v196, %v1920
  %v1922 = vpop.f32.mrf.mxu0
  %v1923 = vadd.f32 %v196, %v1922
  %1924 = vmatmul.bf16.gmra.mxu0 %v659
  %v1925 = vpop.f32.mrf.mxu0
  %v1926 = vadd.f32 %v196, %v1925
  %v1927 = vpop.f32.mrf.mxu0
  %v1928 = vadd.f32 %v196, %v1927
  %1929 = vmatmul.bf16.gmra.mxu0 %v661
  %v1930 = vpop.f32.mrf.mxu0
  %v1931 = vadd.f32 %v196, %v1930
  %v1932 = vpop.f32.mrf.mxu0
  %v1933 = vadd.f32 %v196, %v1932
  %1934 = vmatmul.bf16.gmra.mxu0 %v663
  %v1935 = vpop.f32.mrf.mxu0
  %v1936 = vadd.f32 %v196, %v1935
  %v1937 = vpop.f32.mrf.mxu0
  %v1938 = vadd.f32 %v196, %v1937
  %1939 = vmatmul.bf16.gmra.mxu0 %v665
  %v1940 = vpop.f32.mrf.mxu0
  %v1941 = vadd.f32 %v196, %v1940
  %v1942 = vpop.f32.mrf.mxu0
  %v1943 = vadd.f32 %v196, %v1942
  %1944 = vmatmul.bf16.gmra.mxu0 %v667
  %v1945 = vpop.f32.mrf.mxu0
  %v1946 = vadd.f32 %v196, %v1945
  %v1947 = vpop.f32.mrf.mxu0
  %v1948 = vadd.f32 %v196, %v1947
  %1949 = vmatmul.bf16.gmra.mxu0 %v669
  %v1950 = vpop.f32.mrf.mxu0
  %v1951 = vadd.f32 %v196, %v1950
  %v1952 = vpop.f32.mrf.mxu0
  %v1953 = vadd.f32 %v196, %v1952
  %1954 = vmatmul.bf16.gmra.mxu0 %v671
  %v1955 = vpop.f32.mrf.mxu0
  %v1956 = vadd.f32 %v196, %v1955
  %v1957 = vpop.f32.mrf.mxu0
  %v1958 = vadd.f32 %v196, %v1957
  %1959 = vmatmul.bf16.gmra.mxu0 %v673
  %v1960 = vpop.f32.mrf.mxu0
  %v1961 = vadd.f32 %v196, %v1960
  %v1962 = vpop.f32.mrf.mxu0
  %v1963 = vadd.f32 %v196, %v1962
  %1964 = vmatmul.bf16.gmra.mxu0 %v675
  %v1965 = vpop.f32.mrf.mxu0
  %v1966 = vadd.f32 %v196, %v1965
  %v1967 = vpop.f32.mrf.mxu0
  %v1968 = vadd.f32 %v196, %v1967
  %1969 = vmatmul.bf16.gmra.mxu0 %v677
  %v1970 = vpop.f32.mrf.mxu0
  %v1971 = vadd.f32 %v196, %v1970
  %v1972 = vpop.f32.mrf.mxu0
  %v1973 = vadd.f32 %v196, %v1972
  %1974 = vmatmul.bf16.gmra.mxu0 %v679
  %v1975 = vpop.f32.mrf.mxu0
  %v1976 = vadd.f32 %v196, %v1975
  %v1977 = vpop.f32.mrf.mxu0
  %v1978 = vadd.f32 %v196, %v1977
  %1979 = vmatmul.bf16.gmra.mxu0 %v681
  %v1980 = vpop.f32.mrf.mxu0
  %v1981 = vadd.f32 %v196, %v1980
  %v1982 = vpop.f32.mrf.mxu0
  %v1983 = vadd.f32 %v196, %v1982
  %1984 = vmatmul.bf16.gmra.mxu0 %v683
  %v1985 = vpop.f32.mrf.mxu0
  %v1986 = vadd.f32 %v196, %v1985
  %v1987 = vpop.f32.mrf.mxu0
  %v1988 = vadd.f32 %v196, %v1987
  %1989 = vmatmul.bf16.gmra.mxu0 %v685
  %v1990 = vpop.f32.mrf.mxu0
  %v1991 = vadd.f32 %v196, %v1990
  %v1992 = vpop.f32.mrf.mxu0
  %v1993 = vadd.f32 %v196, %v1992
  %1994 = vmatmul.bf16.gmra.mxu0 %v687
  %v1995 = vpop.f32.mrf.mxu0
  %v1996 = vadd.f32 %v196, %v1995
  %v1997 = vpop.f32.mrf.mxu0
  %v1998 = vadd.f32 %v196, %v1997
  %1999 = vmatmul.bf16.gmra.mxu0 %v689
  %v2000 = vpop.f32.mrf.mxu0
  %v2001 = vadd.f32 %v196, %v2000
  %v2002 = vpop.f32.mrf.mxu0
  %v2003 = vadd.f32 %v196, %v2002
  %2004 = vmatmul.bf16.gmra.mxu0 %v691
  %v2005 = vpop.f32.mrf.mxu0
  %v2006 = vadd.f32 %v196, %v2005
  %v2007 = vpop.f32.mrf.mxu0
  %v2008 = vadd.f32 %v196, %v2007
  %2009 = vmatmul.bf16.gmra.mxu0 %v693
  %v2010 = vpop.f32.mrf.mxu0
  %v2011 = vadd.f32 %v196, %v2010
  %v2012 = vpop.f32.mrf.mxu0
  %v2013 = vadd.f32 %v196, %v2012
  %2014 = vmatmul.bf16.gmra.mxu0 %v695
  %v2015 = vpop.f32.mrf.mxu0
  %v2016 = vadd.f32 %v196, %v2015
  %v2017 = vpop.f32.mrf.mxu0
  %v2018 = vadd.f32 %v196, %v2017
  %2019 = vmatmul.bf16.gmra.mxu0 %v697
  %v2020 = vpop.f32.mrf.mxu0
  %v2021 = vadd.f32 %v196, %v2020
  %v2022 = vpop.f32.mrf.mxu0
  %v2023 = vadd.f32 %v196, %v2022
  %2024 = vmatmul.bf16.gmra.mxu0 %v699
  %v2025 = vpop.f32.mrf.mxu0
  %v2026 = vadd.f32 %v196, %v2025
  %v2027 = vpop.f32.mrf.mxu0
  %v2028 = vadd.f32 %v196, %v2027
  %2029 = vmatmul.bf16.gmra.mxu0 %v701
  %v2030 = vpop.f32.mrf.mxu0
  %v2031 = vadd.f32 %v196, %v2030
  %v2032 = vpop.f32.mrf.mxu0
  %v2033 = vadd.f32 %v196, %v2032
  %2034 = vmatmul.bf16.gmra.mxu0 %v703
  %v2035 = vpop.f32.mrf.mxu0
  %v2036 = vadd.f32 %v196, %v2035
  %v2037 = vpop.f32.mrf.mxu0
  %v2038 = vadd.f32 %v196, %v2037
  %2039 = vmatmul.bf16.gmra.mxu0 %v705
  %v2040 = vpop.f32.mrf.mxu0
  %v2041 = vadd.f32 %v196, %v2040
  %v2042 = vpop.f32.mrf.mxu0
  %v2043 = vadd.f32 %v196, %v2042
  %2044 = vmatmul.bf16.gmra.mxu0 %v707
  %v2045 = vpop.f32.mrf.mxu0
  %v2046 = vadd.f32 %v196, %v2045
  %v2047 = vpop.f32.mrf.mxu0
  %v2048 = vadd.f32 %v196, %v2047
  %2049 = vmatmul.bf16.gmra.mxu0 %v709
  %v2050 = vpop.f32.mrf.mxu0
  %v2051 = vadd.f32 %v196, %v2050
  %v2052 = vpop.f32.mrf.mxu0
  %v2053 = vadd.f32 %v196, %v2052
  %2054 = vdwg.mxu0
  %2055 = vmatpush.bf16.msra.mxu0 0
  %2056 = vmatpush.bf16.msra.mxu0 0
  %2057 = vmatpush.bf16.msra.mxu0 0
  %2058 = vmatpush.bf16.msra.mxu0 0
  %2059 = vmatpush.bf16.msra.mxu0 0
  %2060 = vmatpush.bf16.msra.mxu0 0
  %2061 = vmatpush.bf16.msra.mxu0 %v854
  %2062 = vmatpush.bf16.msra.mxu0 %v852
  %2063 = vmatmul.bf16.gmra.mxu0 %v877
  %v2064 = vpop.f32.mrf.mxu0
  %v2065 = vadd.f32 %v1736, %v2064
  %v2066 = vpop.f32.mrf.mxu0
  %v2067 = vadd.f32 %v1738, %v2066
  %2068 = vmatmul.bf16.gmra.mxu0 %v880
  %v2069 = vpop.f32.mrf.mxu0
  %v2070 = vadd.f32 %v1741, %v2069
  %v2071 = vpop.f32.mrf.mxu0
  %v2072 = vadd.f32 %v1743, %v2071
  %2073 = vmatmul.bf16.gmra.mxu0 %v883
  %v2074 = vpop.f32.mrf.mxu0
  %v2075 = vadd.f32 %v1746, %v2074
  %v2076 = vpop.f32.mrf.mxu0
  %v2077 = vadd.f32 %v1748, %v2076
  %2078 = vmatmul.bf16.gmra.mxu0 %v886
  %v2079 = vpop.f32.mrf.mxu0
  %v2080 = vadd.f32 %v1751, %v2079
  %v2081 = vpop.f32.mrf.mxu0
  %v2082 = vadd.f32 %v1753, %v2081
  %2083 = vmatmul.bf16.gmra.mxu0 %v889
  %v2084 = vpop.f32.mrf.mxu0
  %v2085 = vadd.f32 %v1756, %v2084
  %v2086 = vpop.f32.mrf.mxu0
  %v2087 = vadd.f32 %v1758, %v2086
  %2088 = vmatmul.bf16.gmra.mxu0 %v892
  %v2089 = vpop.f32.mrf.mxu0
  %v2090 = vadd.f32 %v1761, %v2089
  %v2091 = vpop.f32.mrf.mxu0
  %v2092 = vadd.f32 %v1763, %v2091
  %2093 = vmatmul.bf16.gmra.mxu0 %v895
  %v2094 = vpop.f32.mrf.mxu0
  %v2095 = vadd.f32 %v1766, %v2094
  %v2096 = vpop.f32.mrf.mxu0
  %v2097 = vadd.f32 %v1768, %v2096
  %2098 = vmatmul.bf16.gmra.mxu0 %v898
  %v2099 = vpop.f32.mrf.mxu0
  %v2100 = vadd.f32 %v1771, %v2099
  %v2101 = vpop.f32.mrf.mxu0
  %v2102 = vadd.f32 %v1773, %v2101
  %2103 = vmatmul.bf16.gmra.mxu0 %v901
  %v2104 = vpop.f32.mrf.mxu0
  %v2105 = vadd.f32 %v1776, %v2104
  %v2106 = vpop.f32.mrf.mxu0
  %v2107 = vadd.f32 %v1778, %v2106
  %2108 = vmatmul.bf16.gmra.mxu0 %v904
  %v2109 = vpop.f32.mrf.mxu0
  %v2110 = vadd.f32 %v1781, %v2109
  %v2111 = vpop.f32.mrf.mxu0
  %v2112 = vadd.f32 %v1783, %v2111
  %2113 = vmatmul.bf16.gmra.mxu0 %v907
  %v2114 = vpop.f32.mrf.mxu0
  %v2115 = vadd.f32 %v1786, %v2114
  %v2116 = vpop.f32.mrf.mxu0
  %v2117 = vadd.f32 %v1788, %v2116
  %2118 = vmatmul.bf16.gmra.mxu0 %v910
  %v2119 = vpop.f32.mrf.mxu0
  %v2120 = vadd.f32 %v1791, %v2119
  %v2121 = vpop.f32.mrf.mxu0
  %v2122 = vadd.f32 %v1793, %v2121
  %2123 = vmatmul.bf16.gmra.mxu0 %v913
  %v2124 = vpop.f32.mrf.mxu0
  %v2125 = vadd.f32 %v1796, %v2124
  %v2126 = vpop.f32.mrf.mxu0
  %v2127 = vadd.f32 %v1798, %v2126
  %2128 = vmatmul.bf16.gmra.mxu0 %v916
  %v2129 = vpop.f32.mrf.mxu0
  %v2130 = vadd.f32 %v1801, %v2129
  %v2131 = vpop.f32.mrf.mxu0
  %v2132 = vadd.f32 %v1803, %v2131
  %2133 = vmatmul.bf16.gmra.mxu0 %v919
  %v2134 = vpop.f32.mrf.mxu0
  %v2135 = vadd.f32 %v1806, %v2134
  %v2136 = vpop.f32.mrf.mxu0
  %v2137 = vadd.f32 %v1808, %v2136
  %2138 = vmatmul.bf16.gmra.mxu0 %v922
  %v2139 = vpop.f32.mrf.mxu0
  %v2140 = vadd.f32 %v1811, %v2139
  %v2141 = vpop.f32.mrf.mxu0
  %v2142 = vadd.f32 %v1813, %v2141
  %2143 = vmatmul.bf16.gmra.mxu0 %v925
  %v2144 = vpop.f32.mrf.mxu0
  %v2145 = vadd.f32 %v1816, %v2144
  %v2146 = vpop.f32.mrf.mxu0
  %v2147 = vadd.f32 %v1818, %v2146
  %2148 = vmatmul.bf16.gmra.mxu0 %v928
  %v2149 = vpop.f32.mrf.mxu0
  %v2150 = vadd.f32 %v1821, %v2149
  %v2151 = vpop.f32.mrf.mxu0
  %v2152 = vadd.f32 %v1823, %v2151
  %2153 = vmatmul.bf16.gmra.mxu0 %v931
  %v2154 = vpop.f32.mrf.mxu0
  %v2155 = vadd.f32 %v1826, %v2154
  %v2156 = vpop.f32.mrf.mxu0
  %v2157 = vadd.f32 %v1828, %v2156
  %2158 = vmatmul.bf16.gmra.mxu0 %v934
  %v2159 = vpop.f32.mrf.mxu0
  %v2160 = vadd.f32 %v1831, %v2159
  %v2161 = vpop.f32.mrf.mxu0
  %v2162 = vadd.f32 %v1833, %v2161
  %2163 = vmatmul.bf16.gmra.mxu0 %v937
  %v2164 = vpop.f32.mrf.mxu0
  %v2165 = vadd.f32 %v1836, %v2164
  %v2166 = vpop.f32.mrf.mxu0
  %v2167 = vadd.f32 %v1838, %v2166
  %2168 = vmatmul.bf16.gmra.mxu0 %v940
  %v2169 = vpop.f32.mrf.mxu0
  %v2170 = vadd.f32 %v1841, %v2169
  %v2171 = vpop.f32.mrf.mxu0
  %v2172 = vadd.f32 %v1843, %v2171
  %2173 = vmatmul.bf16.gmra.mxu0 %v943
  %v2174 = vpop.f32.mrf.mxu0
  %v2175 = vadd.f32 %v1846, %v2174
  %v2176 = vpop.f32.mrf.mxu0
  %v2177 = vadd.f32 %v1848, %v2176
  %2178 = vmatmul.bf16.gmra.mxu0 %v946
  %v2179 = vpop.f32.mrf.mxu0
  %v2180 = vadd.f32 %v1851, %v2179
  %v2181 = vpop.f32.mrf.mxu0
  %v2182 = vadd.f32 %v1853, %v2181
  %2183 = vmatmul.bf16.gmra.mxu0 %v949
  %v2184 = vpop.f32.mrf.mxu0
  %v2185 = vadd.f32 %v1856, %v2184
  %v2186 = vpop.f32.mrf.mxu0
  %v2187 = vadd.f32 %v1858, %v2186
  %2188 = vmatmul.bf16.gmra.mxu0 %v952
  %v2189 = vpop.f32.mrf.mxu0
  %v2190 = vadd.f32 %v1861, %v2189
  %v2191 = vpop.f32.mrf.mxu0
  %v2192 = vadd.f32 %v1863, %v2191
  %2193 = vmatmul.bf16.gmra.mxu0 %v955
  %v2194 = vpop.f32.mrf.mxu0
  %v2195 = vadd.f32 %v1866, %v2194
  %v2196 = vpop.f32.mrf.mxu0
  %v2197 = vadd.f32 %v1868, %v2196
  %2198 = vmatmul.bf16.gmra.mxu0 %v958
  %v2199 = vpop.f32.mrf.mxu0
  %v2200 = vadd.f32 %v1871, %v2199
  %v2201 = vpop.f32.mrf.mxu0
  %v2202 = vadd.f32 %v1873, %v2201
  %2203 = vmatmul.bf16.gmra.mxu0 %v961
  %v2204 = vpop.f32.mrf.mxu0
  %v2205 = vadd.f32 %v1876, %v2204
  %v2206 = vpop.f32.mrf.mxu0
  %v2207 = vadd.f32 %v1878, %v2206
  %2208 = vmatmul.bf16.gmra.mxu0 %v964
  %v2209 = vpop.f32.mrf.mxu0
  %v2210 = vadd.f32 %v1881, %v2209
  %v2211 = vpop.f32.mrf.mxu0
  %v2212 = vadd.f32 %v1883, %v2211
  %2213 = vmatmul.bf16.gmra.mxu0 %v967
  %v2214 = vpop.f32.mrf.mxu0
  %v2215 = vadd.f32 %v1886, %v2214
  %v2216 = vpop.f32.mrf.mxu0
  %v2217 = vadd.f32 %v1888, %v2216
  %2218 = vmatmul.bf16.gmra.mxu0 %v970
  %v2219 = vpop.f32.mrf.mxu0
  %v2220 = vadd.f32 %v1891, %v2219
  %v2221 = vpop.f32.mrf.mxu0
  %v2222 = vadd.f32 %v1893, %v2221
  %2223 = vmatmul.bf16.gmra.mxu0 %v973
  %v2224 = vpop.f32.mrf.mxu0
  %v2225 = vadd.f32 %v1896, %v2224
  %v2226 = vpop.f32.mrf.mxu0
  %v2227 = vadd.f32 %v1898, %v2226
  %2228 = vmatmul.bf16.gmra.mxu0 %v976
  %v2229 = vpop.f32.mrf.mxu0
  %v2230 = vadd.f32 %v1901, %v2229
  %v2231 = vpop.f32.mrf.mxu0
  %v2232 = vadd.f32 %v1903, %v2231
  %2233 = vmatmul.bf16.gmra.mxu0 %v979
  %v2234 = vpop.f32.mrf.mxu0
  %v2235 = vadd.f32 %v1906, %v2234
  %v2236 = vpop.f32.mrf.mxu0
  %v2237 = vadd.f32 %v1908, %v2236
  %2238 = vmatmul.bf16.gmra.mxu0 %v982
  %v2239 = vpop.f32.mrf.mxu0
  %v2240 = vadd.f32 %v1911, %v2239
  %v2241 = vpop.f32.mrf.mxu0
  %v2242 = vadd.f32 %v1913, %v2241
  %2243 = vmatmul.bf16.gmra.mxu0 %v985
  %v2244 = vpop.f32.mrf.mxu0
  %v2245 = vadd.f32 %v1916, %v2244
  %v2246 = vpop.f32.mrf.mxu0
  %v2247 = vadd.f32 %v1918, %v2246
  %2248 = vmatmul.bf16.gmra.mxu0 %v988
  %v2249 = vpop.f32.mrf.mxu0
  %v2250 = vadd.f32 %v1921, %v2249
  %v2251 = vpop.f32.mrf.mxu0
  %v2252 = vadd.f32 %v1923, %v2251
  %2253 = vmatmul.bf16.gmra.mxu0 %v991
  %v2254 = vpop.f32.mrf.mxu0
  %v2255 = vadd.f32 %v1926, %v2254
  %v2256 = vpop.f32.mrf.mxu0
  %v2257 = vadd.f32 %v1928, %v2256
  %2258 = vmatmul.bf16.gmra.mxu0 %v994
  %v2259 = vpop.f32.mrf.mxu0
  %v2260 = vadd.f32 %v1931, %v2259
  %v2261 = vpop.f32.mrf.mxu0
  %v2262 = vadd.f32 %v1933, %v2261
  %2263 = vmatmul.bf16.gmra.mxu0 %v997
  %v2264 = vpop.f32.mrf.mxu0
  %v2265 = vadd.f32 %v1936, %v2264
  %v2266 = vpop.f32.mrf.mxu0
  %v2267 = vadd.f32 %v1938, %v2266
  %2268 = vmatmul.bf16.gmra.mxu0 %v1000
  %v2269 = vpop.f32.mrf.mxu0
  %v2270 = vadd.f32 %v1941, %v2269
  %v2271 = vpop.f32.mrf.mxu0
  %v2272 = vadd.f32 %v1943, %v2271
  %2273 = vmatmul.bf16.gmra.mxu0 %v1003
  %v2274 = vpop.f32.mrf.mxu0
  %v2275 = vadd.f32 %v1946, %v2274
  %v2276 = vpop.f32.mrf.mxu0
  %v2277 = vadd.f32 %v1948, %v2276
  %2278 = vmatmul.bf16.gmra.mxu0 %v1006
  %v2279 = vpop.f32.mrf.mxu0
  %v2280 = vadd.f32 %v1951, %v2279
  %v2281 = vpop.f32.mrf.mxu0
  %v2282 = vadd.f32 %v1953, %v2281
  %2283 = vmatmul.bf16.gmra.mxu0 %v1009
  %v2284 = vpop.f32.mrf.mxu0
  %v2285 = vadd.f32 %v1956, %v2284
  %v2286 = vpop.f32.mrf.mxu0
  %v2287 = vadd.f32 %v1958, %v2286
  %2288 = vmatmul.bf16.gmra.mxu0 %v1012
  %v2289 = vpop.f32.mrf.mxu0
  %v2290 = vadd.f32 %v1961, %v2289
  %v2291 = vpop.f32.mrf.mxu0
  %v2292 = vadd.f32 %v1963, %v2291
  %2293 = vmatmul.bf16.gmra.mxu0 %v1015
  %v2294 = vpop.f32.mrf.mxu0
  %v2295 = vadd.f32 %v1966, %v2294
  %v2296 = vpop.f32.mrf.mxu0
  %v2297 = vadd.f32 %v1968, %v2296
  %2298 = vmatmul.bf16.gmra.mxu0 %v1018
  %v2299 = vpop.f32.mrf.mxu0
  %v2300 = vadd.f32 %v1971, %v2299
  %v2301 = vpop.f32.mrf.mxu0
  %v2302 = vadd.f32 %v1973, %v2301
  %2303 = vmatmul.bf16.gmra.mxu0 %v1021
  %v2304 = vpop.f32.mrf.mxu0
  %v2305 = vadd.f32 %v1976, %v2304
  %v2306 = vpop.f32.mrf.mxu0
  %v2307 = vadd.f32 %v1978, %v2306
  %2308 = vmatmul.bf16.gmra.mxu0 %v1024
  %v2309 = vpop.f32.mrf.mxu0
  %v2310 = vadd.f32 %v1981, %v2309
  %v2311 = vpop.f32.mrf.mxu0
  %v2312 = vadd.f32 %v1983, %v2311
  %2313 = vmatmul.bf16.gmra.mxu0 %v1027
  %v2314 = vpop.f32.mrf.mxu0
  %v2315 = vadd.f32 %v1986, %v2314
  %v2316 = vpop.f32.mrf.mxu0
  %v2317 = vadd.f32 %v1988, %v2316
  %2318 = vmatmul.bf16.gmra.mxu0 %v1030
  %v2319 = vpop.f32.mrf.mxu0
  %v2320 = vadd.f32 %v1991, %v2319
  %v2321 = vpop.f32.mrf.mxu0
  %v2322 = vadd.f32 %v1993, %v2321
  %2323 = vmatmul.bf16.gmra.mxu0 %v1033
  %v2324 = vpop.f32.mrf.mxu0
  %v2325 = vadd.f32 %v1996, %v2324
  %v2326 = vpop.f32.mrf.mxu0
  %v2327 = vadd.f32 %v1998, %v2326
  %2328 = vmatmul.bf16.gmra.mxu0 %v1036
  %v2329 = vpop.f32.mrf.mxu0
  %v2330 = vadd.f32 %v2001, %v2329
  %v2331 = vpop.f32.mrf.mxu0
  %v2332 = vadd.f32 %v2003, %v2331
  %2333 = vmatmul.bf16.gmra.mxu0 %v1039
  %v2334 = vpop.f32.mrf.mxu0
  %v2335 = vadd.f32 %v2006, %v2334
  %v2336 = vpop.f32.mrf.mxu0
  %v2337 = vadd.f32 %v2008, %v2336
  %2338 = vmatmul.bf16.gmra.mxu0 %v1042
  %v2339 = vpop.f32.mrf.mxu0
  %v2340 = vadd.f32 %v2011, %v2339
  %v2341 = vpop.f32.mrf.mxu0
  %v2342 = vadd.f32 %v2013, %v2341
  %2343 = vmatmul.bf16.gmra.mxu0 %v1045
  %v2344 = vpop.f32.mrf.mxu0
  %v2345 = vadd.f32 %v2016, %v2344
  %v2346 = vpop.f32.mrf.mxu0
  %v2347 = vadd.f32 %v2018, %v2346
  %2348 = vmatmul.bf16.gmra.mxu0 %v1048
  %v2349 = vpop.f32.mrf.mxu0
  %v2350 = vadd.f32 %v2021, %v2349
  %v2351 = vpop.f32.mrf.mxu0
  %v2352 = vadd.f32 %v2023, %v2351
  %2353 = vmatmul.bf16.gmra.mxu0 %v1051
  %v2354 = vpop.f32.mrf.mxu0
  %v2355 = vadd.f32 %v2026, %v2354
  %v2356 = vpop.f32.mrf.mxu0
  %v2357 = vadd.f32 %v2028, %v2356
  %2358 = vmatmul.bf16.gmra.mxu0 %v1054
  %v2359 = vpop.f32.mrf.mxu0
  %v2360 = vadd.f32 %v2031, %v2359
  %v2361 = vpop.f32.mrf.mxu0
  %v2362 = vadd.f32 %v2033, %v2361
  %2363 = vmatmul.bf16.gmra.mxu0 %v1057
  %v2364 = vpop.f32.mrf.mxu0
  %v2365 = vadd.f32 %v2036, %v2364
  %v2366 = vpop.f32.mrf.mxu0
  %v2367 = vadd.f32 %v2038, %v2366
  %2368 = vmatmul.bf16.gmra.mxu0 %v1060
  %v2369 = vpop.f32.mrf.mxu0
  %v2370 = vadd.f32 %v2041, %v2369
  %v2371 = vpop.f32.mrf.mxu0
  %v2372 = vadd.f32 %v2043, %v2371
  %2373 = vmatmul.bf16.gmra.mxu0 %v1063
  %v2374 = vpop.f32.mrf.mxu0
  %v2375 = vadd.f32 %v2046, %v2374
  %v2376 = vpop.f32.mrf.mxu0
  %v2377 = vadd.f32 %v2048, %v2376
  %2378 = vmatmul.bf16.gmra.mxu0 %v1066
  %v2379 = vpop.f32.mrf.mxu0
  %v2380 = vadd.f32 %v2051, %v2379
  %v2381 = vpop.f32.mrf.mxu0
  %v2382 = vadd.f32 %v2053, %v2381
  %2383 = vdwg.mxu0
  %v2384 = vmax.f32 %v1407, 0.0
  %v2385 = vmax.f32 %v2065, 0.0
  %v2386 = vmax.f32 %v1409, 0.0
  %v2387 = vmax.f32 %v2067, 0.0
  %v2388 = vmax.f32 %v1412, 0.0
  %v2389 = vmax.f32 %v2070, 0.0
  %v2390 = vmax.f32 %v1414, 0.0
  %v2391 = vmax.f32 %v2072, 0.0
  %v2392 = vmax.f32 %v1417, 0.0
  %v2393 = vmax.f32 %v2075, 0.0
  %v2394 = vmax.f32 %v1419, 0.0
  %v2395 = vmax.f32 %v2077, 0.0
  %v2396 = vmax.f32 %v1422, 0.0
  %v2397 = vmax.f32 %v2080, 0.0
  %v2398 = vmax.f32 %v1424, 0.0
  %v2399 = vmax.f32 %v2082, 0.0
  %v2400 = vmax.f32 %v1427, 0.0
  %v2401 = vmax.f32 %v2085, 0.0
  %v2402 = vmax.f32 %v1429, 0.0
  %v2403 = vmax.f32 %v2087, 0.0
  %v2404 = vmax.f32 %v1432, 0.0
  %v2405 = vmax.f32 %v2090, 0.0
  %v2406 = vmax.f32 %v1434, 0.0
  %v2407 = vmax.f32 %v2092, 0.0
  %v2408 = vmax.f32 %v1437, 0.0
  %v2409 = vmax.f32 %v2095, 0.0
  %v2410 = vmax.f32 %v1439, 0.0
  %v2411 = vmax.f32 %v2097, 0.0
  %v2412 = vmax.f32 %v1442, 0.0
  %v2413 = vmax.f32 %v2100, 0.0
  %v2414 = vmax.f32 %v1444, 0.0
  %v2415 = vmax.f32 %v2102, 0.0
  %v2416 = vmax.f32 %v1447, 0.0
  %v2417 = vmax.f32 %v2105, 0.0
  %v2418 = vmax.f32 %v1449, 0.0
  %v2419 = vmax.f32 %v2107, 0.0
  %v2420 = vmax.f32 %v1452, 0.0
  %v2421 = vmax.f32 %v2110, 0.0
  %v2422 = vmax.f32 %v1454, 0.0
  %v2423 = vmax.f32 %v2112, 0.0
  %v2424 = vmax.f32 %v1457, 0.0
  %v2425 = vmax.f32 %v2115, 0.0
  %v2426 = vmax.f32 %v1459, 0.0
  %v2427 = vmax.f32 %v2117, 0.0
  %v2428 = vmax.f32 %v1462, 0.0
  %v2429 = vmax.f32 %v2120, 0.0
  %v2430 = vmax.f32 %v1464, 0.0
  %v2431 = vmax.f32 %v2122, 0.0
  %v2432 = vmax.f32 %v1467, 0.0
  %v2433 = vmax.f32 %v2125, 0.0
  %v2434 = vmax.f32 %v1469, 0.0
  %v2435 = vmax.f32 %v2127, 0.0
  %v2436 = vmax.f32 %v1472, 0.0
  %v2437 = vmax.f32 %v2130, 0.0
  %v2438 = vmax.f32 %v1474, 0.0
  %v2439 = vmax.f32 %v2132, 0.0
  %v2440 = vmax.f32 %v1477, 0.0
  %v2441 = vmax.f32 %v2135, 0.0
  %v2442 = vmax.f32 %v1479, 0.0
  %v2443 = vmax.f32 %v2137, 0.0
  %v2444 = vmax.f32 %v1482, 0.0
  %v2445 = vmax.f32 %v2140, 0.0
  %v2446 = vmax.f32 %v1484, 0.0
  %v2447 = vmax.f32 %v2142, 0.0
  %v2448 = vmax.f32 %v1487, 0.0
  %v2449 = vmax.f32 %v2145, 0.0
  %v2450 = vmax.f32 %v1489, 0.0
  %v2451 = vmax.f32 %v2147, 0.0
  %v2452 = vmax.f32 %v1492, 0.0
  %v2453 = vmax.f32 %v2150, 0.0
  %v2454 = vmax.f32 %v1494, 0.0
  %v2455 = vmax.f32 %v2152, 0.0
  %v2456 = vmax.f32 %v1497, 0.0
  %v2457 = vmax.f32 %v2155, 0.0
  %v2458 = vmax.f32 %v1499, 0.0
  %v2459 = vmax.f32 %v2157, 0.0
  %v2460 = vmax.f32 %v1502, 0.0
  %v2461 = vmax.f32 %v2160, 0.0
  %v2462 = vmax.f32 %v1504, 0.0
  %v2463 = vmax.f32 %v2162, 0.0
  %v2464 = vmax.f32 %v1507, 0.0
  %v2465 = vmax.f32 %v2165, 0.0
  %v2466 = vmax.f32 %v1509, 0.0
  %v2467 = vmax.f32 %v2167, 0.0
  %v2468 = vmax.f32 %v1512, 0.0
  %v2469 = vmax.f32 %v2170, 0.0
  %v2470 = vmax.f32 %v1514, 0.0
  %v2471 = vmax.f32 %v2172, 0.0
  %v2472 = vmax.f32 %v1517, 0.0
  %v2473 = vmax.f32 %v2175, 0.0
  %v2474 = vmax.f32 %v1519, 0.0
  %v2475 = vmax.f32 %v2177, 0.0
  %v2476 = vmax.f32 %v1522, 0.0
  %v2477 = vmax.f32 %v2180, 0.0
  %v2478 = vmax.f32 %v1524, 0.0
  %v2479 = vmax.f32 %v2182, 0.0
  %v2480 = vmax.f32 %v1527, 0.0
  %v2481 = vmax.f32 %v2185, 0.0
  %v2482 = vmax.f32 %v1529, 0.0
  %v2483 = vmax.f32 %v2187, 0.0
  %v2484 = vmax.f32 %v1532, 0.0
  %v2485 = vmax.f32 %v2190, 0.0
  %v2486 = vmax.f32 %v1534, 0.0
  %v2487 = vmax.f32 %v2192, 0.0
  %v2488 = vmax.f32 %v1537, 0.0
  %v2489 = vmax.f32 %v2195, 0.0
  %v2490 = vmax.f32 %v1539, 0.0
  %v2491 = vmax.f32 %v2197, 0.0
  %v2492 = vmax.f32 %v1542, 0.0
  %v2493 = vmax.f32 %v2200, 0.0
  %v2494 = vmax.f32 %v1544, 0.0
  %v2495 = vmax.f32 %v2202, 0.0
  %v2496 = vmax.f32 %v1547, 0.0
  %v2497 = vmax.f32 %v2205, 0.0
  %v2498 = vmax.f32 %v1549, 0.0
  %v2499 = vmax.f32 %v2207, 0.0
  %v2500 = vmax.f32 %v1552, 0.0
  %v2501 = vmax.f32 %v2210, 0.0
  %v2502 = vmax.f32 %v1554, 0.0
  %v2503 = vmax.f32 %v2212, 0.0
  %v2504 = vmax.f32 %v1557, 0.0
  %v2505 = vmax.f32 %v2215, 0.0
  %v2506 = vmax.f32 %v1559, 0.0
  %v2507 = vmax.f32 %v2217, 0.0
  %v2508 = vmax.f32 %v1562, 0.0
  %v2509 = vmax.f32 %v2220, 0.0
  %v2510 = vmax.f32 %v1564, 0.0
  %v2511 = vmax.f32 %v2222, 0.0
  %v2512 = vmax.f32 %v1567, 0.0
  %v2513 = vmax.f32 %v2225, 0.0
  %v2514 = vmax.f32 %v1569, 0.0
  %v2515 = vmax.f32 %v2227, 0.0
  %v2516 = vmax.f32 %v1572, 0.0
  %v2517 = vmax.f32 %v2230, 0.0
  %v2518 = vmax.f32 %v1574, 0.0
  %v2519 = vmax.f32 %v2232, 0.0
  %v2520 = vmax.f32 %v1577, 0.0
  %v2521 = vmax.f32 %v2235, 0.0
  %v2522 = vmax.f32 %v1579, 0.0
  %v2523 = vmax.f32 %v2237, 0.0
  %v2524 = vmax.f32 %v1582, 0.0
  %v2525 = vmax.f32 %v2240, 0.0
  %v2526 = vmax.f32 %v1584, 0.0
  %v2527 = vmax.f32 %v2242, 0.0
  %v2528 = vmax.f32 %v1587, 0.0
  %v2529 = vmax.f32 %v2245, 0.0
  %v2530 = vmax.f32 %v1589, 0.0
  %v2531 = vmax.f32 %v2247, 0.0
  %v2532 = vmax.f32 %v1592, 0.0
  %v2533 = vmax.f32 %v2250, 0.0
  %v2534 = vmax.f32 %v1594, 0.0
  %v2535 = vmax.f32 %v2252, 0.0
  %v2536 = vmax.f32 %v1597, 0.0
  %v2537 = vmax.f32 %v2255, 0.0
  %v2538 = vmax.f32 %v1599, 0.0
  %v2539 = vmax.f32 %v2257, 0.0
  %v2540 = vmax.f32 %v1602, 0.0
  %v2541 = vmax.f32 %v2260, 0.0
  %v2542 = vmax.f32 %v1604, 0.0
  %v2543 = vmax.f32 %v2262, 0.0
  %v2544 = vmax.f32 %v1607, 0.0
  %v2545 = vmax.f32 %v2265, 0.0
  %v2546 = vmax.f32 %v1609, 0.0
  %v2547 = vmax.f32 %v2267, 0.0
  %v2548 = vmax.f32 %v1612, 0.0
  %v2549 = vmax.f32 %v2270, 0.0
  %v2550 = vmax.f32 %v1614, 0.0
  %v2551 = vmax.f32 %v2272, 0.0
  %v2552 = vmax.f32 %v1617, 0.0
  %v2553 = vmax.f32 %v2275, 0.0
  %v2554 = vmax.f32 %v1619, 0.0
  %v2555 = vmax.f32 %v2277, 0.0
  %v2556 = vmax.f32 %v1622, 0.0
  %v2557 = vmax.f32 %v2280, 0.0
  %v2558 = vmax.f32 %v1624, 0.0
  %v2559 = vmax.f32 %v2282, 0.0
  %v2560 = vmax.f32 %v1627, 0.0
  %v2561 = vmax.f32 %v2285, 0.0
  %v2562 = vmax.f32 %v1629, 0.0
  %v2563 = vmax.f32 %v2287, 0.0
  %v2564 = vmax.f32 %v1632, 0.0
  %v2565 = vmax.f32 %v2290, 0.0
  %v2566 = vmax.f32 %v1634, 0.0
  %v2567 = vmax.f32 %v2292, 0.0
  %v2568 = vmax.f32 %v1637, 0.0
  %v2569 = vmax.f32 %v2295, 0.0
  %v2570 = vmax.f32 %v1639, 0.0
  %v2571 = vmax.f32 %v2297, 0.0
  %v2572 = vmax.f32 %v1642, 0.0
  %v2573 = vmax.f32 %v2300, 0.0
  %v2574 = vmax.f32 %v1644, 0.0
  %v2575 = vmax.f32 %v2302, 0.0
  %v2576 = vmax.f32 %v1647, 0.0
  %v2577 = vmax.f32 %v2305, 0.0
  %v2578 = vmax.f32 %v1649, 0.0
  %v2579 = vmax.f32 %v2307, 0.0
  %v2580 = vmax.f32 %v1652, 0.0
  %v2581 = vmax.f32 %v2310, 0.0
  %v2582 = vmax.f32 %v1654, 0.0
  %v2583 = vmax.f32 %v2312, 0.0
  %v2584 = vmax.f32 %v1657, 0.0
  %v2585 = vmax.f32 %v2315, 0.0
  %v2586 = vmax.f32 %v1659, 0.0
  %v2587 = vmax.f32 %v2317, 0.0
  %v2588 = vmax.f32 %v1662, 0.0
  %v2589 = vmax.f32 %v2320, 0.0
  %v2590 = vmax.f32 %v1664, 0.0
  %v2591 = vmax.f32 %v2322, 0.0
  %v2592 = vmax.f32 %v1667, 0.0
  %v2593 = vmax.f32 %v2325, 0.0
  %v2594 = vmax.f32 %v1669, 0.0
  %v2595 = vmax.f32 %v2327, 0.0
  %v2596 = vmax.f32 %v1672, 0.0
  %v2597 = vmax.f32 %v2330, 0.0
  %v2598 = vmax.f32 %v1674, 0.0
  %v2599 = vmax.f32 %v2332, 0.0
  %v2600 = vmax.f32 %v1677, 0.0
  %v2601 = vmax.f32 %v2335, 0.0
  %v2602 = vmax.f32 %v1679, 0.0
  %v2603 = vmax.f32 %v2337, 0.0
  %v2604 = vmax.f32 %v1682, 0.0
  %v2605 = vmax.f32 %v2340, 0.0
  %v2606 = vmax.f32 %v1684, 0.0
  %v2607 = vmax.f32 %v2342, 0.0
  %v2608 = vmax.f32 %v1687, 0.0
  %v2609 = vmax.f32 %v2345, 0.0
  %v2610 = vmax.f32 %v1689, 0.0
  %v2611 = vmax.f32 %v2347, 0.0
  %v2612 = vmax.f32 %v1692, 0.0
  %v2613 = vmax.f32 %v2350, 0.0
  %v2614 = vmax.f32 %v1694, 0.0
  %v2615 = vmax.f32 %v2352, 0.0
  %v2616 = vmax.f32 %v1697, 0.0
  %v2617 = vmax.f32 %v2355, 0.0
  %v2618 = vmax.f32 %v1699, 0.0
  %v2619 = vmax.f32 %v2357, 0.0
  %v2620 = vmax.f32 %v1702, 0.0
  %v2621 = vmax.f32 %v2360, 0.0
  %v2622 = vmax.f32 %v1704, 0.0
  %v2623 = vmax.f32 %v2362, 0.0
  %v2624 = vmax.f32 %v1707, 0.0
  %v2625 = vmax.f32 %v2365, 0.0
  %v2626 = vmax.f32 %v1709, 0.0
  %v2627 = vmax.f32 %v2367, 0.0
  %v2628 = vmax.f32 %v1712, 0.0
  %v2629 = vmax.f32 %v2370, 0.0
  %v2630 = vmax.f32 %v1714, 0.0
  %v2631 = vmax.f32 %v2372, 0.0
  %v2632 = vmax.f32 %v1717, 0.0
  %v2633 = vmax.f32 %v2375, 0.0
  %v2634 = vmax.f32 %v1719, 0.0
  %v2635 = vmax.f32 %v2377, 0.0
  %v2636 = vmax.f32 %v1722, 0.0
  %v2637 = vmax.f32 %v2380, 0.0
  %v2638 = vmax.f32 %v1724, 0.0
  %v2639 = vmax.f32 %v2382, 0.0
  %v2640 = vpack.c.bf16 %v2386, %v2384
  %v2641 = vpack.c.bf16 %v2387, %v2385
  %v2642 = vpack.c.bf16 %v2390, %v2388
  %v2643 = vpack.c.bf16 %v2391, %v2389
  %v2644 = vpack.c.bf16 %v2394, %v2392
  %v2645 = vpack.c.bf16 %v2395, %v2393
  %v2646 = vpack.c.bf16 %v2398, %v2396
  %v2647 = vpack.c.bf16 %v2399, %v2397
  %v2648 = vpack.c.bf16 %v2402, %v2400
  %v2649 = vpack.c.bf16 %v2403, %v2401
  %v2650 = vpack.c.bf16 %v2406, %v2404
  %v2651 = vpack.c.bf16 %v2407, %v2405
  %v2652 = vpack.c.bf16 %v2410, %v2408
  %v2653 = vpack.c.bf16 %v2411, %v2409
  %v2654 = vpack.c.bf16 %v2414, %v2412
  %v2655 = vpack.c.bf16 %v2415, %v2413
  %v2656 = vpack.c.bf16 %v2418, %v2416
  %v2657 = vpack.c.bf16 %v2419, %v2417
  %v2658 = vpack.c.bf16 %v2422, %v2420
  %v2659 = vpack.c.bf16 %v2423, %v2421
  %v2660 = vpack.c.bf16 %v2426, %v2424
  %v2661 = vpack.c.bf16 %v2427, %v2425
  %v2662 = vpack.c.bf16 %v2430, %v2428
  %v2663 = vpack.c.bf16 %v2431, %v2429
  %v2664 = vpack.c.bf16 %v2434, %v2432
  %v2665 = vpack.c.bf16 %v2435, %v2433
  %v2666 = vpack.c.bf16 %v2438, %v2436
  %v2667 = vpack.c.bf16 %v2439, %v2437
  %v2668 = vpack.c.bf16 %v2442, %v2440
  %v2669 = vpack.c.bf16 %v2443, %v2441
  %v2670 = vpack.c.bf16 %v2446, %v2444
  %v2671 = vpack.c.bf16 %v2447, %v2445
  %v2672 = vpack.c.bf16 %v2450, %v2448
  %v2673 = vpack.c.bf16 %v2451, %v2449
  %v2674 = vpack.c.bf16 %v2454, %v2452
  %v2675 = vpack.c.bf16 %v2455, %v2453
  %v2676 = vpack.c.bf16 %v2458, %v2456
  %v2677 = vpack.c.bf16 %v2459, %v2457
  %v2678 = vpack.c.bf16 %v2462, %v2460
  %v2679 = vpack.c.bf16 %v2463, %v2461
  %v2680 = vpack.c.bf16 %v2466, %v2464
  %v2681 = vpack.c.bf16 %v2467, %v2465
  %v2682 = vpack.c.bf16 %v2470, %v2468
  %v2683 = vpack.c.bf16 %v2471, %v2469
  %v2684 = vpack.c.bf16 %v2474, %v2472
  %v2685 = vpack.c.bf16 %v2475, %v2473
  %v2686 = vpack.c.bf16 %v2478, %v2476
  %v2687 = vpack.c.bf16 %v2479, %v2477
  %v2688 = vpack.c.bf16 %v2482, %v2480
  %v2689 = vpack.c.bf16 %v2483, %v2481
  %v2690 = vpack.c.bf16 %v2486, %v2484
  %v2691 = vpack.c.bf16 %v2487, %v2485
  %v2692 = vpack.c.bf16 %v2490, %v2488
  %v2693 = vpack.c.bf16 %v2491, %v2489
  %v2694 = vpack.c.bf16 %v2494, %v2492
  %v2695 = vpack.c.bf16 %v2495, %v2493
  %v2696 = vpack.c.bf16 %v2498, %v2496
  %v2697 = vpack.c.bf16 %v2499, %v2497
  %v2698 = vpack.c.bf16 %v2502, %v2500
  %v2699 = vpack.c.bf16 %v2503, %v2501
  %v2700 = vpack.c.bf16 %v2506, %v2504
  %v2701 = vpack.c.bf16 %v2507, %v2505
  %v2702 = vpack.c.bf16 %v2510, %v2508
  %v2703 = vpack.c.bf16 %v2511, %v2509
  %v2704 = vpack.c.bf16 %v2514, %v2512
  %v2705 = vpack.c.bf16 %v2515, %v2513
  %v2706 = vpack.c.bf16 %v2518, %v2516
  %v2707 = vpack.c.bf16 %v2519, %v2517
  %v2708 = vpack.c.bf16 %v2522, %v2520
  %v2709 = vpack.c.bf16 %v2523, %v2521
  %v2710 = vpack.c.bf16 %v2526, %v2524
  %v2711 = vpack.c.bf16 %v2527, %v2525
  %v2712 = vpack.c.bf16 %v2530, %v2528
  %v2713 = vpack.c.bf16 %v2531, %v2529
  %v2714 = vpack.c.bf16 %v2534, %v2532
  %v2715 = vpack.c.bf16 %v2535, %v2533
  %v2716 = vpack.c.bf16 %v2538, %v2536
  %v2717 = vpack.c.bf16 %v2539, %v2537
  %v2718 = vpack.c.bf16 %v2542, %v2540
  %v2719 = vpack.c.bf16 %v2543, %v2541
  %v2720 = vpack.c.bf16 %v2546, %v2544
  %v2721 = vpack.c.bf16 %v2547, %v2545
  %v2722 = vpack.c.bf16 %v2550, %v2548
  %v2723 = vpack.c.bf16 %v2551, %v2549
  %v2724 = vpack.c.bf16 %v2554, %v2552
  %v2725 = vpack.c.bf16 %v2555, %v2553
  %v2726 = vpack.c.bf16 %v2558, %v2556
  %v2727 = vpack.c.bf16 %v2559, %v2557
  %v2728 = vpack.c.bf16 %v2562, %v2560
  %v2729 = vpack.c.bf16 %v2563, %v2561
  %v2730 = vpack.c.bf16 %v2566, %v2564
  %v2731 = vpack.c.bf16 %v2567, %v2565
  %v2732 = vpack.c.bf16 %v2570, %v2568
  %v2733 = vpack.c.bf16 %v2571, %v2569
  %v2734 = vpack.c.bf16 %v2574, %v2572
  %v2735 = vpack.c.bf16 %v2575, %v2573
  %v2736 = vpack.c.bf16 %v2578, %v2576
  %v2737 = vpack.c.bf16 %v2579, %v2577
  %v2738 = vpack.c.bf16 %v2582, %v2580
  %v2739 = vpack.c.bf16 %v2583, %v2581
  %v2740 = vpack.c.bf16 %v2586, %v2584
  %v2741 = vpack.c.bf16 %v2587, %v2585
  %v2742 = vpack.c.bf16 %v2590, %v2588
  %v2743 = vpack.c.bf16 %v2591, %v2589
  %v2744 = vpack.c.bf16 %v2594, %v2592
  %v2745 = vpack.c.bf16 %v2595, %v2593
  %v2746 = vpack.c.bf16 %v2598, %v2596
  %v2747 = vpack.c.bf16 %v2599, %v2597
  %v2748 = vpack.c.bf16 %v2602, %v2600
  %v2749 = vpack.c.bf16 %v2603, %v2601
  %v2750 = vpack.c.bf16 %v2606, %v2604
  %v2751 = vpack.c.bf16 %v2607, %v2605
  %v2752 = vpack.c.bf16 %v2610, %v2608
  %v2753 = vpack.c.bf16 %v2611, %v2609
  %v2754 = vpack.c.bf16 %v2614, %v2612
  %v2755 = vpack.c.bf16 %v2615, %v2613
  %v2756 = vpack.c.bf16 %v2618, %v2616
  %v2757 = vpack.c.bf16 %v2619, %v2617
  %v2758 = vpack.c.bf16 %v2622, %v2620
  %v2759 = vpack.c.bf16 %v2623, %v2621
  %v2760 = vpack.c.bf16 %v2626, %v2624
  %v2761 = vpack.c.bf16 %v2627, %v2625
  %v2762 = vpack.c.bf16 %v2630, %v2628
  %v2763 = vpack.c.bf16 %v2631, %v2629
  %v2764 = vpack.c.bf16 %v2634, %v2632
  %v2765 = vpack.c.bf16 %v2635, %v2633
  %v2766 = vpack.c.bf16 %v2638, %v2636
  %v2767 = vpack.c.bf16 %v2639, %v2637
  %v2768 = vld [vmem:[%s3] sm:$0xf]
  %v2769 = vld [vmem:[%s3 + $0x4] sm:$0xf]
  %v2770 = vld [vmem:[%s3 + $0x8] sm:$0xf]
  %v2771 = vld [vmem:[%s3 + $0xc] sm:$0xf]
  %v2772 = vld [vmem:[%s3 + $0x10] sm:$0xf]
  %v2773 = vld [vmem:[%s3 + $0x14] sm:$0xf]
  %v2774 = vld [vmem:[%s3 + $0x18] sm:$0xf]
  %v2775 = vld [vmem:[%s3 + $0x1c] sm:$0xf]
  %v2776 = vld [vmem:[%s3 + $0x20] sm:$0xf]
  %v2777 = vld [vmem:[%s3 + $0x24] sm:$0xf]
  %v2778 = vld [vmem:[%s3 + $0x28] sm:$0xf]
  %v2779 = vld [vmem:[%s3 + $0x2c] sm:$0xf]
  %v2780 = vld [vmem:[%s3 + $0x30] sm:$0xf]
  %v2781 = vld [vmem:[%s3 + $0x34] sm:$0xf]
  %v2782 = vld [vmem:[%s3 + $0x38] sm:$0xf]
  %v2783 = vld [vmem:[%s3 + $0x3c] sm:$0xf]
  %v2784 = vld [vmem:[%s3 + $0x40] sm:$0xf]
  %v2785 = vld [vmem:[%s3 + $0x44] sm:$0xf]
  %v2786 = vld [vmem:[%s3 + $0x48] sm:$0xf]
  %v2787 = vld [vmem:[%s3 + $0x4c] sm:$0xf]
  %v2788 = vld [vmem:[%s3 + $0x50] sm:$0xf]
  %v2810 = vunpack.c.l.b16 %v2768
  %v2811 = vunpack.c.l.b16 %v2769
  %v2812 = vunpack.c.l.b16 %v2770
  %v2813 = vunpack.c.l.b16 %v2771
  %v2814 = vunpack.c.l.b16 %v2772
  %v2815 = vunpack.c.l.b16 %v2773
  %v2816 = vunpack.c.l.b16 %v2774
  %v2817 = vunpack.c.l.b16 %v2775
  %v2818 = vunpack.c.l.b16 %v2776
  %v2819 = vunpack.c.l.b16 %v2777
  %v2820 = vunpack.c.l.b16 %v2778
  %v2821 = vunpack.c.l.b16 %v2779
  %v2822 = vunpack.c.l.b16 %v2780
  %v2823 = vunpack.c.l.b16 %v2781
  %v2824 = vunpack.c.l.b16 %v2782
  %v2825 = vunpack.c.l.b16 %v2783
  %v2826 = vunpack.c.l.b16 %v2784
  %v2827 = vunpack.c.l.b16 %v2785
  %v2828 = vunpack.c.l.b16 %v2786
  %v2829 = vunpack.c.l.b16 %v2787
  %v2830 = vunpack.c.l.b16 %v2788
  %v2831 = vpack.c.b16 %v2811, %v2810
  %v2832 = vpack.c.b16 %v2813, %v2812
  %v2833 = vpack.c.b16 %v2815, %v2814
  %v2834 = vpack.c.b16 %v2817, %v2816
  %v2835 = vpack.c.b16 %v2819, %v2818
  %v2836 = vpack.c.b16 %v2821, %v2820
  %v2837 = vpack.c.b16 %v2823, %v2822
  %v2838 = vpack.c.b16 %v2825, %v2824
  %v2839 = vpack.c.b16 %v2827, %v2826
  %v2840 = vpack.c.b16 %v2829, %v2828
  %v2841 = vpack.c.b16 %v2830, %v2830
  %vm2852 = vcmask 326656
  %v2854 = vsel %vm2852, %v2641, 0
  %v2857 = vsel %vm2852, %v2643, 0
  %v2860 = vsel %vm2852, %v2645, 0
  %v2863 = vsel %vm2852, %v2647, 0
  %v2866 = vsel %vm2852, %v2649, 0
  %v2869 = vsel %vm2852, %v2651, 0
  %v2872 = vsel %vm2852, %v2653, 0
  %v2875 = vsel %vm2852, %v2655, 0
  %v2878 = vsel %vm2852, %v2657, 0
  %v2881 = vsel %vm2852, %v2659, 0
  %v2884 = vsel %vm2852, %v2661, 0
  %v2887 = vsel %vm2852, %v2663, 0
  %v2890 = vsel %vm2852, %v2665, 0
  %v2893 = vsel %vm2852, %v2667, 0
  %v2896 = vsel %vm2852, %v2669, 0
  %v2899 = vsel %vm2852, %v2671, 0
  %v2902 = vsel %vm2852, %v2673, 0
  %v2905 = vsel %vm2852, %v2675, 0
  %v2908 = vsel %vm2852, %v2677, 0
  %v2911 = vsel %vm2852, %v2679, 0
  %v2914 = vsel %vm2852, %v2681, 0
  %v2917 = vsel %vm2852, %v2683, 0
  %v2920 = vsel %vm2852, %v2685, 0
  %v2923 = vsel %vm2852, %v2687, 0
  %v2926 = vsel %vm2852, %v2689, 0
  %v2929 = vsel %vm2852, %v2691, 0
  %v2932 = vsel %vm2852, %v2693, 0
  %v2935 = vsel %vm2852, %v2695, 0
  %v2938 = vsel %vm2852, %v2697, 0
  %v2941 = vsel %vm2852, %v2699, 0
  %v2944 = vsel %vm2852, %v2701, 0
  %v2947 = vsel %vm2852, %v2703, 0
  %v2950 = vsel %vm2852, %v2705, 0
  %v2953 = vsel %vm2852, %v2707, 0
  %v2956 = vsel %vm2852, %v2709, 0
  %v2959 = vsel %vm2852, %v2711, 0
  %v2962 = vsel %vm2852, %v2713, 0
  %v2965 = vsel %vm2852, %v2715, 0
  %v2968 = vsel %vm2852, %v2717, 0
  %v2971 = vsel %vm2852, %v2719, 0
  %v2974 = vsel %vm2852, %v2721, 0
  %v2977 = vsel %vm2852, %v2723, 0
  %v2980 = vsel %vm2852, %v2725, 0
  %v2983 = vsel %vm2852, %v2727, 0
  %v2986 = vsel %vm2852, %v2729, 0
  %v2989 = vsel %vm2852, %v2731, 0
  %v2992 = vsel %vm2852, %v2733, 0
  %v2995 = vsel %vm2852, %v2735, 0
  %v2998 = vsel %vm2852, %v2737, 0
  %v3001 = vsel %vm2852, %v2739, 0
  %v3004 = vsel %vm2852, %v2741, 0
  %v3007 = vsel %vm2852, %v2743, 0
  %v3010 = vsel %vm2852, %v2745, 0
  %v3013 = vsel %vm2852, %v2747, 0
  %v3016 = vsel %vm2852, %v2749, 0
  %v3019 = vsel %vm2852, %v2751, 0
  %v3022 = vsel %vm2852, %v2753, 0
  %v3025 = vsel %vm2852, %v2755, 0
  %v3028 = vsel %vm2852, %v2757, 0
  %v3031 = vsel %vm2852, %v2759, 0
  %v3034 = vsel %vm2852, %v2761, 0
  %v3037 = vsel %vm2852, %v2763, 0
  %v3040 = vsel %vm2852, %v2765, 0
  %v3043 = vsel %vm2852, %v2767, 0
  %vm3045 = vcmask 1043456
  %v3047 = vsel %vm3045, %v2841, 0
  %3049 = vmatpush.bf16.msra.mxu0 %v2838
  %3050 = vmatpush.bf16.msra.mxu0 %v2837
  %3051 = vmatpush.bf16.msra.mxu0 %v2836
  %3052 = vmatpush.bf16.msra.mxu0 %v2835
  %3053 = vmatpush.bf16.msra.mxu0 %v2834
  %3054 = vmatpush.bf16.msra.mxu0 %v2833
  %3055 = vmatpush.bf16.msra.mxu0 %v2832
  %3056 = vmatpush.bf16.msra.mxu0 %v2831
  %3057 = vmatmul.bf16.gmra.mxu0 %v2640
  %v3058 = vpop.f32.mrf.mxu0
  %v3059 = vadd.f32 0.0, %v3058
  %v3060 = vpop.f32.mrf.mxu0
  %v3061 = vadd.f32 0.0, %v3060
  %3062 = vmatmul.bf16.gmra.mxu0 %v2642
  %v3063 = vpop.f32.mrf.mxu0
  %v3064 = vadd.f32 0.0, %v3063
  %v3065 = vpop.f32.mrf.mxu0
  %v3066 = vadd.f32 0.0, %v3065
  %3067 = vmatmul.bf16.gmra.mxu0 %v2644
  %v3068 = vpop.f32.mrf.mxu0
  %v3069 = vadd.f32 0.0, %v3068
  %v3070 = vpop.f32.mrf.mxu0
  %v3071 = vadd.f32 0.0, %v3070
  %3072 = vmatmul.bf16.gmra.mxu0 %v2646
  %v3073 = vpop.f32.mrf.mxu0
  %v3074 = vadd.f32 0.0, %v3073
  %v3075 = vpop.f32.mrf.mxu0
  %v3076 = vadd.f32 0.0, %v3075
  %3077 = vmatmul.bf16.gmra.mxu0 %v2648
  %v3078 = vpop.f32.mrf.mxu0
  %v3079 = vadd.f32 0.0, %v3078
  %v3080 = vpop.f32.mrf.mxu0
  %v3081 = vadd.f32 0.0, %v3080
  %3082 = vmatmul.bf16.gmra.mxu0 %v2650
  %v3083 = vpop.f32.mrf.mxu0
  %v3084 = vadd.f32 0.0, %v3083
  %v3085 = vpop.f32.mrf.mxu0
  %v3086 = vadd.f32 0.0, %v3085
  %3087 = vmatmul.bf16.gmra.mxu0 %v2652
  %v3088 = vpop.f32.mrf.mxu0
  %v3089 = vadd.f32 0.0, %v3088
  %v3090 = vpop.f32.mrf.mxu0
  %v3091 = vadd.f32 0.0, %v3090
  %3092 = vmatmul.bf16.gmra.mxu0 %v2654
  %v3093 = vpop.f32.mrf.mxu0
  %v3094 = vadd.f32 0.0, %v3093
  %v3095 = vpop.f32.mrf.mxu0
  %v3096 = vadd.f32 0.0, %v3095
  %3097 = vmatmul.bf16.gmra.mxu0 %v2656
  %v3098 = vpop.f32.mrf.mxu0
  %v3099 = vadd.f32 0.0, %v3098
  %v3100 = vpop.f32.mrf.mxu0
  %v3101 = vadd.f32 0.0, %v3100
  %3102 = vmatmul.bf16.gmra.mxu0 %v2658
  %v3103 = vpop.f32.mrf.mxu0
  %v3104 = vadd.f32 0.0, %v3103
  %v3105 = vpop.f32.mrf.mxu0
  %v3106 = vadd.f32 0.0, %v3105
  %3107 = vmatmul.bf16.gmra.mxu0 %v2660
  %v3108 = vpop.f32.mrf.mxu0
  %v3109 = vadd.f32 0.0, %v3108
  %v3110 = vpop.f32.mrf.mxu0
  %v3111 = vadd.f32 0.0, %v3110
  %3112 = vmatmul.bf16.gmra.mxu0 %v2662
  %v3113 = vpop.f32.mrf.mxu0
  %v3114 = vadd.f32 0.0, %v3113
  %v3115 = vpop.f32.mrf.mxu0
  %v3116 = vadd.f32 0.0, %v3115
  %3117 = vmatmul.bf16.gmra.mxu0 %v2664
  %v3118 = vpop.f32.mrf.mxu0
  %v3119 = vadd.f32 0.0, %v3118
  %v3120 = vpop.f32.mrf.mxu0
  %v3121 = vadd.f32 0.0, %v3120
  %3122 = vmatmul.bf16.gmra.mxu0 %v2666
  %v3123 = vpop.f32.mrf.mxu0
  %v3124 = vadd.f32 0.0, %v3123
  %v3125 = vpop.f32.mrf.mxu0
  %v3126 = vadd.f32 0.0, %v3125
  %3127 = vmatmul.bf16.gmra.mxu0 %v2668
  %v3128 = vpop.f32.mrf.mxu0
  %v3129 = vadd.f32 0.0, %v3128
  %v3130 = vpop.f32.mrf.mxu0
  %v3131 = vadd.f32 0.0, %v3130
  %3132 = vmatmul.bf16.gmra.mxu0 %v2670
  %v3133 = vpop.f32.mrf.mxu0
  %v3134 = vadd.f32 0.0, %v3133
  %v3135 = vpop.f32.mrf.mxu0
  %v3136 = vadd.f32 0.0, %v3135
  %3137 = vmatmul.bf16.gmra.mxu0 %v2672
  %v3138 = vpop.f32.mrf.mxu0
  %v3139 = vadd.f32 0.0, %v3138
  %v3140 = vpop.f32.mrf.mxu0
  %v3141 = vadd.f32 0.0, %v3140
  %3142 = vmatmul.bf16.gmra.mxu0 %v2674
  %v3143 = vpop.f32.mrf.mxu0
  %v3144 = vadd.f32 0.0, %v3143
  %v3145 = vpop.f32.mrf.mxu0
  %v3146 = vadd.f32 0.0, %v3145
  %3147 = vmatmul.bf16.gmra.mxu0 %v2676
  %v3148 = vpop.f32.mrf.mxu0
  %v3149 = vadd.f32 0.0, %v3148
  %v3150 = vpop.f32.mrf.mxu0
  %v3151 = vadd.f32 0.0, %v3150
  %3152 = vmatmul.bf16.gmra.mxu0 %v2678
  %v3153 = vpop.f32.mrf.mxu0
  %v3154 = vadd.f32 0.0, %v3153
  %v3155 = vpop.f32.mrf.mxu0
  %v3156 = vadd.f32 0.0, %v3155
  %3157 = vmatmul.bf16.gmra.mxu0 %v2680
  %v3158 = vpop.f32.mrf.mxu0
  %v3159 = vadd.f32 0.0, %v3158
  %v3160 = vpop.f32.mrf.mxu0
  %v3161 = vadd.f32 0.0, %v3160
  %3162 = vmatmul.bf16.gmra.mxu0 %v2682
  %v3163 = vpop.f32.mrf.mxu0
  %v3164 = vadd.f32 0.0, %v3163
  %v3165 = vpop.f32.mrf.mxu0
  %v3166 = vadd.f32 0.0, %v3165
  %3167 = vmatmul.bf16.gmra.mxu0 %v2684
  %v3168 = vpop.f32.mrf.mxu0
  %v3169 = vadd.f32 0.0, %v3168
  %v3170 = vpop.f32.mrf.mxu0
  %v3171 = vadd.f32 0.0, %v3170
  %3172 = vmatmul.bf16.gmra.mxu0 %v2686
  %v3173 = vpop.f32.mrf.mxu0
  %v3174 = vadd.f32 0.0, %v3173
  %v3175 = vpop.f32.mrf.mxu0
  %v3176 = vadd.f32 0.0, %v3175
  %3177 = vmatmul.bf16.gmra.mxu0 %v2688
  %v3178 = vpop.f32.mrf.mxu0
  %v3179 = vadd.f32 0.0, %v3178
  %v3180 = vpop.f32.mrf.mxu0
  %v3181 = vadd.f32 0.0, %v3180
  %3182 = vmatmul.bf16.gmra.mxu0 %v2690
  %v3183 = vpop.f32.mrf.mxu0
  %v3184 = vadd.f32 0.0, %v3183
  %v3185 = vpop.f32.mrf.mxu0
  %v3186 = vadd.f32 0.0, %v3185
  %3187 = vmatmul.bf16.gmra.mxu0 %v2692
  %v3188 = vpop.f32.mrf.mxu0
  %v3189 = vadd.f32 0.0, %v3188
  %v3190 = vpop.f32.mrf.mxu0
  %v3191 = vadd.f32 0.0, %v3190
  %3192 = vmatmul.bf16.gmra.mxu0 %v2694
  %v3193 = vpop.f32.mrf.mxu0
  %v3194 = vadd.f32 0.0, %v3193
  %v3195 = vpop.f32.mrf.mxu0
  %v3196 = vadd.f32 0.0, %v3195
  %3197 = vmatmul.bf16.gmra.mxu0 %v2696
  %v3198 = vpop.f32.mrf.mxu0
  %v3199 = vadd.f32 0.0, %v3198
  %v3200 = vpop.f32.mrf.mxu0
  %v3201 = vadd.f32 0.0, %v3200
  %3202 = vmatmul.bf16.gmra.mxu0 %v2698
  %v3203 = vpop.f32.mrf.mxu0
  %v3204 = vadd.f32 0.0, %v3203
  %v3205 = vpop.f32.mrf.mxu0
  %v3206 = vadd.f32 0.0, %v3205
  %3207 = vmatmul.bf16.gmra.mxu0 %v2700
  %v3208 = vpop.f32.mrf.mxu0
  %v3209 = vadd.f32 0.0, %v3208
  %v3210 = vpop.f32.mrf.mxu0
  %v3211 = vadd.f32 0.0, %v3210
  %3212 = vmatmul.bf16.gmra.mxu0 %v2702
  %v3213 = vpop.f32.mrf.mxu0
  %v3214 = vadd.f32 0.0, %v3213
  %v3215 = vpop.f32.mrf.mxu0
  %v3216 = vadd.f32 0.0, %v3215
  %3217 = vmatmul.bf16.gmra.mxu0 %v2704
  %v3218 = vpop.f32.mrf.mxu0
  %v3219 = vadd.f32 0.0, %v3218
  %v3220 = vpop.f32.mrf.mxu0
  %v3221 = vadd.f32 0.0, %v3220
  %3222 = vmatmul.bf16.gmra.mxu0 %v2706
  %v3223 = vpop.f32.mrf.mxu0
  %v3224 = vadd.f32 0.0, %v3223
  %v3225 = vpop.f32.mrf.mxu0
  %v3226 = vadd.f32 0.0, %v3225
  %3227 = vmatmul.bf16.gmra.mxu0 %v2708
  %v3228 = vpop.f32.mrf.mxu0
  %v3229 = vadd.f32 0.0, %v3228
  %v3230 = vpop.f32.mrf.mxu0
  %v3231 = vadd.f32 0.0, %v3230
  %3232 = vmatmul.bf16.gmra.mxu0 %v2710
  %v3233 = vpop.f32.mrf.mxu0
  %v3234 = vadd.f32 0.0, %v3233
  %v3235 = vpop.f32.mrf.mxu0
  %v3236 = vadd.f32 0.0, %v3235
  %3237 = vmatmul.bf16.gmra.mxu0 %v2712
  %v3238 = vpop.f32.mrf.mxu0
  %v3239 = vadd.f32 0.0, %v3238
  %v3240 = vpop.f32.mrf.mxu0
  %v3241 = vadd.f32 0.0, %v3240
  %3242 = vmatmul.bf16.gmra.mxu0 %v2714
  %v3243 = vpop.f32.mrf.mxu0
  %v3244 = vadd.f32 0.0, %v3243
  %v3245 = vpop.f32.mrf.mxu0
  %v3246 = vadd.f32 0.0, %v3245
  %3247 = vmatmul.bf16.gmra.mxu0 %v2716
  %v3248 = vpop.f32.mrf.mxu0
  %v3249 = vadd.f32 0.0, %v3248
  %v3250 = vpop.f32.mrf.mxu0
  %v3251 = vadd.f32 0.0, %v3250
  %3252 = vmatmul.bf16.gmra.mxu0 %v2718
  %v3253 = vpop.f32.mrf.mxu0
  %v3254 = vadd.f32 0.0, %v3253
  %v3255 = vpop.f32.mrf.mxu0
  %v3256 = vadd.f32 0.0, %v3255
  %3257 = vmatmul.bf16.gmra.mxu0 %v2720
  %v3258 = vpop.f32.mrf.mxu0
  %v3259 = vadd.f32 0.0, %v3258
  %v3260 = vpop.f32.mrf.mxu0
  %v3261 = vadd.f32 0.0, %v3260
  %3262 = vmatmul.bf16.gmra.mxu0 %v2722
  %v3263 = vpop.f32.mrf.mxu0
  %v3264 = vadd.f32 0.0, %v3263
  %v3265 = vpop.f32.mrf.mxu0
  %v3266 = vadd.f32 0.0, %v3265
  %3267 = vmatmul.bf16.gmra.mxu0 %v2724
  %v3268 = vpop.f32.mrf.mxu0
  %v3269 = vadd.f32 0.0, %v3268
  %v3270 = vpop.f32.mrf.mxu0
  %v3271 = vadd.f32 0.0, %v3270
  %3272 = vmatmul.bf16.gmra.mxu0 %v2726
  %v3273 = vpop.f32.mrf.mxu0
  %v3274 = vadd.f32 0.0, %v3273
  %v3275 = vpop.f32.mrf.mxu0
  %v3276 = vadd.f32 0.0, %v3275
  %3277 = vmatmul.bf16.gmra.mxu0 %v2728
  %v3278 = vpop.f32.mrf.mxu0
  %v3279 = vadd.f32 0.0, %v3278
  %v3280 = vpop.f32.mrf.mxu0
  %v3281 = vadd.f32 0.0, %v3280
  %3282 = vmatmul.bf16.gmra.mxu0 %v2730
  %v3283 = vpop.f32.mrf.mxu0
  %v3284 = vadd.f32 0.0, %v3283
  %v3285 = vpop.f32.mrf.mxu0
  %v3286 = vadd.f32 0.0, %v3285
  %3287 = vmatmul.bf16.gmra.mxu0 %v2732
  %v3288 = vpop.f32.mrf.mxu0
  %v3289 = vadd.f32 0.0, %v3288
  %v3290 = vpop.f32.mrf.mxu0
  %v3291 = vadd.f32 0.0, %v3290
  %3292 = vmatmul.bf16.gmra.mxu0 %v2734
  %v3293 = vpop.f32.mrf.mxu0
  %v3294 = vadd.f32 0.0, %v3293
  %v3295 = vpop.f32.mrf.mxu0
  %v3296 = vadd.f32 0.0, %v3295
  %3297 = vmatmul.bf16.gmra.mxu0 %v2736
  %v3298 = vpop.f32.mrf.mxu0
  %v3299 = vadd.f32 0.0, %v3298
  %v3300 = vpop.f32.mrf.mxu0
  %v3301 = vadd.f32 0.0, %v3300
  %3302 = vmatmul.bf16.gmra.mxu0 %v2738
  %v3303 = vpop.f32.mrf.mxu0
  %v3304 = vadd.f32 0.0, %v3303
  %v3305 = vpop.f32.mrf.mxu0
  %v3306 = vadd.f32 0.0, %v3305
  %3307 = vmatmul.bf16.gmra.mxu0 %v2740
  %v3308 = vpop.f32.mrf.mxu0
  %v3309 = vadd.f32 0.0, %v3308
  %v3310 = vpop.f32.mrf.mxu0
  %v3311 = vadd.f32 0.0, %v3310
  %3312 = vmatmul.bf16.gmra.mxu0 %v2742
  %v3313 = vpop.f32.mrf.mxu0
  %v3314 = vadd.f32 0.0, %v3313
  %v3315 = vpop.f32.mrf.mxu0
  %v3316 = vadd.f32 0.0, %v3315
  %3317 = vmatmul.bf16.gmra.mxu0 %v2744
  %v3318 = vpop.f32.mrf.mxu0
  %v3319 = vadd.f32 0.0, %v3318
  %v3320 = vpop.f32.mrf.mxu0
  %v3321 = vadd.f32 0.0, %v3320
  %3322 = vmatmul.bf16.gmra.mxu0 %v2746
  %v3323 = vpop.f32.mrf.mxu0
  %v3324 = vadd.f32 0.0, %v3323
  %v3325 = vpop.f32.mrf.mxu0
  %v3326 = vadd.f32 0.0, %v3325
  %3327 = vmatmul.bf16.gmra.mxu0 %v2748
  %v3328 = vpop.f32.mrf.mxu0
  %v3329 = vadd.f32 0.0, %v3328
  %v3330 = vpop.f32.mrf.mxu0
  %v3331 = vadd.f32 0.0, %v3330
  %3332 = vmatmul.bf16.gmra.mxu0 %v2750
  %v3333 = vpop.f32.mrf.mxu0
  %v3334 = vadd.f32 0.0, %v3333
  %v3335 = vpop.f32.mrf.mxu0
  %v3336 = vadd.f32 0.0, %v3335
  %3337 = vmatmul.bf16.gmra.mxu0 %v2752
  %v3338 = vpop.f32.mrf.mxu0
  %v3339 = vadd.f32 0.0, %v3338
  %v3340 = vpop.f32.mrf.mxu0
  %v3341 = vadd.f32 0.0, %v3340
  %3342 = vmatmul.bf16.gmra.mxu0 %v2754
  %v3343 = vpop.f32.mrf.mxu0
  %v3344 = vadd.f32 0.0, %v3343
  %v3345 = vpop.f32.mrf.mxu0
  %v3346 = vadd.f32 0.0, %v3345
  %3347 = vmatmul.bf16.gmra.mxu0 %v2756
  %v3348 = vpop.f32.mrf.mxu0
  %v3349 = vadd.f32 0.0, %v3348
  %v3350 = vpop.f32.mrf.mxu0
  %v3351 = vadd.f32 0.0, %v3350
  %3352 = vmatmul.bf16.gmra.mxu0 %v2758
  %v3353 = vpop.f32.mrf.mxu0
  %v3354 = vadd.f32 0.0, %v3353
  %v3355 = vpop.f32.mrf.mxu0
  %v3356 = vadd.f32 0.0, %v3355
  %3357 = vmatmul.bf16.gmra.mxu0 %v2760
  %v3358 = vpop.f32.mrf.mxu0
  %v3359 = vadd.f32 0.0, %v3358
  %v3360 = vpop.f32.mrf.mxu0
  %v3361 = vadd.f32 0.0, %v3360
  %3362 = vmatmul.bf16.gmra.mxu0 %v2762
  %v3363 = vpop.f32.mrf.mxu0
  %v3364 = vadd.f32 0.0, %v3363
  %v3365 = vpop.f32.mrf.mxu0
  %v3366 = vadd.f32 0.0, %v3365
  %3367 = vmatmul.bf16.gmra.mxu0 %v2764
  %v3368 = vpop.f32.mrf.mxu0
  %v3369 = vadd.f32 0.0, %v3368
  %v3370 = vpop.f32.mrf.mxu0
  %v3371 = vadd.f32 0.0, %v3370
  %3372 = vmatmul.bf16.gmra.mxu0 %v2766
  %v3373 = vpop.f32.mrf.mxu0
  %v3374 = vadd.f32 0.0, %v3373
  %v3375 = vpop.f32.mrf.mxu0
  %v3376 = vadd.f32 0.0, %v3375
  %3377 = vdwg.mxu0
  %3378 = vmatpush.bf16.msra.mxu0 0
  %3379 = vmatpush.bf16.msra.mxu0 0
  %3380 = vmatpush.bf16.msra.mxu0 0
  %3381 = vmatpush.bf16.msra.mxu0 0
  %3382 = vmatpush.bf16.msra.mxu0 0
  %3383 = vmatpush.bf16.msra.mxu0 %v3047
  %3384 = vmatpush.bf16.msra.mxu0 %v2840
  %3385 = vmatpush.bf16.msra.mxu0 %v2839
  %3386 = vmatmul.bf16.gmra.mxu0 %v2854
  %v3387 = vpop.f32.mrf.mxu0
  %v3388 = vadd.f32 %v3059, %v3387
  %v3389 = vpop.f32.mrf.mxu0
  %v3390 = vadd.f32 %v3061, %v3389
  %3391 = vmatmul.bf16.gmra.mxu0 %v2857
  %v3392 = vpop.f32.mrf.mxu0
  %v3393 = vadd.f32 %v3064, %v3392
  %v3394 = vpop.f32.mrf.mxu0
  %v3395 = vadd.f32 %v3066, %v3394
  %3396 = vmatmul.bf16.gmra.mxu0 %v2860
  %v3397 = vpop.f32.mrf.mxu0
  %v3398 = vadd.f32 %v3069, %v3397
  %v3399 = vpop.f32.mrf.mxu0
  %v3400 = vadd.f32 %v3071, %v3399
  %3401 = vmatmul.bf16.gmra.mxu0 %v2863
  %v3402 = vpop.f32.mrf.mxu0
  %v3403 = vadd.f32 %v3074, %v3402
  %v3404 = vpop.f32.mrf.mxu0
  %v3405 = vadd.f32 %v3076, %v3404
  %3406 = vmatmul.bf16.gmra.mxu0 %v2866
  %v3407 = vpop.f32.mrf.mxu0
  %v3408 = vadd.f32 %v3079, %v3407
  %v3409 = vpop.f32.mrf.mxu0
  %v3410 = vadd.f32 %v3081, %v3409
  %3411 = vmatmul.bf16.gmra.mxu0 %v2869
  %v3412 = vpop.f32.mrf.mxu0
  %v3413 = vadd.f32 %v3084, %v3412
  %v3414 = vpop.f32.mrf.mxu0
  %v3415 = vadd.f32 %v3086, %v3414
  %3416 = vmatmul.bf16.gmra.mxu0 %v2872
  %v3417 = vpop.f32.mrf.mxu0
  %v3418 = vadd.f32 %v3089, %v3417
  %v3419 = vpop.f32.mrf.mxu0
  %v3420 = vadd.f32 %v3091, %v3419
  %3421 = vmatmul.bf16.gmra.mxu0 %v2875
  %v3422 = vpop.f32.mrf.mxu0
  %v3423 = vadd.f32 %v3094, %v3422
  %v3424 = vpop.f32.mrf.mxu0
  %v3425 = vadd.f32 %v3096, %v3424
  %3426 = vmatmul.bf16.gmra.mxu0 %v2878
  %v3427 = vpop.f32.mrf.mxu0
  %v3428 = vadd.f32 %v3099, %v3427
  %v3429 = vpop.f32.mrf.mxu0
  %v3430 = vadd.f32 %v3101, %v3429
  %3431 = vmatmul.bf16.gmra.mxu0 %v2881
  %v3432 = vpop.f32.mrf.mxu0
  %v3433 = vadd.f32 %v3104, %v3432
  %v3434 = vpop.f32.mrf.mxu0
  %v3435 = vadd.f32 %v3106, %v3434
  %3436 = vmatmul.bf16.gmra.mxu0 %v2884
  %v3437 = vpop.f32.mrf.mxu0
  %v3438 = vadd.f32 %v3109, %v3437
  %v3439 = vpop.f32.mrf.mxu0
  %v3440 = vadd.f32 %v3111, %v3439
  %3441 = vmatmul.bf16.gmra.mxu0 %v2887
  %v3442 = vpop.f32.mrf.mxu0
  %v3443 = vadd.f32 %v3114, %v3442
  %v3444 = vpop.f32.mrf.mxu0
  %v3445 = vadd.f32 %v3116, %v3444
  %3446 = vmatmul.bf16.gmra.mxu0 %v2890
  %v3447 = vpop.f32.mrf.mxu0
  %v3448 = vadd.f32 %v3119, %v3447
  %v3449 = vpop.f32.mrf.mxu0
  %v3450 = vadd.f32 %v3121, %v3449
  %3451 = vmatmul.bf16.gmra.mxu0 %v2893
  %v3452 = vpop.f32.mrf.mxu0
  %v3453 = vadd.f32 %v3124, %v3452
  %v3454 = vpop.f32.mrf.mxu0
  %v3455 = vadd.f32 %v3126, %v3454
  %3456 = vmatmul.bf16.gmra.mxu0 %v2896
  %v3457 = vpop.f32.mrf.mxu0
  %v3458 = vadd.f32 %v3129, %v3457
  %v3459 = vpop.f32.mrf.mxu0
  %v3460 = vadd.f32 %v3131, %v3459
  %3461 = vmatmul.bf16.gmra.mxu0 %v2899
  %v3462 = vpop.f32.mrf.mxu0
  %v3463 = vadd.f32 %v3134, %v3462
  %v3464 = vpop.f32.mrf.mxu0
  %v3465 = vadd.f32 %v3136, %v3464
  %3466 = vmatmul.bf16.gmra.mxu0 %v2902
  %v3467 = vpop.f32.mrf.mxu0
  %v3468 = vadd.f32 %v3139, %v3467
  %v3469 = vpop.f32.mrf.mxu0
  %v3470 = vadd.f32 %v3141, %v3469
  %3471 = vmatmul.bf16.gmra.mxu0 %v2905
  %v3472 = vpop.f32.mrf.mxu0
  %v3473 = vadd.f32 %v3144, %v3472
  %v3474 = vpop.f32.mrf.mxu0
  %v3475 = vadd.f32 %v3146, %v3474
  %3476 = vmatmul.bf16.gmra.mxu0 %v2908
  %v3477 = vpop.f32.mrf.mxu0
  %v3478 = vadd.f32 %v3149, %v3477
  %v3479 = vpop.f32.mrf.mxu0
  %v3480 = vadd.f32 %v3151, %v3479
  %3481 = vmatmul.bf16.gmra.mxu0 %v2911
  %v3482 = vpop.f32.mrf.mxu0
  %v3483 = vadd.f32 %v3154, %v3482
  %v3484 = vpop.f32.mrf.mxu0
  %v3485 = vadd.f32 %v3156, %v3484
  %3486 = vmatmul.bf16.gmra.mxu0 %v2914
  %v3487 = vpop.f32.mrf.mxu0
  %v3488 = vadd.f32 %v3159, %v3487
  %v3489 = vpop.f32.mrf.mxu0
  %v3490 = vadd.f32 %v3161, %v3489
  %3491 = vmatmul.bf16.gmra.mxu0 %v2917
  %v3492 = vpop.f32.mrf.mxu0
  %v3493 = vadd.f32 %v3164, %v3492
  %v3494 = vpop.f32.mrf.mxu0
  %v3495 = vadd.f32 %v3166, %v3494
  %3496 = vmatmul.bf16.gmra.mxu0 %v2920
  %v3497 = vpop.f32.mrf.mxu0
  %v3498 = vadd.f32 %v3169, %v3497
  %v3499 = vpop.f32.mrf.mxu0
  %v3500 = vadd.f32 %v3171, %v3499
  %3501 = vmatmul.bf16.gmra.mxu0 %v2923
  %v3502 = vpop.f32.mrf.mxu0
  %v3503 = vadd.f32 %v3174, %v3502
  %v3504 = vpop.f32.mrf.mxu0
  %v3505 = vadd.f32 %v3176, %v3504
  %3506 = vmatmul.bf16.gmra.mxu0 %v2926
  %v3507 = vpop.f32.mrf.mxu0
  %v3508 = vadd.f32 %v3179, %v3507
  %v3509 = vpop.f32.mrf.mxu0
  %v3510 = vadd.f32 %v3181, %v3509
  %3511 = vmatmul.bf16.gmra.mxu0 %v2929
  %v3512 = vpop.f32.mrf.mxu0
  %v3513 = vadd.f32 %v3184, %v3512
  %v3514 = vpop.f32.mrf.mxu0
  %v3515 = vadd.f32 %v3186, %v3514
  %3516 = vmatmul.bf16.gmra.mxu0 %v2932
  %v3517 = vpop.f32.mrf.mxu0
  %v3518 = vadd.f32 %v3189, %v3517
  %v3519 = vpop.f32.mrf.mxu0
  %v3520 = vadd.f32 %v3191, %v3519
  %3521 = vmatmul.bf16.gmra.mxu0 %v2935
  %v3522 = vpop.f32.mrf.mxu0
  %v3523 = vadd.f32 %v3194, %v3522
  %v3524 = vpop.f32.mrf.mxu0
  %v3525 = vadd.f32 %v3196, %v3524
  %3526 = vmatmul.bf16.gmra.mxu0 %v2938
  %v3527 = vpop.f32.mrf.mxu0
  %v3528 = vadd.f32 %v3199, %v3527
  %v3529 = vpop.f32.mrf.mxu0
  %v3530 = vadd.f32 %v3201, %v3529
  %3531 = vmatmul.bf16.gmra.mxu0 %v2941
  %v3532 = vpop.f32.mrf.mxu0
  %v3533 = vadd.f32 %v3204, %v3532
  %v3534 = vpop.f32.mrf.mxu0
  %v3535 = vadd.f32 %v3206, %v3534
  %3536 = vmatmul.bf16.gmra.mxu0 %v2944
  %v3537 = vpop.f32.mrf.mxu0
  %v3538 = vadd.f32 %v3209, %v3537
  %v3539 = vpop.f32.mrf.mxu0
  %v3540 = vadd.f32 %v3211, %v3539
  %3541 = vmatmul.bf16.gmra.mxu0 %v2947
  %v3542 = vpop.f32.mrf.mxu0
  %v3543 = vadd.f32 %v3214, %v3542
  %v3544 = vpop.f32.mrf.mxu0
  %v3545 = vadd.f32 %v3216, %v3544
  %3546 = vmatmul.bf16.gmra.mxu0 %v2950
  %v3547 = vpop.f32.mrf.mxu0
  %v3548 = vadd.f32 %v3219, %v3547
  %v3549 = vpop.f32.mrf.mxu0
  %v3550 = vadd.f32 %v3221, %v3549
  %3551 = vmatmul.bf16.gmra.mxu0 %v2953
  %v3552 = vpop.f32.mrf.mxu0
  %v3553 = vadd.f32 %v3224, %v3552
  %v3554 = vpop.f32.mrf.mxu0
  %v3555 = vadd.f32 %v3226, %v3554
  %3556 = vmatmul.bf16.gmra.mxu0 %v2956
  %v3557 = vpop.f32.mrf.mxu0
  %v3558 = vadd.f32 %v3229, %v3557
  %v3559 = vpop.f32.mrf.mxu0
  %v3560 = vadd.f32 %v3231, %v3559
  %3561 = vmatmul.bf16.gmra.mxu0 %v2959
  %v3562 = vpop.f32.mrf.mxu0
  %v3563 = vadd.f32 %v3234, %v3562
  %v3564 = vpop.f32.mrf.mxu0
  %v3565 = vadd.f32 %v3236, %v3564
  %3566 = vmatmul.bf16.gmra.mxu0 %v2962
  %v3567 = vpop.f32.mrf.mxu0
  %v3568 = vadd.f32 %v3239, %v3567
  %v3569 = vpop.f32.mrf.mxu0
  %v3570 = vadd.f32 %v3241, %v3569
  %3571 = vmatmul.bf16.gmra.mxu0 %v2965
  %v3572 = vpop.f32.mrf.mxu0
  %v3573 = vadd.f32 %v3244, %v3572
  %v3574 = vpop.f32.mrf.mxu0
  %v3575 = vadd.f32 %v3246, %v3574
  %3576 = vmatmul.bf16.gmra.mxu0 %v2968
  %v3577 = vpop.f32.mrf.mxu0
  %v3578 = vadd.f32 %v3249, %v3577
  %v3579 = vpop.f32.mrf.mxu0
  %v3580 = vadd.f32 %v3251, %v3579
  %3581 = vmatmul.bf16.gmra.mxu0 %v2971
  %v3582 = vpop.f32.mrf.mxu0
  %v3583 = vadd.f32 %v3254, %v3582
  %v3584 = vpop.f32.mrf.mxu0
  %v3585 = vadd.f32 %v3256, %v3584
  %3586 = vmatmul.bf16.gmra.mxu0 %v2974
  %v3587 = vpop.f32.mrf.mxu0
  %v3588 = vadd.f32 %v3259, %v3587
  %v3589 = vpop.f32.mrf.mxu0
  %v3590 = vadd.f32 %v3261, %v3589
  %3591 = vmatmul.bf16.gmra.mxu0 %v2977
  %v3592 = vpop.f32.mrf.mxu0
  %v3593 = vadd.f32 %v3264, %v3592
  %v3594 = vpop.f32.mrf.mxu0
  %v3595 = vadd.f32 %v3266, %v3594
  %3596 = vmatmul.bf16.gmra.mxu0 %v2980
  %v3597 = vpop.f32.mrf.mxu0
  %v3598 = vadd.f32 %v3269, %v3597
  %v3599 = vpop.f32.mrf.mxu0
  %v3600 = vadd.f32 %v3271, %v3599
  %3601 = vmatmul.bf16.gmra.mxu0 %v2983
  %v3602 = vpop.f32.mrf.mxu0
  %v3603 = vadd.f32 %v3274, %v3602
  %v3604 = vpop.f32.mrf.mxu0
  %v3605 = vadd.f32 %v3276, %v3604
  %3606 = vmatmul.bf16.gmra.mxu0 %v2986
  %v3607 = vpop.f32.mrf.mxu0
  %v3608 = vadd.f32 %v3279, %v3607
  %v3609 = vpop.f32.mrf.mxu0
  %v3610 = vadd.f32 %v3281, %v3609
  %3611 = vmatmul.bf16.gmra.mxu0 %v2989
  %v3612 = vpop.f32.mrf.mxu0
  %v3613 = vadd.f32 %v3284, %v3612
  %v3614 = vpop.f32.mrf.mxu0
  %v3615 = vadd.f32 %v3286, %v3614
  %3616 = vmatmul.bf16.gmra.mxu0 %v2992
  %v3617 = vpop.f32.mrf.mxu0
  %v3618 = vadd.f32 %v3289, %v3617
  %v3619 = vpop.f32.mrf.mxu0
  %v3620 = vadd.f32 %v3291, %v3619
  %3621 = vmatmul.bf16.gmra.mxu0 %v2995
  %v3622 = vpop.f32.mrf.mxu0
  %v3623 = vadd.f32 %v3294, %v3622
  %v3624 = vpop.f32.mrf.mxu0
  %v3625 = vadd.f32 %v3296, %v3624
  %3626 = vmatmul.bf16.gmra.mxu0 %v2998
  %v3627 = vpop.f32.mrf.mxu0
  %v3628 = vadd.f32 %v3299, %v3627
  %v3629 = vpop.f32.mrf.mxu0
  %v3630 = vadd.f32 %v3301, %v3629
  %3631 = vmatmul.bf16.gmra.mxu0 %v3001
  %v3632 = vpop.f32.mrf.mxu0
  %v3633 = vadd.f32 %v3304, %v3632
  %v3634 = vpop.f32.mrf.mxu0
  %v3635 = vadd.f32 %v3306, %v3634
  %3636 = vmatmul.bf16.gmra.mxu0 %v3004
  %v3637 = vpop.f32.mrf.mxu0
  %v3638 = vadd.f32 %v3309, %v3637
  %v3639 = vpop.f32.mrf.mxu0
  %v3640 = vadd.f32 %v3311, %v3639
  %3641 = vmatmul.bf16.gmra.mxu0 %v3007
  %v3642 = vpop.f32.mrf.mxu0
  %v3643 = vadd.f32 %v3314, %v3642
  %v3644 = vpop.f32.mrf.mxu0
  %v3645 = vadd.f32 %v3316, %v3644
  %3646 = vmatmul.bf16.gmra.mxu0 %v3010
  %v3647 = vpop.f32.mrf.mxu0
  %v3648 = vadd.f32 %v3319, %v3647
  %v3649 = vpop.f32.mrf.mxu0
  %v3650 = vadd.f32 %v3321, %v3649
  %3651 = vmatmul.bf16.gmra.mxu0 %v3013
  %v3652 = vpop.f32.mrf.mxu0
  %v3653 = vadd.f32 %v3324, %v3652
  %v3654 = vpop.f32.mrf.mxu0
  %v3655 = vadd.f32 %v3326, %v3654
  %3656 = vmatmul.bf16.gmra.mxu0 %v3016
  %v3657 = vpop.f32.mrf.mxu0
  %v3658 = vadd.f32 %v3329, %v3657
  %v3659 = vpop.f32.mrf.mxu0
  %v3660 = vadd.f32 %v3331, %v3659
  %3661 = vmatmul.bf16.gmra.mxu0 %v3019
  %v3662 = vpop.f32.mrf.mxu0
  %v3663 = vadd.f32 %v3334, %v3662
  %v3664 = vpop.f32.mrf.mxu0
  %v3665 = vadd.f32 %v3336, %v3664
  %3666 = vmatmul.bf16.gmra.mxu0 %v3022
  %v3667 = vpop.f32.mrf.mxu0
  %v3668 = vadd.f32 %v3339, %v3667
  %v3669 = vpop.f32.mrf.mxu0
  %v3670 = vadd.f32 %v3341, %v3669
  %3671 = vmatmul.bf16.gmra.mxu0 %v3025
  %v3672 = vpop.f32.mrf.mxu0
  %v3673 = vadd.f32 %v3344, %v3672
  %v3674 = vpop.f32.mrf.mxu0
  %v3675 = vadd.f32 %v3346, %v3674
  %3676 = vmatmul.bf16.gmra.mxu0 %v3028
  %v3677 = vpop.f32.mrf.mxu0
  %v3678 = vadd.f32 %v3349, %v3677
  %v3679 = vpop.f32.mrf.mxu0
  %v3680 = vadd.f32 %v3351, %v3679
  %3681 = vmatmul.bf16.gmra.mxu0 %v3031
  %v3682 = vpop.f32.mrf.mxu0
  %v3683 = vadd.f32 %v3354, %v3682
  %v3684 = vpop.f32.mrf.mxu0
  %v3685 = vadd.f32 %v3356, %v3684
  %3686 = vmatmul.bf16.gmra.mxu0 %v3034
  %v3687 = vpop.f32.mrf.mxu0
  %v3688 = vadd.f32 %v3359, %v3687
  %v3689 = vpop.f32.mrf.mxu0
  %v3690 = vadd.f32 %v3361, %v3689
  %3691 = vmatmul.bf16.gmra.mxu0 %v3037
  %v3692 = vpop.f32.mrf.mxu0
  %v3693 = vadd.f32 %v3364, %v3692
  %v3694 = vpop.f32.mrf.mxu0
  %v3695 = vadd.f32 %v3366, %v3694
  %3696 = vmatmul.bf16.gmra.mxu0 %v3040
  %v3697 = vpop.f32.mrf.mxu0
  %v3698 = vadd.f32 %v3369, %v3697
  %v3699 = vpop.f32.mrf.mxu0
  %v3700 = vadd.f32 %v3371, %v3699
  %3701 = vmatmul.bf16.gmra.mxu0 %v3043
  %v3702 = vpop.f32.mrf.mxu0
  %v3703 = vadd.f32 %v3374, %v3702
  %v3704 = vpop.f32.mrf.mxu0
  %v3705 = vadd.f32 %v3376, %v3704
  %3706 = vdwg.mxu0
  %s3707 = scalar_lea.vmem %s3, 84
  %v3708 = vld [vmem:[%s3707] sm:$0xf]
  %v3709 = vld [vmem:[%s3707 + $0x4] sm:$0xf]
  %v3710 = vld [vmem:[%s3707 + $0x8] sm:$0xf]
  %v3711 = vld [vmem:[%s3707 + $0xc] sm:$0xf]
  %v3712 = vld [vmem:[%s3707 + $0x10] sm:$0xf]
  %v3713 = vld [vmem:[%s3707 + $0x14] sm:$0xf]
  %v3714 = vld [vmem:[%s3707 + $0x18] sm:$0xf]
  %v3715 = vld [vmem:[%s3707 + $0x1c] sm:$0xf]
  %v3716 = vld [vmem:[%s3707 + $0x20] sm:$0xf]
  %v3717 = vld [vmem:[%s3707 + $0x24] sm:$0xf]
  %v3718 = vld [vmem:[%s3707 + $0x28] sm:$0xf]
  %v3719 = vld [vmem:[%s3707 + $0x2c] sm:$0xf]
  %v3720 = vld [vmem:[%s3707 + $0x30] sm:$0xf]
  %v3721 = vld [vmem:[%s3707 + $0x34] sm:$0xf]
  %v3722 = vld [vmem:[%s3707 + $0x38] sm:$0xf]
  %v3723 = vld [vmem:[%s3707 + $0x3c] sm:$0xf]
  %v3724 = vld [vmem:[%s3707 + $0x40] sm:$0xf]
  %v3725 = vld [vmem:[%s3707 + $0x44] sm:$0xf]
  %v3726 = vld [vmem:[%s3707 + $0x48] sm:$0xf]
  %v3727 = vld [vmem:[%s3707 + $0x4c] sm:$0xf]
  %v3728 = vld [vmem:[%s3707 + $0x50] sm:$0xf]
  %v3750 = vunpack.c.l.b16 %v3708
  %v3751 = vunpack.c.l.b16 %v3709
  %v3752 = vunpack.c.l.b16 %v3710
  %v3753 = vunpack.c.l.b16 %v3711
  %v3754 = vunpack.c.l.b16 %v3712
  %v3755 = vunpack.c.l.b16 %v3713
  %v3756 = vunpack.c.l.b16 %v3714
  %v3757 = vunpack.c.l.b16 %v3715
  %v3758 = vunpack.c.l.b16 %v3716
  %v3759 = vunpack.c.l.b16 %v3717
  %v3760 = vunpack.c.l.b16 %v3718
  %v3761 = vunpack.c.l.b16 %v3719
  %v3762 = vunpack.c.l.b16 %v3720
  %v3763 = vunpack.c.l.b16 %v3721
  %v3764 = vunpack.c.l.b16 %v3722
  %v3765 = vunpack.c.l.b16 %v3723
  %v3766 = vunpack.c.l.b16 %v3724
  %v3767 = vunpack.c.l.b16 %v3725
  %v3768 = vunpack.c.l.b16 %v3726
  %v3769 = vunpack.c.l.b16 %v3727
  %v3770 = vunpack.c.l.b16 %v3728
  %v3771 = vpack.c.b16 %v3751, %v3750
  %v3772 = vpack.c.b16 %v3753, %v3752
  %v3773 = vpack.c.b16 %v3755, %v3754
  %v3774 = vpack.c.b16 %v3757, %v3756
  %v3775 = vpack.c.b16 %v3759, %v3758
  %v3776 = vpack.c.b16 %v3761, %v3760
  %v3777 = vpack.c.b16 %v3763, %v3762
  %v3778 = vpack.c.b16 %v3765, %v3764
  %v3779 = vpack.c.b16 %v3767, %v3766
  %v3780 = vpack.c.b16 %v3769, %v3768
  %v3781 = vpack.c.b16 %v3770, %v3770
  %v3793 = vsel %vm3045, %v3781, 0
  %3795 = vmatpush.bf16.msra.mxu0 %v3778
  %3796 = vmatpush.bf16.msra.mxu0 %v3777
  %3797 = vmatpush.bf16.msra.mxu0 %v3776
  %3798 = vmatpush.bf16.msra.mxu0 %v3775
  %3799 = vmatpush.bf16.msra.mxu0 %v3774
  %3800 = vmatpush.bf16.msra.mxu0 %v3773
  %3801 = vmatpush.bf16.msra.mxu0 %v3772
  %3802 = vmatpush.bf16.msra.mxu0 %v3771
  %3803 = vmatmul.bf16.gmra.mxu0 %v2640
  %v3804 = vpop.f32.mrf.mxu0
  %v3805 = vadd.f32 0.0, %v3804
  %v3806 = vpop.f32.mrf.mxu0
  %v3807 = vadd.f32 0.0, %v3806
  %3808 = vmatmul.bf16.gmra.mxu0 %v2642
  %v3809 = vpop.f32.mrf.mxu0
  %v3810 = vadd.f32 0.0, %v3809
  %v3811 = vpop.f32.mrf.mxu0
  %v3812 = vadd.f32 0.0, %v3811
  %3813 = vmatmul.bf16.gmra.mxu0 %v2644
  %v3814 = vpop.f32.mrf.mxu0
  %v3815 = vadd.f32 0.0, %v3814
  %v3816 = vpop.f32.mrf.mxu0
  %v3817 = vadd.f32 0.0, %v3816
  %3818 = vmatmul.bf16.gmra.mxu0 %v2646
  %v3819 = vpop.f32.mrf.mxu0
  %v3820 = vadd.f32 0.0, %v3819
  %v3821 = vpop.f32.mrf.mxu0
  %v3822 = vadd.f32 0.0, %v3821
  %3823 = vmatmul.bf16.gmra.mxu0 %v2648
  %v3824 = vpop.f32.mrf.mxu0
  %v3825 = vadd.f32 0.0, %v3824
  %v3826 = vpop.f32.mrf.mxu0
  %v3827 = vadd.f32 0.0, %v3826
  %3828 = vmatmul.bf16.gmra.mxu0 %v2650
  %v3829 = vpop.f32.mrf.mxu0
  %v3830 = vadd.f32 0.0, %v3829
  %v3831 = vpop.f32.mrf.mxu0
  %v3832 = vadd.f32 0.0, %v3831
  %3833 = vmatmul.bf16.gmra.mxu0 %v2652
  %v3834 = vpop.f32.mrf.mxu0
  %v3835 = vadd.f32 0.0, %v3834
  %v3836 = vpop.f32.mrf.mxu0
  %v3837 = vadd.f32 0.0, %v3836
  %3838 = vmatmul.bf16.gmra.mxu0 %v2654
  %v3839 = vpop.f32.mrf.mxu0
  %v3840 = vadd.f32 0.0, %v3839
  %v3841 = vpop.f32.mrf.mxu0
  %v3842 = vadd.f32 0.0, %v3841
  %3843 = vmatmul.bf16.gmra.mxu0 %v2656
  %v3844 = vpop.f32.mrf.mxu0
  %v3845 = vadd.f32 0.0, %v3844
  %v3846 = vpop.f32.mrf.mxu0
  %v3847 = vadd.f32 0.0, %v3846
  %3848 = vmatmul.bf16.gmra.mxu0 %v2658
  %v3849 = vpop.f32.mrf.mxu0
  %v3850 = vadd.f32 0.0, %v3849
  %v3851 = vpop.f32.mrf.mxu0
  %v3852 = vadd.f32 0.0, %v3851
  %3853 = vmatmul.bf16.gmra.mxu0 %v2660
  %v3854 = vpop.f32.mrf.mxu0
  %v3855 = vadd.f32 0.0, %v3854
  %v3856 = vpop.f32.mrf.mxu0
  %v3857 = vadd.f32 0.0, %v3856
  %3858 = vmatmul.bf16.gmra.mxu0 %v2662
  %v3859 = vpop.f32.mrf.mxu0
  %v3860 = vadd.f32 0.0, %v3859
  %v3861 = vpop.f32.mrf.mxu0
  %v3862 = vadd.f32 0.0, %v3861
  %3863 = vmatmul.bf16.gmra.mxu0 %v2664
  %v3864 = vpop.f32.mrf.mxu0
  %v3865 = vadd.f32 0.0, %v3864
  %v3866 = vpop.f32.mrf.mxu0
  %v3867 = vadd.f32 0.0, %v3866
  %3868 = vmatmul.bf16.gmra.mxu0 %v2666
  %v3869 = vpop.f32.mrf.mxu0
  %v3870 = vadd.f32 0.0, %v3869
  %v3871 = vpop.f32.mrf.mxu0
  %v3872 = vadd.f32 0.0, %v3871
  %3873 = vmatmul.bf16.gmra.mxu0 %v2668
  %v3874 = vpop.f32.mrf.mxu0
  %v3875 = vadd.f32 0.0, %v3874
  %v3876 = vpop.f32.mrf.mxu0
  %v3877 = vadd.f32 0.0, %v3876
  %3878 = vmatmul.bf16.gmra.mxu0 %v2670
  %v3879 = vpop.f32.mrf.mxu0
  %v3880 = vadd.f32 0.0, %v3879
  %v3881 = vpop.f32.mrf.mxu0
  %v3882 = vadd.f32 0.0, %v3881
  %3883 = vmatmul.bf16.gmra.mxu0 %v2672
  %v3884 = vpop.f32.mrf.mxu0
  %v3885 = vadd.f32 0.0, %v3884
  %v3886 = vpop.f32.mrf.mxu0
  %v3887 = vadd.f32 0.0, %v3886
  %3888 = vmatmul.bf16.gmra.mxu0 %v2674
  %v3889 = vpop.f32.mrf.mxu0
  %v3890 = vadd.f32 0.0, %v3889
  %v3891 = vpop.f32.mrf.mxu0
  %v3892 = vadd.f32 0.0, %v3891
  %3893 = vmatmul.bf16.gmra.mxu0 %v2676
  %v3894 = vpop.f32.mrf.mxu0
  %v3895 = vadd.f32 0.0, %v3894
  %v3896 = vpop.f32.mrf.mxu0
  %v3897 = vadd.f32 0.0, %v3896
  %3898 = vmatmul.bf16.gmra.mxu0 %v2678
  %v3899 = vpop.f32.mrf.mxu0
  %v3900 = vadd.f32 0.0, %v3899
  %v3901 = vpop.f32.mrf.mxu0
  %v3902 = vadd.f32 0.0, %v3901
  %3903 = vmatmul.bf16.gmra.mxu0 %v2680
  %v3904 = vpop.f32.mrf.mxu0
  %v3905 = vadd.f32 0.0, %v3904
  %v3906 = vpop.f32.mrf.mxu0
  %v3907 = vadd.f32 0.0, %v3906
  %3908 = vmatmul.bf16.gmra.mxu0 %v2682
  %v3909 = vpop.f32.mrf.mxu0
  %v3910 = vadd.f32 0.0, %v3909
  %v3911 = vpop.f32.mrf.mxu0
  %v3912 = vadd.f32 0.0, %v3911
  %3913 = vmatmul.bf16.gmra.mxu0 %v2684
  %v3914 = vpop.f32.mrf.mxu0
  %v3915 = vadd.f32 0.0, %v3914
  %v3916 = vpop.f32.mrf.mxu0
  %v3917 = vadd.f32 0.0, %v3916
  %3918 = vmatmul.bf16.gmra.mxu0 %v2686
  %v3919 = vpop.f32.mrf.mxu0
  %v3920 = vadd.f32 0.0, %v3919
  %v3921 = vpop.f32.mrf.mxu0
  %v3922 = vadd.f32 0.0, %v3921
  %3923 = vmatmul.bf16.gmra.mxu0 %v2688
  %v3924 = vpop.f32.mrf.mxu0
  %v3925 = vadd.f32 0.0, %v3924
  %v3926 = vpop.f32.mrf.mxu0
  %v3927 = vadd.f32 0.0, %v3926
  %3928 = vmatmul.bf16.gmra.mxu0 %v2690
  %v3929 = vpop.f32.mrf.mxu0
  %v3930 = vadd.f32 0.0, %v3929
  %v3931 = vpop.f32.mrf.mxu0
  %v3932 = vadd.f32 0.0, %v3931
  %3933 = vmatmul.bf16.gmra.mxu0 %v2692
  %v3934 = vpop.f32.mrf.mxu0
  %v3935 = vadd.f32 0.0, %v3934
  %v3936 = vpop.f32.mrf.mxu0
  %v3937 = vadd.f32 0.0, %v3936
  %3938 = vmatmul.bf16.gmra.mxu0 %v2694
  %v3939 = vpop.f32.mrf.mxu0
  %v3940 = vadd.f32 0.0, %v3939
  %v3941 = vpop.f32.mrf.mxu0
  %v3942 = vadd.f32 0.0, %v3941
  %3943 = vmatmul.bf16.gmra.mxu0 %v2696
  %v3944 = vpop.f32.mrf.mxu0
  %v3945 = vadd.f32 0.0, %v3944
  %v3946 = vpop.f32.mrf.mxu0
  %v3947 = vadd.f32 0.0, %v3946
  %3948 = vmatmul.bf16.gmra.mxu0 %v2698
  %v3949 = vpop.f32.mrf.mxu0
  %v3950 = vadd.f32 0.0, %v3949
  %v3951 = vpop.f32.mrf.mxu0
  %v3952 = vadd.f32 0.0, %v3951
  %3953 = vmatmul.bf16.gmra.mxu0 %v2700
  %v3954 = vpop.f32.mrf.mxu0
  %v3955 = vadd.f32 0.0, %v3954
  %v3956 = vpop.f32.mrf.mxu0
  %v3957 = vadd.f32 0.0, %v3956
  %3958 = vmatmul.bf16.gmra.mxu0 %v2702
  %v3959 = vpop.f32.mrf.mxu0
  %v3960 = vadd.f32 0.0, %v3959
  %v3961 = vpop.f32.mrf.mxu0
  %v3962 = vadd.f32 0.0, %v3961
  %3963 = vmatmul.bf16.gmra.mxu0 %v2704
  %v3964 = vpop.f32.mrf.mxu0
  %v3965 = vadd.f32 0.0, %v3964
  %v3966 = vpop.f32.mrf.mxu0
  %v3967 = vadd.f32 0.0, %v3966
  %3968 = vmatmul.bf16.gmra.mxu0 %v2706
  %v3969 = vpop.f32.mrf.mxu0
  %v3970 = vadd.f32 0.0, %v3969
  %v3971 = vpop.f32.mrf.mxu0
  %v3972 = vadd.f32 0.0, %v3971
  %3973 = vmatmul.bf16.gmra.mxu0 %v2708
  %v3974 = vpop.f32.mrf.mxu0
  %v3975 = vadd.f32 0.0, %v3974
  %v3976 = vpop.f32.mrf.mxu0
  %v3977 = vadd.f32 0.0, %v3976
  %3978 = vmatmul.bf16.gmra.mxu0 %v2710
  %v3979 = vpop.f32.mrf.mxu0
  %v3980 = vadd.f32 0.0, %v3979
  %v3981 = vpop.f32.mrf.mxu0
  %v3982 = vadd.f32 0.0, %v3981
  %3983 = vmatmul.bf16.gmra.mxu0 %v2712
  %v3984 = vpop.f32.mrf.mxu0
  %v3985 = vadd.f32 0.0, %v3984
  %v3986 = vpop.f32.mrf.mxu0
  %v3987 = vadd.f32 0.0, %v3986
  %3988 = vmatmul.bf16.gmra.mxu0 %v2714
  %v3989 = vpop.f32.mrf.mxu0
  %v3990 = vadd.f32 0.0, %v3989
  %v3991 = vpop.f32.mrf.mxu0
  %v3992 = vadd.f32 0.0, %v3991
  %3993 = vmatmul.bf16.gmra.mxu0 %v2716
  %v3994 = vpop.f32.mrf.mxu0
  %v3995 = vadd.f32 0.0, %v3994
  %v3996 = vpop.f32.mrf.mxu0
  %v3997 = vadd.f32 0.0, %v3996
  %3998 = vmatmul.bf16.gmra.mxu0 %v2718
  %v3999 = vpop.f32.mrf.mxu0
  %v4000 = vadd.f32 0.0, %v3999
  %v4001 = vpop.f32.mrf.mxu0
  %v4002 = vadd.f32 0.0, %v4001
  %4003 = vmatmul.bf16.gmra.mxu0 %v2720
  %v4004 = vpop.f32.mrf.mxu0
  %v4005 = vadd.f32 0.0, %v4004
  %v4006 = vpop.f32.mrf.mxu0
  %v4007 = vadd.f32 0.0, %v4006
  %4008 = vmatmul.bf16.gmra.mxu0 %v2722
  %v4009 = vpop.f32.mrf.mxu0
  %v4010 = vadd.f32 0.0, %v4009
  %v4011 = vpop.f32.mrf.mxu0
  %v4012 = vadd.f32 0.0, %v4011
  %4013 = vmatmul.bf16.gmra.mxu0 %v2724
  %v4014 = vpop.f32.mrf.mxu0
  %v4015 = vadd.f32 0.0, %v4014
  %v4016 = vpop.f32.mrf.mxu0
  %v4017 = vadd.f32 0.0, %v4016
  %4018 = vmatmul.bf16.gmra.mxu0 %v2726
  %v4019 = vpop.f32.mrf.mxu0
  %v4020 = vadd.f32 0.0, %v4019
  %v4021 = vpop.f32.mrf.mxu0
  %v4022 = vadd.f32 0.0, %v4021
  %4023 = vmatmul.bf16.gmra.mxu0 %v2728
  %v4024 = vpop.f32.mrf.mxu0
  %v4025 = vadd.f32 0.0, %v4024
  %v4026 = vpop.f32.mrf.mxu0
  %v4027 = vadd.f32 0.0, %v4026
  %4028 = vmatmul.bf16.gmra.mxu0 %v2730
  %v4029 = vpop.f32.mrf.mxu0
  %v4030 = vadd.f32 0.0, %v4029
  %v4031 = vpop.f32.mrf.mxu0
  %v4032 = vadd.f32 0.0, %v4031
  %4033 = vmatmul.bf16.gmra.mxu0 %v2732
  %v4034 = vpop.f32.mrf.mxu0
  %v4035 = vadd.f32 0.0, %v4034
  %v4036 = vpop.f32.mrf.mxu0
  %v4037 = vadd.f32 0.0, %v4036
  %4038 = vmatmul.bf16.gmra.mxu0 %v2734
  %v4039 = vpop.f32.mrf.mxu0
  %v4040 = vadd.f32 0.0, %v4039
  %v4041 = vpop.f32.mrf.mxu0
  %v4042 = vadd.f32 0.0, %v4041
  %4043 = vmatmul.bf16.gmra.mxu0 %v2736
  %v4044 = vpop.f32.mrf.mxu0
  %v4045 = vadd.f32 0.0, %v4044
  %v4046 = vpop.f32.mrf.mxu0
  %v4047 = vadd.f32 0.0, %v4046
  %4048 = vmatmul.bf16.gmra.mxu0 %v2738
  %v4049 = vpop.f32.mrf.mxu0
  %v4050 = vadd.f32 0.0, %v4049
  %v4051 = vpop.f32.mrf.mxu0
  %v4052 = vadd.f32 0.0, %v4051
  %4053 = vmatmul.bf16.gmra.mxu0 %v2740
  %v4054 = vpop.f32.mrf.mxu0
  %v4055 = vadd.f32 0.0, %v4054
  %v4056 = vpop.f32.mrf.mxu0
  %v4057 = vadd.f32 0.0, %v4056
  %4058 = vmatmul.bf16.gmra.mxu0 %v2742
  %v4059 = vpop.f32.mrf.mxu0
  %v4060 = vadd.f32 0.0, %v4059
  %v4061 = vpop.f32.mrf.mxu0
  %v4062 = vadd.f32 0.0, %v4061
  %4063 = vmatmul.bf16.gmra.mxu0 %v2744
  %v4064 = vpop.f32.mrf.mxu0
  %v4065 = vadd.f32 0.0, %v4064
  %v4066 = vpop.f32.mrf.mxu0
  %v4067 = vadd.f32 0.0, %v4066
  %4068 = vmatmul.bf16.gmra.mxu0 %v2746
  %v4069 = vpop.f32.mrf.mxu0
  %v4070 = vadd.f32 0.0, %v4069
  %v4071 = vpop.f32.mrf.mxu0
  %v4072 = vadd.f32 0.0, %v4071
  %4073 = vmatmul.bf16.gmra.mxu0 %v2748
  %v4074 = vpop.f32.mrf.mxu0
  %v4075 = vadd.f32 0.0, %v4074
  %v4076 = vpop.f32.mrf.mxu0
  %v4077 = vadd.f32 0.0, %v4076
  %4078 = vmatmul.bf16.gmra.mxu0 %v2750
  %v4079 = vpop.f32.mrf.mxu0
  %v4080 = vadd.f32 0.0, %v4079
  %v4081 = vpop.f32.mrf.mxu0
  %v4082 = vadd.f32 0.0, %v4081
  %4083 = vmatmul.bf16.gmra.mxu0 %v2752
  %v4084 = vpop.f32.mrf.mxu0
  %v4085 = vadd.f32 0.0, %v4084
  %v4086 = vpop.f32.mrf.mxu0
  %v4087 = vadd.f32 0.0, %v4086
  %4088 = vmatmul.bf16.gmra.mxu0 %v2754
  %v4089 = vpop.f32.mrf.mxu0
  %v4090 = vadd.f32 0.0, %v4089
  %v4091 = vpop.f32.mrf.mxu0
  %v4092 = vadd.f32 0.0, %v4091
  %4093 = vmatmul.bf16.gmra.mxu0 %v2756
  %v4094 = vpop.f32.mrf.mxu0
  %v4095 = vadd.f32 0.0, %v4094
  %v4096 = vpop.f32.mrf.mxu0
  %v4097 = vadd.f32 0.0, %v4096
  %4098 = vmatmul.bf16.gmra.mxu0 %v2758
  %v4099 = vpop.f32.mrf.mxu0
  %v4100 = vadd.f32 0.0, %v4099
  %v4101 = vpop.f32.mrf.mxu0
  %v4102 = vadd.f32 0.0, %v4101
  %4103 = vmatmul.bf16.gmra.mxu0 %v2760
  %v4104 = vpop.f32.mrf.mxu0
  %v4105 = vadd.f32 0.0, %v4104
  %v4106 = vpop.f32.mrf.mxu0
  %v4107 = vadd.f32 0.0, %v4106
  %4108 = vmatmul.bf16.gmra.mxu0 %v2762
  %v4109 = vpop.f32.mrf.mxu0
  %v4110 = vadd.f32 0.0, %v4109
  %v4111 = vpop.f32.mrf.mxu0
  %v4112 = vadd.f32 0.0, %v4111
  %4113 = vmatmul.bf16.gmra.mxu0 %v2764
  %v4114 = vpop.f32.mrf.mxu0
  %v4115 = vadd.f32 0.0, %v4114
  %v4116 = vpop.f32.mrf.mxu0
  %v4117 = vadd.f32 0.0, %v4116
  %4118 = vmatmul.bf16.gmra.mxu0 %v2766
  %v4119 = vpop.f32.mrf.mxu0
  %v4120 = vadd.f32 0.0, %v4119
  %v4121 = vpop.f32.mrf.mxu0
  %v4122 = vadd.f32 0.0, %v4121
  %4123 = vdwg.mxu0
  %4124 = vmatpush.bf16.msra.mxu0 0
  %4125 = vmatpush.bf16.msra.mxu0 0
  %4126 = vmatpush.bf16.msra.mxu0 0
  %4127 = vmatpush.bf16.msra.mxu0 0
  %4128 = vmatpush.bf16.msra.mxu0 0
  %4129 = vmatpush.bf16.msra.mxu0 %v3793
  %4130 = vmatpush.bf16.msra.mxu0 %v3780
  %4131 = vmatpush.bf16.msra.mxu0 %v3779
  %4132 = vmatmul.bf16.gmra.mxu0 %v2854
  %v4133 = vpop.f32.mrf.mxu0
  %v4134 = vadd.f32 %v3805, %v4133
  %v4135 = vpop.f32.mrf.mxu0
  %v4136 = vadd.f32 %v3807, %v4135
  %4137 = vmatmul.bf16.gmra.mxu0 %v2857
  %v4138 = vpop.f32.mrf.mxu0
  %v4139 = vadd.f32 %v3810, %v4138
  %v4140 = vpop.f32.mrf.mxu0
  %v4141 = vadd.f32 %v3812, %v4140
  %4142 = vmatmul.bf16.gmra.mxu0 %v2860
  %v4143 = vpop.f32.mrf.mxu0
  %v4144 = vadd.f32 %v3815, %v4143
  %v4145 = vpop.f32.mrf.mxu0
  %v4146 = vadd.f32 %v3817, %v4145
  %4147 = vmatmul.bf16.gmra.mxu0 %v2863
  %v4148 = vpop.f32.mrf.mxu0
  %v4149 = vadd.f32 %v3820, %v4148
  %v4150 = vpop.f32.mrf.mxu0
  %v4151 = vadd.f32 %v3822, %v4150
  %4152 = vmatmul.bf16.gmra.mxu0 %v2866
  %v4153 = vpop.f32.mrf.mxu0
  %v4154 = vadd.f32 %v3825, %v4153
  %v4155 = vpop.f32.mrf.mxu0
  %v4156 = vadd.f32 %v3827, %v4155
  %4157 = vmatmul.bf16.gmra.mxu0 %v2869
  %v4158 = vpop.f32.mrf.mxu0
  %v4159 = vadd.f32 %v3830, %v4158
  %v4160 = vpop.f32.mrf.mxu0
  %v4161 = vadd.f32 %v3832, %v4160
  %4162 = vmatmul.bf16.gmra.mxu0 %v2872
  %v4163 = vpop.f32.mrf.mxu0
  %v4164 = vadd.f32 %v3835, %v4163
  %v4165 = vpop.f32.mrf.mxu0
  %v4166 = vadd.f32 %v3837, %v4165
  %4167 = vmatmul.bf16.gmra.mxu0 %v2875
  %v4168 = vpop.f32.mrf.mxu0
  %v4169 = vadd.f32 %v3840, %v4168
  %v4170 = vpop.f32.mrf.mxu0
  %v4171 = vadd.f32 %v3842, %v4170
  %4172 = vmatmul.bf16.gmra.mxu0 %v2878
  %v4173 = vpop.f32.mrf.mxu0
  %v4174 = vadd.f32 %v3845, %v4173
  %v4175 = vpop.f32.mrf.mxu0
  %v4176 = vadd.f32 %v3847, %v4175
  %4177 = vmatmul.bf16.gmra.mxu0 %v2881
  %v4178 = vpop.f32.mrf.mxu0
  %v4179 = vadd.f32 %v3850, %v4178
  %v4180 = vpop.f32.mrf.mxu0
  %v4181 = vadd.f32 %v3852, %v4180
  %4182 = vmatmul.bf16.gmra.mxu0 %v2884
  %v4183 = vpop.f32.mrf.mxu0
  %v4184 = vadd.f32 %v3855, %v4183
  %v4185 = vpop.f32.mrf.mxu0
  %v4186 = vadd.f32 %v3857, %v4185
  %4187 = vmatmul.bf16.gmra.mxu0 %v2887
  %v4188 = vpop.f32.mrf.mxu0
  %v4189 = vadd.f32 %v3860, %v4188
  %v4190 = vpop.f32.mrf.mxu0
  %v4191 = vadd.f32 %v3862, %v4190
  %4192 = vmatmul.bf16.gmra.mxu0 %v2890
  %v4193 = vpop.f32.mrf.mxu0
  %v4194 = vadd.f32 %v3865, %v4193
  %v4195 = vpop.f32.mrf.mxu0
  %v4196 = vadd.f32 %v3867, %v4195
  %4197 = vmatmul.bf16.gmra.mxu0 %v2893
  %v4198 = vpop.f32.mrf.mxu0
  %v4199 = vadd.f32 %v3870, %v4198
  %v4200 = vpop.f32.mrf.mxu0
  %v4201 = vadd.f32 %v3872, %v4200
  %4202 = vmatmul.bf16.gmra.mxu0 %v2896
  %v4203 = vpop.f32.mrf.mxu0
  %v4204 = vadd.f32 %v3875, %v4203
  %v4205 = vpop.f32.mrf.mxu0
  %v4206 = vadd.f32 %v3877, %v4205
  %4207 = vmatmul.bf16.gmra.mxu0 %v2899
  %v4208 = vpop.f32.mrf.mxu0
  %v4209 = vadd.f32 %v3880, %v4208
  %v4210 = vpop.f32.mrf.mxu0
  %v4211 = vadd.f32 %v3882, %v4210
  %4212 = vmatmul.bf16.gmra.mxu0 %v2902
  %v4213 = vpop.f32.mrf.mxu0
  %v4214 = vadd.f32 %v3885, %v4213
  %v4215 = vpop.f32.mrf.mxu0
  %v4216 = vadd.f32 %v3887, %v4215
  %4217 = vmatmul.bf16.gmra.mxu0 %v2905
  %v4218 = vpop.f32.mrf.mxu0
  %v4219 = vadd.f32 %v3890, %v4218
  %v4220 = vpop.f32.mrf.mxu0
  %v4221 = vadd.f32 %v3892, %v4220
  %4222 = vmatmul.bf16.gmra.mxu0 %v2908
  %v4223 = vpop.f32.mrf.mxu0
  %v4224 = vadd.f32 %v3895, %v4223
  %v4225 = vpop.f32.mrf.mxu0
  %v4226 = vadd.f32 %v3897, %v4225
  %4227 = vmatmul.bf16.gmra.mxu0 %v2911
  %v4228 = vpop.f32.mrf.mxu0
  %v4229 = vadd.f32 %v3900, %v4228
  %v4230 = vpop.f32.mrf.mxu0
  %v4231 = vadd.f32 %v3902, %v4230
  %4232 = vmatmul.bf16.gmra.mxu0 %v2914
  %v4233 = vpop.f32.mrf.mxu0
  %v4234 = vadd.f32 %v3905, %v4233
  %v4235 = vpop.f32.mrf.mxu0
  %v4236 = vadd.f32 %v3907, %v4235
  %4237 = vmatmul.bf16.gmra.mxu0 %v2917
  %v4238 = vpop.f32.mrf.mxu0
  %v4239 = vadd.f32 %v3910, %v4238
  %v4240 = vpop.f32.mrf.mxu0
  %v4241 = vadd.f32 %v3912, %v4240
  %4242 = vmatmul.bf16.gmra.mxu0 %v2920
  %v4243 = vpop.f32.mrf.mxu0
  %v4244 = vadd.f32 %v3915, %v4243
  %v4245 = vpop.f32.mrf.mxu0
  %v4246 = vadd.f32 %v3917, %v4245
  %4247 = vmatmul.bf16.gmra.mxu0 %v2923
  %v4248 = vpop.f32.mrf.mxu0
  %v4249 = vadd.f32 %v3920, %v4248
  %v4250 = vpop.f32.mrf.mxu0
  %v4251 = vadd.f32 %v3922, %v4250
  %4252 = vmatmul.bf16.gmra.mxu0 %v2926
  %v4253 = vpop.f32.mrf.mxu0
  %v4254 = vadd.f32 %v3925, %v4253
  %v4255 = vpop.f32.mrf.mxu0
  %v4256 = vadd.f32 %v3927, %v4255
  %4257 = vmatmul.bf16.gmra.mxu0 %v2929
  %v4258 = vpop.f32.mrf.mxu0
  %v4259 = vadd.f32 %v3930, %v4258
  %v4260 = vpop.f32.mrf.mxu0
  %v4261 = vadd.f32 %v3932, %v4260
  %4262 = vmatmul.bf16.gmra.mxu0 %v2932
  %v4263 = vpop.f32.mrf.mxu0
  %v4264 = vadd.f32 %v3935, %v4263
  %v4265 = vpop.f32.mrf.mxu0
  %v4266 = vadd.f32 %v3937, %v4265
  %4267 = vmatmul.bf16.gmra.mxu0 %v2935
  %v4268 = vpop.f32.mrf.mxu0
  %v4269 = vadd.f32 %v3940, %v4268
  %v4270 = vpop.f32.mrf.mxu0
  %v4271 = vadd.f32 %v3942, %v4270
  %4272 = vmatmul.bf16.gmra.mxu0 %v2938
  %v4273 = vpop.f32.mrf.mxu0
  %v4274 = vadd.f32 %v3945, %v4273
  %v4275 = vpop.f32.mrf.mxu0
  %v4276 = vadd.f32 %v3947, %v4275
  %4277 = vmatmul.bf16.gmra.mxu0 %v2941
  %v4278 = vpop.f32.mrf.mxu0
  %v4279 = vadd.f32 %v3950, %v4278
  %v4280 = vpop.f32.mrf.mxu0
  %v4281 = vadd.f32 %v3952, %v4280
  %4282 = vmatmul.bf16.gmra.mxu0 %v2944
  %v4283 = vpop.f32.mrf.mxu0
  %v4284 = vadd.f32 %v3955, %v4283
  %v4285 = vpop.f32.mrf.mxu0
  %v4286 = vadd.f32 %v3957, %v4285
  %4287 = vmatmul.bf16.gmra.mxu0 %v2947
  %v4288 = vpop.f32.mrf.mxu0
  %v4289 = vadd.f32 %v3960, %v4288
  %v4290 = vpop.f32.mrf.mxu0
  %v4291 = vadd.f32 %v3962, %v4290
  %4292 = vmatmul.bf16.gmra.mxu0 %v2950
  %v4293 = vpop.f32.mrf.mxu0
  %v4294 = vadd.f32 %v3965, %v4293
  %v4295 = vpop.f32.mrf.mxu0
  %v4296 = vadd.f32 %v3967, %v4295
  %4297 = vmatmul.bf16.gmra.mxu0 %v2953
  %v4298 = vpop.f32.mrf.mxu0
  %v4299 = vadd.f32 %v3970, %v4298
  %v4300 = vpop.f32.mrf.mxu0
  %v4301 = vadd.f32 %v3972, %v4300
  %4302 = vmatmul.bf16.gmra.mxu0 %v2956
  %v4303 = vpop.f32.mrf.mxu0
  %v4304 = vadd.f32 %v3975, %v4303
  %v4305 = vpop.f32.mrf.mxu0
  %v4306 = vadd.f32 %v3977, %v4305
  %4307 = vmatmul.bf16.gmra.mxu0 %v2959
  %v4308 = vpop.f32.mrf.mxu0
  %v4309 = vadd.f32 %v3980, %v4308
  %v4310 = vpop.f32.mrf.mxu0
  %v4311 = vadd.f32 %v3982, %v4310
  %4312 = vmatmul.bf16.gmra.mxu0 %v2962
  %v4313 = vpop.f32.mrf.mxu0
  %v4314 = vadd.f32 %v3985, %v4313
  %v4315 = vpop.f32.mrf.mxu0
  %v4316 = vadd.f32 %v3987, %v4315
  %4317 = vmatmul.bf16.gmra.mxu0 %v2965
  %v4318 = vpop.f32.mrf.mxu0
  %v4319 = vadd.f32 %v3990, %v4318
  %v4320 = vpop.f32.mrf.mxu0
  %v4321 = vadd.f32 %v3992, %v4320
  %4322 = vmatmul.bf16.gmra.mxu0 %v2968
  %v4323 = vpop.f32.mrf.mxu0
  %v4324 = vadd.f32 %v3995, %v4323
  %v4325 = vpop.f32.mrf.mxu0
  %v4326 = vadd.f32 %v3997, %v4325
  %4327 = vmatmul.bf16.gmra.mxu0 %v2971
  %v4328 = vpop.f32.mrf.mxu0
  %v4329 = vadd.f32 %v4000, %v4328
  %v4330 = vpop.f32.mrf.mxu0
  %v4331 = vadd.f32 %v4002, %v4330
  %4332 = vmatmul.bf16.gmra.mxu0 %v2974
  %v4333 = vpop.f32.mrf.mxu0
  %v4334 = vadd.f32 %v4005, %v4333
  %v4335 = vpop.f32.mrf.mxu0
  %v4336 = vadd.f32 %v4007, %v4335
  %4337 = vmatmul.bf16.gmra.mxu0 %v2977
  %v4338 = vpop.f32.mrf.mxu0
  %v4339 = vadd.f32 %v4010, %v4338
  %v4340 = vpop.f32.mrf.mxu0
  %v4341 = vadd.f32 %v4012, %v4340
  %4342 = vmatmul.bf16.gmra.mxu0 %v2980
  %v4343 = vpop.f32.mrf.mxu0
  %v4344 = vadd.f32 %v4015, %v4343
  %v4345 = vpop.f32.mrf.mxu0
  %v4346 = vadd.f32 %v4017, %v4345
  %4347 = vmatmul.bf16.gmra.mxu0 %v2983
  %v4348 = vpop.f32.mrf.mxu0
  %v4349 = vadd.f32 %v4020, %v4348
  %v4350 = vpop.f32.mrf.mxu0
  %v4351 = vadd.f32 %v4022, %v4350
  %4352 = vmatmul.bf16.gmra.mxu0 %v2986
  %v4353 = vpop.f32.mrf.mxu0
  %v4354 = vadd.f32 %v4025, %v4353
  %v4355 = vpop.f32.mrf.mxu0
  %v4356 = vadd.f32 %v4027, %v4355
  %4357 = vmatmul.bf16.gmra.mxu0 %v2989
  %v4358 = vpop.f32.mrf.mxu0
  %v4359 = vadd.f32 %v4030, %v4358
  %v4360 = vpop.f32.mrf.mxu0
  %v4361 = vadd.f32 %v4032, %v4360
  %4362 = vmatmul.bf16.gmra.mxu0 %v2992
  %v4363 = vpop.f32.mrf.mxu0
  %v4364 = vadd.f32 %v4035, %v4363
  %v4365 = vpop.f32.mrf.mxu0
  %v4366 = vadd.f32 %v4037, %v4365
  %4367 = vmatmul.bf16.gmra.mxu0 %v2995
  %v4368 = vpop.f32.mrf.mxu0
  %v4369 = vadd.f32 %v4040, %v4368
  %v4370 = vpop.f32.mrf.mxu0
  %v4371 = vadd.f32 %v4042, %v4370
  %4372 = vmatmul.bf16.gmra.mxu0 %v2998
  %v4373 = vpop.f32.mrf.mxu0
  %v4374 = vadd.f32 %v4045, %v4373
  %v4375 = vpop.f32.mrf.mxu0
  %v4376 = vadd.f32 %v4047, %v4375
  %4377 = vmatmul.bf16.gmra.mxu0 %v3001
  %v4378 = vpop.f32.mrf.mxu0
  %v4379 = vadd.f32 %v4050, %v4378
  %v4380 = vpop.f32.mrf.mxu0
  %v4381 = vadd.f32 %v4052, %v4380
  %4382 = vmatmul.bf16.gmra.mxu0 %v3004
  %v4383 = vpop.f32.mrf.mxu0
  %v4384 = vadd.f32 %v4055, %v4383
  %v4385 = vpop.f32.mrf.mxu0
  %v4386 = vadd.f32 %v4057, %v4385
  %4387 = vmatmul.bf16.gmra.mxu0 %v3007
  %v4388 = vpop.f32.mrf.mxu0
  %v4389 = vadd.f32 %v4060, %v4388
  %v4390 = vpop.f32.mrf.mxu0
  %v4391 = vadd.f32 %v4062, %v4390
  %4392 = vmatmul.bf16.gmra.mxu0 %v3010
  %v4393 = vpop.f32.mrf.mxu0
  %v4394 = vadd.f32 %v4065, %v4393
  %v4395 = vpop.f32.mrf.mxu0
  %v4396 = vadd.f32 %v4067, %v4395
  %4397 = vmatmul.bf16.gmra.mxu0 %v3013
  %v4398 = vpop.f32.mrf.mxu0
  %v4399 = vadd.f32 %v4070, %v4398
  %v4400 = vpop.f32.mrf.mxu0
  %v4401 = vadd.f32 %v4072, %v4400
  %4402 = vmatmul.bf16.gmra.mxu0 %v3016
  %v4403 = vpop.f32.mrf.mxu0
  %v4404 = vadd.f32 %v4075, %v4403
  %v4405 = vpop.f32.mrf.mxu0
  %v4406 = vadd.f32 %v4077, %v4405
  %4407 = vmatmul.bf16.gmra.mxu0 %v3019
  %v4408 = vpop.f32.mrf.mxu0
  %v4409 = vadd.f32 %v4080, %v4408
  %v4410 = vpop.f32.mrf.mxu0
  %v4411 = vadd.f32 %v4082, %v4410
  %4412 = vmatmul.bf16.gmra.mxu0 %v3022
  %v4413 = vpop.f32.mrf.mxu0
  %v4414 = vadd.f32 %v4085, %v4413
  %v4415 = vpop.f32.mrf.mxu0
  %v4416 = vadd.f32 %v4087, %v4415
  %4417 = vmatmul.bf16.gmra.mxu0 %v3025
  %v4418 = vpop.f32.mrf.mxu0
  %v4419 = vadd.f32 %v4090, %v4418
  %v4420 = vpop.f32.mrf.mxu0
  %v4421 = vadd.f32 %v4092, %v4420
  %4422 = vmatmul.bf16.gmra.mxu0 %v3028
  %v4423 = vpop.f32.mrf.mxu0
  %v4424 = vadd.f32 %v4095, %v4423
  %v4425 = vpop.f32.mrf.mxu0
  %v4426 = vadd.f32 %v4097, %v4425
  %4427 = vmatmul.bf16.gmra.mxu0 %v3031
  %v4428 = vpop.f32.mrf.mxu0
  %v4429 = vadd.f32 %v4100, %v4428
  %v4430 = vpop.f32.mrf.mxu0
  %v4431 = vadd.f32 %v4102, %v4430
  %4432 = vmatmul.bf16.gmra.mxu0 %v3034
  %v4433 = vpop.f32.mrf.mxu0
  %v4434 = vadd.f32 %v4105, %v4433
  %v4435 = vpop.f32.mrf.mxu0
  %v4436 = vadd.f32 %v4107, %v4435
  %4437 = vmatmul.bf16.gmra.mxu0 %v3037
  %v4438 = vpop.f32.mrf.mxu0
  %v4439 = vadd.f32 %v4110, %v4438
  %v4440 = vpop.f32.mrf.mxu0
  %v4441 = vadd.f32 %v4112, %v4440
  %4442 = vmatmul.bf16.gmra.mxu0 %v3040
  %v4443 = vpop.f32.mrf.mxu0
  %v4444 = vadd.f32 %v4115, %v4443
  %v4445 = vpop.f32.mrf.mxu0
  %v4446 = vadd.f32 %v4117, %v4445
  %4447 = vmatmul.bf16.gmra.mxu0 %v3043
  %v4448 = vpop.f32.mrf.mxu0
  %v4449 = vadd.f32 %v4120, %v4448
  %v4450 = vpop.f32.mrf.mxu0
  %v4451 = vadd.f32 %v4122, %v4450
  %4452 = vdwg.mxu0
  %v4453 = vmax.f32 %v3388, %v4134
  %v4454 = vmax.f32 %v3390, %v4136
  %v4455 = vmax.f32 %v3393, %v4139
  %v4456 = vmax.f32 %v3395, %v4141
  %v4457 = vmax.f32 %v3398, %v4144
  %v4458 = vmax.f32 %v3400, %v4146
  %v4459 = vmax.f32 %v3403, %v4149
  %v4460 = vmax.f32 %v3405, %v4151
  %v4461 = vmax.f32 %v3408, %v4154
  %v4462 = vmax.f32 %v3410, %v4156
  %v4463 = vmax.f32 %v3413, %v4159
  %v4464 = vmax.f32 %v3415, %v4161
  %v4465 = vmax.f32 %v3418, %v4164
  %v4466 = vmax.f32 %v3420, %v4166
  %v4467 = vmax.f32 %v3423, %v4169
  %v4468 = vmax.f32 %v3425, %v4171
  %v4469 = vmax.f32 %v3428, %v4174
  %v4470 = vmax.f32 %v3430, %v4176
  %v4471 = vmax.f32 %v3433, %v4179
  %v4472 = vmax.f32 %v3435, %v4181
  %v4473 = vmax.f32 %v3438, %v4184
  %v4474 = vmax.f32 %v3440, %v4186
  %v4475 = vmax.f32 %v3443, %v4189
  %v4476 = vmax.f32 %v3445, %v4191
  %v4477 = vmax.f32 %v3448, %v4194
  %v4478 = vmax.f32 %v3450, %v4196
  %v4479 = vmax.f32 %v3453, %v4199
  %v4480 = vmax.f32 %v3455, %v4201
  %v4481 = vmax.f32 %v3458, %v4204
  %v4482 = vmax.f32 %v3460, %v4206
  %v4483 = vmax.f32 %v3463, %v4209
  %v4484 = vmax.f32 %v3465, %v4211
  %v4485 = vmax.f32 %v3468, %v4214
  %v4486 = vmax.f32 %v3470, %v4216
  %v4487 = vmax.f32 %v3473, %v4219
  %v4488 = vmax.f32 %v3475, %v4221
  %v4489 = vmax.f32 %v3478, %v4224
  %v4490 = vmax.f32 %v3480, %v4226
  %v4491 = vmax.f32 %v3483, %v4229
  %v4492 = vmax.f32 %v3485, %v4231
  %v4493 = vmax.f32 %v3488, %v4234
  %v4494 = vmax.f32 %v3490, %v4236
  %v4495 = vmax.f32 %v3493, %v4239
  %v4496 = vmax.f32 %v3495, %v4241
  %v4497 = vmax.f32 %v3498, %v4244
  %v4498 = vmax.f32 %v3500, %v4246
  %v4499 = vmax.f32 %v3503, %v4249
  %v4500 = vmax.f32 %v3505, %v4251
  %v4501 = vmax.f32 %v3508, %v4254
  %v4502 = vmax.f32 %v3510, %v4256
  %v4503 = vmax.f32 %v3513, %v4259
  %v4504 = vmax.f32 %v3515, %v4261
  %v4505 = vmax.f32 %v3518, %v4264
  %v4506 = vmax.f32 %v3520, %v4266
  %v4507 = vmax.f32 %v3523, %v4269
  %v4508 = vmax.f32 %v3525, %v4271
  %v4509 = vmax.f32 %v3528, %v4274
  %v4510 = vmax.f32 %v3530, %v4276
  %v4511 = vmax.f32 %v3533, %v4279
  %v4512 = vmax.f32 %v3535, %v4281
  %v4513 = vmax.f32 %v3538, %v4284
  %v4514 = vmax.f32 %v3540, %v4286
  %v4515 = vmax.f32 %v3543, %v4289
  %v4516 = vmax.f32 %v3545, %v4291
  %v4517 = vmax.f32 %v3548, %v4294
  %v4518 = vmax.f32 %v3550, %v4296
  %v4519 = vmax.f32 %v3553, %v4299
  %v4520 = vmax.f32 %v3555, %v4301
  %v4521 = vmax.f32 %v3558, %v4304
  %v4522 = vmax.f32 %v3560, %v4306
  %v4523 = vmax.f32 %v3563, %v4309
  %v4524 = vmax.f32 %v3565, %v4311
  %v4525 = vmax.f32 %v3568, %v4314
  %v4526 = vmax.f32 %v3570, %v4316
  %v4527 = vmax.f32 %v3573, %v4319
  %v4528 = vmax.f32 %v3575, %v4321
  %v4529 = vmax.f32 %v3578, %v4324
  %v4530 = vmax.f32 %v3580, %v4326
  %v4531 = vmax.f32 %v3583, %v4329
  %v4532 = vmax.f32 %v3585, %v4331
  %v4533 = vmax.f32 %v3588, %v4334
  %v4534 = vmax.f32 %v3590, %v4336
  %v4535 = vmax.f32 %v3593, %v4339
  %v4536 = vmax.f32 %v3595, %v4341
  %v4537 = vmax.f32 %v3598, %v4344
  %v4538 = vmax.f32 %v3600, %v4346
  %v4539 = vmax.f32 %v3603, %v4349
  %v4540 = vmax.f32 %v3605, %v4351
  %v4541 = vmax.f32 %v3608, %v4354
  %v4542 = vmax.f32 %v3610, %v4356
  %v4543 = vmax.f32 %v3613, %v4359
  %v4544 = vmax.f32 %v3615, %v4361
  %v4545 = vmax.f32 %v3618, %v4364
  %v4546 = vmax.f32 %v3620, %v4366
  %v4547 = vmax.f32 %v3623, %v4369
  %v4548 = vmax.f32 %v3625, %v4371
  %v4549 = vmax.f32 %v3628, %v4374
  %v4550 = vmax.f32 %v3630, %v4376
  %v4551 = vmax.f32 %v3633, %v4379
  %v4552 = vmax.f32 %v3635, %v4381
  %v4553 = vmax.f32 %v3638, %v4384
  %v4554 = vmax.f32 %v3640, %v4386
  %v4555 = vmax.f32 %v3643, %v4389
  %v4556 = vmax.f32 %v3645, %v4391
  %v4557 = vmax.f32 %v3648, %v4394
  %v4558 = vmax.f32 %v3650, %v4396
  %v4559 = vmax.f32 %v3653, %v4399
  %v4560 = vmax.f32 %v3655, %v4401
  %v4561 = vmax.f32 %v3658, %v4404
  %v4562 = vmax.f32 %v3660, %v4406
  %v4563 = vmax.f32 %v3663, %v4409
  %v4564 = vmax.f32 %v3665, %v4411
  %v4565 = vmax.f32 %v3668, %v4414
  %v4566 = vmax.f32 %v3670, %v4416
  %v4567 = vmax.f32 %v3673, %v4419
  %v4568 = vmax.f32 %v3675, %v4421
  %v4569 = vmax.f32 %v3678, %v4424
  %v4570 = vmax.f32 %v3680, %v4426
  %v4571 = vmax.f32 %v3683, %v4429
  %v4572 = vmax.f32 %v3685, %v4431
  %v4573 = vmax.f32 %v3688, %v4434
  %v4574 = vmax.f32 %v3690, %v4436
  %v4575 = vmax.f32 %v3693, %v4439
  %v4576 = vmax.f32 %v3695, %v4441
  %v4577 = vmax.f32 %v3698, %v4444
  %v4578 = vmax.f32 %v3700, %v4446
  %v4579 = vmax.f32 %v3703, %v4449
  %v4580 = vmax.f32 %v3705, %v4451
  %vm4581 = vcmask 687104
  %4582 = vst.msk [vmem:[#allocation2] sm:$0xff] %vm4581, %v4453
  %4583 = vst.msk [vmem:[#allocation2 + $0x8] sm:$0xff] %vm4581, %v4454
  %4584 = vst.msk [vmem:[#allocation2 + $0x10] sm:$0xff] %vm4581, %v4455
  %4585 = vst.msk [vmem:[#allocation2 + $0x18] sm:$0xff] %vm4581, %v4456
  %4586 = vst.msk [vmem:[#allocation2 + $0x20] sm:$0xff] %vm4581, %v4457
  %4587 = vst.msk [vmem:[#allocation2 + $0x28] sm:$0xff] %vm4581, %v4458
  %4588 = vst.msk [vmem:[#allocation2 + $0x30] sm:$0xff] %vm4581, %v4459
  %4589 = vst.msk [vmem:[#allocation2 + $0x38] sm:$0xff] %vm4581, %v4460
  %4590 = vst.msk [vmem:[#allocation2 + $0x40] sm:$0xff] %vm4581, %v4461
  %4591 = vst.msk [vmem:[#allocation2 + $0x48] sm:$0xff] %vm4581, %v4462
  %4592 = vst.msk [vmem:[#allocation2 + $0x50] sm:$0xff] %vm4581, %v4463
  %4593 = vst.msk [vmem:[#allocation2 + $0x58] sm:$0xff] %vm4581, %v4464
  %4594 = vst.msk [vmem:[#allocation2 + $0x60] sm:$0xff] %vm4581, %v4465
  %4595 = vst.msk [vmem:[#allocation2 + $0x68] sm:$0xff] %vm4581, %v4466
  %4596 = vst.msk [vmem:[#allocation2 + $0x70] sm:$0xff] %vm4581, %v4467
  %4597 = vst.msk [vmem:[#allocation2 + $0x78] sm:$0xff] %vm4581, %v4468
  %4598 = vst.msk [vmem:[#allocation2 + $0x80] sm:$0xff] %vm4581, %v4469
  %4599 = vst.msk [vmem:[#allocation2 + $0x88] sm:$0xff] %vm4581, %v4470
  %4600 = vst.msk [vmem:[#allocation2 + $0x90] sm:$0xff] %vm4581, %v4471
  %4601 = vst.msk [vmem:[#allocation2 + $0x98] sm:$0xff] %vm4581, %v4472
  %4602 = vst.msk [vmem:[#allocation2 + $0xa0] sm:$0xff] %vm4581, %v4473
  %4603 = vst.msk [vmem:[#allocation2 + $0xa8] sm:$0xff] %vm4581, %v4474
  %4604 = vst.msk [vmem:[#allocation2 + $0xb0] sm:$0xff] %vm4581, %v4475
  %4605 = vst.msk [vmem:[#allocation2 + $0xb8] sm:$0xff] %vm4581, %v4476
  %4606 = vst.msk [vmem:[#allocation2 + $0xc0] sm:$0xff] %vm4581, %v4477
  %4607 = vst.msk [vmem:[#allocation2 + $0xc8] sm:$0xff] %vm4581, %v4478
  %4608 = vst.msk [vmem:[#allocation2 + $0xd0] sm:$0xff] %vm4581, %v4479
  %4609 = vst.msk [vmem:[#allocation2 + $0xd8] sm:$0xff] %vm4581, %v4480
  %4610 = vst.msk [vmem:[#allocation2 + $0xe0] sm:$0xff] %vm4581, %v4481
  %4611 = vst.msk [vmem:[#allocation2 + $0xe8] sm:$0xff] %vm4581, %v4482
  %4612 = vst.msk [vmem:[#allocation2 + $0xf0] sm:$0xff] %vm4581, %v4483
  %4613 = vst.msk [vmem:[#allocation2 + $0xf8] sm:$0xff] %vm4581, %v4484
  %4614 = vst.msk [vmem:[#allocation2 + $0x100] sm:$0xff] %vm4581, %v4485
  %4615 = vst.msk [vmem:[#allocation2 + $0x108] sm:$0xff] %vm4581, %v4486
  %4616 = vst.msk [vmem:[#allocation2 + $0x110] sm:$0xff] %vm4581, %v4487
  %4617 = vst.msk [vmem:[#allocation2 + $0x118] sm:$0xff] %vm4581, %v4488
  %4618 = vst.msk [vmem:[#allocation2 + $0x120] sm:$0xff] %vm4581, %v4489
  %4619 = vst.msk [vmem:[#allocation2 + $0x128] sm:$0xff] %vm4581, %v4490
  %4620 = vst.msk [vmem:[#allocation2 + $0x130] sm:$0xff] %vm4581, %v4491
  %4621 = vst.msk [vmem:[#allocation2 + $0x138] sm:$0xff] %vm4581, %v4492
  %4622 = vst.msk [vmem:[#allocation2 + $0x140] sm:$0xff] %vm4581, %v4493
  %4623 = vst.msk [vmem:[#allocation2 + $0x148] sm:$0xff] %vm4581, %v4494
  %4624 = vst.msk [vmem:[#allocation2 + $0x150] sm:$0xff] %vm4581, %v4495
  %4625 = vst.msk [vmem:[#allocation2 + $0x158] sm:$0xff] %vm4581, %v4496
  %4626 = vst.msk [vmem:[#allocation2 + $0x160] sm:$0xff] %vm4581, %v4497
  %4627 = vst.msk [vmem:[#allocation2 + $0x168] sm:$0xff] %vm4581, %v4498
  %4628 = vst.msk [vmem:[#allocation2 + $0x170] sm:$0xff] %vm4581, %v4499
  %4629 = vst.msk [vmem:[#allocation2 + $0x178] sm:$0xff] %vm4581, %v4500
  %4630 = vst.msk [vmem:[#allocation2 + $0x180] sm:$0xff] %vm4581, %v4501
  %4631 = vst.msk [vmem:[#allocation2 + $0x188] sm:$0xff] %vm4581, %v4502
  %4632 = vst.msk [vmem:[#allocation2 + $0x190] sm:$0xff] %vm4581, %v4503
  %4633 = vst.msk [vmem:[#allocation2 + $0x198] sm:$0xff] %vm4581, %v4504
  %4634 = vst.msk [vmem:[#allocation2 + $0x1a0] sm:$0xff] %vm4581, %v4505
  %4635 = vst.msk [vmem:[#allocation2 + $0x1a8] sm:$0xff] %vm4581, %v4506
  %4636 = vst.msk [vmem:[#allocation2 + $0x1b0] sm:$0xff] %vm4581, %v4507
  %4637 = vst.msk [vmem:[#allocation2 + $0x1b8] sm:$0xff] %vm4581, %v4508
  %4638 = vst.msk [vmem:[#allocation2 + $0x1c0] sm:$0xff] %vm4581, %v4509
  %4639 = vst.msk [vmem:[#allocation2 + $0x1c8] sm:$0xff] %vm4581, %v4510
  %4640 = vst.msk [vmem:[#allocation2 + $0x1d0] sm:$0xff] %vm4581, %v4511
  %4641 = vst.msk [vmem:[#allocation2 + $0x1d8] sm:$0xff] %vm4581, %v4512
  %4642 = vst.msk [vmem:[#allocation2 + $0x1e0] sm:$0xff] %vm4581, %v4513
  %4643 = vst.msk [vmem:[#allocation2 + $0x1e8] sm:$0xff] %vm4581, %v4514
  %4644 = vst.msk [vmem:[#allocation2 + $0x1f0] sm:$0xff] %vm4581, %v4515
  %4645 = vst.msk [vmem:[#allocation2 + $0x1f8] sm:$0xff] %vm4581, %v4516
  %4646 = vst.msk [vmem:[#allocation2 + $0x200] sm:$0xff] %vm4581, %v4517
  %4647 = vst.msk [vmem:[#allocation2 + $0x208] sm:$0xff] %vm4581, %v4518
  %4648 = vst.msk [vmem:[#allocation2 + $0x210] sm:$0xff] %vm4581, %v4519
  %4649 = vst.msk [vmem:[#allocation2 + $0x218] sm:$0xff] %vm4581, %v4520
  %4650 = vst.msk [vmem:[#allocation2 + $0x220] sm:$0xff] %vm4581, %v4521
  %4651 = vst.msk [vmem:[#allocation2 + $0x228] sm:$0xff] %vm4581, %v4522
  %4652 = vst.msk [vmem:[#allocation2 + $0x230] sm:$0xff] %vm4581, %v4523
  %4653 = vst.msk [vmem:[#allocation2 + $0x238] sm:$0xff] %vm4581, %v4524
  %4654 = vst.msk [vmem:[#allocation2 + $0x240] sm:$0xff] %vm4581, %v4525
  %4655 = vst.msk [vmem:[#allocation2 + $0x248] sm:$0xff] %vm4581, %v4526
  %4656 = vst.msk [vmem:[#allocation2 + $0x250] sm:$0xff] %vm4581, %v4527
  %4657 = vst.msk [vmem:[#allocation2 + $0x258] sm:$0xff] %vm4581, %v4528
  %4658 = vst.msk [vmem:[#allocation2 + $0x260] sm:$0xff] %vm4581, %v4529
  %4659 = vst.msk [vmem:[#allocation2 + $0x268] sm:$0xff] %vm4581, %v4530
  %4660 = vst.msk [vmem:[#allocation2 + $0x270] sm:$0xff] %vm4581, %v4531
  %4661 = vst.msk [vmem:[#allocation2 + $0x278] sm:$0xff] %vm4581, %v4532
  %4662 = vst.msk [vmem:[#allocation2 + $0x280] sm:$0xff] %vm4581, %v4533
  %4663 = vst.msk [vmem:[#allocation2 + $0x288] sm:$0xff] %vm4581, %v4534
  %4664 = vst.msk [vmem:[#allocation2 + $0x290] sm:$0xff] %vm4581, %v4535
  %4665 = vst.msk [vmem:[#allocation2 + $0x298] sm:$0xff] %vm4581, %v4536
  %4666 = vst.msk [vmem:[#allocation2 + $0x2a0] sm:$0xff] %vm4581, %v4537
  %4667 = vst.msk [vmem:[#allocation2 + $0x2a8] sm:$0xff] %vm4581, %v4538
  %4668 = vst.msk [vmem:[#allocation2 + $0x2b0] sm:$0xff] %vm4581, %v4539
  %4669 = vst.msk [vmem:[#allocation2 + $0x2b8] sm:$0xff] %vm4581, %v4540
  %4670 = vst.msk [vmem:[#allocation2 + $0x2c0] sm:$0xff] %vm4581, %v4541
  %4671 = vst.msk [vmem:[#allocation2 + $0x2c8] sm:$0xff] %vm4581, %v4542
  %4672 = vst.msk [vmem:[#allocation2 + $0x2d0] sm:$0xff] %vm4581, %v4543
  %4673 = vst.msk [vmem:[#allocation2 + $0x2d8] sm:$0xff] %vm4581, %v4544
  %4674 = vst.msk [vmem:[#allocation2 + $0x2e0] sm:$0xff] %vm4581, %v4545
  %4675 = vst.msk [vmem:[#allocation2 + $0x2e8] sm:$0xff] %vm4581, %v4546
  %4676 = vst.msk [vmem:[#allocation2 + $0x2f0] sm:$0xff] %vm4581, %v4547
  %4677 = vst.msk [vmem:[#allocation2 + $0x2f8] sm:$0xff] %vm4581, %v4548
  %4678 = vst.msk [vmem:[#allocation2 + $0x300] sm:$0xff] %vm4581, %v4549
  %4679 = vst.msk [vmem:[#allocation2 + $0x308] sm:$0xff] %vm4581, %v4550
  %4680 = vst.msk [vmem:[#allocation2 + $0x310] sm:$0xff] %vm4581, %v4551
  %4681 = vst.msk [vmem:[#allocation2 + $0x318] sm:$0xff] %vm4581, %v4552
  %4682 = vst.msk [vmem:[#allocation2 + $0x320] sm:$0xff] %vm4581, %v4553
  %4683 = vst.msk [vmem:[#allocation2 + $0x328] sm:$0xff] %vm4581, %v4554
  %4684 = vst.msk [vmem:[#allocation2 + $0x330] sm:$0xff] %vm4581, %v4555
  %4685 = vst.msk [vmem:[#allocation2 + $0x338] sm:$0xff] %vm4581, %v4556
  %4686 = vst.msk [vmem:[#allocation2 + $0x340] sm:$0xff] %vm4581, %v4557
  %4687 = vst.msk [vmem:[#allocation2 + $0x348] sm:$0xff] %vm4581, %v4558
  %4688 = vst.msk [vmem:[#allocation2 + $0x350] sm:$0xff] %vm4581, %v4559
  %4689 = vst.msk [vmem:[#allocation2 + $0x358] sm:$0xff] %vm4581, %v4560
  %4690 = vst.msk [vmem:[#allocation2 + $0x360] sm:$0xff] %vm4581, %v4561
  %4691 = vst.msk [vmem:[#allocation2 + $0x368] sm:$0xff] %vm4581, %v4562
  %4692 = vst.msk [vmem:[#allocation2 + $0x370] sm:$0xff] %vm4581, %v4563
  %4693 = vst.msk [vmem:[#allocation2 + $0x378] sm:$0xff] %vm4581, %v4564
  %4694 = vst.msk [vmem:[#allocation2 + $0x380] sm:$0xff] %vm4581, %v4565
  %4695 = vst.msk [vmem:[#allocation2 + $0x388] sm:$0xff] %vm4581, %v4566
  %4696 = vst.msk [vmem:[#allocation2 + $0x390] sm:$0xff] %vm4581, %v4567
  %4697 = vst.msk [vmem:[#allocation2 + $0x398] sm:$0xff] %vm4581, %v4568
  %4698 = vst.msk [vmem:[#allocation2 + $0x3a0] sm:$0xff] %vm4581, %v4569
  %4699 = vst.msk [vmem:[#allocation2 + $0x3a8] sm:$0xff] %vm4581, %v4570
  %4700 = vst.msk [vmem:[#allocation2 + $0x3b0] sm:$0xff] %vm4581, %v4571
  %4701 = vst.msk [vmem:[#allocation2 + $0x3b8] sm:$0xff] %vm4581, %v4572
  %4702 = vst.msk [vmem:[#allocation2 + $0x3c0] sm:$0xff] %vm4581, %v4573
  %4703 = vst.msk [vmem:[#allocation2 + $0x3c8] sm:$0xff] %vm4581, %v4574
  %4704 = vst.msk [vmem:[#allocation2 + $0x3d0] sm:$0xff] %vm4581, %v4575
  %4705 = vst.msk [vmem:[#allocation2 + $0x3d8] sm:$0xff] %vm4581, %v4576
  %4706 = vst.msk [vmem:[#allocation2 + $0x3e0] sm:$0xff] %vm4581, %v4577
  %4707 = vst.msk [vmem:[#allocation2 + $0x3e8] sm:$0xff] %vm4581, %v4578
  %4708 = vst.msk [vmem:[#allocation2 + $0x3f0] sm:$0xff] %vm4581, %v4579
  %4709 = vst.msk [vmem:[#allocation2 + $0x3f8] sm:$0xff] %vm4581, %v4580
  %v4710 = vld [vmem:[#allocation2] ss:$2 sm:$0xff]
  %s4711 = scalar_lea.vmem [#allocation2], 16
  %v4712 = vld [vmem:[%s4711] ss:$2 sm:$0xff]
  %s4713 = scalar_lea.vmem [#allocation2], 32
  %v4714 = vld [vmem:[%s4713] ss:$2 sm:$0xff]
  %s4715 = scalar_lea.vmem [#allocation2], 48
  %v4716 = vld [vmem:[%s4715] ss:$2 sm:$0xff]
  %s4717 = scalar_lea.vmem [#allocation2], 64
  %v4718 = vld [vmem:[%s4717] ss:$2 sm:$0xff]
  %s4719 = scalar_lea.vmem [#allocation2], 80
  %v4720 = vld [vmem:[%s4719] ss:$2 sm:$0xff]
  %s4721 = scalar_lea.vmem [#allocation2], 96
  %v4722 = vld [vmem:[%s4721] ss:$2 sm:$0xff]
  %s4723 = scalar_lea.vmem [#allocation2], 112
  %v4724 = vld [vmem:[%s4723] ss:$2 sm:$0xff]
  %s4725 = scalar_lea.vmem [#allocation2], 128
  %v4726 = vld [vmem:[%s4725] ss:$2 sm:$0xff]
  %s4727 = scalar_lea.vmem [#allocation2], 144
  %v4728 = vld [vmem:[%s4727] ss:$2 sm:$0xff]
  %s4729 = scalar_lea.vmem [#allocation2], 160
  %v4730 = vld [vmem:[%s4729] ss:$2 sm:$0xff]
  %s4731 = scalar_lea.vmem [#allocation2], 176
  %v4732 = vld [vmem:[%s4731] ss:$2 sm:$0xff]
  %s4733 = scalar_lea.vmem [#allocation2], 192
  %v4734 = vld [vmem:[%s4733] ss:$2 sm:$0xff]
  %s4735 = scalar_lea.vmem [#allocation2], 208
  %v4736 = vld [vmem:[%s4735] ss:$2 sm:$0xff]
  %s4737 = scalar_lea.vmem [#allocation2], 224
  %v4738 = vld [vmem:[%s4737] ss:$2 sm:$0xff]
  %s4739 = scalar_lea.vmem [#allocation2], 240
  %v4740 = vld [vmem:[%s4739] ss:$2 sm:$0xff]
  %s4741 = scalar_lea.vmem [#allocation2], 256
  %v4742 = vld [vmem:[%s4741] ss:$2 sm:$0xff]
  %s4743 = scalar_lea.vmem [#allocation2], 272
  %v4744 = vld [vmem:[%s4743] ss:$2 sm:$0xff]
  %s4745 = scalar_lea.vmem [#allocation2], 288
  %v4746 = vld [vmem:[%s4745] ss:$2 sm:$0xff]
  %s4747 = scalar_lea.vmem [#allocation2], 304
  %v4748 = vld [vmem:[%s4747] ss:$2 sm:$0xff]
  %s4749 = scalar_lea.vmem [#allocation2], 320
  %v4750 = vld [vmem:[%s4749] ss:$2 sm:$0xff]
  %s4751 = scalar_lea.vmem [#allocation2], 336
  %v4752 = vld [vmem:[%s4751] ss:$2 sm:$0xff]
  %s4753 = scalar_lea.vmem [#allocation2], 352
  %v4754 = vld [vmem:[%s4753] ss:$2 sm:$0xff]
  %s4755 = scalar_lea.vmem [#allocation2], 368
  %v4756 = vld [vmem:[%s4755] ss:$2 sm:$0xff]
  %s4757 = scalar_lea.vmem [#allocation2], 384
  %v4758 = vld [vmem:[%s4757] ss:$2 sm:$0xff]
  %s4759 = scalar_lea.vmem [#allocation2], 400
  %v4760 = vld [vmem:[%s4759] ss:$2 sm:$0xff]
  %s4761 = scalar_lea.vmem [#allocation2], 416
  %v4762 = vld [vmem:[%s4761] ss:$2 sm:$0xff]
  %s4763 = scalar_lea.vmem [#allocation2], 432
  %v4764 = vld [vmem:[%s4763] ss:$2 sm:$0xff]
  %s4765 = scalar_lea.vmem [#allocation2], 448
  %v4766 = vld [vmem:[%s4765] ss:$2 sm:$0xff]
  %s4767 = scalar_lea.vmem [#allocation2], 464
  %v4768 = vld [vmem:[%s4767] ss:$2 sm:$0xff]
  %s4769 = scalar_lea.vmem [#allocation2], 480
  %v4770 = vld [vmem:[%s4769] ss:$2 sm:$0xff]
  %s4771 = scalar_lea.vmem [#allocation2], 496
  %v4772 = vld [vmem:[%s4771] ss:$2 sm:$0xff]
  %s4773 = scalar_lea.vmem [#allocation2], 512
  %v4774 = vld [vmem:[%s4773] ss:$2 sm:$0xff]
  %s4775 = scalar_lea.vmem [#allocation2], 528
  %v4776 = vld [vmem:[%s4775] ss:$2 sm:$0xff]
  %s4777 = scalar_lea.vmem [#allocation2], 544
  %v4778 = vld [vmem:[%s4777] ss:$2 sm:$0xff]
  %s4779 = scalar_lea.vmem [#allocation2], 560
  %v4780 = vld [vmem:[%s4779] ss:$2 sm:$0xff]
  %s4781 = scalar_lea.vmem [#allocation2], 576
  %v4782 = vld [vmem:[%s4781] ss:$2 sm:$0xff]
  %s4783 = scalar_lea.vmem [#allocation2], 592
  %v4784 = vld [vmem:[%s4783] ss:$2 sm:$0xff]
  %s4785 = scalar_lea.vmem [#allocation2], 608
  %v4786 = vld [vmem:[%s4785] ss:$2 sm:$0xff]
  %s4787 = scalar_lea.vmem [#allocation2], 624
  %v4788 = vld [vmem:[%s4787] ss:$2 sm:$0xff]
  %s4789 = scalar_lea.vmem [#allocation2], 640
  %v4790 = vld [vmem:[%s4789] ss:$2 sm:$0xff]
  %s4791 = scalar_lea.vmem [#allocation2], 656
  %v4792 = vld [vmem:[%s4791] ss:$2 sm:$0xff]
  %s4793 = scalar_lea.vmem [#allocation2], 672
  %v4794 = vld [vmem:[%s4793] ss:$2 sm:$0xff]
  %s4795 = scalar_lea.vmem [#allocation2], 688
  %v4796 = vld [vmem:[%s4795] ss:$2 sm:$0xff]
  %s4797 = scalar_lea.vmem [#allocation2], 704
  %v4798 = vld [vmem:[%s4797] ss:$2 sm:$0xff]
  %s4799 = scalar_lea.vmem [#allocation2], 720
  %v4800 = vld [vmem:[%s4799] ss:$2 sm:$0xff]
  %s4801 = scalar_lea.vmem [#allocation2], 736
  %v4802 = vld [vmem:[%s4801] ss:$2 sm:$0xff]
  %s4803 = scalar_lea.vmem [#allocation2], 752
  %v4804 = vld [vmem:[%s4803] ss:$2 sm:$0xff]
  %s4805 = scalar_lea.vmem [#allocation2], 768
  %v4806 = vld [vmem:[%s4805] ss:$2 sm:$0xff]
  %s4807 = scalar_lea.vmem [#allocation2], 784
  %v4808 = vld [vmem:[%s4807] ss:$2 sm:$0xff]
  %s4809 = scalar_lea.vmem [#allocation2], 800
  %v4810 = vld [vmem:[%s4809] ss:$2 sm:$0xff]
  %s4811 = scalar_lea.vmem [#allocation2], 816
  %v4812 = vld [vmem:[%s4811] ss:$2 sm:$0xff]
  %s4813 = scalar_lea.vmem [#allocation2], 832
  %v4814 = vld [vmem:[%s4813] ss:$2 sm:$0xff]
  %s4815 = scalar_lea.vmem [#allocation2], 848
  %v4816 = vld [vmem:[%s4815] ss:$2 sm:$0xff]
  %s4817 = scalar_lea.vmem [#allocation2], 864
  %v4818 = vld [vmem:[%s4817] ss:$2 sm:$0xff]
  %s4819 = scalar_lea.vmem [#allocation2], 880
  %v4820 = vld [vmem:[%s4819] ss:$2 sm:$0xff]
  %s4821 = scalar_lea.vmem [#allocation2], 896
  %v4822 = vld [vmem:[%s4821] ss:$2 sm:$0xff]
  %s4823 = scalar_lea.vmem [#allocation2], 912
  %v4824 = vld [vmem:[%s4823] ss:$2 sm:$0xff]
  %s4825 = scalar_lea.vmem [#allocation2], 928
  %v4826 = vld [vmem:[%s4825] ss:$2 sm:$0xff]
  %s4827 = scalar_lea.vmem [#allocation2], 944
  %v4828 = vld [vmem:[%s4827] ss:$2 sm:$0xff]
  %s4829 = scalar_lea.vmem [#allocation2], 960
  %v4830 = vld [vmem:[%s4829] ss:$2 sm:$0xff]
  %s4831 = scalar_lea.vmem [#allocation2], 976
  %v4832 = vld [vmem:[%s4831] ss:$2 sm:$0xff]
  %s4833 = scalar_lea.vmem [#allocation2], 992
  %v4834 = vld [vmem:[%s4833] ss:$2 sm:$0xff]
  %s4835 = scalar_lea.vmem [#allocation2], 1008
  %v4836 = vld [vmem:[%s4835] ss:$2 sm:$0xff]
  %s4837 = scalar_lea.vmem [#allocation2], 1
  %v4838 = vld [vmem:[%s4837] ss:$2 sm:$0xff]
  %s4839 = scalar_lea.vmem [#allocation2], 17
  %v4840 = vld [vmem:[%s4839] ss:$2 sm:$0xff]
  %s4841 = scalar_lea.vmem [#allocation2], 33
  %v4842 = vld [vmem:[%s4841] ss:$2 sm:$0xff]
  %s4843 = scalar_lea.vmem [#allocation2], 49
  %v4844 = vld [vmem:[%s4843] ss:$2 sm:$0xff]
  %s4845 = scalar_lea.vmem [#allocation2], 65
  %v4846 = vld [vmem:[%s4845] ss:$2 sm:$0xff]
  %s4847 = scalar_lea.vmem [#allocation2], 81
  %v4848 = vld [vmem:[%s4847] ss:$2 sm:$0xff]
  %s4849 = scalar_lea.vmem [#allocation2], 97
  %v4850 = vld [vmem:[%s4849] ss:$2 sm:$0xff]
  %s4851 = scalar_lea.vmem [#allocation2], 113
  %v4852 = vld [vmem:[%s4851] ss:$2 sm:$0xff]
  %s4853 = scalar_lea.vmem [#allocation2], 129
  %v4854 = vld [vmem:[%s4853] ss:$2 sm:$0xff]
  %s4855 = scalar_lea.vmem [#allocation2], 145
  %v4856 = vld [vmem:[%s4855] ss:$2 sm:$0xff]
  %s4857 = scalar_lea.vmem [#allocation2], 161
  %v4858 = vld [vmem:[%s4857] ss:$2 sm:$0xff]
  %s4859 = scalar_lea.vmem [#allocation2], 177
  %v4860 = vld [vmem:[%s4859] ss:$2 sm:$0xff]
  %s4861 = scalar_lea.vmem [#allocation2], 193
  %v4862 = vld [vmem:[%s4861] ss:$2 sm:$0xff]
  %s4863 = scalar_lea.vmem [#allocation2], 209
  %v4864 = vld [vmem:[%s4863] ss:$2 sm:$0xff]
  %s4865 = scalar_lea.vmem [#allocation2], 225
  %v4866 = vld [vmem:[%s4865] ss:$2 sm:$0xff]
  %s4867 = scalar_lea.vmem [#allocation2], 241
  %v4868 = vld [vmem:[%s4867] ss:$2 sm:$0xff]
  %s4869 = scalar_lea.vmem [#allocation2], 257
  %v4870 = vld [vmem:[%s4869] ss:$2 sm:$0xff]
  %s4871 = scalar_lea.vmem [#allocation2], 273
  %v4872 = vld [vmem:[%s4871] ss:$2 sm:$0xff]
  %s4873 = scalar_lea.vmem [#allocation2], 289
  %v4874 = vld [vmem:[%s4873] ss:$2 sm:$0xff]
  %s4875 = scalar_lea.vmem [#allocation2], 305
  %v4876 = vld [vmem:[%s4875] ss:$2 sm:$0xff]
  %s4877 = scalar_lea.vmem [#allocation2], 321
  %v4878 = vld [vmem:[%s4877] ss:$2 sm:$0xff]
  %s4879 = scalar_lea.vmem [#allocation2], 337
  %v4880 = vld [vmem:[%s4879] ss:$2 sm:$0xff]
  %s4881 = scalar_lea.vmem [#allocation2], 353
  %v4882 = vld [vmem:[%s4881] ss:$2 sm:$0xff]
  %s4883 = scalar_lea.vmem [#allocation2], 369
  %v4884 = vld [vmem:[%s4883] ss:$2 sm:$0xff]
  %s4885 = scalar_lea.vmem [#allocation2], 385
  %v4886 = vld [vmem:[%s4885] ss:$2 sm:$0xff]
  %s4887 = scalar_lea.vmem [#allocation2], 401
  %v4888 = vld [vmem:[%s4887] ss:$2 sm:$0xff]
  %s4889 = scalar_lea.vmem [#allocation2], 417
  %v4890 = vld [vmem:[%s4889] ss:$2 sm:$0xff]
  %s4891 = scalar_lea.vmem [#allocation2], 433
  %v4892 = vld [vmem:[%s4891] ss:$2 sm:$0xff]
  %s4893 = scalar_lea.vmem [#allocation2], 449
  %v4894 = vld [vmem:[%s4893] ss:$2 sm:$0xff]
  %s4895 = scalar_lea.vmem [#allocation2], 465
  %v4896 = vld [vmem:[%s4895] ss:$2 sm:$0xff]
  %s4897 = scalar_lea.vmem [#allocation2], 481
  %v4898 = vld [vmem:[%s4897] ss:$2 sm:$0xff]
  %s4899 = scalar_lea.vmem [#allocation2], 497
  %v4900 = vld [vmem:[%s4899] ss:$2 sm:$0xff]
  %s4901 = scalar_lea.vmem [#allocation2], 513
  %v4902 = vld [vmem:[%s4901] ss:$2 sm:$0xff]
  %s4903 = scalar_lea.vmem [#allocation2], 529
  %v4904 = vld [vmem:[%s4903] ss:$2 sm:$0xff]
  %s4905 = scalar_lea.vmem [#allocation2], 545
  %v4906 = vld [vmem:[%s4905] ss:$2 sm:$0xff]
  %s4907 = scalar_lea.vmem [#allocation2], 561
  %v4908 = vld [vmem:[%s4907] ss:$2 sm:$0xff]
  %s4909 = scalar_lea.vmem [#allocation2], 577
  %v4910 = vld [vmem:[%s4909] ss:$2 sm:$0xff]
  %s4911 = scalar_lea.vmem [#allocation2], 593
  %v4912 = vld [vmem:[%s4911] ss:$2 sm:$0xff]
  %s4913 = scalar_lea.vmem [#allocation2], 609
  %v4914 = vld [vmem:[%s4913] ss:$2 sm:$0xff]
  %s4915 = scalar_lea.vmem [#allocation2], 625
  %v4916 = vld [vmem:[%s4915] ss:$2 sm:$0xff]
  %s4917 = scalar_lea.vmem [#allocation2], 641
  %v4918 = vld [vmem:[%s4917] ss:$2 sm:$0xff]
  %s4919 = scalar_lea.vmem [#allocation2], 657
  %v4920 = vld [vmem:[%s4919] ss:$2 sm:$0xff]
  %s4921 = scalar_lea.vmem [#allocation2], 673
  %v4922 = vld [vmem:[%s4921] ss:$2 sm:$0xff]
  %s4923 = scalar_lea.vmem [#allocation2], 689
  %v4924 = vld [vmem:[%s4923] ss:$2 sm:$0xff]
  %s4925 = scalar_lea.vmem [#allocation2], 705
  %v4926 = vld [vmem:[%s4925] ss:$2 sm:$0xff]
  %s4927 = scalar_lea.vmem [#allocation2], 721
  %v4928 = vld [vmem:[%s4927] ss:$2 sm:$0xff]
  %s4929 = scalar_lea.vmem [#allocation2], 737
  %v4930 = vld [vmem:[%s4929] ss:$2 sm:$0xff]
  %s4931 = scalar_lea.vmem [#allocation2], 753
  %v4932 = vld [vmem:[%s4931] ss:$2 sm:$0xff]
  %s4933 = scalar_lea.vmem [#allocation2], 769
  %v4934 = vld [vmem:[%s4933] ss:$2 sm:$0xff]
  %s4935 = scalar_lea.vmem [#allocation2], 785
  %v4936 = vld [vmem:[%s4935] ss:$2 sm:$0xff]
  %s4937 = scalar_lea.vmem [#allocation2], 801
  %v4938 = vld [vmem:[%s4937] ss:$2 sm:$0xff]
  %s4939 = scalar_lea.vmem [#allocation2], 817
  %v4940 = vld [vmem:[%s4939] ss:$2 sm:$0xff]
  %s4941 = scalar_lea.vmem [#allocation2], 833
  %v4942 = vld [vmem:[%s4941] ss:$2 sm:$0xff]
  %s4943 = scalar_lea.vmem [#allocation2], 849
  %v4944 = vld [vmem:[%s4943] ss:$2 sm:$0xff]
  %s4945 = scalar_lea.vmem [#allocation2], 865
  %v4946 = vld [vmem:[%s4945] ss:$2 sm:$0xff]
  %s4947 = scalar_lea.vmem [#allocation2], 881
  %v4948 = vld [vmem:[%s4947] ss:$2 sm:$0xff]
  %s4949 = scalar_lea.vmem [#allocation2], 897
  %v4950 = vld [vmem:[%s4949] ss:$2 sm:$0xff]
  %s4951 = scalar_lea.vmem [#allocation2], 913
  %v4952 = vld [vmem:[%s4951] ss:$2 sm:$0xff]
  %s4953 = scalar_lea.vmem [#allocation2], 929
  %v4954 = vld [vmem:[%s4953] ss:$2 sm:$0xff]
  %s4955 = scalar_lea.vmem [#allocation2], 945
  %v4956 = vld [vmem:[%s4955] ss:$2 sm:$0xff]
  %s4957 = scalar_lea.vmem [#allocation2], 961
  %v4958 = vld [vmem:[%s4957] ss:$2 sm:$0xff]
  %s4959 = scalar_lea.vmem [#allocation2], 977
  %v4960 = vld [vmem:[%s4959] ss:$2 sm:$0xff]
  %s4961 = scalar_lea.vmem [#allocation2], 993
  %v4962 = vld [vmem:[%s4961] ss:$2 sm:$0xff]
  %s4963 = scalar_lea.vmem [#allocation2], 1009
  %v4964 = vld [vmem:[%s4963] ss:$2 sm:$0xff]
  %v4965 = vmax.f32 %v4710, %v4838
  %v4966 = vmax.f32 %v4712, %v4840
  %v4967 = vmax.f32 %v4714, %v4842
  %v4968 = vmax.f32 %v4716, %v4844
  %v4969 = vmax.f32 %v4718, %v4846
  %v4970 = vmax.f32 %v4720, %v4848
  %v4971 = vmax.f32 %v4722, %v4850
  %v4972 = vmax.f32 %v4724, %v4852
  %v4973 = vmax.f32 %v4726, %v4854
  %v4974 = vmax.f32 %v4728, %v4856
  %v4975 = vmax.f32 %v4730, %v4858
  %v4976 = vmax.f32 %v4732, %v4860
  %v4977 = vmax.f32 %v4734, %v4862
  %v4978 = vmax.f32 %v4736, %v4864
  %v4979 = vmax.f32 %v4738, %v4866
  %v4980 = vmax.f32 %v4740, %v4868
  %v4981 = vmax.f32 %v4742, %v4870
  %v4982 = vmax.f32 %v4744, %v4872
  %v4983 = vmax.f32 %v4746, %v4874
  %v4984 = vmax.f32 %v4748, %v4876
  %v4985 = vmax.f32 %v4750, %v4878
  %v4986 = vmax.f32 %v4752, %v4880
  %v4987 = vmax.f32 %v4754, %v4882
  %v4988 = vmax.f32 %v4756, %v4884
  %v4989 = vmax.f32 %v4758, %v4886
  %v4990 = vmax.f32 %v4760, %v4888
  %v4991 = vmax.f32 %v4762, %v4890
  %v4992 = vmax.f32 %v4764, %v4892
  %v4993 = vmax.f32 %v4766, %v4894
  %v4994 = vmax.f32 %v4768, %v4896
  %v4995 = vmax.f32 %v4770, %v4898
  %v4996 = vmax.f32 %v4772, %v4900
  %v4997 = vmax.f32 %v4774, %v4902
  %v4998 = vmax.f32 %v4776, %v4904
  %v4999 = vmax.f32 %v4778, %v4906
  %v5000 = vmax.f32 %v4780, %v4908
  %v5001 = vmax.f32 %v4782, %v4910
  %v5002 = vmax.f32 %v4784, %v4912
  %v5003 = vmax.f32 %v4786, %v4914
  %v5004 = vmax.f32 %v4788, %v4916
  %v5005 = vmax.f32 %v4790, %v4918
  %v5006 = vmax.f32 %v4792, %v4920
  %v5007 = vmax.f32 %v4794, %v4922
  %v5008 = vmax.f32 %v4796, %v4924
  %v5009 = vmax.f32 %v4798, %v4926
  %v5010 = vmax.f32 %v4800, %v4928
  %v5011 = vmax.f32 %v4802, %v4930
  %v5012 = vmax.f32 %v4804, %v4932
  %v5013 = vmax.f32 %v4806, %v4934
  %v5014 = vmax.f32 %v4808, %v4936
  %v5015 = vmax.f32 %v4810, %v4938
  %v5016 = vmax.f32 %v4812, %v4940
  %v5017 = vmax.f32 %v4814, %v4942
  %v5018 = vmax.f32 %v4816, %v4944
  %v5019 = vmax.f32 %v4818, %v4946
  %v5020 = vmax.f32 %v4820, %v4948
  %v5021 = vmax.f32 %v4822, %v4950
  %v5022 = vmax.f32 %v4824, %v4952
  %v5023 = vmax.f32 %v4826, %v4954
  %v5024 = vmax.f32 %v4828, %v4956
  %v5025 = vmax.f32 %v4830, %v4958
  %v5026 = vmax.f32 %v4832, %v4960
  %v5027 = vmax.f32 %v4834, %v4962
  %v5028 = vmax.f32 %v4836, %v4964
  %5029 = vst.msk [vmem:[#allocation3] sm:$0xff] %vm4581, %v4965
  %5030 = vst.msk [vmem:[#allocation3 + $0x8] sm:$0xff] %vm4581, %v4966
  %5031 = vst.msk [vmem:[#allocation3 + $0x10] sm:$0xff] %vm4581, %v4967
  %5032 = vst.msk [vmem:[#allocation3 + $0x18] sm:$0xff] %vm4581, %v4968
  %5033 = vst.msk [vmem:[#allocation3 + $0x20] sm:$0xff] %vm4581, %v4969
  %5034 = vst.msk [vmem:[#allocation3 + $0x28] sm:$0xff] %vm4581, %v4970
  %5035 = vst.msk [vmem:[#allocation3 + $0x30] sm:$0xff] %vm4581, %v4971
  %5036 = vst.msk [vmem:[#allocation3 + $0x38] sm:$0xff] %vm4581, %v4972
  %5037 = vst.msk [vmem:[#allocation3 + $0x40] sm:$0xff] %vm4581, %v4973
  %5038 = vst.msk [vmem:[#allocation3 + $0x48] sm:$0xff] %vm4581, %v4974
  %5039 = vst.msk [vmem:[#allocation3 + $0x50] sm:$0xff] %vm4581, %v4975
  %5040 = vst.msk [vmem:[#allocation3 + $0x58] sm:$0xff] %vm4581, %v4976
  %5041 = vst.msk [vmem:[#allocation3 + $0x60] sm:$0xff] %vm4581, %v4977
  %5042 = vst.msk [vmem:[#allocation3 + $0x68] sm:$0xff] %vm4581, %v4978
  %5043 = vst.msk [vmem:[#allocation3 + $0x70] sm:$0xff] %vm4581, %v4979
  %5044 = vst.msk [vmem:[#allocation3 + $0x78] sm:$0xff] %vm4581, %v4980
  %5045 = vst.msk [vmem:[#allocation3 + $0x80] sm:$0xff] %vm4581, %v4981
  %5046 = vst.msk [vmem:[#allocation3 + $0x88] sm:$0xff] %vm4581, %v4982
  %5047 = vst.msk [vmem:[#allocation3 + $0x90] sm:$0xff] %vm4581, %v4983
  %5048 = vst.msk [vmem:[#allocation3 + $0x98] sm:$0xff] %vm4581, %v4984
  %5049 = vst.msk [vmem:[#allocation3 + $0xa0] sm:$0xff] %vm4581, %v4985
  %5050 = vst.msk [vmem:[#allocation3 + $0xa8] sm:$0xff] %vm4581, %v4986
  %5051 = vst.msk [vmem:[#allocation3 + $0xb0] sm:$0xff] %vm4581, %v4987
  %5052 = vst.msk [vmem:[#allocation3 + $0xb8] sm:$0xff] %vm4581, %v4988
  %5053 = vst.msk [vmem:[#allocation3 + $0xc0] sm:$0xff] %vm4581, %v4989
  %5054 = vst.msk [vmem:[#allocation3 + $0xc8] sm:$0xff] %vm4581, %v4990
  %5055 = vst.msk [vmem:[#allocation3 + $0xd0] sm:$0xff] %vm4581, %v4991
  %5056 = vst.msk [vmem:[#allocation3 + $0xd8] sm:$0xff] %vm4581, %v4992
  %5057 = vst.msk [vmem:[#allocation3 + $0xe0] sm:$0xff] %vm4581, %v4993
  %5058 = vst.msk [vmem:[#allocation3 + $0xe8] sm:$0xff] %vm4581, %v4994
  %5059 = vst.msk [vmem:[#allocation3 + $0xf0] sm:$0xff] %vm4581, %v4995
  %5060 = vst.msk [vmem:[#allocation3 + $0xf8] sm:$0xff] %vm4581, %v4996
  %5061 = vst.msk [vmem:[#allocation3 + $0x100] sm:$0xff] %vm4581, %v4997
  %5062 = vst.msk [vmem:[#allocation3 + $0x108] sm:$0xff] %vm4581, %v4998
  %5063 = vst.msk [vmem:[#allocation3 + $0x110] sm:$0xff] %vm4581, %v4999
  %5064 = vst.msk [vmem:[#allocation3 + $0x118] sm:$0xff] %vm4581, %v5000
  %5065 = vst.msk [vmem:[#allocation3 + $0x120] sm:$0xff] %vm4581, %v5001
  %5066 = vst.msk [vmem:[#allocation3 + $0x128] sm:$0xff] %vm4581, %v5002
  %5067 = vst.msk [vmem:[#allocation3 + $0x130] sm:$0xff] %vm4581, %v5003
  %5068 = vst.msk [vmem:[#allocation3 + $0x138] sm:$0xff] %vm4581, %v5004
  %5069 = vst.msk [vmem:[#allocation3 + $0x140] sm:$0xff] %vm4581, %v5005
  %5070 = vst.msk [vmem:[#allocation3 + $0x148] sm:$0xff] %vm4581, %v5006
  %5071 = vst.msk [vmem:[#allocation3 + $0x150] sm:$0xff] %vm4581, %v5007
  %5072 = vst.msk [vmem:[#allocation3 + $0x158] sm:$0xff] %vm4581, %v5008
  %5073 = vst.msk [vmem:[#allocation3 + $0x160] sm:$0xff] %vm4581, %v5009
  %5074 = vst.msk [vmem:[#allocation3 + $0x168] sm:$0xff] %vm4581, %v5010
  %5075 = vst.msk [vmem:[#allocation3 + $0x170] sm:$0xff] %vm4581, %v5011
  %5076 = vst.msk [vmem:[#allocation3 + $0x178] sm:$0xff] %vm4581, %v5012
  %5077 = vst.msk [vmem:[#allocation3 + $0x180] sm:$0xff] %vm4581, %v5013
  %5078 = vst.msk [vmem:[#allocation3 + $0x188] sm:$0xff] %vm4581, %v5014
  %5079 = vst.msk [vmem:[#allocation3 + $0x190] sm:$0xff] %vm4581, %v5015
  %5080 = vst.msk [vmem:[#allocation3 + $0x198] sm:$0xff] %vm4581, %v5016
  %5081 = vst.msk [vmem:[#allocation3 + $0x1a0] sm:$0xff] %vm4581, %v5017
  %5082 = vst.msk [vmem:[#allocation3 + $0x1a8] sm:$0xff] %vm4581, %v5018
  %5083 = vst.msk [vmem:[#allocation3 + $0x1b0] sm:$0xff] %vm4581, %v5019
  %5084 = vst.msk [vmem:[#allocation3 + $0x1b8] sm:$0xff] %vm4581, %v5020
  %5085 = vst.msk [vmem:[#allocation3 + $0x1c0] sm:$0xff] %vm4581, %v5021
  %5086 = vst.msk [vmem:[#allocation3 + $0x1c8] sm:$0xff] %vm4581, %v5022
  %5087 = vst.msk [vmem:[#allocation3 + $0x1d0] sm:$0xff] %vm4581, %v5023
  %5088 = vst.msk [vmem:[#allocation3 + $0x1d8] sm:$0xff] %vm4581, %v5024
  %5089 = vst.msk [vmem:[#allocation3 + $0x1e0] sm:$0xff] %vm4581, %v5025
  %5090 = vst.msk [vmem:[#allocation3 + $0x1e8] sm:$0xff] %vm4581, %v5026
  %5091 = vst.msk [vmem:[#allocation3 + $0x1f0] sm:$0xff] %vm4581, %v5027
  %5092 = vst.msk [vmem:[#allocation3 + $0x1f8] sm:$0xff] %vm4581, %v5028
  %5093 = vst.msk [vmem:[#allocation3 + $0x200] sm:$0xff] %vm4581, 0.0
  %v5094 = vld [vmem:[#allocation3] sm:$0xff]
  %v5095 = vld [vmem:[#allocation3 + $0x8] sm:$0xff]
  %v5096 = vld [vmem:[#allocation3 + $0x10] sm:$0xff]
  %v5097 = vld [vmem:[#allocation3 + $0x18] sm:$0xff]
  %v5098 = vld [vmem:[#allocation3 + $0x20] sm:$0xff]
  %v5099 = vld [vmem:[#allocation3 + $0x28] sm:$0xff]
  %v5100 = vld [vmem:[#allocation3 + $0x30] sm:$0xff]
  %v5101 = vld [vmem:[#allocation3 + $0x38] sm:$0xff]
  %v5102 = vld [vmem:[#allocation3 + $0x40] sm:$0xff]
  %v5103 = vld [vmem:[#allocation3 + $0x48] sm:$0xff]
  %v5104 = vld [vmem:[#allocation3 + $0x50] sm:$0xff]
  %v5105 = vld [vmem:[#allocation3 + $0x58] sm:$0xff]
  %v5106 = vld [vmem:[#allocation3 + $0x60] sm:$0xff]
  %v5107 = vld [vmem:[#allocation3 + $0x68] sm:$0xff]
  %v5108 = vld [vmem:[#allocation3 + $0x70] sm:$0xff]
  %v5109 = vld [vmem:[#allocation3 + $0x78] sm:$0xff]
  %v5110 = vld [vmem:[#allocation3 + $0x80] sm:$0xff]
  %v5111 = vld [vmem:[#allocation3 + $0x88] sm:$0xff]
  %v5112 = vld [vmem:[#allocation3 + $0x90] sm:$0xff]
  %v5113 = vld [vmem:[#allocation3 + $0x98] sm:$0xff]
  %v5114 = vld [vmem:[#allocation3 + $0xa0] sm:$0xff]
  %v5115 = vld [vmem:[#allocation3 + $0xa8] sm:$0xff]
  %v5116 = vld [vmem:[#allocation3 + $0xb0] sm:$0xff]
  %v5117 = vld [vmem:[#allocation3 + $0xb8] sm:$0xff]
  %v5118 = vld [vmem:[#allocation3 + $0xc0] sm:$0xff]
  %v5119 = vld [vmem:[#allocation3 + $0xc8] sm:$0xff]
  %v5120 = vld [vmem:[#allocation3 + $0xd0] sm:$0xff]
  %v5121 = vld [vmem:[#allocation3 + $0xd8] sm:$0xff]
  %v5122 = vld [vmem:[#allocation3 + $0xe0] sm:$0xff]
  %v5123 = vld [vmem:[#allocation3 + $0xe8] sm:$0xff]
  %v5124 = vld [vmem:[#allocation3 + $0xf0] sm:$0xff]
  %v5125 = vld [vmem:[#allocation3 + $0xf8] sm:$0xff]
  %v5126 = vld [vmem:[#allocation3 + $0x100] sm:$0xff]
  %v5127 = vld [vmem:[#allocation3 + $0x108] sm:$0xff]
  %v5128 = vld [vmem:[#allocation3 + $0x110] sm:$0xff]
  %v5129 = vld [vmem:[#allocation3 + $0x118] sm:$0xff]
  %v5130 = vld [vmem:[#allocation3 + $0x120] sm:$0xff]
  %v5131 = vld [vmem:[#allocation3 + $0x128] sm:$0xff]
  %v5132 = vld [vmem:[#allocation3 + $0x130] sm:$0xff]
  %v5133 = vld [vmem:[#allocation3 + $0x138] sm:$0xff]
  %v5134 = vld [vmem:[#allocation3 + $0x140] sm:$0xff]
  %v5135 = vld [vmem:[#allocation3 + $0x148] sm:$0xff]
  %v5136 = vld [vmem:[#allocation3 + $0x150] sm:$0xff]
  %v5137 = vld [vmem:[#allocation3 + $0x158] sm:$0xff]
  %v5138 = vld [vmem:[#allocation3 + $0x160] sm:$0xff]
  %v5139 = vld [vmem:[#allocation3 + $0x168] sm:$0xff]
  %v5140 = vld [vmem:[#allocation3 + $0x170] sm:$0xff]
  %v5141 = vld [vmem:[#allocation3 + $0x178] sm:$0xff]
  %v5142 = vld [vmem:[#allocation3 + $0x180] sm:$0xff]
  %v5143 = vld [vmem:[#allocation3 + $0x188] sm:$0xff]
  %v5144 = vld [vmem:[#allocation3 + $0x190] sm:$0xff]
  %v5145 = vld [vmem:[#allocation3 + $0x198] sm:$0xff]
  %v5146 = vld [vmem:[#allocation3 + $0x1a0] sm:$0xff]
  %v5147 = vld [vmem:[#allocation3 + $0x1a8] sm:$0xff]
  %v5148 = vld [vmem:[#allocation3 + $0x1b0] sm:$0xff]
  %v5149 = vld [vmem:[#allocation3 + $0x1b8] sm:$0xff]
  %v5150 = vld [vmem:[#allocation3 + $0x1c0] sm:$0xff]
  %v5151 = vld [vmem:[#allocation3 + $0x1c8] sm:$0xff]
  %v5152 = vld [vmem:[#allocation3 + $0x1d0] sm:$0xff]
  %v5153 = vld [vmem:[#allocation3 + $0x1d8] sm:$0xff]
  %v5154 = vld [vmem:[#allocation3 + $0x1e0] sm:$0xff]
  %v5155 = vld [vmem:[#allocation3 + $0x1e8] sm:$0xff]
  %v5156 = vld [vmem:[#allocation3 + $0x1f0] sm:$0xff]
  %v5157 = vld [vmem:[#allocation3 + $0x1f8] sm:$0xff]
  %v5158 = vpack.c.bf16 %v5095, %v5094
  %v5159 = vpack.c.bf16 %v5097, %v5096
  %v5160 = vpack.c.bf16 %v5099, %v5098
  %v5161 = vpack.c.bf16 %v5101, %v5100
  %v5162 = vpack.c.bf16 %v5103, %v5102
  %v5163 = vpack.c.bf16 %v5105, %v5104
  %v5164 = vpack.c.bf16 %v5107, %v5106
  %v5165 = vpack.c.bf16 %v5109, %v5108
  %v5166 = vpack.c.bf16 %v5111, %v5110
  %v5167 = vpack.c.bf16 %v5113, %v5112
  %v5168 = vpack.c.bf16 %v5115, %v5114
  %v5169 = vpack.c.bf16 %v5117, %v5116
  %v5170 = vpack.c.bf16 %v5119, %v5118
  %v5171 = vpack.c.bf16 %v5121, %v5120
  %v5172 = vpack.c.bf16 %v5123, %v5122
  %v5173 = vpack.c.bf16 %v5125, %v5124
  %v5174 = vpack.c.bf16 %v5127, %v5126
  %v5175 = vpack.c.bf16 %v5129, %v5128
  %v5176 = vpack.c.bf16 %v5131, %v5130
  %v5177 = vpack.c.bf16 %v5133, %v5132
  %v5178 = vpack.c.bf16 %v5135, %v5134
  %v5179 = vpack.c.bf16 %v5137, %v5136
  %v5180 = vpack.c.bf16 %v5139, %v5138
  %v5181 = vpack.c.bf16 %v5141, %v5140
  %v5182 = vpack.c.bf16 %v5143, %v5142
  %v5183 = vpack.c.bf16 %v5145, %v5144
  %v5184 = vpack.c.bf16 %v5147, %v5146
  %v5185 = vpack.c.bf16 %v5149, %v5148
  %v5186 = vpack.c.bf16 %v5151, %v5150
  %v5187 = vpack.c.bf16 %v5153, %v5152
  %v5188 = vpack.c.bf16 %v5155, %v5154
  %v5189 = vpack.c.bf16 %v5157, %v5156
  %v5190 = vld [vmem:[%s4] sm:$0xff]
  %v5191 = vld [vmem:[%s4 + $0x8] sm:$0xff]
  %v5192 = vld [vmem:[%s4 + $0x10] sm:$0xff]
  %v5193 = vld [vmem:[%s4 + $0x18] sm:$0xff]
  %v5194 = vld [vmem:[%s4 + $0x20] sm:$0xff]
  %v5195 = vld [vmem:[%s4 + $0x28] sm:$0xff]
  %v5196 = vld [vmem:[%s4 + $0x30] sm:$0xff]
  %v5197 = vld [vmem:[%s4 + $0x38] sm:$0xff]
  %v5198 = vld [vmem:[%s4 + $0x40] sm:$0xff]
  %v5199 = vld [vmem:[%s4 + $0x48] sm:$0xff]
  %v5200 = vld [vmem:[%s4 + $0x50] sm:$0x33]
  %v5212 = vunpack.c.l.b16 %v5190
  %v5213 = vunpack.c.h.b16 %v5190
  %v5214 = vunpack.c.l.b16 %v5191
  %v5215 = vunpack.c.h.b16 %v5191
  %v5216 = vunpack.c.l.b16 %v5192
  %v5217 = vunpack.c.h.b16 %v5192
  %v5218 = vunpack.c.l.b16 %v5193
  %v5219 = vunpack.c.h.b16 %v5193
  %v5220 = vunpack.c.l.b16 %v5194
  %v5221 = vunpack.c.h.b16 %v5194
  %v5222 = vunpack.c.l.b16 %v5195
  %v5223 = vunpack.c.h.b16 %v5195
  %v5224 = vunpack.c.l.b16 %v5196
  %v5225 = vunpack.c.h.b16 %v5196
  %v5226 = vunpack.c.l.b16 %v5197
  %v5227 = vunpack.c.h.b16 %v5197
  %v5228 = vunpack.c.l.b16 %v5198
  %v5229 = vunpack.c.h.b16 %v5198
  %v5230 = vunpack.c.l.b16 %v5199
  %v5231 = vunpack.c.h.b16 %v5199
  %v5232 = vunpack.c.l.b16 %v5200
  %v5233 = vunpack.c.h.b16 %v5200
  %v5234 = vpack.c.b16 %v5214, %v5212
  %v5235 = vpack.c.b16 %v5215, %v5213
  %v5236 = vpack.c.b16 %v5218, %v5216
  %v5237 = vpack.c.b16 %v5219, %v5217
  %v5238 = vpack.c.b16 %v5222, %v5220
  %v5239 = vpack.c.b16 %v5223, %v5221
  %v5240 = vpack.c.b16 %v5226, %v5224
  %v5241 = vpack.c.b16 %v5227, %v5225
  %v5242 = vpack.c.b16 %v5230, %v5228
  %v5243 = vpack.c.b16 %v5231, %v5229
  %v5244 = vpack.c.b16 %v5232, %v5232
  %v5245 = vpack.c.b16 %v5233, %v5233
  %v5257 = vsel %vm4581, %v5158, 0
  %v5260 = vsel %vm4581, %v5159, 0
  %v5263 = vsel %vm4581, %v5160, 0
  %v5266 = vsel %vm4581, %v5161, 0
  %v5269 = vsel %vm4581, %v5162, 0
  %v5272 = vsel %vm4581, %v5163, 0
  %v5275 = vsel %vm4581, %v5164, 0
  %v5278 = vsel %vm4581, %v5165, 0
  %v5281 = vsel %vm4581, %v5166, 0
  %v5284 = vsel %vm4581, %v5167, 0
  %v5287 = vsel %vm4581, %v5168, 0
  %v5290 = vsel %vm4581, %v5169, 0
  %v5293 = vsel %vm4581, %v5170, 0
  %v5296 = vsel %vm4581, %v5171, 0
  %v5299 = vsel %vm4581, %v5172, 0
  %v5302 = vsel %vm4581, %v5173, 0
  %v5305 = vsel %vm4581, %v5174, 0
  %v5308 = vsel %vm4581, %v5175, 0
  %v5311 = vsel %vm4581, %v5176, 0
  %v5314 = vsel %vm4581, %v5177, 0
  %v5317 = vsel %vm4581, %v5178, 0
  %v5320 = vsel %vm4581, %v5179, 0
  %v5323 = vsel %vm4581, %v5180, 0
  %v5326 = vsel %vm4581, %v5181, 0
  %v5329 = vsel %vm4581, %v5182, 0
  %v5332 = vsel %vm4581, %v5183, 0
  %v5335 = vsel %vm4581, %v5184, 0
  %v5338 = vsel %vm4581, %v5185, 0
  %v5341 = vsel %vm4581, %v5186, 0
  %v5344 = vsel %vm4581, %v5187, 0
  %v5347 = vsel %vm4581, %v5188, 0
  %v5350 = vsel %vm4581, %v5189, 0
  %vm5352 = vcmask 1041408
  %v5354 = vsel %vm5352, %v5244, 0
  %v5357 = vsel %vm5352, %v5245, 0
  %5359 = vmatpush.bf16.msra.mxu0 0
  %5360 = vmatpush.bf16.msra.mxu0 0
  %5361 = vmatpush.bf16.msra.mxu0 %v5354
  %5362 = vmatpush.bf16.msra.mxu0 %v5242
  %5363 = vmatpush.bf16.msra.mxu0 %v5240
  %5364 = vmatpush.bf16.msra.mxu0 %v5238
  %5365 = vmatpush.bf16.msra.mxu0 %v5236
  %5366 = vmatpush.bf16.msra.mxu0 %v5234
  %5367 = vmatmul.bf16.gmra.mxu0 %v5257
  %v5368 = vpop.f32.mrf.mxu0
  %v5369 = vadd.f32 0.0, %v5368
  %v5370 = vpop.f32.mrf.mxu0
  %v5371 = vadd.f32 0.0, %v5370
  %5372 = vmatmul.bf16.gmra.mxu0 %v5260
  %v5373 = vpop.f32.mrf.mxu0
  %v5374 = vadd.f32 0.0, %v5373
  %v5375 = vpop.f32.mrf.mxu0
  %v5376 = vadd.f32 0.0, %v5375
  %5377 = vmatmul.bf16.gmra.mxu0 %v5263
  %v5378 = vpop.f32.mrf.mxu0
  %v5379 = vadd.f32 0.0, %v5378
  %v5380 = vpop.f32.mrf.mxu0
  %v5381 = vadd.f32 0.0, %v5380
  %5382 = vmatmul.bf16.gmra.mxu0 %v5266
  %v5383 = vpop.f32.mrf.mxu0
  %v5384 = vadd.f32 0.0, %v5383
  %v5385 = vpop.f32.mrf.mxu0
  %v5386 = vadd.f32 0.0, %v5385
  %5387 = vmatmul.bf16.gmra.mxu0 %v5269
  %v5388 = vpop.f32.mrf.mxu0
  %v5389 = vadd.f32 0.0, %v5388
  %v5390 = vpop.f32.mrf.mxu0
  %v5391 = vadd.f32 0.0, %v5390
  %5392 = vmatmul.bf16.gmra.mxu0 %v5272
  %v5393 = vpop.f32.mrf.mxu0
  %v5394 = vadd.f32 0.0, %v5393
  %v5395 = vpop.f32.mrf.mxu0
  %v5396 = vadd.f32 0.0, %v5395
  %5397 = vmatmul.bf16.gmra.mxu0 %v5275
  %v5398 = vpop.f32.mrf.mxu0
  %v5399 = vadd.f32 0.0, %v5398
  %v5400 = vpop.f32.mrf.mxu0
  %v5401 = vadd.f32 0.0, %v5400
  %5402 = vmatmul.bf16.gmra.mxu0 %v5278
  %v5403 = vpop.f32.mrf.mxu0
  %v5404 = vadd.f32 0.0, %v5403
  %v5405 = vpop.f32.mrf.mxu0
  %v5406 = vadd.f32 0.0, %v5405
  %5407 = vmatmul.bf16.gmra.mxu0 %v5281
  %v5408 = vpop.f32.mrf.mxu0
  %v5409 = vadd.f32 0.0, %v5408
  %v5410 = vpop.f32.mrf.mxu0
  %v5411 = vadd.f32 0.0, %v5410
  %5412 = vmatmul.bf16.gmra.mxu0 %v5284
  %v5413 = vpop.f32.mrf.mxu0
  %v5414 = vadd.f32 0.0, %v5413
  %v5415 = vpop.f32.mrf.mxu0
  %v5416 = vadd.f32 0.0, %v5415
  %5417 = vmatmul.bf16.gmra.mxu0 %v5287
  %v5418 = vpop.f32.mrf.mxu0
  %v5419 = vadd.f32 0.0, %v5418
  %v5420 = vpop.f32.mrf.mxu0
  %v5421 = vadd.f32 0.0, %v5420
  %5422 = vmatmul.bf16.gmra.mxu0 %v5290
  %v5423 = vpop.f32.mrf.mxu0
  %v5424 = vadd.f32 0.0, %v5423
  %v5425 = vpop.f32.mrf.mxu0
  %v5426 = vadd.f32 0.0, %v5425
  %5427 = vmatmul.bf16.gmra.mxu0 %v5293
  %v5428 = vpop.f32.mrf.mxu0
  %v5429 = vadd.f32 0.0, %v5428
  %v5430 = vpop.f32.mrf.mxu0
  %v5431 = vadd.f32 0.0, %v5430
  %5432 = vmatmul.bf16.gmra.mxu0 %v5296
  %v5433 = vpop.f32.mrf.mxu0
  %v5434 = vadd.f32 0.0, %v5433
  %v5435 = vpop.f32.mrf.mxu0
  %v5436 = vadd.f32 0.0, %v5435
  %5437 = vmatmul.bf16.gmra.mxu0 %v5299
  %v5438 = vpop.f32.mrf.mxu0
  %v5439 = vadd.f32 0.0, %v5438
  %v5440 = vpop.f32.mrf.mxu0
  %v5441 = vadd.f32 0.0, %v5440
  %5442 = vmatmul.bf16.gmra.mxu0 %v5302
  %v5443 = vpop.f32.mrf.mxu0
  %v5444 = vadd.f32 0.0, %v5443
  %v5445 = vpop.f32.mrf.mxu0
  %v5446 = vadd.f32 0.0, %v5445
  %5447 = vmatmul.bf16.gmra.mxu0 %v5305
  %v5448 = vpop.f32.mrf.mxu0
  %v5449 = vadd.f32 0.0, %v5448
  %v5450 = vpop.f32.mrf.mxu0
  %v5451 = vadd.f32 0.0, %v5450
  %5452 = vmatmul.bf16.gmra.mxu0 %v5308
  %v5453 = vpop.f32.mrf.mxu0
  %v5454 = vadd.f32 0.0, %v5453
  %v5455 = vpop.f32.mrf.mxu0
  %v5456 = vadd.f32 0.0, %v5455
  %5457 = vmatmul.bf16.gmra.mxu0 %v5311
  %v5458 = vpop.f32.mrf.mxu0
  %v5459 = vadd.f32 0.0, %v5458
  %v5460 = vpop.f32.mrf.mxu0
  %v5461 = vadd.f32 0.0, %v5460
  %5462 = vmatmul.bf16.gmra.mxu0 %v5314
  %v5463 = vpop.f32.mrf.mxu0
  %v5464 = vadd.f32 0.0, %v5463
  %v5465 = vpop.f32.mrf.mxu0
  %v5466 = vadd.f32 0.0, %v5465
  %5467 = vmatmul.bf16.gmra.mxu0 %v5317
  %v5468 = vpop.f32.mrf.mxu0
  %v5469 = vadd.f32 0.0, %v5468
  %v5470 = vpop.f32.mrf.mxu0
  %v5471 = vadd.f32 0.0, %v5470
  %5472 = vmatmul.bf16.gmra.mxu0 %v5320
  %v5473 = vpop.f32.mrf.mxu0
  %v5474 = vadd.f32 0.0, %v5473
  %v5475 = vpop.f32.mrf.mxu0
  %v5476 = vadd.f32 0.0, %v5475
  %5477 = vmatmul.bf16.gmra.mxu0 %v5323
  %v5478 = vpop.f32.mrf.mxu0
  %v5479 = vadd.f32 0.0, %v5478
  %v5480 = vpop.f32.mrf.mxu0
  %v5481 = vadd.f32 0.0, %v5480
  %5482 = vmatmul.bf16.gmra.mxu0 %v5326
  %v5483 = vpop.f32.mrf.mxu0
  %v5484 = vadd.f32 0.0, %v5483
  %v5485 = vpop.f32.mrf.mxu0
  %v5486 = vadd.f32 0.0, %v5485
  %5487 = vmatmul.bf16.gmra.mxu0 %v5329
  %v5488 = vpop.f32.mrf.mxu0
  %v5489 = vadd.f32 0.0, %v5488
  %v5490 = vpop.f32.mrf.mxu0
  %v5491 = vadd.f32 0.0, %v5490
  %5492 = vmatmul.bf16.gmra.mxu0 %v5332
  %v5493 = vpop.f32.mrf.mxu0
  %v5494 = vadd.f32 0.0, %v5493
  %v5495 = vpop.f32.mrf.mxu0
  %v5496 = vadd.f32 0.0, %v5495
  %5497 = vmatmul.bf16.gmra.mxu0 %v5335
  %v5498 = vpop.f32.mrf.mxu0
  %v5499 = vadd.f32 0.0, %v5498
  %v5500 = vpop.f32.mrf.mxu0
  %v5501 = vadd.f32 0.0, %v5500
  %5502 = vmatmul.bf16.gmra.mxu0 %v5338
  %v5503 = vpop.f32.mrf.mxu0
  %v5504 = vadd.f32 0.0, %v5503
  %v5505 = vpop.f32.mrf.mxu0
  %v5506 = vadd.f32 0.0, %v5505
  %5507 = vmatmul.bf16.gmra.mxu0 %v5341
  %v5508 = vpop.f32.mrf.mxu0
  %v5509 = vadd.f32 0.0, %v5508
  %v5510 = vpop.f32.mrf.mxu0
  %v5511 = vadd.f32 0.0, %v5510
  %5512 = vmatmul.bf16.gmra.mxu0 %v5344
  %v5513 = vpop.f32.mrf.mxu0
  %v5514 = vadd.f32 0.0, %v5513
  %v5515 = vpop.f32.mrf.mxu0
  %v5516 = vadd.f32 0.0, %v5515
  %5517 = vmatmul.bf16.gmra.mxu0 %v5347
  %v5518 = vpop.f32.mrf.mxu0
  %v5519 = vadd.f32 0.0, %v5518
  %v5520 = vpop.f32.mrf.mxu0
  %v5521 = vadd.f32 0.0, %v5520
  %5522 = vmatmul.bf16.gmra.mxu0 %v5350
  %v5523 = vpop.f32.mrf.mxu0
  %v5524 = vadd.f32 0.0, %v5523
  %v5525 = vpop.f32.mrf.mxu0
  %v5526 = vadd.f32 0.0, %v5525
  %5527 = vdwg.mxu0
  %5528 = vmatpush.bf16.msra.mxu0 0
  %5529 = vmatpush.bf16.msra.mxu0 0
  %5530 = vmatpush.bf16.msra.mxu0 %v5357
  %5531 = vmatpush.bf16.msra.mxu0 %v5243
  %5532 = vmatpush.bf16.msra.mxu0 %v5241
  %5533 = vmatpush.bf16.msra.mxu0 %v5239
  %5534 = vmatpush.bf16.msra.mxu0 %v5237
  %5535 = vmatpush.bf16.msra.mxu0 %v5235
  %5536 = vmatmul.bf16.gmra.mxu0 %v5257
  %v5537 = vpop.f32.mrf.mxu0
  %v5538 = vadd.f32 0.0, %v5537
  %v5539 = vpop.f32.mrf.mxu0
  %v5540 = vadd.f32 0.0, %v5539
  %5541 = vmatmul.bf16.gmra.mxu0 %v5260
  %v5542 = vpop.f32.mrf.mxu0
  %v5543 = vadd.f32 0.0, %v5542
  %v5544 = vpop.f32.mrf.mxu0
  %v5545 = vadd.f32 0.0, %v5544
  %5546 = vmatmul.bf16.gmra.mxu0 %v5263
  %v5547 = vpop.f32.mrf.mxu0
  %v5548 = vadd.f32 0.0, %v5547
  %v5549 = vpop.f32.mrf.mxu0
  %v5550 = vadd.f32 0.0, %v5549
  %5551 = vmatmul.bf16.gmra.mxu0 %v5266
  %v5552 = vpop.f32.mrf.mxu0
  %v5553 = vadd.f32 0.0, %v5552
  %v5554 = vpop.f32.mrf.mxu0
  %v5555 = vadd.f32 0.0, %v5554
  %5556 = vmatmul.bf16.gmra.mxu0 %v5269
  %v5557 = vpop.f32.mrf.mxu0
  %v5558 = vadd.f32 0.0, %v5557
  %v5559 = vpop.f32.mrf.mxu0
  %v5560 = vadd.f32 0.0, %v5559
  %5561 = vmatmul.bf16.gmra.mxu0 %v5272
  %v5562 = vpop.f32.mrf.mxu0
  %v5563 = vadd.f32 0.0, %v5562
  %v5564 = vpop.f32.mrf.mxu0
  %v5565 = vadd.f32 0.0, %v5564
  %5566 = vmatmul.bf16.gmra.mxu0 %v5275
  %v5567 = vpop.f32.mrf.mxu0
  %v5568 = vadd.f32 0.0, %v5567
  %v5569 = vpop.f32.mrf.mxu0
  %v5570 = vadd.f32 0.0, %v5569
  %5571 = vmatmul.bf16.gmra.mxu0 %v5278
  %v5572 = vpop.f32.mrf.mxu0
  %v5573 = vadd.f32 0.0, %v5572
  %v5574 = vpop.f32.mrf.mxu0
  %v5575 = vadd.f32 0.0, %v5574
  %5576 = vmatmul.bf16.gmra.mxu0 %v5281
  %v5577 = vpop.f32.mrf.mxu0
  %v5578 = vadd.f32 0.0, %v5577
  %v5579 = vpop.f32.mrf.mxu0
  %v5580 = vadd.f32 0.0, %v5579
  %5581 = vmatmul.bf16.gmra.mxu0 %v5284
  %v5582 = vpop.f32.mrf.mxu0
  %v5583 = vadd.f32 0.0, %v5582
  %v5584 = vpop.f32.mrf.mxu0
  %v5585 = vadd.f32 0.0, %v5584
  %5586 = vmatmul.bf16.gmra.mxu0 %v5287
  %v5587 = vpop.f32.mrf.mxu0
  %v5588 = vadd.f32 0.0, %v5587
  %v5589 = vpop.f32.mrf.mxu0
  %v5590 = vadd.f32 0.0, %v5589
  %5591 = vmatmul.bf16.gmra.mxu0 %v5290
  %v5592 = vpop.f32.mrf.mxu0
  %v5593 = vadd.f32 0.0, %v5592
  %v5594 = vpop.f32.mrf.mxu0
  %v5595 = vadd.f32 0.0, %v5594
  %5596 = vmatmul.bf16.gmra.mxu0 %v5293
  %v5597 = vpop.f32.mrf.mxu0
  %v5598 = vadd.f32 0.0, %v5597
  %v5599 = vpop.f32.mrf.mxu0
  %v5600 = vadd.f32 0.0, %v5599
  %5601 = vmatmul.bf16.gmra.mxu0 %v5296
  %v5602 = vpop.f32.mrf.mxu0
  %v5603 = vadd.f32 0.0, %v5602
  %v5604 = vpop.f32.mrf.mxu0
  %v5605 = vadd.f32 0.0, %v5604
  %5606 = vmatmul.bf16.gmra.mxu0 %v5299
  %v5607 = vpop.f32.mrf.mxu0
  %v5608 = vadd.f32 0.0, %v5607
  %v5609 = vpop.f32.mrf.mxu0
  %v5610 = vadd.f32 0.0, %v5609
  %5611 = vmatmul.bf16.gmra.mxu0 %v5302
  %v5612 = vpop.f32.mrf.mxu0
  %v5613 = vadd.f32 0.0, %v5612
  %v5614 = vpop.f32.mrf.mxu0
  %v5615 = vadd.f32 0.0, %v5614
  %5616 = vmatmul.bf16.gmra.mxu0 %v5305
  %v5617 = vpop.f32.mrf.mxu0
  %v5618 = vadd.f32 0.0, %v5617
  %v5619 = vpop.f32.mrf.mxu0
  %v5620 = vadd.f32 0.0, %v5619
  %5621 = vmatmul.bf16.gmra.mxu0 %v5308
  %v5622 = vpop.f32.mrf.mxu0
  %v5623 = vadd.f32 0.0, %v5622
  %v5624 = vpop.f32.mrf.mxu0
  %v5625 = vadd.f32 0.0, %v5624
  %5626 = vmatmul.bf16.gmra.mxu0 %v5311
  %v5627 = vpop.f32.mrf.mxu0
  %v5628 = vadd.f32 0.0, %v5627
  %v5629 = vpop.f32.mrf.mxu0
  %v5630 = vadd.f32 0.0, %v5629
  %5631 = vmatmul.bf16.gmra.mxu0 %v5314
  %v5632 = vpop.f32.mrf.mxu0
  %v5633 = vadd.f32 0.0, %v5632
  %v5634 = vpop.f32.mrf.mxu0
  %v5635 = vadd.f32 0.0, %v5634
  %5636 = vmatmul.bf16.gmra.mxu0 %v5317
  %v5637 = vpop.f32.mrf.mxu0
  %v5638 = vadd.f32 0.0, %v5637
  %v5639 = vpop.f32.mrf.mxu0
  %v5640 = vadd.f32 0.0, %v5639
  %5641 = vmatmul.bf16.gmra.mxu0 %v5320
  %v5642 = vpop.f32.mrf.mxu0
  %v5643 = vadd.f32 0.0, %v5642
  %v5644 = vpop.f32.mrf.mxu0
  %v5645 = vadd.f32 0.0, %v5644
  %5646 = vmatmul.bf16.gmra.mxu0 %v5323
  %v5647 = vpop.f32.mrf.mxu0
  %v5648 = vadd.f32 0.0, %v5647
  %v5649 = vpop.f32.mrf.mxu0
  %v5650 = vadd.f32 0.0, %v5649
  %5651 = vmatmul.bf16.gmra.mxu0 %v5326
  %v5652 = vpop.f32.mrf.mxu0
  %v5653 = vadd.f32 0.0, %v5652
  %v5654 = vpop.f32.mrf.mxu0
  %v5655 = vadd.f32 0.0, %v5654
  %5656 = vmatmul.bf16.gmra.mxu0 %v5329
  %v5657 = vpop.f32.mrf.mxu0
  %v5658 = vadd.f32 0.0, %v5657
  %v5659 = vpop.f32.mrf.mxu0
  %v5660 = vadd.f32 0.0, %v5659
  %5661 = vmatmul.bf16.gmra.mxu0 %v5332
  %v5662 = vpop.f32.mrf.mxu0
  %v5663 = vadd.f32 0.0, %v5662
  %v5664 = vpop.f32.mrf.mxu0
  %v5665 = vadd.f32 0.0, %v5664
  %5666 = vmatmul.bf16.gmra.mxu0 %v5335
  %v5667 = vpop.f32.mrf.mxu0
  %v5668 = vadd.f32 0.0, %v5667
  %v5669 = vpop.f32.mrf.mxu0
  %v5670 = vadd.f32 0.0, %v5669
  %5671 = vmatmul.bf16.gmra.mxu0 %v5338
  %v5672 = vpop.f32.mrf.mxu0
  %v5673 = vadd.f32 0.0, %v5672
  %v5674 = vpop.f32.mrf.mxu0
  %v5675 = vadd.f32 0.0, %v5674
  %5676 = vmatmul.bf16.gmra.mxu0 %v5341
  %v5677 = vpop.f32.mrf.mxu0
  %v5678 = vadd.f32 0.0, %v5677
  %v5679 = vpop.f32.mrf.mxu0
  %v5680 = vadd.f32 0.0, %v5679
  %5681 = vmatmul.bf16.gmra.mxu0 %v5344
  %v5682 = vpop.f32.mrf.mxu0
  %v5683 = vadd.f32 0.0, %v5682
  %v5684 = vpop.f32.mrf.mxu0
  %v5685 = vadd.f32 0.0, %v5684
  %5686 = vmatmul.bf16.gmra.mxu0 %v5347
  %v5687 = vpop.f32.mrf.mxu0
  %v5688 = vadd.f32 0.0, %v5687
  %v5689 = vpop.f32.mrf.mxu0
  %v5690 = vadd.f32 0.0, %v5689
  %5691 = vmatmul.bf16.gmra.mxu0 %v5350
  %v5692 = vpop.f32.mrf.mxu0
  %v5693 = vadd.f32 0.0, %v5692
  %v5694 = vpop.f32.mrf.mxu0
  %v5695 = vadd.f32 0.0, %v5694
  %5696 = vdwg.mxu0
  %5697 = vst [vmem:[#allocation4] sm:$0xff] %v5369
  %5698 = vst.msk [vmem:[#allocation4 + $0x8] sm:$0xff] %vm875, %v5538
  %5699 = vst [vmem:[#allocation4 + $0x10] sm:$0xff] %v5371
  %5700 = vst.msk [vmem:[#allocation4 + $0x18] sm:$0xff] %vm875, %v5540
  %5701 = vst [vmem:[#allocation4 + $0x20] sm:$0xff] %v5374
  %5702 = vst.msk [vmem:[#allocation4 + $0x28] sm:$0xff] %vm875, %v5543
  %5703 = vst [vmem:[#allocation4 + $0x30] sm:$0xff] %v5376
  %5704 = vst.msk [vmem:[#allocation4 + $0x38] sm:$0xff] %vm875, %v5545
  %5705 = vst [vmem:[#allocation4 + $0x40] sm:$0xff] %v5379
  %5706 = vst.msk [vmem:[#allocation4 + $0x48] sm:$0xff] %vm875, %v5548
  %5707 = vst [vmem:[#allocation4 + $0x50] sm:$0xff] %v5381
  %5708 = vst.msk [vmem:[#allocation4 + $0x58] sm:$0xff] %vm875, %v5550
  %5709 = vst [vmem:[#allocation4 + $0x60] sm:$0xff] %v5384
  %5710 = vst.msk [vmem:[#allocation4 + $0x68] sm:$0xff] %vm875, %v5553
  %5711 = vst [vmem:[#allocation4 + $0x70] sm:$0xff] %v5386
  %5712 = vst.msk [vmem:[#allocation4 + $0x78] sm:$0xff] %vm875, %v5555
  %5713 = vst [vmem:[#allocation4 + $0x80] sm:$0xff] %v5389
  %5714 = vst.msk [vmem:[#allocation4 + $0x88] sm:$0xff] %vm875, %v5558
  %5715 = vst [vmem:[#allocation4 + $0x90] sm:$0xff] %v5391
  %5716 = vst.msk [vmem:[#allocation4 + $0x98] sm:$0xff] %vm875, %v5560
  %5717 = vst [vmem:[#allocation4 + $0xa0] sm:$0xff] %v5394
  %5718 = vst.msk [vmem:[#allocation4 + $0xa8] sm:$0xff] %vm875, %v5563
  %5719 = vst [vmem:[#allocation4 + $0xb0] sm:$0xff] %v5396
  %5720 = vst.msk [vmem:[#allocation4 + $0xb8] sm:$0xff] %vm875, %v5565
  %5721 = vst [vmem:[#allocation4 + $0xc0] sm:$0xff] %v5399
  %5722 = vst.msk [vmem:[#allocation4 + $0xc8] sm:$0xff] %vm875, %v5568
  %5723 = vst [vmem:[#allocation4 + $0xd0] sm:$0xff] %v5401
  %5724 = vst.msk [vmem:[#allocation4 + $0xd8] sm:$0xff] %vm875, %v5570
  %5725 = vst [vmem:[#allocation4 + $0xe0] sm:$0xff] %v5404
  %5726 = vst.msk [vmem:[#allocation4 + $0xe8] sm:$0xff] %vm875, %v5573
  %5727 = vst [vmem:[#allocation4 + $0xf0] sm:$0xff] %v5406
  %5728 = vst.msk [vmem:[#allocation4 + $0xf8] sm:$0xff] %vm875, %v5575
  %5729 = vst [vmem:[#allocation4 + $0x100] sm:$0xff] %v5409
  %5730 = vst.msk [vmem:[#allocation4 + $0x108] sm:$0xff] %vm875, %v5578
  %5731 = vst [vmem:[#allocation4 + $0x110] sm:$0xff] %v5411
  %5732 = vst.msk [vmem:[#allocation4 + $0x118] sm:$0xff] %vm875, %v5580
  %5733 = vst [vmem:[#allocation4 + $0x120] sm:$0xff] %v5414
  %5734 = vst.msk [vmem:[#allocation4 + $0x128] sm:$0xff] %vm875, %v5583
  %5735 = vst [vmem:[#allocation4 + $0x130] sm:$0xff] %v5416
  %5736 = vst.msk [vmem:[#allocation4 + $0x138] sm:$0xff] %vm875, %v5585
  %5737 = vst [vmem:[#allocation4 + $0x140] sm:$0xff] %v5419
  %5738 = vst.msk [vmem:[#allocation4 + $0x148] sm:$0xff] %vm875, %v5588
  %5739 = vst [vmem:[#allocation4 + $0x150] sm:$0xff] %v5421
  %5740 = vst.msk [vmem:[#allocation4 + $0x158] sm:$0xff] %vm875, %v5590
  %5741 = vst [vmem:[#allocation4 + $0x160] sm:$0xff] %v5424
  %5742 = vst.msk [vmem:[#allocation4 + $0x168] sm:$0xff] %vm875, %v5593
  %5743 = vst [vmem:[#allocation4 + $0x170] sm:$0xff] %v5426
  %5744 = vst.msk [vmem:[#allocation4 + $0x178] sm:$0xff] %vm875, %v5595
  %5745 = vst [vmem:[#allocation4 + $0x180] sm:$0xff] %v5429
  %5746 = vst.msk [vmem:[#allocation4 + $0x188] sm:$0xff] %vm875, %v5598
  %5747 = vst [vmem:[#allocation4 + $0x190] sm:$0xff] %v5431
  %5748 = vst.msk [vmem:[#allocation4 + $0x198] sm:$0xff] %vm875, %v5600
  %5749 = vst [vmem:[#allocation4 + $0x1a0] sm:$0xff] %v5434
  %5750 = vst.msk [vmem:[#allocation4 + $0x1a8] sm:$0xff] %vm875, %v5603
  %5751 = vst [vmem:[#allocation4 + $0x1b0] sm:$0xff] %v5436
  %5752 = vst.msk [vmem:[#allocation4 + $0x1b8] sm:$0xff] %vm875, %v5605
  %5753 = vst [vmem:[#allocation4 + $0x1c0] sm:$0xff] %v5439
  %5754 = vst.msk [vmem:[#allocation4 + $0x1c8] sm:$0xff] %vm875, %v5608
  %5755 = vst [vmem:[#allocation4 + $0x1d0] sm:$0xff] %v5441
  %5756 = vst.msk [vmem:[#allocation4 + $0x1d8] sm:$0xff] %vm875, %v5610
  %5757 = vst [vmem:[#allocation4 + $0x1e0] sm:$0xff] %v5444
  %5758 = vst.msk [vmem:[#allocation4 + $0x1e8] sm:$0xff] %vm875, %v5613
  %5759 = vst [vmem:[#allocation4 + $0x1f0] sm:$0xff] %v5446
  %5760 = vst.msk [vmem:[#allocation4 + $0x1f8] sm:$0xff] %vm875, %v5615
  %5761 = vst [vmem:[#allocation4 + $0x200] sm:$0xff] %v5449
  %5762 = vst.msk [vmem:[#allocation4 + $0x208] sm:$0xff] %vm875, %v5618
  %5763 = vst [vmem:[#allocation4 + $0x210] sm:$0xff] %v5451
  %5764 = vst.msk [vmem:[#allocation4 + $0x218] sm:$0xff] %vm875, %v5620
  %5765 = vst [vmem:[#allocation4 + $0x220] sm:$0xff] %v5454
  %5766 = vst.msk [vmem:[#allocation4 + $0x228] sm:$0xff] %vm875, %v5623
  %5767 = vst [vmem:[#allocation4 + $0x230] sm:$0xff] %v5456
  %5768 = vst.msk [vmem:[#allocation4 + $0x238] sm:$0xff] %vm875, %v5625
  %5769 = vst [vmem:[#allocation4 + $0x240] sm:$0xff] %v5459
  %5770 = vst.msk [vmem:[#allocation4 + $0x248] sm:$0xff] %vm875, %v5628
  %5771 = vst [vmem:[#allocation4 + $0x250] sm:$0xff] %v5461
  %5772 = vst.msk [vmem:[#allocation4 + $0x258] sm:$0xff] %vm875, %v5630
  %5773 = vst [vmem:[#allocation4 + $0x260] sm:$0xff] %v5464
  %5774 = vst.msk [vmem:[#allocation4 + $0x268] sm:$0xff] %vm875, %v5633
  %5775 = vst [vmem:[#allocation4 + $0x270] sm:$0xff] %v5466
  %5776 = vst.msk [vmem:[#allocation4 + $0x278] sm:$0xff] %vm875, %v5635
  %5777 = vst [vmem:[#allocation4 + $0x280] sm:$0xff] %v5469
  %5778 = vst.msk [vmem:[#allocation4 + $0x288] sm:$0xff] %vm875, %v5638
  %5779 = vst [vmem:[#allocation4 + $0x290] sm:$0xff] %v5471
  %5780 = vst.msk [vmem:[#allocation4 + $0x298] sm:$0xff] %vm875, %v5640
  %5781 = vst [vmem:[#allocation4 + $0x2a0] sm:$0xff] %v5474
  %5782 = vst.msk [vmem:[#allocation4 + $0x2a8] sm:$0xff] %vm875, %v5643
  %5783 = vst [vmem:[#allocation4 + $0x2b0] sm:$0xff] %v5476
  %5784 = vst.msk [vmem:[#allocation4 + $0x2b8] sm:$0xff] %vm875, %v5645
  %5785 = vst [vmem:[#allocation4 + $0x2c0] sm:$0xff] %v5479
  %5786 = vst.msk [vmem:[#allocation4 + $0x2c8] sm:$0xff] %vm875, %v5648
  %5787 = vst [vmem:[#allocation4 + $0x2d0] sm:$0xff] %v5481
  %5788 = vst.msk [vmem:[#allocation4 + $0x2d8] sm:$0xff] %vm875, %v5650
  %5789 = vst [vmem:[#allocation4 + $0x2e0] sm:$0xff] %v5484
  %5790 = vst.msk [vmem:[#allocation4 + $0x2e8] sm:$0xff] %vm875, %v5653
  %5791 = vst [vmem:[#allocation4 + $0x2f0] sm:$0xff] %v5486
  %5792 = vst.msk [vmem:[#allocation4 + $0x2f8] sm:$0xff] %vm875, %v5655
  %5793 = vst [vmem:[#allocation4 + $0x300] sm:$0xff] %v5489
  %5794 = vst.msk [vmem:[#allocation4 + $0x308] sm:$0xff] %vm875, %v5658
  %5795 = vst [vmem:[#allocation4 + $0x310] sm:$0xff] %v5491
  %5796 = vst.msk [vmem:[#allocation4 + $0x318] sm:$0xff] %vm875, %v5660
  %5797 = vst [vmem:[#allocation4 + $0x320] sm:$0xff] %v5494
  %5798 = vst.msk [vmem:[#allocation4 + $0x328] sm:$0xff] %vm875, %v5663
  %5799 = vst [vmem:[#allocation4 + $0x330] sm:$0xff] %v5496
  %5800 = vst.msk [vmem:[#allocation4 + $0x338] sm:$0xff] %vm875, %v5665
  %5801 = vst [vmem:[#allocation4 + $0x340] sm:$0xff] %v5499
  %5802 = vst.msk [vmem:[#allocation4 + $0x348] sm:$0xff] %vm875, %v5668
  %5803 = vst [vmem:[#allocation4 + $0x350] sm:$0xff] %v5501
  %5804 = vst.msk [vmem:[#allocation4 + $0x358] sm:$0xff] %vm875, %v5670
  %5805 = vst [vmem:[#allocation4 + $0x360] sm:$0xff] %v5504
  %5806 = vst.msk [vmem:[#allocation4 + $0x368] sm:$0xff] %vm875, %v5673
  %5807 = vst [vmem:[#allocation4 + $0x370] sm:$0xff] %v5506
  %5808 = vst.msk [vmem:[#allocation4 + $0x378] sm:$0xff] %vm875, %v5675
  %5809 = vst [vmem:[#allocation4 + $0x380] sm:$0xff] %v5509
  %5810 = vst.msk [vmem:[#allocation4 + $0x388] sm:$0xff] %vm875, %v5678
  %5811 = vst [vmem:[#allocation4 + $0x390] sm:$0xff] %v5511
  %5812 = vst.msk [vmem:[#allocation4 + $0x398] sm:$0xff] %vm875, %v5680
  %5813 = vst [vmem:[#allocation4 + $0x3a0] sm:$0xff] %v5514
  %5814 = vst.msk [vmem:[#allocation4 + $0x3a8] sm:$0xff] %vm875, %v5683
  %5815 = vst [vmem:[#allocation4 + $0x3b0] sm:$0xff] %v5516
  %5816 = vst.msk [vmem:[#allocation4 + $0x3b8] sm:$0xff] %vm875, %v5685
  %5817 = vst [vmem:[#allocation4 + $0x3c0] sm:$0xff] %v5519
  %5818 = vst.msk [vmem:[#allocation4 + $0x3c8] sm:$0xff] %vm875, %v5688
  %5819 = vst [vmem:[#allocation4 + $0x3d0] sm:$0xff] %v5521
  %5820 = vst.msk [vmem:[#allocation4 + $0x3d8] sm:$0xff] %vm875, %v5690
  %5821 = vst [vmem:[#allocation4 + $0x3e0] sm:$0xff] %v5524
  %5822 = vst.msk [vmem:[#allocation4 + $0x3e8] sm:$0xff] %vm875, %v5693
  %5823 = vst [vmem:[#allocation4 + $0x3f0] sm:$0xff] %v5526
  %5824 = vst.msk [vmem:[#allocation4 + $0x3f8] sm:$0xff] %vm875, %v5695
  %v5825 = vld [vmem:[#allocation4] sm:$0xff]
  %v5826 = vld [vmem:[#allocation4 + $0x8] sm:$0xff]
  %v5827 = vld [vmem:[#allocation4 + $0x10] sm:$0xff]
  %v5828 = vld [vmem:[#allocation4 + $0x18] sm:$0xff]
  %v5829 = vld [vmem:[#allocation4 + $0x20] sm:$0xff]
  %v5830 = vld [vmem:[#allocation4 + $0x28] sm:$0xff]
  %v5831 = vld [vmem:[#allocation4 + $0x30] sm:$0xff]
  %v5832 = vld [vmem:[#allocation4 + $0x38] sm:$0xff]
  %v5833 = vld [vmem:[#allocation4 + $0x40] sm:$0xff]
  %v5834 = vld [vmem:[#allocation4 + $0x48] sm:$0xff]
  %v5835 = vld [vmem:[#allocation4 + $0x50] sm:$0xff]
  %v5836 = vld [vmem:[#allocation4 + $0x58] sm:$0xff]
  %v5837 = vld [vmem:[#allocation4 + $0x60] sm:$0xff]
  %v5838 = vld [vmem:[#allocation4 + $0x68] sm:$0xff]
  %v5839 = vld [vmem:[#allocation4 + $0x70] sm:$0xff]
  %v5840 = vld [vmem:[#allocation4 + $0x78] sm:$0xff]
  %v5841 = vld [vmem:[#allocation4 + $0x80] sm:$0xff]
  %v5842 = vld [vmem:[#allocation4 + $0x88] sm:$0xff]
  %v5843 = vld [vmem:[#allocation4 + $0x90] sm:$0xff]
  %v5844 = vld [vmem:[#allocation4 + $0x98] sm:$0xff]
  %v5845 = vld [vmem:[#allocation4 + $0xa0] sm:$0xff]
  %v5846 = vld [vmem:[#allocation4 + $0xa8] sm:$0xff]
  %v5847 = vld [vmem:[#allocation4 + $0xb0] sm:$0xff]
  %v5848 = vld [vmem:[#allocation4 + $0xb8] sm:$0xff]
  %v5849 = vld [vmem:[#allocation4 + $0xc0] sm:$0xff]
  %v5850 = vld [vmem:[#allocation4 + $0xc8] sm:$0xff]
  %v5851 = vld [vmem:[#allocation4 + $0xd0] sm:$0xff]
  %v5852 = vld [vmem:[#allocation4 + $0xd8] sm:$0xff]
  %v5853 = vld [vmem:[#allocation4 + $0xe0] sm:$0xff]
  %v5854 = vld [vmem:[#allocation4 + $0xe8] sm:$0xff]
  %v5855 = vld [vmem:[#allocation4 + $0xf0] sm:$0xff]
  %v5856 = vld [vmem:[#allocation4 + $0xf8] sm:$0xff]
  %v5857 = vld [vmem:[#allocation4 + $0x100] sm:$0xff]
  %v5858 = vld [vmem:[#allocation4 + $0x108] sm:$0xff]
  %v5859 = vld [vmem:[#allocation4 + $0x110] sm:$0xff]
  %v5860 = vld [vmem:[#allocation4 + $0x118] sm:$0xff]
  %v5861 = vld [vmem:[#allocation4 + $0x120] sm:$0xff]
  %v5862 = vld [vmem:[#allocation4 + $0x128] sm:$0xff]
  %v5863 = vld [vmem:[#allocation4 + $0x130] sm:$0xff]
  %v5864 = vld [vmem:[#allocation4 + $0x138] sm:$0xff]
  %v5865 = vld [vmem:[#allocation4 + $0x140] sm:$0xff]
  %v5866 = vld [vmem:[#allocation4 + $0x148] sm:$0xff]
  %v5867 = vld [vmem:[#allocation4 + $0x150] sm:$0xff]
  %v5868 = vld [vmem:[#allocation4 + $0x158] sm:$0xff]
  %v5869 = vld [vmem:[#allocation4 + $0x160] sm:$0xff]
  %v5870 = vld [vmem:[#allocation4 + $0x168] sm:$0xff]
  %v5871 = vld [vmem:[#allocation4 + $0x170] sm:$0xff]
  %v5872 = vld [vmem:[#allocation4 + $0x178] sm:$0xff]
  %v5873 = vld [vmem:[#allocation4 + $0x180] sm:$0xff]
  %v5874 = vld [vmem:[#allocation4 + $0x188] sm:$0xff]
  %v5875 = vld [vmem:[#allocation4 + $0x190] sm:$0xff]
  %v5876 = vld [vmem:[#allocation4 + $0x198] sm:$0xff]
  %v5877 = vld [vmem:[#allocation4 + $0x1a0] sm:$0xff]
  %v5878 = vld [vmem:[#allocation4 + $0x1a8] sm:$0xff]
  %v5879 = vld [vmem:[#allocation4 + $0x1b0] sm:$0xff]
  %v5880 = vld [vmem:[#allocation4 + $0x1b8] sm:$0xff]
  %v5881 = vld [vmem:[#allocation4 + $0x1c0] sm:$0xff]
  %v5882 = vld [vmem:[#allocation4 + $0x1c8] sm:$0xff]
  %v5883 = vld [vmem:[#allocation4 + $0x1d0] sm:$0xff]
  %v5884 = vld [vmem:[#allocation4 + $0x1d8] sm:$0xff]
  %v5885 = vld [vmem:[#allocation4 + $0x1e0] sm:$0xff]
  %v5886 = vld [vmem:[#allocation4 + $0x1e8] sm:$0xff]
  %v5887 = vld [vmem:[#allocation4 + $0x1f0] sm:$0xff]
  %v5888 = vld [vmem:[#allocation4 + $0x1f8] sm:$0xff]
  %v5889 = vld [vmem:[#allocation4 + $0x200] sm:$0xff]
  %v5890 = vld [vmem:[#allocation4 + $0x208] sm:$0xff]
  %v5891 = vld [vmem:[#allocation4 + $0x210] sm:$0xff]
  %v5892 = vld [vmem:[#allocation4 + $0x218] sm:$0xff]
  %v5893 = vld [vmem:[#allocation4 + $0x220] sm:$0xff]
  %v5894 = vld [vmem:[#allocation4 + $0x228] sm:$0xff]
  %v5895 = vld [vmem:[#allocation4 + $0x230] sm:$0xff]
  %v5896 = vld [vmem:[#allocation4 + $0x238] sm:$0xff]
  %v5897 = vld [vmem:[#allocation4 + $0x240] sm:$0xff]
  %v5898 = vld [vmem:[#allocation4 + $0x248] sm:$0xff]
  %v5899 = vld [vmem:[#allocation4 + $0x250] sm:$0xff]
  %v5900 = vld [vmem:[#allocation4 + $0x258] sm:$0xff]
  %v5901 = vld [vmem:[#allocation4 + $0x260] sm:$0xff]
  %v5902 = vld [vmem:[#allocation4 + $0x268] sm:$0xff]
  %v5903 = vld [vmem:[#allocation4 + $0x270] sm:$0xff]
  %v5904 = vld [vmem:[#allocation4 + $0x278] sm:$0xff]
  %v5905 = vld [vmem:[#allocation4 + $0x280] sm:$0xff]
  %v5906 = vld [vmem:[#allocation4 + $0x288] sm:$0xff]
  %v5907 = vld [vmem:[#allocation4 + $0x290] sm:$0xff]
  %v5908 = vld [vmem:[#allocation4 + $0x298] sm:$0xff]
  %v5909 = vld [vmem:[#allocation4 + $0x2a0] sm:$0xff]
  %v5910 = vld [vmem:[#allocation4 + $0x2a8] sm:$0xff]
  %v5911 = vld [vmem:[#allocation4 + $0x2b0] sm:$0xff]
  %v5912 = vld [vmem:[#allocation4 + $0x2b8] sm:$0xff]
  %v5913 = vld [vmem:[#allocation4 + $0x2c0] sm:$0xff]
  %v5914 = vld [vmem:[#allocation4 + $0x2c8] sm:$0xff]
  %v5915 = vld [vmem:[#allocation4 + $0x2d0] sm:$0xff]
  %v5916 = vld [vmem:[#allocation4 + $0x2d8] sm:$0xff]
  %v5917 = vld [vmem:[#allocation4 + $0x2e0] sm:$0xff]
  %v5918 = vld [vmem:[#allocation4 + $0x2e8] sm:$0xff]
  %v5919 = vld [vmem:[#allocation4 + $0x2f0] sm:$0xff]
  %v5920 = vld [vmem:[#allocation4 + $0x2f8] sm:$0xff]
  %v5921 = vld [vmem:[#allocation4 + $0x300] sm:$0xff]
  %v5922 = vld [vmem:[#allocation4 + $0x308] sm:$0xff]
  %v5923 = vld [vmem:[#allocation4 + $0x310] sm:$0xff]
  %v5924 = vld [vmem:[#allocation4 + $0x318] sm:$0xff]
  %v5925 = vld [vmem:[#allocation4 + $0x320] sm:$0xff]
  %v5926 = vld [vmem:[#allocation4 + $0x328] sm:$0xff]
  %v5927 = vld [vmem:[#allocation4 + $0x330] sm:$0xff]
  %v5928 = vld [vmem:[#allocation4 + $0x338] sm:$0xff]
  %v5929 = vld [vmem:[#allocation4 + $0x340] sm:$0xff]
  %v5930 = vld [vmem:[#allocation4 + $0x348] sm:$0xff]
  %v5931 = vld [vmem:[#allocation4 + $0x350] sm:$0xff]
  %v5932 = vld [vmem:[#allocation4 + $0x358] sm:$0xff]
  %v5933 = vld [vmem:[#allocation4 + $0x360] sm:$0xff]
  %v5934 = vld [vmem:[#allocation4 + $0x368] sm:$0xff]
  %v5935 = vld [vmem:[#allocation4 + $0x370] sm:$0xff]
  %v5936 = vld [vmem:[#allocation4 + $0x378] sm:$0xff]
  %v5937 = vld [vmem:[#allocation4 + $0x380] sm:$0xff]
  %v5938 = vld [vmem:[#allocation4 + $0x388] sm:$0xff]
  %v5939 = vld [vmem:[#allocation4 + $0x390] sm:$0xff]
  %v5940 = vld [vmem:[#allocation4 + $0x398] sm:$0xff]
  %v5941 = vld [vmem:[#allocation4 + $0x3a0] sm:$0xff]
  %v5942 = vld [vmem:[#allocation4 + $0x3a8] sm:$0xff]
  %v5943 = vld [vmem:[#allocation4 + $0x3b0] sm:$0xff]
  %v5944 = vld [vmem:[#allocation4 + $0x3b8] sm:$0xff]
  %v5945 = vld [vmem:[#allocation4 + $0x3c0] sm:$0xff]
  %v5946 = vld [vmem:[#allocation4 + $0x3c8] sm:$0xff]
  %v5947 = vld [vmem:[#allocation4 + $0x3d0] sm:$0xff]
  %v5948 = vld [vmem:[#allocation4 + $0x3d8] sm:$0xff]
  %v5949 = vld [vmem:[#allocation4 + $0x3e0] sm:$0xff]
  %v5950 = vld [vmem:[#allocation4 + $0x3e8] sm:$0xff]
  %v5951 = vld [vmem:[#allocation4 + $0x3f0] sm:$0xff]
  %v5952 = vld [vmem:[#allocation4 + $0x3f8] sm:$0xff]
  %v5953 = vld [vmem:[#allocation3 + $0x1] sm:$0xff]
  %v5954 = vld [vmem:[#allocation3 + $0x9] sm:$0xff]
  %v5955 = vld [vmem:[#allocation3 + $0x11] sm:$0xff]
  %v5956 = vld [vmem:[#allocation3 + $0x19] sm:$0xff]
  %v5957 = vld [vmem:[#allocation3 + $0x21] sm:$0xff]
  %v5958 = vld [vmem:[#allocation3 + $0x29] sm:$0xff]
  %v5959 = vld [vmem:[#allocation3 + $0x31] sm:$0xff]
  %v5960 = vld [vmem:[#allocation3 + $0x39] sm:$0xff]
  %v5961 = vld [vmem:[#allocation3 + $0x41] sm:$0xff]
  %v5962 = vld [vmem:[#allocation3 + $0x49] sm:$0xff]
  %v5963 = vld [vmem:[#allocation3 + $0x51] sm:$0xff]
  %v5964 = vld [vmem:[#allocation3 + $0x59] sm:$0xff]
  %v5965 = vld [vmem:[#allocation3 + $0x61] sm:$0xff]
  %v5966 = vld [vmem:[#allocation3 + $0x69] sm:$0xff]
  %v5967 = vld [vmem:[#allocation3 + $0x71] sm:$0xff]
  %v5968 = vld [vmem:[#allocation3 + $0x79] sm:$0xff]
  %v5969 = vld [vmem:[#allocation3 + $0x81] sm:$0xff]
  %v5970 = vld [vmem:[#allocation3 + $0x89] sm:$0xff]
  %v5971 = vld [vmem:[#allocation3 + $0x91] sm:$0xff]
  %v5972 = vld [vmem:[#allocation3 + $0x99] sm:$0xff]
  %v5973 = vld [vmem:[#allocation3 + $0xa1] sm:$0xff]
  %v5974 = vld [vmem:[#allocation3 + $0xa9] sm:$0xff]
  %v5975 = vld [vmem:[#allocation3 + $0xb1] sm:$0xff]
  %v5976 = vld [vmem:[#allocation3 + $0xb9] sm:$0xff]
  %v5977 = vld [vmem:[#allocation3 + $0xc1] sm:$0xff]
  %v5978 = vld [vmem:[#allocation3 + $0xc9] sm:$0xff]
  %v5979 = vld [vmem:[#allocation3 + $0xd1] sm:$0xff]
  %v5980 = vld [vmem:[#allocation3 + $0xd9] sm:$0xff]
  %v5981 = vld [vmem:[#allocation3 + $0xe1] sm:$0xff]
  %v5982 = vld [vmem:[#allocation3 + $0xe9] sm:$0xff]
  %v5983 = vld [vmem:[#allocation3 + $0xf1] sm:$0xff]
  %v5984 = vld [vmem:[#allocation3 + $0xf9] sm:$0xff]
  %v5985 = vld [vmem:[#allocation3 + $0x101] sm:$0xff]
  %v5986 = vld [vmem:[#allocation3 + $0x109] sm:$0xff]
  %v5987 = vld [vmem:[#allocation3 + $0x111] sm:$0xff]
  %v5988 = vld [vmem:[#allocation3 + $0x119] sm:$0xff]
  %v5989 = vld [vmem:[#allocation3 + $0x121] sm:$0xff]
  %v5990 = vld [vmem:[#allocation3 + $0x129] sm:$0xff]
  %v5991 = vld [vmem:[#allocation3 + $0x131] sm:$0xff]
  %v5992 = vld [vmem:[#allocation3 + $0x139] sm:$0xff]
  %v5993 = vld [vmem:[#allocation3 + $0x141] sm:$0xff]
  %v5994 = vld [vmem:[#allocation3 + $0x149] sm:$0xff]
  %v5995 = vld [vmem:[#allocation3 + $0x151] sm:$0xff]
  %v5996 = vld [vmem:[#allocation3 + $0x159] sm:$0xff]
  %v5997 = vld [vmem:[#allocation3 + $0x161] sm:$0xff]
  %v5998 = vld [vmem:[#allocation3 + $0x169] sm:$0xff]
  %v5999 = vld [vmem:[#allocation3 + $0x171] sm:$0xff]
  %v6000 = vld [vmem:[#allocation3 + $0x179] sm:$0xff]
  %v6001 = vld [vmem:[#allocation3 + $0x181] sm:$0xff]
  %v6002 = vld [vmem:[#allocation3 + $0x189] sm:$0xff]
  %v6003 = vld [vmem:[#allocation3 + $0x191] sm:$0xff]
  %v6004 = vld [vmem:[#allocation3 + $0x199] sm:$0xff]
  %v6005 = vld [vmem:[#allocation3 + $0x1a1] sm:$0xff]
  %v6006 = vld [vmem:[#allocation3 + $0x1a9] sm:$0xff]
  %v6007 = vld [vmem:[#allocation3 + $0x1b1] sm:$0xff]
  %v6008 = vld [vmem:[#allocation3 + $0x1b9] sm:$0xff]
  %v6009 = vld [vmem:[#allocation3 + $0x1c1] sm:$0xff]
  %v6010 = vld [vmem:[#allocation3 + $0x1c9] sm:$0xff]
  %v6011 = vld [vmem:[#allocation3 + $0x1d1] sm:$0xff]
  %v6012 = vld [vmem:[#allocation3 + $0x1d9] sm:$0xff]
  %v6013 = vld [vmem:[#allocation3 + $0x1e1] sm:$0xff]
  %v6014 = vld [vmem:[#allocation3 + $0x1e9] sm:$0xff]
  %v6015 = vld [vmem:[#allocation3 + $0x1f1] sm:$0xff]
  %v6016 = vld [vmem:[#allocation3 + $0x1f9] sm:$0xff]
  %v6017 = vpack.c.bf16 %v5954, %v5953
  %v6018 = vpack.c.bf16 %v5956, %v5955
  %v6019 = vpack.c.bf16 %v5958, %v5957
  %v6020 = vpack.c.bf16 %v5960, %v5959
  %v6021 = vpack.c.bf16 %v5962, %v5961
  %v6022 = vpack.c.bf16 %v5964, %v5963
  %v6023 = vpack.c.bf16 %v5966, %v5965
  %v6024 = vpack.c.bf16 %v5968, %v5967
  %v6025 = vpack.c.bf16 %v5970, %v5969
  %v6026 = vpack.c.bf16 %v5972, %v5971
  %v6027 = vpack.c.bf16 %v5974, %v5973
  %v6028 = vpack.c.bf16 %v5976, %v5975
  %v6029 = vpack.c.bf16 %v5978, %v5977
  %v6030 = vpack.c.bf16 %v5980, %v5979
  %v6031 = vpack.c.bf16 %v5982, %v5981
  %v6032 = vpack.c.bf16 %v5984, %v5983
  %v6033 = vpack.c.bf16 %v5986, %v5985
  %v6034 = vpack.c.bf16 %v5988, %v5987
  %v6035 = vpack.c.bf16 %v5990, %v5989
  %v6036 = vpack.c.bf16 %v5992, %v5991
  %v6037 = vpack.c.bf16 %v5994, %v5993
  %v6038 = vpack.c.bf16 %v5996, %v5995
  %v6039 = vpack.c.bf16 %v5998, %v5997
  %v6040 = vpack.c.bf16 %v6000, %v5999
  %v6041 = vpack.c.bf16 %v6002, %v6001
  %v6042 = vpack.c.bf16 %v6004, %v6003
  %v6043 = vpack.c.bf16 %v6006, %v6005
  %v6044 = vpack.c.bf16 %v6008, %v6007
  %v6045 = vpack.c.bf16 %v6010, %v6009
  %v6046 = vpack.c.bf16 %v6012, %v6011
  %v6047 = vpack.c.bf16 %v6014, %v6013
  %v6048 = vpack.c.bf16 %v6016, %v6015
  %s6049 = scalar_lea.vmem %s4, 88
  %v6050 = vld [vmem:[%s6049] sm:$0xff]
  %v6051 = vld [vmem:[%s6049 + $0x8] sm:$0xff]
  %v6052 = vld [vmem:[%s6049 + $0x10] sm:$0xff]
  %v6053 = vld [vmem:[%s6049 + $0x18] sm:$0xff]
  %v6054 = vld [vmem:[%s6049 + $0x20] sm:$0xff]
  %v6055 = vld [vmem:[%s6049 + $0x28] sm:$0xff]
  %v6056 = vld [vmem:[%s6049 + $0x30] sm:$0xff]
  %v6057 = vld [vmem:[%s6049 + $0x38] sm:$0xff]
  %v6058 = vld [vmem:[%s6049 + $0x40] sm:$0xff]
  %v6059 = vld [vmem:[%s6049 + $0x48] sm:$0xff]
  %v6060 = vld [vmem:[%s6049 + $0x50] sm:$0x33]
  %v6072 = vunpack.c.l.b16 %v6050
  %v6073 = vunpack.c.h.b16 %v6050
  %v6074 = vunpack.c.l.b16 %v6051
  %v6075 = vunpack.c.h.b16 %v6051
  %v6076 = vunpack.c.l.b16 %v6052
  %v6077 = vunpack.c.h.b16 %v6052
  %v6078 = vunpack.c.l.b16 %v6053
  %v6079 = vunpack.c.h.b16 %v6053
  %v6080 = vunpack.c.l.b16 %v6054
  %v6081 = vunpack.c.h.b16 %v6054
  %v6082 = vunpack.c.l.b16 %v6055
  %v6083 = vunpack.c.h.b16 %v6055
  %v6084 = vunpack.c.l.b16 %v6056
  %v6085 = vunpack.c.h.b16 %v6056
  %v6086 = vunpack.c.l.b16 %v6057
  %v6087 = vunpack.c.h.b16 %v6057
  %v6088 = vunpack.c.l.b16 %v6058
  %v6089 = vunpack.c.h.b16 %v6058
  %v6090 = vunpack.c.l.b16 %v6059
  %v6091 = vunpack.c.h.b16 %v6059
  %v6092 = vunpack.c.l.b16 %v6060
  %v6093 = vunpack.c.h.b16 %v6060
  %v6094 = vpack.c.b16 %v6074, %v6072
  %v6095 = vpack.c.b16 %v6075, %v6073
  %v6096 = vpack.c.b16 %v6078, %v6076
  %v6097 = vpack.c.b16 %v6079, %v6077
  %v6098 = vpack.c.b16 %v6082, %v6080
  %v6099 = vpack.c.b16 %v6083, %v6081
  %v6100 = vpack.c.b16 %v6086, %v6084
  %v6101 = vpack.c.b16 %v6087, %v6085
  %v6102 = vpack.c.b16 %v6090, %v6088
  %v6103 = vpack.c.b16 %v6091, %v6089
  %v6104 = vpack.c.b16 %v6092, %v6092
  %v6105 = vpack.c.b16 %v6093, %v6093
  %v6117 = vsel %vm4581, %v6017, 0
  %v6120 = vsel %vm4581, %v6018, 0
  %v6123 = vsel %vm4581, %v6019, 0
  %v6126 = vsel %vm4581, %v6020, 0
  %v6129 = vsel %vm4581, %v6021, 0
  %v6132 = vsel %vm4581, %v6022, 0
  %v6135 = vsel %vm4581, %v6023, 0
  %v6138 = vsel %vm4581, %v6024, 0
  %v6141 = vsel %vm4581, %v6025, 0
  %v6144 = vsel %vm4581, %v6026, 0
  %v6147 = vsel %vm4581, %v6027, 0
  %v6150 = vsel %vm4581, %v6028, 0
  %v6153 = vsel %vm4581, %v6029, 0
  %v6156 = vsel %vm4581, %v6030, 0
  %v6159 = vsel %vm4581, %v6031, 0
  %v6162 = vsel %vm4581, %v6032, 0
  %v6165 = vsel %vm4581, %v6033, 0
  %v6168 = vsel %vm4581, %v6034, 0
  %v6171 = vsel %vm4581, %v6035, 0
  %v6174 = vsel %vm4581, %v6036, 0
  %v6177 = vsel %vm4581, %v6037, 0
  %v6180 = vsel %vm4581, %v6038, 0
  %v6183 = vsel %vm4581, %v6039, 0
  %v6186 = vsel %vm4581, %v6040, 0
  %v6189 = vsel %vm4581, %v6041, 0
  %v6192 = vsel %vm4581, %v6042, 0
  %v6195 = vsel %vm4581, %v6043, 0
  %v6198 = vsel %vm4581, %v6044, 0
  %v6201 = vsel %vm4581, %v6045, 0
  %v6204 = vsel %vm4581, %v6046, 0
  %v6207 = vsel %vm4581, %v6047, 0
  %v6210 = vsel %vm4581, %v6048, 0
  %v6213 = vsel %vm5352, %v6104, 0
  %v6216 = vsel %vm5352, %v6105, 0
  %6218 = vmatpush.bf16.msra.mxu0 0
  %6219 = vmatpush.bf16.msra.mxu0 0
  %6220 = vmatpush.bf16.msra.mxu0 %v6213
  %6221 = vmatpush.bf16.msra.mxu0 %v6102
  %6222 = vmatpush.bf16.msra.mxu0 %v6100
  %6223 = vmatpush.bf16.msra.mxu0 %v6098
  %6224 = vmatpush.bf16.msra.mxu0 %v6096
  %6225 = vmatpush.bf16.msra.mxu0 %v6094
  %6226 = vmatmul.bf16.gmra.mxu0 %v6117
  %v6227 = vpop.f32.mrf.mxu0
  %v6228 = vadd.f32 0.0, %v6227
  %v6229 = vpop.f32.mrf.mxu0
  %v6230 = vadd.f32 0.0, %v6229
  %6231 = vmatmul.bf16.gmra.mxu0 %v6120
  %v6232 = vpop.f32.mrf.mxu0
  %v6233 = vadd.f32 0.0, %v6232
  %v6234 = vpop.f32.mrf.mxu0
  %v6235 = vadd.f32 0.0, %v6234
  %6236 = vmatmul.bf16.gmra.mxu0 %v6123
  %v6237 = vpop.f32.mrf.mxu0
  %v6238 = vadd.f32 0.0, %v6237
  %v6239 = vpop.f32.mrf.mxu0
  %v6240 = vadd.f32 0.0, %v6239
  %6241 = vmatmul.bf16.gmra.mxu0 %v6126
  %v6242 = vpop.f32.mrf.mxu0
  %v6243 = vadd.f32 0.0, %v6242
  %v6244 = vpop.f32.mrf.mxu0
  %v6245 = vadd.f32 0.0, %v6244
  %6246 = vmatmul.bf16.gmra.mxu0 %v6129
  %v6247 = vpop.f32.mrf.mxu0
  %v6248 = vadd.f32 0.0, %v6247
  %v6249 = vpop.f32.mrf.mxu0
  %v6250 = vadd.f32 0.0, %v6249
  %6251 = vmatmul.bf16.gmra.mxu0 %v6132
  %v6252 = vpop.f32.mrf.mxu0
  %v6253 = vadd.f32 0.0, %v6252
  %v6254 = vpop.f32.mrf.mxu0
  %v6255 = vadd.f32 0.0, %v6254
  %6256 = vmatmul.bf16.gmra.mxu0 %v6135
  %v6257 = vpop.f32.mrf.mxu0
  %v6258 = vadd.f32 0.0, %v6257
  %v6259 = vpop.f32.mrf.mxu0
  %v6260 = vadd.f32 0.0, %v6259
  %6261 = vmatmul.bf16.gmra.mxu0 %v6138
  %v6262 = vpop.f32.mrf.mxu0
  %v6263 = vadd.f32 0.0, %v6262
  %v6264 = vpop.f32.mrf.mxu0
  %v6265 = vadd.f32 0.0, %v6264
  %6266 = vmatmul.bf16.gmra.mxu0 %v6141
  %v6267 = vpop.f32.mrf.mxu0
  %v6268 = vadd.f32 0.0, %v6267
  %v6269 = vpop.f32.mrf.mxu0
  %v6270 = vadd.f32 0.0, %v6269
  %6271 = vmatmul.bf16.gmra.mxu0 %v6144
  %v6272 = vpop.f32.mrf.mxu0
  %v6273 = vadd.f32 0.0, %v6272
  %v6274 = vpop.f32.mrf.mxu0
  %v6275 = vadd.f32 0.0, %v6274
  %6276 = vmatmul.bf16.gmra.mxu0 %v6147
  %v6277 = vpop.f32.mrf.mxu0
  %v6278 = vadd.f32 0.0, %v6277
  %v6279 = vpop.f32.mrf.mxu0
  %v6280 = vadd.f32 0.0, %v6279
  %6281 = vmatmul.bf16.gmra.mxu0 %v6150
  %v6282 = vpop.f32.mrf.mxu0
  %v6283 = vadd.f32 0.0, %v6282
  %v6284 = vpop.f32.mrf.mxu0
  %v6285 = vadd.f32 0.0, %v6284
  %6286 = vmatmul.bf16.gmra.mxu0 %v6153
  %v6287 = vpop.f32.mrf.mxu0
  %v6288 = vadd.f32 0.0, %v6287
  %v6289 = vpop.f32.mrf.mxu0
  %v6290 = vadd.f32 0.0, %v6289
  %6291 = vmatmul.bf16.gmra.mxu0 %v6156
  %v6292 = vpop.f32.mrf.mxu0
  %v6293 = vadd.f32 0.0, %v6292
  %v6294 = vpop.f32.mrf.mxu0
  %v6295 = vadd.f32 0.0, %v6294
  %6296 = vmatmul.bf16.gmra.mxu0 %v6159
  %v6297 = vpop.f32.mrf.mxu0
  %v6298 = vadd.f32 0.0, %v6297
  %v6299 = vpop.f32.mrf.mxu0
  %v6300 = vadd.f32 0.0, %v6299
  %6301 = vmatmul.bf16.gmra.mxu0 %v6162
  %v6302 = vpop.f32.mrf.mxu0
  %v6303 = vadd.f32 0.0, %v6302
  %v6304 = vpop.f32.mrf.mxu0
  %v6305 = vadd.f32 0.0, %v6304
  %6306 = vmatmul.bf16.gmra.mxu0 %v6165
  %v6307 = vpop.f32.mrf.mxu0
  %v6308 = vadd.f32 0.0, %v6307
  %v6309 = vpop.f32.mrf.mxu0
  %v6310 = vadd.f32 0.0, %v6309
  %6311 = vmatmul.bf16.gmra.mxu0 %v6168
  %v6312 = vpop.f32.mrf.mxu0
  %v6313 = vadd.f32 0.0, %v6312
  %v6314 = vpop.f32.mrf.mxu0
  %v6315 = vadd.f32 0.0, %v6314
  %6316 = vmatmul.bf16.gmra.mxu0 %v6171
  %v6317 = vpop.f32.mrf.mxu0
  %v6318 = vadd.f32 0.0, %v6317
  %v6319 = vpop.f32.mrf.mxu0
  %v6320 = vadd.f32 0.0, %v6319
  %6321 = vmatmul.bf16.gmra.mxu0 %v6174
  %v6322 = vpop.f32.mrf.mxu0
  %v6323 = vadd.f32 0.0, %v6322
  %v6324 = vpop.f32.mrf.mxu0
  %v6325 = vadd.f32 0.0, %v6324
  %6326 = vmatmul.bf16.gmra.mxu0 %v6177
  %v6327 = vpop.f32.mrf.mxu0
  %v6328 = vadd.f32 0.0, %v6327
  %v6329 = vpop.f32.mrf.mxu0
  %v6330 = vadd.f32 0.0, %v6329
  %6331 = vmatmul.bf16.gmra.mxu0 %v6180
  %v6332 = vpop.f32.mrf.mxu0
  %v6333 = vadd.f32 0.0, %v6332
  %v6334 = vpop.f32.mrf.mxu0
  %v6335 = vadd.f32 0.0, %v6334
  %6336 = vmatmul.bf16.gmra.mxu0 %v6183
  %v6337 = vpop.f32.mrf.mxu0
  %v6338 = vadd.f32 0.0, %v6337
  %v6339 = vpop.f32.mrf.mxu0
  %v6340 = vadd.f32 0.0, %v6339
  %6341 = vmatmul.bf16.gmra.mxu0 %v6186
  %v6342 = vpop.f32.mrf.mxu0
  %v6343 = vadd.f32 0.0, %v6342
  %v6344 = vpop.f32.mrf.mxu0
  %v6345 = vadd.f32 0.0, %v6344
  %6346 = vmatmul.bf16.gmra.mxu0 %v6189
  %v6347 = vpop.f32.mrf.mxu0
  %v6348 = vadd.f32 0.0, %v6347
  %v6349 = vpop.f32.mrf.mxu0
  %v6350 = vadd.f32 0.0, %v6349
  %6351 = vmatmul.bf16.gmra.mxu0 %v6192
  %v6352 = vpop.f32.mrf.mxu0
  %v6353 = vadd.f32 0.0, %v6352
  %v6354 = vpop.f32.mrf.mxu0
  %v6355 = vadd.f32 0.0, %v6354
  %6356 = vmatmul.bf16.gmra.mxu0 %v6195
  %v6357 = vpop.f32.mrf.mxu0
  %v6358 = vadd.f32 0.0, %v6357
  %v6359 = vpop.f32.mrf.mxu0
  %v6360 = vadd.f32 0.0, %v6359
  %6361 = vmatmul.bf16.gmra.mxu0 %v6198
  %v6362 = vpop.f32.mrf.mxu0
  %v6363 = vadd.f32 0.0, %v6362
  %v6364 = vpop.f32.mrf.mxu0
  %v6365 = vadd.f32 0.0, %v6364
  %6366 = vmatmul.bf16.gmra.mxu0 %v6201
  %v6367 = vpop.f32.mrf.mxu0
  %v6368 = vadd.f32 0.0, %v6367
  %v6369 = vpop.f32.mrf.mxu0
  %v6370 = vadd.f32 0.0, %v6369
  %6371 = vmatmul.bf16.gmra.mxu0 %v6204
  %v6372 = vpop.f32.mrf.mxu0
  %v6373 = vadd.f32 0.0, %v6372
  %v6374 = vpop.f32.mrf.mxu0
  %v6375 = vadd.f32 0.0, %v6374
  %6376 = vmatmul.bf16.gmra.mxu0 %v6207
  %v6377 = vpop.f32.mrf.mxu0
  %v6378 = vadd.f32 0.0, %v6377
  %v6379 = vpop.f32.mrf.mxu0
  %v6380 = vadd.f32 0.0, %v6379
  %6381 = vmatmul.bf16.gmra.mxu0 %v6210
  %v6382 = vpop.f32.mrf.mxu0
  %v6383 = vadd.f32 0.0, %v6382
  %v6384 = vpop.f32.mrf.mxu0
  %v6385 = vadd.f32 0.0, %v6384
  %6386 = vdwg.mxu0
  %6387 = vmatpush.bf16.msra.mxu0 0
  %6388 = vmatpush.bf16.msra.mxu0 0
  %6389 = vmatpush.bf16.msra.mxu0 %v6216
  %6390 = vmatpush.bf16.msra.mxu0 %v6103
  %6391 = vmatpush.bf16.msra.mxu0 %v6101
  %6392 = vmatpush.bf16.msra.mxu0 %v6099
  %6393 = vmatpush.bf16.msra.mxu0 %v6097
  %6394 = vmatpush.bf16.msra.mxu0 %v6095
  %6395 = vmatmul.bf16.gmra.mxu0 %v6117
  %v6396 = vpop.f32.mrf.mxu0
  %v6397 = vadd.f32 0.0, %v6396
  %v6398 = vpop.f32.mrf.mxu0
  %v6399 = vadd.f32 0.0, %v6398
  %6400 = vmatmul.bf16.gmra.mxu0 %v6120
  %v6401 = vpop.f32.mrf.mxu0
  %v6402 = vadd.f32 0.0, %v6401
  %v6403 = vpop.f32.mrf.mxu0
  %v6404 = vadd.f32 0.0, %v6403
  %6405 = vmatmul.bf16.gmra.mxu0 %v6123
  %v6406 = vpop.f32.mrf.mxu0
  %v6407 = vadd.f32 0.0, %v6406
  %v6408 = vpop.f32.mrf.mxu0
  %v6409 = vadd.f32 0.0, %v6408
  %6410 = vmatmul.bf16.gmra.mxu0 %v6126
  %v6411 = vpop.f32.mrf.mxu0
  %v6412 = vadd.f32 0.0, %v6411
  %v6413 = vpop.f32.mrf.mxu0
  %v6414 = vadd.f32 0.0, %v6413
  %6415 = vmatmul.bf16.gmra.mxu0 %v6129
  %v6416 = vpop.f32.mrf.mxu0
  %v6417 = vadd.f32 0.0, %v6416
  %v6418 = vpop.f32.mrf.mxu0
  %v6419 = vadd.f32 0.0, %v6418
  %6420 = vmatmul.bf16.gmra.mxu0 %v6132
  %v6421 = vpop.f32.mrf.mxu0
  %v6422 = vadd.f32 0.0, %v6421
  %v6423 = vpop.f32.mrf.mxu0
  %v6424 = vadd.f32 0.0, %v6423
  %6425 = vmatmul.bf16.gmra.mxu0 %v6135
  %v6426 = vpop.f32.mrf.mxu0
  %v6427 = vadd.f32 0.0, %v6426
  %v6428 = vpop.f32.mrf.mxu0
  %v6429 = vadd.f32 0.0, %v6428
  %6430 = vmatmul.bf16.gmra.mxu0 %v6138
  %v6431 = vpop.f32.mrf.mxu0
  %v6432 = vadd.f32 0.0, %v6431
  %v6433 = vpop.f32.mrf.mxu0
  %v6434 = vadd.f32 0.0, %v6433
  %6435 = vmatmul.bf16.gmra.mxu0 %v6141
  %v6436 = vpop.f32.mrf.mxu0
  %v6437 = vadd.f32 0.0, %v6436
  %v6438 = vpop.f32.mrf.mxu0
  %v6439 = vadd.f32 0.0, %v6438
  %6440 = vmatmul.bf16.gmra.mxu0 %v6144
  %v6441 = vpop.f32.mrf.mxu0
  %v6442 = vadd.f32 0.0, %v6441
  %v6443 = vpop.f32.mrf.mxu0
  %v6444 = vadd.f32 0.0, %v6443
  %6445 = vmatmul.bf16.gmra.mxu0 %v6147
  %v6446 = vpop.f32.mrf.mxu0
  %v6447 = vadd.f32 0.0, %v6446
  %v6448 = vpop.f32.mrf.mxu0
  %v6449 = vadd.f32 0.0, %v6448
  %6450 = vmatmul.bf16.gmra.mxu0 %v6150
  %v6451 = vpop.f32.mrf.mxu0
  %v6452 = vadd.f32 0.0, %v6451
  %v6453 = vpop.f32.mrf.mxu0
  %v6454 = vadd.f32 0.0, %v6453
  %6455 = vmatmul.bf16.gmra.mxu0 %v6153
  %v6456 = vpop.f32.mrf.mxu0
  %v6457 = vadd.f32 0.0, %v6456
  %v6458 = vpop.f32.mrf.mxu0
  %v6459 = vadd.f32 0.0, %v6458
  %6460 = vmatmul.bf16.gmra.mxu0 %v6156
  %v6461 = vpop.f32.mrf.mxu0
  %v6462 = vadd.f32 0.0, %v6461
  %v6463 = vpop.f32.mrf.mxu0
  %v6464 = vadd.f32 0.0, %v6463
  %6465 = vmatmul.bf16.gmra.mxu0 %v6159
  %v6466 = vpop.f32.mrf.mxu0
  %v6467 = vadd.f32 0.0, %v6466
  %v6468 = vpop.f32.mrf.mxu0
  %v6469 = vadd.f32 0.0, %v6468
  %6470 = vmatmul.bf16.gmra.mxu0 %v6162
  %v6471 = vpop.f32.mrf.mxu0
  %v6472 = vadd.f32 0.0, %v6471
  %v6473 = vpop.f32.mrf.mxu0
  %v6474 = vadd.f32 0.0, %v6473
  %6475 = vmatmul.bf16.gmra.mxu0 %v6165
  %v6476 = vpop.f32.mrf.mxu0
  %v6477 = vadd.f32 0.0, %v6476
  %v6478 = vpop.f32.mrf.mxu0
  %v6479 = vadd.f32 0.0, %v6478
  %6480 = vmatmul.bf16.gmra.mxu0 %v6168
  %v6481 = vpop.f32.mrf.mxu0
  %v6482 = vadd.f32 0.0, %v6481
  %v6483 = vpop.f32.mrf.mxu0
  %v6484 = vadd.f32 0.0, %v6483
  %6485 = vmatmul.bf16.gmra.mxu0 %v6171
  %v6486 = vpop.f32.mrf.mxu0
  %v6487 = vadd.f32 0.0, %v6486
  %v6488 = vpop.f32.mrf.mxu0
  %v6489 = vadd.f32 0.0, %v6488
  %6490 = vmatmul.bf16.gmra.mxu0 %v6174
  %v6491 = vpop.f32.mrf.mxu0
  %v6492 = vadd.f32 0.0, %v6491
  %v6493 = vpop.f32.mrf.mxu0
  %v6494 = vadd.f32 0.0, %v6493
  %6495 = vmatmul.bf16.gmra.mxu0 %v6177
  %v6496 = vpop.f32.mrf.mxu0
  %v6497 = vadd.f32 0.0, %v6496
  %v6498 = vpop.f32.mrf.mxu0
  %v6499 = vadd.f32 0.0, %v6498
  %6500 = vmatmul.bf16.gmra.mxu0 %v6180
  %v6501 = vpop.f32.mrf.mxu0
  %v6502 = vadd.f32 0.0, %v6501
  %v6503 = vpop.f32.mrf.mxu0
  %v6504 = vadd.f32 0.0, %v6503
  %6505 = vmatmul.bf16.gmra.mxu0 %v6183
  %v6506 = vpop.f32.mrf.mxu0
  %v6507 = vadd.f32 0.0, %v6506
  %v6508 = vpop.f32.mrf.mxu0
  %v6509 = vadd.f32 0.0, %v6508
  %6510 = vmatmul.bf16.gmra.mxu0 %v6186
  %v6511 = vpop.f32.mrf.mxu0
  %v6512 = vadd.f32 0.0, %v6511
  %v6513 = vpop.f32.mrf.mxu0
  %v6514 = vadd.f32 0.0, %v6513
  %6515 = vmatmul.bf16.gmra.mxu0 %v6189
  %v6516 = vpop.f32.mrf.mxu0
  %v6517 = vadd.f32 0.0, %v6516
  %v6518 = vpop.f32.mrf.mxu0
  %v6519 = vadd.f32 0.0, %v6518
  %6520 = vmatmul.bf16.gmra.mxu0 %v6192
  %v6521 = vpop.f32.mrf.mxu0
  %v6522 = vadd.f32 0.0, %v6521
  %v6523 = vpop.f32.mrf.mxu0
  %v6524 = vadd.f32 0.0, %v6523
  %6525 = vmatmul.bf16.gmra.mxu0 %v6195
  %v6526 = vpop.f32.mrf.mxu0
  %v6527 = vadd.f32 0.0, %v6526
  %v6528 = vpop.f32.mrf.mxu0
  %v6529 = vadd.f32 0.0, %v6528
  %6530 = vmatmul.bf16.gmra.mxu0 %v6198
  %v6531 = vpop.f32.mrf.mxu0
  %v6532 = vadd.f32 0.0, %v6531
  %v6533 = vpop.f32.mrf.mxu0
  %v6534 = vadd.f32 0.0, %v6533
  %6535 = vmatmul.bf16.gmra.mxu0 %v6201
  %v6536 = vpop.f32.mrf.mxu0
  %v6537 = vadd.f32 0.0, %v6536
  %v6538 = vpop.f32.mrf.mxu0
  %v6539 = vadd.f32 0.0, %v6538
  %6540 = vmatmul.bf16.gmra.mxu0 %v6204
  %v6541 = vpop.f32.mrf.mxu0
  %v6542 = vadd.f32 0.0, %v6541
  %v6543 = vpop.f32.mrf.mxu0
  %v6544 = vadd.f32 0.0, %v6543
  %6545 = vmatmul.bf16.gmra.mxu0 %v6207
  %v6546 = vpop.f32.mrf.mxu0
  %v6547 = vadd.f32 0.0, %v6546
  %v6548 = vpop.f32.mrf.mxu0
  %v6549 = vadd.f32 0.0, %v6548
  %6550 = vmatmul.bf16.gmra.mxu0 %v6210
  %v6551 = vpop.f32.mrf.mxu0
  %v6552 = vadd.f32 0.0, %v6551
  %v6553 = vpop.f32.mrf.mxu0
  %v6554 = vadd.f32 0.0, %v6553
  %6555 = vdwg.mxu0
  %v6556 = vadd.f32 %v5825, %v6228
  %v6557 = vadd.f32 %v5826, %v6397
  %v6558 = vadd.f32 %v5827, %v6230
  %v6559 = vadd.f32 %v5828, %v6399
  %v6560 = vadd.f32 %v5829, %v6233
  %v6561 = vadd.f32 %v5830, %v6402
  %v6562 = vadd.f32 %v5831, %v6235
  %v6563 = vadd.f32 %v5832, %v6404
  %v6564 = vadd.f32 %v5833, %v6238
  %v6565 = vadd.f32 %v5834, %v6407
  %v6566 = vadd.f32 %v5835, %v6240
  %v6567 = vadd.f32 %v5836, %v6409
  %v6568 = vadd.f32 %v5837, %v6243
  %v6569 = vadd.f32 %v5838, %v6412
  %v6570 = vadd.f32 %v5839, %v6245
  %v6571 = vadd.f32 %v5840, %v6414
  %v6572 = vadd.f32 %v5841, %v6248
  %v6573 = vadd.f32 %v5842, %v6417
  %v6574 = vadd.f32 %v5843, %v6250
  %v6575 = vadd.f32 %v5844, %v6419
  %v6576 = vadd.f32 %v5845, %v6253
  %v6577 = vadd.f32 %v5846, %v6422
  %v6578 = vadd.f32 %v5847, %v6255
  %v6579 = vadd.f32 %v5848, %v6424
  %v6580 = vadd.f32 %v5849, %v6258
  %v6581 = vadd.f32 %v5850, %v6427
  %v6582 = vadd.f32 %v5851, %v6260
  %v6583 = vadd.f32 %v5852, %v6429
  %v6584 = vadd.f32 %v5853, %v6263
  %v6585 = vadd.f32 %v5854, %v6432
  %v6586 = vadd.f32 %v5855, %v6265
  %v6587 = vadd.f32 %v5856, %v6434
  %v6588 = vadd.f32 %v5857, %v6268
  %v6589 = vadd.f32 %v5858, %v6437
  %v6590 = vadd.f32 %v5859, %v6270
  %v6591 = vadd.f32 %v5860, %v6439
  %v6592 = vadd.f32 %v5861, %v6273
  %v6593 = vadd.f32 %v5862, %v6442
  %v6594 = vadd.f32 %v5863, %v6275
  %v6595 = vadd.f32 %v5864, %v6444
  %v6596 = vadd.f32 %v5865, %v6278
  %v6597 = vadd.f32 %v5866, %v6447
  %v6598 = vadd.f32 %v5867, %v6280
  %v6599 = vadd.f32 %v5868, %v6449
  %v6600 = vadd.f32 %v5869, %v6283
  %v6601 = vadd.f32 %v5870, %v6452
  %v6602 = vadd.f32 %v5871, %v6285
  %v6603 = vadd.f32 %v5872, %v6454
  %v6604 = vadd.f32 %v5873, %v6288
  %v6605 = vadd.f32 %v5874, %v6457
  %v6606 = vadd.f32 %v5875, %v6290
  %v6607 = vadd.f32 %v5876, %v6459
  %v6608 = vadd.f32 %v5877, %v6293
  %v6609 = vadd.f32 %v5878, %v6462
  %v6610 = vadd.f32 %v5879, %v6295
  %v6611 = vadd.f32 %v5880, %v6464
  %v6612 = vadd.f32 %v5881, %v6298
  %v6613 = vadd.f32 %v5882, %v6467
  %v6614 = vadd.f32 %v5883, %v6300
  %v6615 = vadd.f32 %v5884, %v6469
  %v6616 = vadd.f32 %v5885, %v6303
  %v6617 = vadd.f32 %v5886, %v6472
  %v6618 = vadd.f32 %v5887, %v6305
  %v6619 = vadd.f32 %v5888, %v6474
  %v6620 = vadd.f32 %v5889, %v6308
  %v6621 = vadd.f32 %v5890, %v6477
  %v6622 = vadd.f32 %v5891, %v6310
  %v6623 = vadd.f32 %v5892, %v6479
  %v6624 = vadd.f32 %v5893, %v6313
  %v6625 = vadd.f32 %v5894, %v6482
  %v6626 = vadd.f32 %v5895, %v6315
  %v6627 = vadd.f32 %v5896, %v6484
  %v6628 = vadd.f32 %v5897, %v6318
  %v6629 = vadd.f32 %v5898, %v6487
  %v6630 = vadd.f32 %v5899, %v6320
  %v6631 = vadd.f32 %v5900, %v6489
  %v6632 = vadd.f32 %v5901, %v6323
  %v6633 = vadd.f32 %v5902, %v6492
  %v6634 = vadd.f32 %v5903, %v6325
  %v6635 = vadd.f32 %v5904, %v6494
  %v6636 = vadd.f32 %v5905, %v6328
  %v6637 = vadd.f32 %v5906, %v6497
  %v6638 = vadd.f32 %v5907, %v6330
  %v6639 = vadd.f32 %v5908, %v6499
  %v6640 = vadd.f32 %v5909, %v6333
  %v6641 = vadd.f32 %v5910, %v6502
  %v6642 = vadd.f32 %v5911, %v6335
  %v6643 = vadd.f32 %v5912, %v6504
  %v6644 = vadd.f32 %v5913, %v6338
  %v6645 = vadd.f32 %v5914, %v6507
  %v6646 = vadd.f32 %v5915, %v6340
  %v6647 = vadd.f32 %v5916, %v6509
  %v6648 = vadd.f32 %v5917, %v6343
  %v6649 = vadd.f32 %v5918, %v6512
  %v6650 = vadd.f32 %v5919, %v6345
  %v6651 = vadd.f32 %v5920, %v6514
  %v6652 = vadd.f32 %v5921, %v6348
  %v6653 = vadd.f32 %v5922, %v6517
  %v6654 = vadd.f32 %v5923, %v6350
  %v6655 = vadd.f32 %v5924, %v6519
  %v6656 = vadd.f32 %v5925, %v6353
  %v6657 = vadd.f32 %v5926, %v6522
  %v6658 = vadd.f32 %v5927, %v6355
  %v6659 = vadd.f32 %v5928, %v6524
  %v6660 = vadd.f32 %v5929, %v6358
  %v6661 = vadd.f32 %v5930, %v6527
  %v6662 = vadd.f32 %v5931, %v6360
  %v6663 = vadd.f32 %v5932, %v6529
  %v6664 = vadd.f32 %v5933, %v6363
  %v6665 = vadd.f32 %v5934, %v6532
  %v6666 = vadd.f32 %v5935, %v6365
  %v6667 = vadd.f32 %v5936, %v6534
  %v6668 = vadd.f32 %v5937, %v6368
  %v6669 = vadd.f32 %v5938, %v6537
  %v6670 = vadd.f32 %v5939, %v6370
  %v6671 = vadd.f32 %v5940, %v6539
  %v6672 = vadd.f32 %v5941, %v6373
  %v6673 = vadd.f32 %v5942, %v6542
  %v6674 = vadd.f32 %v5943, %v6375
  %v6675 = vadd.f32 %v5944, %v6544
  %v6676 = vadd.f32 %v5945, %v6378
  %v6677 = vadd.f32 %v5946, %v6547
  %v6678 = vadd.f32 %v5947, %v6380
  %v6679 = vadd.f32 %v5948, %v6549
  %v6680 = vadd.f32 %v5949, %v6383
  %v6681 = vadd.f32 %v5950, %v6552
  %v6682 = vadd.f32 %v5951, %v6385
  %v6683 = vadd.f32 %v5952, %v6554
  %6684 = vst [vmem:[#allocation4] sm:$0xff] %v6556
  %6685 = vst.msk [vmem:[#allocation4 + $0x8] sm:$0xff] %vm875, %v6557
  %6686 = vst [vmem:[#allocation4 + $0x10] sm:$0xff] %v6558
  %6687 = vst.msk [vmem:[#allocation4 + $0x18] sm:$0xff] %vm875, %v6559
  %6688 = vst [vmem:[#allocation4 + $0x20] sm:$0xff] %v6560
  %6689 = vst.msk [vmem:[#allocation4 + $0x28] sm:$0xff] %vm875, %v6561
  %6690 = vst [vmem:[#allocation4 + $0x30] sm:$0xff] %v6562
  %6691 = vst.msk [vmem:[#allocation4 + $0x38] sm:$0xff] %vm875, %v6563
  %6692 = vst [vmem:[#allocation4 + $0x40] sm:$0xff] %v6564
  %6693 = vst.msk [vmem:[#allocation4 + $0x48] sm:$0xff] %vm875, %v6565
  %6694 = vst [vmem:[#allocation4 + $0x50] sm:$0xff] %v6566
  %6695 = vst.msk [vmem:[#allocation4 + $0x58] sm:$0xff] %vm875, %v6567
  %6696 = vst [vmem:[#allocation4 + $0x60] sm:$0xff] %v6568
  %6697 = vst.msk [vmem:[#allocation4 + $0x68] sm:$0xff] %vm875, %v6569
  %6698 = vst [vmem:[#allocation4 + $0x70] sm:$0xff] %v6570
  %6699 = vst.msk [vmem:[#allocation4 + $0x78] sm:$0xff] %vm875, %v6571
  %6700 = vst [vmem:[#allocation4 + $0x80] sm:$0xff] %v6572
  %6701 = vst.msk [vmem:[#allocation4 + $0x88] sm:$0xff] %vm875, %v6573
  %6702 = vst [vmem:[#allocation4 + $0x90] sm:$0xff] %v6574
  %6703 = vst.msk [vmem:[#allocation4 + $0x98] sm:$0xff] %vm875, %v6575
  %6704 = vst [vmem:[#allocation4 + $0xa0] sm:$0xff] %v6576
  %6705 = vst.msk [vmem:[#allocation4 + $0xa8] sm:$0xff] %vm875, %v6577
  %6706 = vst [vmem:[#allocation4 + $0xb0] sm:$0xff] %v6578
  %6707 = vst.msk [vmem:[#allocation4 + $0xb8] sm:$0xff] %vm875, %v6579
  %6708 = vst [vmem:[#allocation4 + $0xc0] sm:$0xff] %v6580
  %6709 = vst.msk [vmem:[#allocation4 + $0xc8] sm:$0xff] %vm875, %v6581
  %6710 = vst [vmem:[#allocation4 + $0xd0] sm:$0xff] %v6582
  %6711 = vst.msk [vmem:[#allocation4 + $0xd8] sm:$0xff] %vm875, %v6583
  %6712 = vst [vmem:[#allocation4 + $0xe0] sm:$0xff] %v6584
  %6713 = vst.msk [vmem:[#allocation4 + $0xe8] sm:$0xff] %vm875, %v6585
  %6714 = vst [vmem:[#allocation4 + $0xf0] sm:$0xff] %v6586
  %6715 = vst.msk [vmem:[#allocation4 + $0xf8] sm:$0xff] %vm875, %v6587
  %6716 = vst [vmem:[#allocation4 + $0x100] sm:$0xff] %v6588
  %6717 = vst.msk [vmem:[#allocation4 + $0x108] sm:$0xff] %vm875, %v6589
  %6718 = vst [vmem:[#allocation4 + $0x110] sm:$0xff] %v6590
  %6719 = vst.msk [vmem:[#allocation4 + $0x118] sm:$0xff] %vm875, %v6591
  %6720 = vst [vmem:[#allocation4 + $0x120] sm:$0xff] %v6592
  %6721 = vst.msk [vmem:[#allocation4 + $0x128] sm:$0xff] %vm875, %v6593
  %6722 = vst [vmem:[#allocation4 + $0x130] sm:$0xff] %v6594
  %6723 = vst.msk [vmem:[#allocation4 + $0x138] sm:$0xff] %vm875, %v6595
  %6724 = vst [vmem:[#allocation4 + $0x140] sm:$0xff] %v6596
  %6725 = vst.msk [vmem:[#allocation4 + $0x148] sm:$0xff] %vm875, %v6597
  %6726 = vst [vmem:[#allocation4 + $0x150] sm:$0xff] %v6598
  %6727 = vst.msk [vmem:[#allocation4 + $0x158] sm:$0xff] %vm875, %v6599
  %6728 = vst [vmem:[#allocation4 + $0x160] sm:$0xff] %v6600
  %6729 = vst.msk [vmem:[#allocation4 + $0x168] sm:$0xff] %vm875, %v6601
  %6730 = vst [vmem:[#allocation4 + $0x170] sm:$0xff] %v6602
  %6731 = vst.msk [vmem:[#allocation4 + $0x178] sm:$0xff] %vm875, %v6603
  %6732 = vst [vmem:[#allocation4 + $0x180] sm:$0xff] %v6604
  %6733 = vst.msk [vmem:[#allocation4 + $0x188] sm:$0xff] %vm875, %v6605
  %6734 = vst [vmem:[#allocation4 + $0x190] sm:$0xff] %v6606
  %6735 = vst.msk [vmem:[#allocation4 + $0x198] sm:$0xff] %vm875, %v6607
  %6736 = vst [vmem:[#allocation4 + $0x1a0] sm:$0xff] %v6608
  %6737 = vst.msk [vmem:[#allocation4 + $0x1a8] sm:$0xff] %vm875, %v6609
  %6738 = vst [vmem:[#allocation4 + $0x1b0] sm:$0xff] %v6610
  %6739 = vst.msk [vmem:[#allocation4 + $0x1b8] sm:$0xff] %vm875, %v6611
  %6740 = vst [vmem:[#allocation4 + $0x1c0] sm:$0xff] %v6612
  %6741 = vst.msk [vmem:[#allocation4 + $0x1c8] sm:$0xff] %vm875, %v6613
  %6742 = vst [vmem:[#allocation4 + $0x1d0] sm:$0xff] %v6614
  %6743 = vst.msk [vmem:[#allocation4 + $0x1d8] sm:$0xff] %vm875, %v6615
  %6744 = vst [vmem:[#allocation4 + $0x1e0] sm:$0xff] %v6616
  %6745 = vst.msk [vmem:[#allocation4 + $0x1e8] sm:$0xff] %vm875, %v6617
  %6746 = vst [vmem:[#allocation4 + $0x1f0] sm:$0xff] %v6618
  %6747 = vst.msk [vmem:[#allocation4 + $0x1f8] sm:$0xff] %vm875, %v6619
  %6748 = vst [vmem:[#allocation4 + $0x200] sm:$0xff] %v6620
  %6749 = vst.msk [vmem:[#allocation4 + $0x208] sm:$0xff] %vm875, %v6621
  %6750 = vst [vmem:[#allocation4 + $0x210] sm:$0xff] %v6622
  %6751 = vst.msk [vmem:[#allocation4 + $0x218] sm:$0xff] %vm875, %v6623
  %6752 = vst [vmem:[#allocation4 + $0x220] sm:$0xff] %v6624
  %6753 = vst.msk [vmem:[#allocation4 + $0x228] sm:$0xff] %vm875, %v6625
  %6754 = vst [vmem:[#allocation4 + $0x230] sm:$0xff] %v6626
  %6755 = vst.msk [vmem:[#allocation4 + $0x238] sm:$0xff] %vm875, %v6627
  %6756 = vst [vmem:[#allocation4 + $0x240] sm:$0xff] %v6628
  %6757 = vst.msk [vmem:[#allocation4 + $0x248] sm:$0xff] %vm875, %v6629
  %6758 = vst [vmem:[#allocation4 + $0x250] sm:$0xff] %v6630
  %6759 = vst.msk [vmem:[#allocation4 + $0x258] sm:$0xff] %vm875, %v6631
  %6760 = vst [vmem:[#allocation4 + $0x260] sm:$0xff] %v6632
  %6761 = vst.msk [vmem:[#allocation4 + $0x268] sm:$0xff] %vm875, %v6633
  %6762 = vst [vmem:[#allocation4 + $0x270] sm:$0xff] %v6634
  %6763 = vst.msk [vmem:[#allocation4 + $0x278] sm:$0xff] %vm875, %v6635
  %6764 = vst [vmem:[#allocation4 + $0x280] sm:$0xff] %v6636
  %6765 = vst.msk [vmem:[#allocation4 + $0x288] sm:$0xff] %vm875, %v6637
  %6766 = vst [vmem:[#allocation4 + $0x290] sm:$0xff] %v6638
  %6767 = vst.msk [vmem:[#allocation4 + $0x298] sm:$0xff] %vm875, %v6639
  %6768 = vst [vmem:[#allocation4 + $0x2a0] sm:$0xff] %v6640
  %6769 = vst.msk [vmem:[#allocation4 + $0x2a8] sm:$0xff] %vm875, %v6641
  %6770 = vst [vmem:[#allocation4 + $0x2b0] sm:$0xff] %v6642
  %6771 = vst.msk [vmem:[#allocation4 + $0x2b8] sm:$0xff] %vm875, %v6643
  %6772 = vst [vmem:[#allocation4 + $0x2c0] sm:$0xff] %v6644
  %6773 = vst.msk [vmem:[#allocation4 + $0x2c8] sm:$0xff] %vm875, %v6645
  %6774 = vst [vmem:[#allocation4 + $0x2d0] sm:$0xff] %v6646
  %6775 = vst.msk [vmem:[#allocation4 + $0x2d8] sm:$0xff] %vm875, %v6647
  %6776 = vst [vmem:[#allocation4 + $0x2e0] sm:$0xff] %v6648
  %6777 = vst.msk [vmem:[#allocation4 + $0x2e8] sm:$0xff] %vm875, %v6649
  %6778 = vst [vmem:[#allocation4 + $0x2f0] sm:$0xff] %v6650
  %6779 = vst.msk [vmem:[#allocation4 + $0x2f8] sm:$0xff] %vm875, %v6651
  %6780 = vst [vmem:[#allocation4 + $0x300] sm:$0xff] %v6652
  %6781 = vst.msk [vmem:[#allocation4 + $0x308] sm:$0xff] %vm875, %v6653
  %6782 = vst [vmem:[#allocation4 + $0x310] sm:$0xff] %v6654
  %6783 = vst.msk [vmem:[#allocation4 + $0x318] sm:$0xff] %vm875, %v6655
  %6784 = vst [vmem:[#allocation4 + $0x320] sm:$0xff] %v6656
  %6785 = vst.msk [vmem:[#allocation4 + $0x328] sm:$0xff] %vm875, %v6657
  %6786 = vst [vmem:[#allocation4 + $0x330] sm:$0xff] %v6658
  %6787 = vst.msk [vmem:[#allocation4 + $0x338] sm:$0xff] %vm875, %v6659
  %6788 = vst [vmem:[#allocation4 + $0x340] sm:$0xff] %v6660
  %6789 = vst.msk [vmem:[#allocation4 + $0x348] sm:$0xff] %vm875, %v6661
  %6790 = vst [vmem:[#allocation4 + $0x350] sm:$0xff] %v6662
  %6791 = vst.msk [vmem:[#allocation4 + $0x358] sm:$0xff] %vm875, %v6663
  %6792 = vst [vmem:[#allocation4 + $0x360] sm:$0xff] %v6664
  %6793 = vst.msk [vmem:[#allocation4 + $0x368] sm:$0xff] %vm875, %v6665
  %6794 = vst [vmem:[#allocation4 + $0x370] sm:$0xff] %v6666
  %6795 = vst.msk [vmem:[#allocation4 + $0x378] sm:$0xff] %vm875, %v6667
  %6796 = vst [vmem:[#allocation4 + $0x380] sm:$0xff] %v6668
  %6797 = vst.msk [vmem:[#allocation4 + $0x388] sm:$0xff] %vm875, %v6669
  %6798 = vst [vmem:[#allocation4 + $0x390] sm:$0xff] %v6670
  %6799 = vst.msk [vmem:[#allocation4 + $0x398] sm:$0xff] %vm875, %v6671
  %6800 = vst [vmem:[#allocation4 + $0x3a0] sm:$0xff] %v6672
  %6801 = vst.msk [vmem:[#allocation4 + $0x3a8] sm:$0xff] %vm875, %v6673
  %6802 = vst [vmem:[#allocation4 + $0x3b0] sm:$0xff] %v6674
  %6803 = vst.msk [vmem:[#allocation4 + $0x3b8] sm:$0xff] %vm875, %v6675
  %6804 = vst [vmem:[#allocation4 + $0x3c0] sm:$0xff] %v6676
  %6805 = vst.msk [vmem:[#allocation4 + $0x3c8] sm:$0xff] %vm875, %v6677
  %6806 = vst [vmem:[#allocation4 + $0x3d0] sm:$0xff] %v6678
  %6807 = vst.msk [vmem:[#allocation4 + $0x3d8] sm:$0xff] %vm875, %v6679
  %6808 = vst [vmem:[#allocation4 + $0x3e0] sm:$0xff] %v6680
  %6809 = vst.msk [vmem:[#allocation4 + $0x3e8] sm:$0xff] %vm875, %v6681
  %6810 = vst [vmem:[#allocation4 + $0x3f0] sm:$0xff] %v6682
  %6811 = vst.msk [vmem:[#allocation4 + $0x3f8] sm:$0xff] %vm875, %v6683
  %v6812 = vld [vmem:[#allocation4] sm:$0xff]
  %v6813 = vld [vmem:[#allocation4 + $0x8] sm:$0xff]
  %v6814 = vld [vmem:[#allocation4 + $0x10] sm:$0xff]
  %v6815 = vld [vmem:[#allocation4 + $0x18] sm:$0xff]
  %v6816 = vld [vmem:[#allocation4 + $0x20] sm:$0xff]
  %v6817 = vld [vmem:[#allocation4 + $0x28] sm:$0xff]
  %v6818 = vld [vmem:[#allocation4 + $0x30] sm:$0xff]
  %v6819 = vld [vmem:[#allocation4 + $0x38] sm:$0xff]
  %v6820 = vld [vmem:[#allocation4 + $0x40] sm:$0xff]
  %v6821 = vld [vmem:[#allocation4 + $0x48] sm:$0xff]
  %v6822 = vld [vmem:[#allocation4 + $0x50] sm:$0xff]
  %v6823 = vld [vmem:[#allocation4 + $0x58] sm:$0xff]
  %v6824 = vld [vmem:[#allocation4 + $0x60] sm:$0xff]
  %v6825 = vld [vmem:[#allocation4 + $0x68] sm:$0xff]
  %v6826 = vld [vmem:[#allocation4 + $0x70] sm:$0xff]
  %v6827 = vld [vmem:[#allocation4 + $0x78] sm:$0xff]
  %v6828 = vld [vmem:[#allocation4 + $0x80] sm:$0xff]
  %v6829 = vld [vmem:[#allocation4 + $0x88] sm:$0xff]
  %v6830 = vld [vmem:[#allocation4 + $0x90] sm:$0xff]
  %v6831 = vld [vmem:[#allocation4 + $0x98] sm:$0xff]
  %v6832 = vld [vmem:[#allocation4 + $0xa0] sm:$0xff]
  %v6833 = vld [vmem:[#allocation4 + $0xa8] sm:$0xff]
  %v6834 = vld [vmem:[#allocation4 + $0xb0] sm:$0xff]
  %v6835 = vld [vmem:[#allocation4 + $0xb8] sm:$0xff]
  %v6836 = vld [vmem:[#allocation4 + $0xc0] sm:$0xff]
  %v6837 = vld [vmem:[#allocation4 + $0xc8] sm:$0xff]
  %v6838 = vld [vmem:[#allocation4 + $0xd0] sm:$0xff]
  %v6839 = vld [vmem:[#allocation4 + $0xd8] sm:$0xff]
  %v6840 = vld [vmem:[#allocation4 + $0xe0] sm:$0xff]
  %v6841 = vld [vmem:[#allocation4 + $0xe8] sm:$0xff]
  %v6842 = vld [vmem:[#allocation4 + $0xf0] sm:$0xff]
  %v6843 = vld [vmem:[#allocation4 + $0xf8] sm:$0xff]
  %v6844 = vld [vmem:[#allocation4 + $0x100] sm:$0xff]
  %v6845 = vld [vmem:[#allocation4 + $0x108] sm:$0xff]
  %v6846 = vld [vmem:[#allocation4 + $0x110] sm:$0xff]
  %v6847 = vld [vmem:[#allocation4 + $0x118] sm:$0xff]
  %v6848 = vld [vmem:[#allocation4 + $0x120] sm:$0xff]
  %v6849 = vld [vmem:[#allocation4 + $0x128] sm:$0xff]
  %v6850 = vld [vmem:[#allocation4 + $0x130] sm:$0xff]
  %v6851 = vld [vmem:[#allocation4 + $0x138] sm:$0xff]
  %v6852 = vld [vmem:[#allocation4 + $0x140] sm:$0xff]
  %v6853 = vld [vmem:[#allocation4 + $0x148] sm:$0xff]
  %v6854 = vld [vmem:[#allocation4 + $0x150] sm:$0xff]
  %v6855 = vld [vmem:[#allocation4 + $0x158] sm:$0xff]
  %v6856 = vld [vmem:[#allocation4 + $0x160] sm:$0xff]
  %v6857 = vld [vmem:[#allocation4 + $0x168] sm:$0xff]
  %v6858 = vld [vmem:[#allocation4 + $0x170] sm:$0xff]
  %v6859 = vld [vmem:[#allocation4 + $0x178] sm:$0xff]
  %v6860 = vld [vmem:[#allocation4 + $0x180] sm:$0xff]
  %v6861 = vld [vmem:[#allocation4 + $0x188] sm:$0xff]
  %v6862 = vld [vmem:[#allocation4 + $0x190] sm:$0xff]
  %v6863 = vld [vmem:[#allocation4 + $0x198] sm:$0xff]
  %v6864 = vld [vmem:[#allocation4 + $0x1a0] sm:$0xff]
  %v6865 = vld [vmem:[#allocation4 + $0x1a8] sm:$0xff]
  %v6866 = vld [vmem:[#allocation4 + $0x1b0] sm:$0xff]
  %v6867 = vld [vmem:[#allocation4 + $0x1b8] sm:$0xff]
  %v6868 = vld [vmem:[#allocation4 + $0x1c0] sm:$0xff]
  %v6869 = vld [vmem:[#allocation4 + $0x1c8] sm:$0xff]
  %v6870 = vld [vmem:[#allocation4 + $0x1d0] sm:$0xff]
  %v6871 = vld [vmem:[#allocation4 + $0x1d8] sm:$0xff]
  %v6872 = vld [vmem:[#allocation4 + $0x1e0] sm:$0xff]
  %v6873 = vld [vmem:[#allocation4 + $0x1e8] sm:$0xff]
  %v6874 = vld [vmem:[#allocation4 + $0x1f0] sm:$0xff]
  %v6875 = vld [vmem:[#allocation4 + $0x1f8] sm:$0xff]
  %v6876 = vld [vmem:[#allocation4 + $0x200] sm:$0xff]
  %v6877 = vld [vmem:[#allocation4 + $0x208] sm:$0xff]
  %v6878 = vld [vmem:[#allocation4 + $0x210] sm:$0xff]
  %v6879 = vld [vmem:[#allocation4 + $0x218] sm:$0xff]
  %v6880 = vld [vmem:[#allocation4 + $0x220] sm:$0xff]
  %v6881 = vld [vmem:[#allocation4 + $0x228] sm:$0xff]
  %v6882 = vld [vmem:[#allocation4 + $0x230] sm:$0xff]
  %v6883 = vld [vmem:[#allocation4 + $0x238] sm:$0xff]
  %v6884 = vld [vmem:[#allocation4 + $0x240] sm:$0xff]
  %v6885 = vld [vmem:[#allocation4 + $0x248] sm:$0xff]
  %v6886 = vld [vmem:[#allocation4 + $0x250] sm:$0xff]
  %v6887 = vld [vmem:[#allocation4 + $0x258] sm:$0xff]
  %v6888 = vld [vmem:[#allocation4 + $0x260] sm:$0xff]
  %v6889 = vld [vmem:[#allocation4 + $0x268] sm:$0xff]
  %v6890 = vld [vmem:[#allocation4 + $0x270] sm:$0xff]
  %v6891 = vld [vmem:[#allocation4 + $0x278] sm:$0xff]
  %v6892 = vld [vmem:[#allocation4 + $0x280] sm:$0xff]
  %v6893 = vld [vmem:[#allocation4 + $0x288] sm:$0xff]
  %v6894 = vld [vmem:[#allocation4 + $0x290] sm:$0xff]
  %v6895 = vld [vmem:[#allocation4 + $0x298] sm:$0xff]
  %v6896 = vld [vmem:[#allocation4 + $0x2a0] sm:$0xff]
  %v6897 = vld [vmem:[#allocation4 + $0x2a8] sm:$0xff]
  %v6898 = vld [vmem:[#allocation4 + $0x2b0] sm:$0xff]
  %v6899 = vld [vmem:[#allocation4 + $0x2b8] sm:$0xff]
  %v6900 = vld [vmem:[#allocation4 + $0x2c0] sm:$0xff]
  %v6901 = vld [vmem:[#allocation4 + $0x2c8] sm:$0xff]
  %v6902 = vld [vmem:[#allocation4 + $0x2d0] sm:$0xff]
  %v6903 = vld [vmem:[#allocation4 + $0x2d8] sm:$0xff]
  %v6904 = vld [vmem:[#allocation4 + $0x2e0] sm:$0xff]
  %v6905 = vld [vmem:[#allocation4 + $0x2e8] sm:$0xff]
  %v6906 = vld [vmem:[#allocation4 + $0x2f0] sm:$0xff]
  %v6907 = vld [vmem:[#allocation4 + $0x2f8] sm:$0xff]
  %v6908 = vld [vmem:[#allocation4 + $0x300] sm:$0xff]
  %v6909 = vld [vmem:[#allocation4 + $0x308] sm:$0xff]
  %v6910 = vld [vmem:[#allocation4 + $0x310] sm:$0xff]
  %v6911 = vld [vmem:[#allocation4 + $0x318] sm:$0xff]
  %v6912 = vld [vmem:[#allocation4 + $0x320] sm:$0xff]
  %v6913 = vld [vmem:[#allocation4 + $0x328] sm:$0xff]
  %v6914 = vld [vmem:[#allocation4 + $0x330] sm:$0xff]
  %v6915 = vld [vmem:[#allocation4 + $0x338] sm:$0xff]
  %v6916 = vld [vmem:[#allocation4 + $0x340] sm:$0xff]
  %v6917 = vld [vmem:[#allocation4 + $0x348] sm:$0xff]
  %v6918 = vld [vmem:[#allocation4 + $0x350] sm:$0xff]
  %v6919 = vld [vmem:[#allocation4 + $0x358] sm:$0xff]
  %v6920 = vld [vmem:[#allocation4 + $0x360] sm:$0xff]
  %v6921 = vld [vmem:[#allocation4 + $0x368] sm:$0xff]
  %v6922 = vld [vmem:[#allocation4 + $0x370] sm:$0xff]
  %v6923 = vld [vmem:[#allocation4 + $0x378] sm:$0xff]
  %v6924 = vld [vmem:[#allocation4 + $0x380] sm:$0xff]
  %v6925 = vld [vmem:[#allocation4 + $0x388] sm:$0xff]
  %v6926 = vld [vmem:[#allocation4 + $0x390] sm:$0xff]
  %v6927 = vld [vmem:[#allocation4 + $0x398] sm:$0xff]
  %v6928 = vld [vmem:[#allocation4 + $0x3a0] sm:$0xff]
  %v6929 = vld [vmem:[#allocation4 + $0x3a8] sm:$0xff]
  %v6930 = vld [vmem:[#allocation4 + $0x3b0] sm:$0xff]
  %v6931 = vld [vmem:[#allocation4 + $0x3b8] sm:$0xff]
  %v6932 = vld [vmem:[#allocation4 + $0x3c0] sm:$0xff]
  %v6933 = vld [vmem:[#allocation4 + $0x3c8] sm:$0xff]
  %v6934 = vld [vmem:[#allocation4 + $0x3d0] sm:$0xff]
  %v6935 = vld [vmem:[#allocation4 + $0x3d8] sm:$0xff]
  %v6936 = vld [vmem:[#allocation4 + $0x3e0] sm:$0xff]
  %v6937 = vld [vmem:[#allocation4 + $0x3e8] sm:$0xff]
  %v6938 = vld [vmem:[#allocation4 + $0x3f0] sm:$0xff]
  %v6939 = vld [vmem:[#allocation4 + $0x3f8] sm:$0xff]
  %v6940 = vld [vmem:[#allocation3 + $0x2] sm:$0xff]
  %v6941 = vld [vmem:[#allocation3 + $0xa] sm:$0xff]
  %v6942 = vld [vmem:[#allocation3 + $0x12] sm:$0xff]
  %v6943 = vld [vmem:[#allocation3 + $0x1a] sm:$0xff]
  %v6944 = vld [vmem:[#allocation3 + $0x22] sm:$0xff]
  %v6945 = vld [vmem:[#allocation3 + $0x2a] sm:$0xff]
  %v6946 = vld [vmem:[#allocation3 + $0x32] sm:$0xff]
  %v6947 = vld [vmem:[#allocation3 + $0x3a] sm:$0xff]
  %v6948 = vld [vmem:[#allocation3 + $0x42] sm:$0xff]
  %v6949 = vld [vmem:[#allocation3 + $0x4a] sm:$0xff]
  %v6950 = vld [vmem:[#allocation3 + $0x52] sm:$0xff]
  %v6951 = vld [vmem:[#allocation3 + $0x5a] sm:$0xff]
  %v6952 = vld [vmem:[#allocation3 + $0x62] sm:$0xff]
  %v6953 = vld [vmem:[#allocation3 + $0x6a] sm:$0xff]
  %v6954 = vld [vmem:[#allocation3 + $0x72] sm:$0xff]
  %v6955 = vld [vmem:[#allocation3 + $0x7a] sm:$0xff]
  %v6956 = vld [vmem:[#allocation3 + $0x82] sm:$0xff]
  %v6957 = vld [vmem:[#allocation3 + $0x8a] sm:$0xff]
  %v6958 = vld [vmem:[#allocation3 + $0x92] sm:$0xff]
  %v6959 = vld [vmem:[#allocation3 + $0x9a] sm:$0xff]
  %v6960 = vld [vmem:[#allocation3 + $0xa2] sm:$0xff]
  %v6961 = vld [vmem:[#allocation3 + $0xaa] sm:$0xff]
  %v6962 = vld [vmem:[#allocation3 + $0xb2] sm:$0xff]
  %v6963 = vld [vmem:[#allocation3 + $0xba] sm:$0xff]
  %v6964 = vld [vmem:[#allocation3 + $0xc2] sm:$0xff]
  %v6965 = vld [vmem:[#allocation3 + $0xca] sm:$0xff]
  %v6966 = vld [vmem:[#allocation3 + $0xd2] sm:$0xff]
  %v6967 = vld [vmem:[#allocation3 + $0xda] sm:$0xff]
  %v6968 = vld [vmem:[#allocation3 + $0xe2] sm:$0xff]
  %v6969 = vld [vmem:[#allocation3 + $0xea] sm:$0xff]
  %v6970 = vld [vmem:[#allocation3 + $0xf2] sm:$0xff]
  %v6971 = vld [vmem:[#allocation3 + $0xfa] sm:$0xff]
  %v6972 = vld [vmem:[#allocation3 + $0x102] sm:$0xff]
  %v6973 = vld [vmem:[#allocation3 + $0x10a] sm:$0xff]
  %v6974 = vld [vmem:[#allocation3 + $0x112] sm:$0xff]
  %v6975 = vld [vmem:[#allocation3 + $0x11a] sm:$0xff]
  %v6976 = vld [vmem:[#allocation3 + $0x122] sm:$0xff]
  %v6977 = vld [vmem:[#allocation3 + $0x12a] sm:$0xff]
  %v6978 = vld [vmem:[#allocation3 + $0x132] sm:$0xff]
  %v6979 = vld [vmem:[#allocation3 + $0x13a] sm:$0xff]
  %v6980 = vld [vmem:[#allocation3 + $0x142] sm:$0xff]
  %v6981 = vld [vmem:[#allocation3 + $0x14a] sm:$0xff]
  %v6982 = vld [vmem:[#allocation3 + $0x152] sm:$0xff]
  %v6983 = vld [vmem:[#allocation3 + $0x15a] sm:$0xff]
  %v6984 = vld [vmem:[#allocation3 + $0x162] sm:$0xff]
  %v6985 = vld [vmem:[#allocation3 + $0x16a] sm:$0xff]
  %v6986 = vld [vmem:[#allocation3 + $0x172] sm:$0xff]
  %v6987 = vld [vmem:[#allocation3 + $0x17a] sm:$0xff]
  %v6988 = vld [vmem:[#allocation3 + $0x182] sm:$0xff]
  %v6989 = vld [vmem:[#allocation3 + $0x18a] sm:$0xff]
  %v6990 = vld [vmem:[#allocation3 + $0x192] sm:$0xff]
  %v6991 = vld [vmem:[#allocation3 + $0x19a] sm:$0xff]
  %v6992 = vld [vmem:[#allocation3 + $0x1a2] sm:$0xff]
  %v6993 = vld [vmem:[#allocation3 + $0x1aa] sm:$0xff]
  %v6994 = vld [vmem:[#allocation3 + $0x1b2] sm:$0xff]
  %v6995 = vld [vmem:[#allocation3 + $0x1ba] sm:$0xff]
  %v6996 = vld [vmem:[#allocation3 + $0x1c2] sm:$0xff]
  %v6997 = vld [vmem:[#allocation3 + $0x1ca] sm:$0xff]
  %v6998 = vld [vmem:[#allocation3 + $0x1d2] sm:$0xff]
  %v6999 = vld [vmem:[#allocation3 + $0x1da] sm:$0xff]
  %v7000 = vld [vmem:[#allocation3 + $0x1e2] sm:$0xff]
  %v7001 = vld [vmem:[#allocation3 + $0x1ea] sm:$0xff]
  %v7002 = vld [vmem:[#allocation3 + $0x1f2] sm:$0xff]
  %v7003 = vld [vmem:[#allocation3 + $0x1fa] sm:$0xff]
  %v7004 = vpack.c.bf16 %v6941, %v6940
  %v7005 = vpack.c.bf16 %v6943, %v6942
  %v7006 = vpack.c.bf16 %v6945, %v6944
  %v7007 = vpack.c.bf16 %v6947, %v6946
  %v7008 = vpack.c.bf16 %v6949, %v6948
  %v7009 = vpack.c.bf16 %v6951, %v6950
  %v7010 = vpack.c.bf16 %v6953, %v6952
  %v7011 = vpack.c.bf16 %v6955, %v6954
  %v7012 = vpack.c.bf16 %v6957, %v6956
  %v7013 = vpack.c.bf16 %v6959, %v6958
  %v7014 = vpack.c.bf16 %v6961, %v6960
  %v7015 = vpack.c.bf16 %v6963, %v6962
  %v7016 = vpack.c.bf16 %v6965, %v6964
  %v7017 = vpack.c.bf16 %v6967, %v6966
  %v7018 = vpack.c.bf16 %v6969, %v6968
  %v7019 = vpack.c.bf16 %v6971, %v6970
  %v7020 = vpack.c.bf16 %v6973, %v6972
  %v7021 = vpack.c.bf16 %v6975, %v6974
  %v7022 = vpack.c.bf16 %v6977, %v6976
  %v7023 = vpack.c.bf16 %v6979, %v6978
  %v7024 = vpack.c.bf16 %v6981, %v6980
  %v7025 = vpack.c.bf16 %v6983, %v6982
  %v7026 = vpack.c.bf16 %v6985, %v6984
  %v7027 = vpack.c.bf16 %v6987, %v6986
  %v7028 = vpack.c.bf16 %v6989, %v6988
  %v7029 = vpack.c.bf16 %v6991, %v6990
  %v7030 = vpack.c.bf16 %v6993, %v6992
  %v7031 = vpack.c.bf16 %v6995, %v6994
  %v7032 = vpack.c.bf16 %v6997, %v6996
  %v7033 = vpack.c.bf16 %v6999, %v6998
  %v7034 = vpack.c.bf16 %v7001, %v7000
  %v7035 = vpack.c.bf16 %v7003, %v7002
  %s7036 = scalar_lea.vmem %s4, 176
  %v7037 = vld [vmem:[%s7036] sm:$0xff]
  %v7038 = vld [vmem:[%s7036 + $0x8] sm:$0xff]
  %v7039 = vld [vmem:[%s7036 + $0x10] sm:$0xff]
  %v7040 = vld [vmem:[%s7036 + $0x18] sm:$0xff]
  %v7041 = vld [vmem:[%s7036 + $0x20] sm:$0xff]
  %v7042 = vld [vmem:[%s7036 + $0x28] sm:$0xff]
  %v7043 = vld [vmem:[%s7036 + $0x30] sm:$0xff]
  %v7044 = vld [vmem:[%s7036 + $0x38] sm:$0xff]
  %v7045 = vld [vmem:[%s7036 + $0x40] sm:$0xff]
  %v7046 = vld [vmem:[%s7036 + $0x48] sm:$0xff]
  %v7047 = vld [vmem:[%s7036 + $0x50] sm:$0x33]
  %v7059 = vunpack.c.l.b16 %v7037
  %v7060 = vunpack.c.h.b16 %v7037
  %v7061 = vunpack.c.l.b16 %v7038
  %v7062 = vunpack.c.h.b16 %v7038
  %v7063 = vunpack.c.l.b16 %v7039
  %v7064 = vunpack.c.h.b16 %v7039
  %v7065 = vunpack.c.l.b16 %v7040
  %v7066 = vunpack.c.h.b16 %v7040
  %v7067 = vunpack.c.l.b16 %v7041
  %v7068 = vunpack.c.h.b16 %v7041
  %v7069 = vunpack.c.l.b16 %v7042
  %v7070 = vunpack.c.h.b16 %v7042
  %v7071 = vunpack.c.l.b16 %v7043
  %v7072 = vunpack.c.h.b16 %v7043
  %v7073 = vunpack.c.l.b16 %v7044
  %v7074 = vunpack.c.h.b16 %v7044
  %v7075 = vunpack.c.l.b16 %v7045
  %v7076 = vunpack.c.h.b16 %v7045
  %v7077 = vunpack.c.l.b16 %v7046
  %v7078 = vunpack.c.h.b16 %v7046
  %v7079 = vunpack.c.l.b16 %v7047
  %v7080 = vunpack.c.h.b16 %v7047
  %v7081 = vpack.c.b16 %v7061, %v7059
  %v7082 = vpack.c.b16 %v7062, %v7060
  %v7083 = vpack.c.b16 %v7065, %v7063
  %v7084 = vpack.c.b16 %v7066, %v7064
  %v7085 = vpack.c.b16 %v7069, %v7067
  %v7086 = vpack.c.b16 %v7070, %v7068
  %v7087 = vpack.c.b16 %v7073, %v7071
  %v7088 = vpack.c.b16 %v7074, %v7072
  %v7089 = vpack.c.b16 %v7077, %v7075
  %v7090 = vpack.c.b16 %v7078, %v7076
  %v7091 = vpack.c.b16 %v7079, %v7079
  %v7092 = vpack.c.b16 %v7080, %v7080
  %v7104 = vsel %vm4581, %v7004, 0
  %v7107 = vsel %vm4581, %v7005, 0
  %v7110 = vsel %vm4581, %v7006, 0
  %v7113 = vsel %vm4581, %v7007, 0
  %v7116 = vsel %vm4581, %v7008, 0
  %v7119 = vsel %vm4581, %v7009, 0
  %v7122 = vsel %vm4581, %v7010, 0
  %v7125 = vsel %vm4581, %v7011, 0
  %v7128 = vsel %vm4581, %v7012, 0
  %v7131 = vsel %vm4581, %v7013, 0
  %v7134 = vsel %vm4581, %v7014, 0
  %v7137 = vsel %vm4581, %v7015, 0
  %v7140 = vsel %vm4581, %v7016, 0
  %v7143 = vsel %vm4581, %v7017, 0
  %v7146 = vsel %vm4581, %v7018, 0
  %v7149 = vsel %vm4581, %v7019, 0
  %v7152 = vsel %vm4581, %v7020, 0
  %v7155 = vsel %vm4581, %v7021, 0
  %v7158 = vsel %vm4581, %v7022, 0
  %v7161 = vsel %vm4581, %v7023, 0
  %v7164 = vsel %vm4581, %v7024, 0
  %v7167 = vsel %vm4581, %v7025, 0
  %v7170 = vsel %vm4581, %v7026, 0
  %v7173 = vsel %vm4581, %v7027, 0
  %v7176 = vsel %vm4581, %v7028, 0
  %v7179 = vsel %vm4581, %v7029, 0
  %v7182 = vsel %vm4581, %v7030, 0
  %v7185 = vsel %vm4581, %v7031, 0
  %v7188 = vsel %vm4581, %v7032, 0
  %v7191 = vsel %vm4581, %v7033, 0
  %v7194 = vsel %vm4581, %v7034, 0
  %v7197 = vsel %vm4581, %v7035, 0
  %v7200 = vsel %vm5352, %v7091, 0
  %v7203 = vsel %vm5352, %v7092, 0
  %7205 = vmatpush.bf16.msra.mxu0 0
  %7206 = vmatpush.bf16.msra.mxu0 0
  %7207 = vmatpush.bf16.msra.mxu0 %v7200
  %7208 = vmatpush.bf16.msra.mxu0 %v7089
  %7209 = vmatpush.bf16.msra.mxu0 %v7087
  %7210 = vmatpush.bf16.msra.mxu0 %v7085
  %7211 = vmatpush.bf16.msra.mxu0 %v7083
  %7212 = vmatpush.bf16.msra.mxu0 %v7081
  %7213 = vmatmul.bf16.gmra.mxu0 %v7104
  %v7214 = vpop.f32.mrf.mxu0
  %v7215 = vadd.f32 0.0, %v7214
  %v7216 = vpop.f32.mrf.mxu0
  %v7217 = vadd.f32 0.0, %v7216
  %7218 = vmatmul.bf16.gmra.mxu0 %v7107
  %v7219 = vpop.f32.mrf.mxu0
  %v7220 = vadd.f32 0.0, %v7219
  %v7221 = vpop.f32.mrf.mxu0
  %v7222 = vadd.f32 0.0, %v7221
  %7223 = vmatmul.bf16.gmra.mxu0 %v7110
  %v7224 = vpop.f32.mrf.mxu0
  %v7225 = vadd.f32 0.0, %v7224
  %v7226 = vpop.f32.mrf.mxu0
  %v7227 = vadd.f32 0.0, %v7226
  %7228 = vmatmul.bf16.gmra.mxu0 %v7113
  %v7229 = vpop.f32.mrf.mxu0
  %v7230 = vadd.f32 0.0, %v7229
  %v7231 = vpop.f32.mrf.mxu0
  %v7232 = vadd.f32 0.0, %v7231
  %7233 = vmatmul.bf16.gmra.mxu0 %v7116
  %v7234 = vpop.f32.mrf.mxu0
  %v7235 = vadd.f32 0.0, %v7234
  %v7236 = vpop.f32.mrf.mxu0
  %v7237 = vadd.f32 0.0, %v7236
  %7238 = vmatmul.bf16.gmra.mxu0 %v7119
  %v7239 = vpop.f32.mrf.mxu0
  %v7240 = vadd.f32 0.0, %v7239
  %v7241 = vpop.f32.mrf.mxu0
  %v7242 = vadd.f32 0.0, %v7241
  %7243 = vmatmul.bf16.gmra.mxu0 %v7122
  %v7244 = vpop.f32.mrf.mxu0
  %v7245 = vadd.f32 0.0, %v7244
  %v7246 = vpop.f32.mrf.mxu0
  %v7247 = vadd.f32 0.0, %v7246
  %7248 = vmatmul.bf16.gmra.mxu0 %v7125
  %v7249 = vpop.f32.mrf.mxu0
  %v7250 = vadd.f32 0.0, %v7249
  %v7251 = vpop.f32.mrf.mxu0
  %v7252 = vadd.f32 0.0, %v7251
  %7253 = vmatmul.bf16.gmra.mxu0 %v7128
  %v7254 = vpop.f32.mrf.mxu0
  %v7255 = vadd.f32 0.0, %v7254
  %v7256 = vpop.f32.mrf.mxu0
  %v7257 = vadd.f32 0.0, %v7256
  %7258 = vmatmul.bf16.gmra.mxu0 %v7131
  %v7259 = vpop.f32.mrf.mxu0
  %v7260 = vadd.f32 0.0, %v7259
  %v7261 = vpop.f32.mrf.mxu0
  %v7262 = vadd.f32 0.0, %v7261
  %7263 = vmatmul.bf16.gmra.mxu0 %v7134
  %v7264 = vpop.f32.mrf.mxu0
  %v7265 = vadd.f32 0.0, %v7264
  %v7266 = vpop.f32.mrf.mxu0
  %v7267 = vadd.f32 0.0, %v7266
  %7268 = vmatmul.bf16.gmra.mxu0 %v7137
  %v7269 = vpop.f32.mrf.mxu0
  %v7270 = vadd.f32 0.0, %v7269
  %v7271 = vpop.f32.mrf.mxu0
  %v7272 = vadd.f32 0.0, %v7271
  %7273 = vmatmul.bf16.gmra.mxu0 %v7140
  %v7274 = vpop.f32.mrf.mxu0
  %v7275 = vadd.f32 0.0, %v7274
  %v7276 = vpop.f32.mrf.mxu0
  %v7277 = vadd.f32 0.0, %v7276
  %7278 = vmatmul.bf16.gmra.mxu0 %v7143
  %v7279 = vpop.f32.mrf.mxu0
  %v7280 = vadd.f32 0.0, %v7279
  %v7281 = vpop.f32.mrf.mxu0
  %v7282 = vadd.f32 0.0, %v7281
  %7283 = vmatmul.bf16.gmra.mxu0 %v7146
  %v7284 = vpop.f32.mrf.mxu0
  %v7285 = vadd.f32 0.0, %v7284
  %v7286 = vpop.f32.mrf.mxu0
  %v7287 = vadd.f32 0.0, %v7286
  %7288 = vmatmul.bf16.gmra.mxu0 %v7149
  %v7289 = vpop.f32.mrf.mxu0
  %v7290 = vadd.f32 0.0, %v7289
  %v7291 = vpop.f32.mrf.mxu0
  %v7292 = vadd.f32 0.0, %v7291
  %7293 = vmatmul.bf16.gmra.mxu0 %v7152
  %v7294 = vpop.f32.mrf.mxu0
  %v7295 = vadd.f32 0.0, %v7294
  %v7296 = vpop.f32.mrf.mxu0
  %v7297 = vadd.f32 0.0, %v7296
  %7298 = vmatmul.bf16.gmra.mxu0 %v7155
  %v7299 = vpop.f32.mrf.mxu0
  %v7300 = vadd.f32 0.0, %v7299
  %v7301 = vpop.f32.mrf.mxu0
  %v7302 = vadd.f32 0.0, %v7301
  %7303 = vmatmul.bf16.gmra.mxu0 %v7158
  %v7304 = vpop.f32.mrf.mxu0
  %v7305 = vadd.f32 0.0, %v7304
  %v7306 = vpop.f32.mrf.mxu0
  %v7307 = vadd.f32 0.0, %v7306
  %7308 = vmatmul.bf16.gmra.mxu0 %v7161
  %v7309 = vpop.f32.mrf.mxu0
  %v7310 = vadd.f32 0.0, %v7309
  %v7311 = vpop.f32.mrf.mxu0
  %v7312 = vadd.f32 0.0, %v7311
  %7313 = vmatmul.bf16.gmra.mxu0 %v7164
  %v7314 = vpop.f32.mrf.mxu0
  %v7315 = vadd.f32 0.0, %v7314
  %v7316 = vpop.f32.mrf.mxu0
  %v7317 = vadd.f32 0.0, %v7316
  %7318 = vmatmul.bf16.gmra.mxu0 %v7167
  %v7319 = vpop.f32.mrf.mxu0
  %v7320 = vadd.f32 0.0, %v7319
  %v7321 = vpop.f32.mrf.mxu0
  %v7322 = vadd.f32 0.0, %v7321
  %7323 = vmatmul.bf16.gmra.mxu0 %v7170
  %v7324 = vpop.f32.mrf.mxu0
  %v7325 = vadd.f32 0.0, %v7324
  %v7326 = vpop.f32.mrf.mxu0
  %v7327 = vadd.f32 0.0, %v7326
  %7328 = vmatmul.bf16.gmra.mxu0 %v7173
  %v7329 = vpop.f32.mrf.mxu0
  %v7330 = vadd.f32 0.0, %v7329
  %v7331 = vpop.f32.mrf.mxu0
  %v7332 = vadd.f32 0.0, %v7331
  %7333 = vmatmul.bf16.gmra.mxu0 %v7176
  %v7334 = vpop.f32.mrf.mxu0
  %v7335 = vadd.f32 0.0, %v7334
  %v7336 = vpop.f32.mrf.mxu0
  %v7337 = vadd.f32 0.0, %v7336
  %7338 = vmatmul.bf16.gmra.mxu0 %v7179
  %v7339 = vpop.f32.mrf.mxu0
  %v7340 = vadd.f32 0.0, %v7339
  %v7341 = vpop.f32.mrf.mxu0
  %v7342 = vadd.f32 0.0, %v7341
  %7343 = vmatmul.bf16.gmra.mxu0 %v7182
  %v7344 = vpop.f32.mrf.mxu0
  %v7345 = vadd.f32 0.0, %v7344
  %v7346 = vpop.f32.mrf.mxu0
  %v7347 = vadd.f32 0.0, %v7346
  %7348 = vmatmul.bf16.gmra.mxu0 %v7185
  %v7349 = vpop.f32.mrf.mxu0
  %v7350 = vadd.f32 0.0, %v7349
  %v7351 = vpop.f32.mrf.mxu0
  %v7352 = vadd.f32 0.0, %v7351
  %7353 = vmatmul.bf16.gmra.mxu0 %v7188
  %v7354 = vpop.f32.mrf.mxu0
  %v7355 = vadd.f32 0.0, %v7354
  %v7356 = vpop.f32.mrf.mxu0
  %v7357 = vadd.f32 0.0, %v7356
  %7358 = vmatmul.bf16.gmra.mxu0 %v7191
  %v7359 = vpop.f32.mrf.mxu0
  %v7360 = vadd.f32 0.0, %v7359
  %v7361 = vpop.f32.mrf.mxu0
  %v7362 = vadd.f32 0.0, %v7361
  %7363 = vmatmul.bf16.gmra.mxu0 %v7194
  %v7364 = vpop.f32.mrf.mxu0
  %v7365 = vadd.f32 0.0, %v7364
  %v7366 = vpop.f32.mrf.mxu0
  %v7367 = vadd.f32 0.0, %v7366
  %7368 = vmatmul.bf16.gmra.mxu0 %v7197
  %v7369 = vpop.f32.mrf.mxu0
  %v7370 = vadd.f32 0.0, %v7369
  %v7371 = vpop.f32.mrf.mxu0
  %v7372 = vadd.f32 0.0, %v7371
  %7373 = vdwg.mxu0
  %7374 = vmatpush.bf16.msra.mxu0 0
  %7375 = vmatpush.bf16.msra.mxu0 0
  %7376 = vmatpush.bf16.msra.mxu0 %v7203
  %7377 = vmatpush.bf16.msra.mxu0 %v7090
  %7378 = vmatpush.bf16.msra.mxu0 %v7088
  %7379 = vmatpush.bf16.msra.mxu0 %v7086
  %7380 = vmatpush.bf16.msra.mxu0 %v7084
  %7381 = vmatpush.bf16.msra.mxu0 %v7082
  %7382 = vmatmul.bf16.gmra.mxu0 %v7104
  %v7383 = vpop.f32.mrf.mxu0
  %v7384 = vadd.f32 0.0, %v7383
  %v7385 = vpop.f32.mrf.mxu0
  %v7386 = vadd.f32 0.0, %v7385
  %7387 = vmatmul.bf16.gmra.mxu0 %v7107
  %v7388 = vpop.f32.mrf.mxu0
  %v7389 = vadd.f32 0.0, %v7388
  %v7390 = vpop.f32.mrf.mxu0
  %v7391 = vadd.f32 0.0, %v7390
  %7392 = vmatmul.bf16.gmra.mxu0 %v7110
  %v7393 = vpop.f32.mrf.mxu0
  %v7394 = vadd.f32 0.0, %v7393
  %v7395 = vpop.f32.mrf.mxu0
  %v7396 = vadd.f32 0.0, %v7395
  %7397 = vmatmul.bf16.gmra.mxu0 %v7113
  %v7398 = vpop.f32.mrf.mxu0
  %v7399 = vadd.f32 0.0, %v7398
  %v7400 = vpop.f32.mrf.mxu0
  %v7401 = vadd.f32 0.0, %v7400
  %7402 = vmatmul.bf16.gmra.mxu0 %v7116
  %v7403 = vpop.f32.mrf.mxu0
  %v7404 = vadd.f32 0.0, %v7403
  %v7405 = vpop.f32.mrf.mxu0
  %v7406 = vadd.f32 0.0, %v7405
  %7407 = vmatmul.bf16.gmra.mxu0 %v7119
  %v7408 = vpop.f32.mrf.mxu0
  %v7409 = vadd.f32 0.0, %v7408
  %v7410 = vpop.f32.mrf.mxu0
  %v7411 = vadd.f32 0.0, %v7410
  %7412 = vmatmul.bf16.gmra.mxu0 %v7122
  %v7413 = vpop.f32.mrf.mxu0
  %v7414 = vadd.f32 0.0, %v7413
  %v7415 = vpop.f32.mrf.mxu0
  %v7416 = vadd.f32 0.0, %v7415
  %7417 = vmatmul.bf16.gmra.mxu0 %v7125
  %v7418 = vpop.f32.mrf.mxu0
  %v7419 = vadd.f32 0.0, %v7418
  %v7420 = vpop.f32.mrf.mxu0
  %v7421 = vadd.f32 0.0, %v7420
  %7422 = vmatmul.bf16.gmra.mxu0 %v7128
  %v7423 = vpop.f32.mrf.mxu0
  %v7424 = vadd.f32 0.0, %v7423
  %v7425 = vpop.f32.mrf.mxu0
  %v7426 = vadd.f32 0.0, %v7425
  %7427 = vmatmul.bf16.gmra.mxu0 %v7131
  %v7428 = vpop.f32.mrf.mxu0
  %v7429 = vadd.f32 0.0, %v7428
  %v7430 = vpop.f32.mrf.mxu0
  %v7431 = vadd.f32 0.0, %v7430
  %7432 = vmatmul.bf16.gmra.mxu0 %v7134
  %v7433 = vpop.f32.mrf.mxu0
  %v7434 = vadd.f32 0.0, %v7433
  %v7435 = vpop.f32.mrf.mxu0
  %v7436 = vadd.f32 0.0, %v7435
  %7437 = vmatmul.bf16.gmra.mxu0 %v7137
  %v7438 = vpop.f32.mrf.mxu0
  %v7439 = vadd.f32 0.0, %v7438
  %v7440 = vpop.f32.mrf.mxu0
  %v7441 = vadd.f32 0.0, %v7440
  %7442 = vmatmul.bf16.gmra.mxu0 %v7140
  %v7443 = vpop.f32.mrf.mxu0
  %v7444 = vadd.f32 0.0, %v7443
  %v7445 = vpop.f32.mrf.mxu0
  %v7446 = vadd.f32 0.0, %v7445
  %7447 = vmatmul.bf16.gmra.mxu0 %v7143
  %v7448 = vpop.f32.mrf.mxu0
  %v7449 = vadd.f32 0.0, %v7448
  %v7450 = vpop.f32.mrf.mxu0
  %v7451 = vadd.f32 0.0, %v7450
  %7452 = vmatmul.bf16.gmra.mxu0 %v7146
  %v7453 = vpop.f32.mrf.mxu0
  %v7454 = vadd.f32 0.0, %v7453
  %v7455 = vpop.f32.mrf.mxu0
  %v7456 = vadd.f32 0.0, %v7455
  %7457 = vmatmul.bf16.gmra.mxu0 %v7149
  %v7458 = vpop.f32.mrf.mxu0
  %v7459 = vadd.f32 0.0, %v7458
  %v7460 = vpop.f32.mrf.mxu0
  %v7461 = vadd.f32 0.0, %v7460
  %7462 = vmatmul.bf16.gmra.mxu0 %v7152
  %v7463 = vpop.f32.mrf.mxu0
  %v7464 = vadd.f32 0.0, %v7463
  %v7465 = vpop.f32.mrf.mxu0
  %v7466 = vadd.f32 0.0, %v7465
  %7467 = vmatmul.bf16.gmra.mxu0 %v7155
  %v7468 = vpop.f32.mrf.mxu0
  %v7469 = vadd.f32 0.0, %v7468
  %v7470 = vpop.f32.mrf.mxu0
  %v7471 = vadd.f32 0.0, %v7470
  %7472 = vmatmul.bf16.gmra.mxu0 %v7158
  %v7473 = vpop.f32.mrf.mxu0
  %v7474 = vadd.f32 0.0, %v7473
  %v7475 = vpop.f32.mrf.mxu0
  %v7476 = vadd.f32 0.0, %v7475
  %7477 = vmatmul.bf16.gmra.mxu0 %v7161
  %v7478 = vpop.f32.mrf.mxu0
  %v7479 = vadd.f32 0.0, %v7478
  %v7480 = vpop.f32.mrf.mxu0
  %v7481 = vadd.f32 0.0, %v7480
  %7482 = vmatmul.bf16.gmra.mxu0 %v7164
  %v7483 = vpop.f32.mrf.mxu0
  %v7484 = vadd.f32 0.0, %v7483
  %v7485 = vpop.f32.mrf.mxu0
  %v7486 = vadd.f32 0.0, %v7485
  %7487 = vmatmul.bf16.gmra.mxu0 %v7167
  %v7488 = vpop.f32.mrf.mxu0
  %v7489 = vadd.f32 0.0, %v7488
  %v7490 = vpop.f32.mrf.mxu0
  %v7491 = vadd.f32 0.0, %v7490
  %7492 = vmatmul.bf16.gmra.mxu0 %v7170
  %v7493 = vpop.f32.mrf.mxu0
  %v7494 = vadd.f32 0.0, %v7493
  %v7495 = vpop.f32.mrf.mxu0
  %v7496 = vadd.f32 0.0, %v7495
  %7497 = vmatmul.bf16.gmra.mxu0 %v7173
  %v7498 = vpop.f32.mrf.mxu0
  %v7499 = vadd.f32 0.0, %v7498
  %v7500 = vpop.f32.mrf.mxu0
  %v7501 = vadd.f32 0.0, %v7500
  %7502 = vmatmul.bf16.gmra.mxu0 %v7176
  %v7503 = vpop.f32.mrf.mxu0
  %v7504 = vadd.f32 0.0, %v7503
  %v7505 = vpop.f32.mrf.mxu0
  %v7506 = vadd.f32 0.0, %v7505
  %7507 = vmatmul.bf16.gmra.mxu0 %v7179
  %v7508 = vpop.f32.mrf.mxu0
  %v7509 = vadd.f32 0.0, %v7508
  %v7510 = vpop.f32.mrf.mxu0
  %v7511 = vadd.f32 0.0, %v7510
  %7512 = vmatmul.bf16.gmra.mxu0 %v7182
  %v7513 = vpop.f32.mrf.mxu0
  %v7514 = vadd.f32 0.0, %v7513
  %v7515 = vpop.f32.mrf.mxu0
  %v7516 = vadd.f32 0.0, %v7515
  %7517 = vmatmul.bf16.gmra.mxu0 %v7185
  %v7518 = vpop.f32.mrf.mxu0
  %v7519 = vadd.f32 0.0, %v7518
  %v7520 = vpop.f32.mrf.mxu0
  %v7521 = vadd.f32 0.0, %v7520
  %7522 = vmatmul.bf16.gmra.mxu0 %v7188
  %v7523 = vpop.f32.mrf.mxu0
  %v7524 = vadd.f32 0.0, %v7523
  %v7525 = vpop.f32.mrf.mxu0
  %v7526 = vadd.f32 0.0, %v7525
  %7527 = vmatmul.bf16.gmra.mxu0 %v7191
  %v7528 = vpop.f32.mrf.mxu0
  %v7529 = vadd.f32 0.0, %v7528
  %v7530 = vpop.f32.mrf.mxu0
  %v7531 = vadd.f32 0.0, %v7530
  %7532 = vmatmul.bf16.gmra.mxu0 %v7194
  %v7533 = vpop.f32.mrf.mxu0
  %v7534 = vadd.f32 0.0, %v7533
  %v7535 = vpop.f32.mrf.mxu0
  %v7536 = vadd.f32 0.0, %v7535
  %7537 = vmatmul.bf16.gmra.mxu0 %v7197
  %v7538 = vpop.f32.mrf.mxu0
  %v7539 = vadd.f32 0.0, %v7538
  %v7540 = vpop.f32.mrf.mxu0
  %v7541 = vadd.f32 0.0, %v7540
  %7542 = vdwg.mxu0
  %v7543 = vadd.f32 %v6812, %v7215
  %v7544 = vadd.f32 %v6813, %v7384
  %v7545 = vadd.f32 %v6814, %v7217
  %v7546 = vadd.f32 %v6815, %v7386
  %v7547 = vadd.f32 %v6816, %v7220
  %v7548 = vadd.f32 %v6817, %v7389
  %v7549 = vadd.f32 %v6818, %v7222
  %v7550 = vadd.f32 %v6819, %v7391
  %v7551 = vadd.f32 %v6820, %v7225
  %v7552 = vadd.f32 %v6821, %v7394
  %v7553 = vadd.f32 %v6822, %v7227
  %v7554 = vadd.f32 %v6823, %v7396
  %v7555 = vadd.f32 %v6824, %v7230
  %v7556 = vadd.f32 %v6825, %v7399
  %v7557 = vadd.f32 %v6826, %v7232
  %v7558 = vadd.f32 %v6827, %v7401
  %v7559 = vadd.f32 %v6828, %v7235
  %v7560 = vadd.f32 %v6829, %v7404
  %v7561 = vadd.f32 %v6830, %v7237
  %v7562 = vadd.f32 %v6831, %v7406
  %v7563 = vadd.f32 %v6832, %v7240
  %v7564 = vadd.f32 %v6833, %v7409
  %v7565 = vadd.f32 %v6834, %v7242
  %v7566 = vadd.f32 %v6835, %v7411
  %v7567 = vadd.f32 %v6836, %v7245
  %v7568 = vadd.f32 %v6837, %v7414
  %v7569 = vadd.f32 %v6838, %v7247
  %v7570 = vadd.f32 %v6839, %v7416
  %v7571 = vadd.f32 %v6840, %v7250
  %v7572 = vadd.f32 %v6841, %v7419
  %v7573 = vadd.f32 %v6842, %v7252
  %v7574 = vadd.f32 %v6843, %v7421
  %v7575 = vadd.f32 %v6844, %v7255
  %v7576 = vadd.f32 %v6845, %v7424
  %v7577 = vadd.f32 %v6846, %v7257
  %v7578 = vadd.f32 %v6847, %v7426
  %v7579 = vadd.f32 %v6848, %v7260
  %v7580 = vadd.f32 %v6849, %v7429
  %v7581 = vadd.f32 %v6850, %v7262
  %v7582 = vadd.f32 %v6851, %v7431
  %v7583 = vadd.f32 %v6852, %v7265
  %v7584 = vadd.f32 %v6853, %v7434
  %v7585 = vadd.f32 %v6854, %v7267
  %v7586 = vadd.f32 %v6855, %v7436
  %v7587 = vadd.f32 %v6856, %v7270
  %v7588 = vadd.f32 %v6857, %v7439
  %v7589 = vadd.f32 %v6858, %v7272
  %v7590 = vadd.f32 %v6859, %v7441
  %v7591 = vadd.f32 %v6860, %v7275
  %v7592 = vadd.f32 %v6861, %v7444
  %v7593 = vadd.f32 %v6862, %v7277
  %v7594 = vadd.f32 %v6863, %v7446
  %v7595 = vadd.f32 %v6864, %v7280
  %v7596 = vadd.f32 %v6865, %v7449
  %v7597 = vadd.f32 %v6866, %v7282
  %v7598 = vadd.f32 %v6867, %v7451
  %v7599 = vadd.f32 %v6868, %v7285
  %v7600 = vadd.f32 %v6869, %v7454
  %v7601 = vadd.f32 %v6870, %v7287
  %v7602 = vadd.f32 %v6871, %v7456
  %v7603 = vadd.f32 %v6872, %v7290
  %v7604 = vadd.f32 %v6873, %v7459
  %v7605 = vadd.f32 %v6874, %v7292
  %v7606 = vadd.f32 %v6875, %v7461
  %v7607 = vadd.f32 %v6876, %v7295
  %v7608 = vadd.f32 %v6877, %v7464
  %v7609 = vadd.f32 %v6878, %v7297
  %v7610 = vadd.f32 %v6879, %v7466
  %v7611 = vadd.f32 %v6880, %v7300
  %v7612 = vadd.f32 %v6881, %v7469
  %v7613 = vadd.f32 %v6882, %v7302
  %v7614 = vadd.f32 %v6883, %v7471
  %v7615 = vadd.f32 %v6884, %v7305
  %v7616 = vadd.f32 %v6885, %v7474
  %v7617 = vadd.f32 %v6886, %v7307
  %v7618 = vadd.f32 %v6887, %v7476
  %v7619 = vadd.f32 %v6888, %v7310
  %v7620 = vadd.f32 %v6889, %v7479
  %v7621 = vadd.f32 %v6890, %v7312
  %v7622 = vadd.f32 %v6891, %v7481
  %v7623 = vadd.f32 %v6892, %v7315
  %v7624 = vadd.f32 %v6893, %v7484
  %v7625 = vadd.f32 %v6894, %v7317
  %v7626 = vadd.f32 %v6895, %v7486
  %v7627 = vadd.f32 %v6896, %v7320
  %v7628 = vadd.f32 %v6897, %v7489
  %v7629 = vadd.f32 %v6898, %v7322
  %v7630 = vadd.f32 %v6899, %v7491
  %v7631 = vadd.f32 %v6900, %v7325
  %v7632 = vadd.f32 %v6901, %v7494
  %v7633 = vadd.f32 %v6902, %v7327
  %v7634 = vadd.f32 %v6903, %v7496
  %v7635 = vadd.f32 %v6904, %v7330
  %v7636 = vadd.f32 %v6905, %v7499
  %v7637 = vadd.f32 %v6906, %v7332
  %v7638 = vadd.f32 %v6907, %v7501
  %v7639 = vadd.f32 %v6908, %v7335
  %v7640 = vadd.f32 %v6909, %v7504
  %v7641 = vadd.f32 %v6910, %v7337
  %v7642 = vadd.f32 %v6911, %v7506
  %v7643 = vadd.f32 %v6912, %v7340
  %v7644 = vadd.f32 %v6913, %v7509
  %v7645 = vadd.f32 %v6914, %v7342
  %v7646 = vadd.f32 %v6915, %v7511
  %v7647 = vadd.f32 %v6916, %v7345
  %v7648 = vadd.f32 %v6917, %v7514
  %v7649 = vadd.f32 %v6918, %v7347
  %v7650 = vadd.f32 %v6919, %v7516
  %v7651 = vadd.f32 %v6920, %v7350
  %v7652 = vadd.f32 %v6921, %v7519
  %v7653 = vadd.f32 %v6922, %v7352
  %v7654 = vadd.f32 %v6923, %v7521
  %v7655 = vadd.f32 %v6924, %v7355
  %v7656 = vadd.f32 %v6925, %v7524
  %v7657 = vadd.f32 %v6926, %v7357
  %v7658 = vadd.f32 %v6927, %v7526
  %v7659 = vadd.f32 %v6928, %v7360
  %v7660 = vadd.f32 %v6929, %v7529
  %v7661 = vadd.f32 %v6930, %v7362
  %v7662 = vadd.f32 %v6931, %v7531
  %v7663 = vadd.f32 %v6932, %v7365
  %v7664 = vadd.f32 %v6933, %v7534
  %v7665 = vadd.f32 %v6934, %v7367
  %v7666 = vadd.f32 %v6935, %v7536
  %v7667 = vadd.f32 %v6936, %v7370
  %v7668 = vadd.f32 %v6937, %v7539
  %v7669 = vadd.f32 %v6938, %v7372
  %v7670 = vadd.f32 %v6939, %v7541
  %7671 = vst [vmem:[#allocation4] sm:$0xff] %v7543
  %7672 = vst.msk [vmem:[#allocation4 + $0x8] sm:$0xff] %vm875, %v7544
  %7673 = vst [vmem:[#allocation4 + $0x10] sm:$0xff] %v7545
  %7674 = vst.msk [vmem:[#allocation4 + $0x18] sm:$0xff] %vm875, %v7546
  %7675 = vst [vmem:[#allocation4 + $0x20] sm:$0xff] %v7547
  %7676 = vst.msk [vmem:[#allocation4 + $0x28] sm:$0xff] %vm875, %v7548
  %7677 = vst [vmem:[#allocation4 + $0x30] sm:$0xff] %v7549
  %7678 = vst.msk [vmem:[#allocation4 + $0x38] sm:$0xff] %vm875, %v7550
  %7679 = vst [vmem:[#allocation4 + $0x40] sm:$0xff] %v7551
  %7680 = vst.msk [vmem:[#allocation4 + $0x48] sm:$0xff] %vm875, %v7552
  %7681 = vst [vmem:[#allocation4 + $0x50] sm:$0xff] %v7553
  %7682 = vst.msk [vmem:[#allocation4 + $0x58] sm:$0xff] %vm875, %v7554
  %7683 = vst [vmem:[#allocation4 + $0x60] sm:$0xff] %v7555
  %7684 = vst.msk [vmem:[#allocation4 + $0x68] sm:$0xff] %vm875, %v7556
  %7685 = vst [vmem:[#allocation4 + $0x70] sm:$0xff] %v7557
  %7686 = vst.msk [vmem:[#allocation4 + $0x78] sm:$0xff] %vm875, %v7558
  %7687 = vst [vmem:[#allocation4 + $0x80] sm:$0xff] %v7559
  %7688 = vst.msk [vmem:[#allocation4 + $0x88] sm:$0xff] %vm875, %v7560
  %7689 = vst [vmem:[#allocation4 + $0x90] sm:$0xff] %v7561
  %7690 = vst.msk [vmem:[#allocation4 + $0x98] sm:$0xff] %vm875, %v7562
  %7691 = vst [vmem:[#allocation4 + $0xa0] sm:$0xff] %v7563
  %7692 = vst.msk [vmem:[#allocation4 + $0xa8] sm:$0xff] %vm875, %v7564
  %7693 = vst [vmem:[#allocation4 + $0xb0] sm:$0xff] %v7565
  %7694 = vst.msk [vmem:[#allocation4 + $0xb8] sm:$0xff] %vm875, %v7566
  %7695 = vst [vmem:[#allocation4 + $0xc0] sm:$0xff] %v7567
  %7696 = vst.msk [vmem:[#allocation4 + $0xc8] sm:$0xff] %vm875, %v7568
  %7697 = vst [vmem:[#allocation4 + $0xd0] sm:$0xff] %v7569
  %7698 = vst.msk [vmem:[#allocation4 + $0xd8] sm:$0xff] %vm875, %v7570
  %7699 = vst [vmem:[#allocation4 + $0xe0] sm:$0xff] %v7571
  %7700 = vst.msk [vmem:[#allocation4 + $0xe8] sm:$0xff] %vm875, %v7572
  %7701 = vst [vmem:[#allocation4 + $0xf0] sm:$0xff] %v7573
  %7702 = vst.msk [vmem:[#allocation4 + $0xf8] sm:$0xff] %vm875, %v7574
  %7703 = vst [vmem:[#allocation4 + $0x100] sm:$0xff] %v7575
  %7704 = vst.msk [vmem:[#allocation4 + $0x108] sm:$0xff] %vm875, %v7576
  %7705 = vst [vmem:[#allocation4 + $0x110] sm:$0xff] %v7577
  %7706 = vst.msk [vmem:[#allocation4 + $0x118] sm:$0xff] %vm875, %v7578
  %7707 = vst [vmem:[#allocation4 + $0x120] sm:$0xff] %v7579
  %7708 = vst.msk [vmem:[#allocation4 + $0x128] sm:$0xff] %vm875, %v7580
  %7709 = vst [vmem:[#allocation4 + $0x130] sm:$0xff] %v7581
  %7710 = vst.msk [vmem:[#allocation4 + $0x138] sm:$0xff] %vm875, %v7582
  %7711 = vst [vmem:[#allocation4 + $0x140] sm:$0xff] %v7583
  %7712 = vst.msk [vmem:[#allocation4 + $0x148] sm:$0xff] %vm875, %v7584
  %7713 = vst [vmem:[#allocation4 + $0x150] sm:$0xff] %v7585
  %7714 = vst.msk [vmem:[#allocation4 + $0x158] sm:$0xff] %vm875, %v7586
  %7715 = vst [vmem:[#allocation4 + $0x160] sm:$0xff] %v7587
  %7716 = vst.msk [vmem:[#allocation4 + $0x168] sm:$0xff] %vm875, %v7588
  %7717 = vst [vmem:[#allocation4 + $0x170] sm:$0xff] %v7589
  %7718 = vst.msk [vmem:[#allocation4 + $0x178] sm:$0xff] %vm875, %v7590
  %7719 = vst [vmem:[#allocation4 + $0x180] sm:$0xff] %v7591
  %7720 = vst.msk [vmem:[#allocation4 + $0x188] sm:$0xff] %vm875, %v7592
  %7721 = vst [vmem:[#allocation4 + $0x190] sm:$0xff] %v7593
  %7722 = vst.msk [vmem:[#allocation4 + $0x198] sm:$0xff] %vm875, %v7594
  %7723 = vst [vmem:[#allocation4 + $0x1a0] sm:$0xff] %v7595
  %7724 = vst.msk [vmem:[#allocation4 + $0x1a8] sm:$0xff] %vm875, %v7596
  %7725 = vst [vmem:[#allocation4 + $0x1b0] sm:$0xff] %v7597
  %7726 = vst.msk [vmem:[#allocation4 + $0x1b8] sm:$0xff] %vm875, %v7598
  %7727 = vst [vmem:[#allocation4 + $0x1c0] sm:$0xff] %v7599
  %7728 = vst.msk [vmem:[#allocation4 + $0x1c8] sm:$0xff] %vm875, %v7600
  %7729 = vst [vmem:[#allocation4 + $0x1d0] sm:$0xff] %v7601
  %7730 = vst.msk [vmem:[#allocation4 + $0x1d8] sm:$0xff] %vm875, %v7602
  %7731 = vst [vmem:[#allocation4 + $0x1e0] sm:$0xff] %v7603
  %7732 = vst.msk [vmem:[#allocation4 + $0x1e8] sm:$0xff] %vm875, %v7604
  %7733 = vst [vmem:[#allocation4 + $0x1f0] sm:$0xff] %v7605
  %7734 = vst.msk [vmem:[#allocation4 + $0x1f8] sm:$0xff] %vm875, %v7606
  %7735 = vst [vmem:[#allocation4 + $0x200] sm:$0xff] %v7607
  %7736 = vst.msk [vmem:[#allocation4 + $0x208] sm:$0xff] %vm875, %v7608
  %7737 = vst [vmem:[#allocation4 + $0x210] sm:$0xff] %v7609
  %7738 = vst.msk [vmem:[#allocation4 + $0x218] sm:$0xff] %vm875, %v7610
  %7739 = vst [vmem:[#allocation4 + $0x220] sm:$0xff] %v7611
  %7740 = vst.msk [vmem:[#allocation4 + $0x228] sm:$0xff] %vm875, %v7612
  %7741 = vst [vmem:[#allocation4 + $0x230] sm:$0xff] %v7613
  %7742 = vst.msk [vmem:[#allocation4 + $0x238] sm:$0xff] %vm875, %v7614
  %7743 = vst [vmem:[#allocation4 + $0x240] sm:$0xff] %v7615
  %7744 = vst.msk [vmem:[#allocation4 + $0x248] sm:$0xff] %vm875, %v7616
  %7745 = vst [vmem:[#allocation4 + $0x250] sm:$0xff] %v7617
  %7746 = vst.msk [vmem:[#allocation4 + $0x258] sm:$0xff] %vm875, %v7618
  %7747 = vst [vmem:[#allocation4 + $0x260] sm:$0xff] %v7619
  %7748 = vst.msk [vmem:[#allocation4 + $0x268] sm:$0xff] %vm875, %v7620
  %7749 = vst [vmem:[#allocation4 + $0x270] sm:$0xff] %v7621
  %7750 = vst.msk [vmem:[#allocation4 + $0x278] sm:$0xff] %vm875, %v7622
  %7751 = vst [vmem:[#allocation4 + $0x280] sm:$0xff] %v7623
  %7752 = vst.msk [vmem:[#allocation4 + $0x288] sm:$0xff] %vm875, %v7624
  %7753 = vst [vmem:[#allocation4 + $0x290] sm:$0xff] %v7625
  %7754 = vst.msk [vmem:[#allocation4 + $0x298] sm:$0xff] %vm875, %v7626
  %7755 = vst [vmem:[#allocation4 + $0x2a0] sm:$0xff] %v7627
  %7756 = vst.msk [vmem:[#allocation4 + $0x2a8] sm:$0xff] %vm875, %v7628
  %7757 = vst [vmem:[#allocation4 + $0x2b0] sm:$0xff] %v7629
  %7758 = vst.msk [vmem:[#allocation4 + $0x2b8] sm:$0xff] %vm875, %v7630
  %7759 = vst [vmem:[#allocation4 + $0x2c0] sm:$0xff] %v7631
  %7760 = vst.msk [vmem:[#allocation4 + $0x2c8] sm:$0xff] %vm875, %v7632
  %7761 = vst [vmem:[#allocation4 + $0x2d0] sm:$0xff] %v7633
  %7762 = vst.msk [vmem:[#allocation4 + $0x2d8] sm:$0xff] %vm875, %v7634
  %7763 = vst [vmem:[#allocation4 + $0x2e0] sm:$0xff] %v7635
  %7764 = vst.msk [vmem:[#allocation4 + $0x2e8] sm:$0xff] %vm875, %v7636
  %7765 = vst [vmem:[#allocation4 + $0x2f0] sm:$0xff] %v7637
  %7766 = vst.msk [vmem:[#allocation4 + $0x2f8] sm:$0xff] %vm875, %v7638
  %7767 = vst [vmem:[#allocation4 + $0x300] sm:$0xff] %v7639
  %7768 = vst.msk [vmem:[#allocation4 + $0x308] sm:$0xff] %vm875, %v7640
  %7769 = vst [vmem:[#allocation4 + $0x310] sm:$0xff] %v7641
  %7770 = vst.msk [vmem:[#allocation4 + $0x318] sm:$0xff] %vm875, %v7642
  %7771 = vst [vmem:[#allocation4 + $0x320] sm:$0xff] %v7643
  %7772 = vst.msk [vmem:[#allocation4 + $0x328] sm:$0xff] %vm875, %v7644
  %7773 = vst [vmem:[#allocation4 + $0x330] sm:$0xff] %v7645
  %7774 = vst.msk [vmem:[#allocation4 + $0x338] sm:$0xff] %vm875, %v7646
  %7775 = vst [vmem:[#allocation4 + $0x340] sm:$0xff] %v7647
  %7776 = vst.msk [vmem:[#allocation4 + $0x348] sm:$0xff] %vm875, %v7648
  %7777 = vst [vmem:[#allocation4 + $0x350] sm:$0xff] %v7649
  %7778 = vst.msk [vmem:[#allocation4 + $0x358] sm:$0xff] %vm875, %v7650
  %7779 = vst [vmem:[#allocation4 + $0x360] sm:$0xff] %v7651
  %7780 = vst.msk [vmem:[#allocation4 + $0x368] sm:$0xff] %vm875, %v7652
  %7781 = vst [vmem:[#allocation4 + $0x370] sm:$0xff] %v7653
  %7782 = vst.msk [vmem:[#allocation4 + $0x378] sm:$0xff] %vm875, %v7654
  %7783 = vst [vmem:[#allocation4 + $0x380] sm:$0xff] %v7655
  %7784 = vst.msk [vmem:[#allocation4 + $0x388] sm:$0xff] %vm875, %v7656
  %7785 = vst [vmem:[#allocation4 + $0x390] sm:$0xff] %v7657
  %7786 = vst.msk [vmem:[#allocation4 + $0x398] sm:$0xff] %vm875, %v7658
  %7787 = vst [vmem:[#allocation4 + $0x3a0] sm:$0xff] %v7659
  %7788 = vst.msk [vmem:[#allocation4 + $0x3a8] sm:$0xff] %vm875, %v7660
  %7789 = vst [vmem:[#allocation4 + $0x3b0] sm:$0xff] %v7661
  %7790 = vst.msk [vmem:[#allocation4 + $0x3b8] sm:$0xff] %vm875, %v7662
  %7791 = vst [vmem:[#allocation4 + $0x3c0] sm:$0xff] %v7663
  %7792 = vst.msk [vmem:[#allocation4 + $0x3c8] sm:$0xff] %vm875, %v7664
  %7793 = vst [vmem:[#allocation4 + $0x3d0] sm:$0xff] %v7665
  %7794 = vst.msk [vmem:[#allocation4 + $0x3d8] sm:$0xff] %vm875, %v7666
  %7795 = vst [vmem:[#allocation4 + $0x3e0] sm:$0xff] %v7667
  %7796 = vst.msk [vmem:[#allocation4 + $0x3e8] sm:$0xff] %vm875, %v7668
  %7797 = vst [vmem:[#allocation4 + $0x3f0] sm:$0xff] %v7669
  %7798 = vst.msk [vmem:[#allocation4 + $0x3f8] sm:$0xff] %vm875, %v7670
  %v7799 = vld [vmem:[#allocation4] sm:$0xff]
  %v7800 = vld [vmem:[#allocation4 + $0x8] sm:$0xff]
  %v7801 = vld [vmem:[#allocation4 + $0x10] sm:$0xff]
  %v7802 = vld [vmem:[#allocation4 + $0x18] sm:$0xff]
  %v7803 = vld [vmem:[#allocation4 + $0x20] sm:$0xff]
  %v7804 = vld [vmem:[#allocation4 + $0x28] sm:$0xff]
  %v7805 = vld [vmem:[#allocation4 + $0x30] sm:$0xff]
  %v7806 = vld [vmem:[#allocation4 + $0x38] sm:$0xff]
  %v7807 = vld [vmem:[#allocation4 + $0x40] sm:$0xff]
  %v7808 = vld [vmem:[#allocation4 + $0x48] sm:$0xff]
  %v7809 = vld [vmem:[#allocation4 + $0x50] sm:$0xff]
  %v7810 = vld [vmem:[#allocation4 + $0x58] sm:$0xff]
  %v7811 = vld [vmem:[#allocation4 + $0x60] sm:$0xff]
  %v7812 = vld [vmem:[#allocation4 + $0x68] sm:$0xff]
  %v7813 = vld [vmem:[#allocation4 + $0x70] sm:$0xff]
  %v7814 = vld [vmem:[#allocation4 + $0x78] sm:$0xff]
  %v7815 = vld [vmem:[#allocation4 + $0x80] sm:$0xff]
  %v7816 = vld [vmem:[#allocation4 + $0x88] sm:$0xff]
  %v7817 = vld [vmem:[#allocation4 + $0x90] sm:$0xff]
  %v7818 = vld [vmem:[#allocation4 + $0x98] sm:$0xff]
  %v7819 = vld [vmem:[#allocation4 + $0xa0] sm:$0xff]
  %v7820 = vld [vmem:[#allocation4 + $0xa8] sm:$0xff]
  %v7821 = vld [vmem:[#allocation4 + $0xb0] sm:$0xff]
  %v7822 = vld [vmem:[#allocation4 + $0xb8] sm:$0xff]
  %v7823 = vld [vmem:[#allocation4 + $0xc0] sm:$0xff]
  %v7824 = vld [vmem:[#allocation4 + $0xc8] sm:$0xff]
  %v7825 = vld [vmem:[#allocation4 + $0xd0] sm:$0xff]
  %v7826 = vld [vmem:[#allocation4 + $0xd8] sm:$0xff]
  %v7827 = vld [vmem:[#allocation4 + $0xe0] sm:$0xff]
  %v7828 = vld [vmem:[#allocation4 + $0xe8] sm:$0xff]
  %v7829 = vld [vmem:[#allocation4 + $0xf0] sm:$0xff]
  %v7830 = vld [vmem:[#allocation4 + $0xf8] sm:$0xff]
  %v7831 = vld [vmem:[#allocation4 + $0x100] sm:$0xff]
  %v7832 = vld [vmem:[#allocation4 + $0x108] sm:$0xff]
  %v7833 = vld [vmem:[#allocation4 + $0x110] sm:$0xff]
  %v7834 = vld [vmem:[#allocation4 + $0x118] sm:$0xff]
  %v7835 = vld [vmem:[#allocation4 + $0x120] sm:$0xff]
  %v7836 = vld [vmem:[#allocation4 + $0x128] sm:$0xff]
  %v7837 = vld [vmem:[#allocation4 + $0x130] sm:$0xff]
  %v7838 = vld [vmem:[#allocation4 + $0x138] sm:$0xff]
  %v7839 = vld [vmem:[#allocation4 + $0x140] sm:$0xff]
  %v7840 = vld [vmem:[#allocation4 + $0x148] sm:$0xff]
  %v7841 = vld [vmem:[#allocation4 + $0x150] sm:$0xff]
  %v7842 = vld [vmem:[#allocation4 + $0x158] sm:$0xff]
  %v7843 = vld [vmem:[#allocation4 + $0x160] sm:$0xff]
  %v7844 = vld [vmem:[#allocation4 + $0x168] sm:$0xff]
  %v7845 = vld [vmem:[#allocation4 + $0x170] sm:$0xff]
  %v7846 = vld [vmem:[#allocation4 + $0x178] sm:$0xff]
  %v7847 = vld [vmem:[#allocation4 + $0x180] sm:$0xff]
  %v7848 = vld [vmem:[#allocation4 + $0x188] sm:$0xff]
  %v7849 = vld [vmem:[#allocation4 + $0x190] sm:$0xff]
  %v7850 = vld [vmem:[#allocation4 + $0x198] sm:$0xff]
  %v7851 = vld [vmem:[#allocation4 + $0x1a0] sm:$0xff]
  %v7852 = vld [vmem:[#allocation4 + $0x1a8] sm:$0xff]
  %v7853 = vld [vmem:[#allocation4 + $0x1b0] sm:$0xff]
  %v7854 = vld [vmem:[#allocation4 + $0x1b8] sm:$0xff]
  %v7855 = vld [vmem:[#allocation4 + $0x1c0] sm:$0xff]
  %v7856 = vld [vmem:[#allocation4 + $0x1c8] sm:$0xff]
  %v7857 = vld [vmem:[#allocation4 + $0x1d0] sm:$0xff]
  %v7858 = vld [vmem:[#allocation4 + $0x1d8] sm:$0xff]
  %v7859 = vld [vmem:[#allocation4 + $0x1e0] sm:$0xff]
  %v7860 = vld [vmem:[#allocation4 + $0x1e8] sm:$0xff]
  %v7861 = vld [vmem:[#allocation4 + $0x1f0] sm:$0xff]
  %v7862 = vld [vmem:[#allocation4 + $0x1f8] sm:$0xff]
  %v7863 = vld [vmem:[#allocation4 + $0x200] sm:$0xff]
  %v7864 = vld [vmem:[#allocation4 + $0x208] sm:$0xff]
  %v7865 = vld [vmem:[#allocation4 + $0x210] sm:$0xff]
  %v7866 = vld [vmem:[#allocation4 + $0x218] sm:$0xff]
  %v7867 = vld [vmem:[#allocation4 + $0x220] sm:$0xff]
  %v7868 = vld [vmem:[#allocation4 + $0x228] sm:$0xff]
  %v7869 = vld [vmem:[#allocation4 + $0x230] sm:$0xff]
  %v7870 = vld [vmem:[#allocation4 + $0x238] sm:$0xff]
  %v7871 = vld [vmem:[#allocation4 + $0x240] sm:$0xff]
  %v7872 = vld [vmem:[#allocation4 + $0x248] sm:$0xff]
  %v7873 = vld [vmem:[#allocation4 + $0x250] sm:$0xff]
  %v7874 = vld [vmem:[#allocation4 + $0x258] sm:$0xff]
  %v7875 = vld [vmem:[#allocation4 + $0x260] sm:$0xff]
  %v7876 = vld [vmem:[#allocation4 + $0x268] sm:$0xff]
  %v7877 = vld [vmem:[#allocation4 + $0x270] sm:$0xff]
  %v7878 = vld [vmem:[#allocation4 + $0x278] sm:$0xff]
  %v7879 = vld [vmem:[#allocation4 + $0x280] sm:$0xff]
  %v7880 = vld [vmem:[#allocation4 + $0x288] sm:$0xff]
  %v7881 = vld [vmem:[#allocation4 + $0x290] sm:$0xff]
  %v7882 = vld [vmem:[#allocation4 + $0x298] sm:$0xff]
  %v7883 = vld [vmem:[#allocation4 + $0x2a0] sm:$0xff]
  %v7884 = vld [vmem:[#allocation4 + $0x2a8] sm:$0xff]
  %v7885 = vld [vmem:[#allocation4 + $0x2b0] sm:$0xff]
  %v7886 = vld [vmem:[#allocation4 + $0x2b8] sm:$0xff]
  %v7887 = vld [vmem:[#allocation4 + $0x2c0] sm:$0xff]
  %v7888 = vld [vmem:[#allocation4 + $0x2c8] sm:$0xff]
  %v7889 = vld [vmem:[#allocation4 + $0x2d0] sm:$0xff]
  %v7890 = vld [vmem:[#allocation4 + $0x2d8] sm:$0xff]
  %v7891 = vld [vmem:[#allocation4 + $0x2e0] sm:$0xff]
  %v7892 = vld [vmem:[#allocation4 + $0x2e8] sm:$0xff]
  %v7893 = vld [vmem:[#allocation4 + $0x2f0] sm:$0xff]
  %v7894 = vld [vmem:[#allocation4 + $0x2f8] sm:$0xff]
  %v7895 = vld [vmem:[#allocation4 + $0x300] sm:$0xff]
  %v7896 = vld [vmem:[#allocation4 + $0x308] sm:$0xff]
  %v7897 = vld [vmem:[#allocation4 + $0x310] sm:$0xff]
  %v7898 = vld [vmem:[#allocation4 + $0x318] sm:$0xff]
  %v7899 = vld [vmem:[#allocation4 + $0x320] sm:$0xff]
  %v7900 = vld [vmem:[#allocation4 + $0x328] sm:$0xff]
  %v7901 = vld [vmem:[#allocation4 + $0x330] sm:$0xff]
  %v7902 = vld [vmem:[#allocation4 + $0x338] sm:$0xff]
  %v7903 = vld [vmem:[#allocation4 + $0x340] sm:$0xff]
  %v7904 = vld [vmem:[#allocation4 + $0x348] sm:$0xff]
  %v7905 = vld [vmem:[#allocation4 + $0x350] sm:$0xff]
  %v7906 = vld [vmem:[#allocation4 + $0x358] sm:$0xff]
  %v7907 = vld [vmem:[#allocation4 + $0x360] sm:$0xff]
  %v7908 = vld [vmem:[#allocation4 + $0x368] sm:$0xff]
  %v7909 = vld [vmem:[#allocation4 + $0x370] sm:$0xff]
  %v7910 = vld [vmem:[#allocation4 + $0x378] sm:$0xff]
  %v7911 = vld [vmem:[#allocation4 + $0x380] sm:$0xff]
  %v7912 = vld [vmem:[#allocation4 + $0x388] sm:$0xff]
  %v7913 = vld [vmem:[#allocation4 + $0x390] sm:$0xff]
  %v7914 = vld [vmem:[#allocation4 + $0x398] sm:$0xff]
  %v7915 = vld [vmem:[#allocation4 + $0x3a0] sm:$0xff]
  %v7916 = vld [vmem:[#allocation4 + $0x3a8] sm:$0xff]
  %v7917 = vld [vmem:[#allocation4 + $0x3b0] sm:$0xff]
  %v7918 = vld [vmem:[#allocation4 + $0x3b8] sm:$0xff]
  %v7919 = vld [vmem:[#allocation4 + $0x3c0] sm:$0xff]
  %v7920 = vld [vmem:[#allocation4 + $0x3c8] sm:$0xff]
  %v7921 = vld [vmem:[#allocation4 + $0x3d0] sm:$0xff]
  %v7922 = vld [vmem:[#allocation4 + $0x3d8] sm:$0xff]
  %v7923 = vld [vmem:[#allocation4 + $0x3e0] sm:$0xff]
  %v7924 = vld [vmem:[#allocation4 + $0x3e8] sm:$0xff]
  %v7925 = vld [vmem:[#allocation4 + $0x3f0] sm:$0xff]
  %v7926 = vld [vmem:[#allocation4 + $0x3f8] sm:$0xff]
  %v7927 = vld [vmem:[#allocation3 + $0x3] sm:$0xff]
  %v7928 = vld [vmem:[#allocation3 + $0xb] sm:$0xff]
  %v7929 = vld [vmem:[#allocation3 + $0x13] sm:$0xff]
  %v7930 = vld [vmem:[#allocation3 + $0x1b] sm:$0xff]
  %v7931 = vld [vmem:[#allocation3 + $0x23] sm:$0xff]
  %v7932 = vld [vmem:[#allocation3 + $0x2b] sm:$0xff]
  %v7933 = vld [vmem:[#allocation3 + $0x33] sm:$0xff]
  %v7934 = vld [vmem:[#allocation3 + $0x3b] sm:$0xff]
  %v7935 = vld [vmem:[#allocation3 + $0x43] sm:$0xff]
  %v7936 = vld [vmem:[#allocation3 + $0x4b] sm:$0xff]
  %v7937 = vld [vmem:[#allocation3 + $0x53] sm:$0xff]
  %v7938 = vld [vmem:[#allocation3 + $0x5b] sm:$0xff]
  %v7939 = vld [vmem:[#allocation3 + $0x63] sm:$0xff]
  %v7940 = vld [vmem:[#allocation3 + $0x6b] sm:$0xff]
  %v7941 = vld [vmem:[#allocation3 + $0x73] sm:$0xff]
  %v7942 = vld [vmem:[#allocation3 + $0x7b] sm:$0xff]
  %v7943 = vld [vmem:[#allocation3 + $0x83] sm:$0xff]
  %v7944 = vld [vmem:[#allocation3 + $0x8b] sm:$0xff]
  %v7945 = vld [vmem:[#allocation3 + $0x93] sm:$0xff]
  %v7946 = vld [vmem:[#allocation3 + $0x9b] sm:$0xff]
  %v7947 = vld [vmem:[#allocation3 + $0xa3] sm:$0xff]
  %v7948 = vld [vmem:[#allocation3 + $0xab] sm:$0xff]
  %v7949 = vld [vmem:[#allocation3 + $0xb3] sm:$0xff]
  %v7950 = vld [vmem:[#allocation3 + $0xbb] sm:$0xff]
  %v7951 = vld [vmem:[#allocation3 + $0xc3] sm:$0xff]
  %v7952 = vld [vmem:[#allocation3 + $0xcb] sm:$0xff]
  %v7953 = vld [vmem:[#allocation3 + $0xd3] sm:$0xff]
  %v7954 = vld [vmem:[#allocation3 + $0xdb] sm:$0xff]
  %v7955 = vld [vmem:[#allocation3 + $0xe3] sm:$0xff]
  %v7956 = vld [vmem:[#allocation3 + $0xeb] sm:$0xff]
  %v7957 = vld [vmem:[#allocation3 + $0xf3] sm:$0xff]
  %v7958 = vld [vmem:[#allocation3 + $0xfb] sm:$0xff]
  %v7959 = vld [vmem:[#allocation3 + $0x103] sm:$0xff]
  %v7960 = vld [vmem:[#allocation3 + $0x10b] sm:$0xff]
  %v7961 = vld [vmem:[#allocation3 + $0x113] sm:$0xff]
  %v7962 = vld [vmem:[#allocation3 + $0x11b] sm:$0xff]
  %v7963 = vld [vmem:[#allocation3 + $0x123] sm:$0xff]
  %v7964 = vld [vmem:[#allocation3 + $0x12b] sm:$0xff]
  %v7965 = vld [vmem:[#allocation3 + $0x133] sm:$0xff]
  %v7966 = vld [vmem:[#allocation3 + $0x13b] sm:$0xff]
  %v7967 = vld [vmem:[#allocation3 + $0x143] sm:$0xff]
  %v7968 = vld [vmem:[#allocation3 + $0x14b] sm:$0xff]
  %v7969 = vld [vmem:[#allocation3 + $0x153] sm:$0xff]
  %v7970 = vld [vmem:[#allocation3 + $0x15b] sm:$0xff]
  %v7971 = vld [vmem:[#allocation3 + $0x163] sm:$0xff]
  %v7972 = vld [vmem:[#allocation3 + $0x16b] sm:$0xff]
  %v7973 = vld [vmem:[#allocation3 + $0x173] sm:$0xff]
  %v7974 = vld [vmem:[#allocation3 + $0x17b] sm:$0xff]
  %v7975 = vld [vmem:[#allocation3 + $0x183] sm:$0xff]
  %v7976 = vld [vmem:[#allocation3 + $0x18b] sm:$0xff]
  %v7977 = vld [vmem:[#allocation3 + $0x193] sm:$0xff]
  %v7978 = vld [vmem:[#allocation3 + $0x19b] sm:$0xff]
  %v7979 = vld [vmem:[#allocation3 + $0x1a3] sm:$0xff]
  %v7980 = vld [vmem:[#allocation3 + $0x1ab] sm:$0xff]
  %v7981 = vld [vmem:[#allocation3 + $0x1b3] sm:$0xff]
  %v7982 = vld [vmem:[#allocation3 + $0x1bb] sm:$0xff]
  %v7983 = vld [vmem:[#allocation3 + $0x1c3] sm:$0xff]
  %v7984 = vld [vmem:[#allocation3 + $0x1cb] sm:$0xff]
  %v7985 = vld [vmem:[#allocation3 + $0x1d3] sm:$0xff]
  %v7986 = vld [vmem:[#allocation3 + $0x1db] sm:$0xff]
  %v7987 = vld [vmem:[#allocation3 + $0x1e3] sm:$0xff]
  %v7988 = vld [vmem:[#allocation3 + $0x1eb] sm:$0xff]
  %v7989 = vld [vmem:[#allocation3 + $0x1f3] sm:$0xff]
  %v7990 = vld [vmem:[#allocation3 + $0x1fb] sm:$0xff]
  %v7991 = vpack.c.bf16 %v7928, %v7927
  %v7992 = vpack.c.bf16 %v7930, %v7929
  %v7993 = vpack.c.bf16 %v7932, %v7931
  %v7994 = vpack.c.bf16 %v7934, %v7933
  %v7995 = vpack.c.bf16 %v7936, %v7935
  %v7996 = vpack.c.bf16 %v7938, %v7937
  %v7997 = vpack.c.bf16 %v7940, %v7939
  %v7998 = vpack.c.bf16 %v7942, %v7941
  %v7999 = vpack.c.bf16 %v7944, %v7943
  %v8000 = vpack.c.bf16 %v7946, %v7945
  %v8001 = vpack.c.bf16 %v7948, %v7947
  %v8002 = vpack.c.bf16 %v7950, %v7949
  %v8003 = vpack.c.bf16 %v7952, %v7951
  %v8004 = vpack.c.bf16 %v7954, %v7953
  %v8005 = vpack.c.bf16 %v7956, %v7955
  %v8006 = vpack.c.bf16 %v7958, %v7957
  %v8007 = vpack.c.bf16 %v7960, %v7959
  %v8008 = vpack.c.bf16 %v7962, %v7961
  %v8009 = vpack.c.bf16 %v7964, %v7963
  %v8010 = vpack.c.bf16 %v7966, %v7965
  %v8011 = vpack.c.bf16 %v7968, %v7967
  %v8012 = vpack.c.bf16 %v7970, %v7969
  %v8013 = vpack.c.bf16 %v7972, %v7971
  %v8014 = vpack.c.bf16 %v7974, %v7973
  %v8015 = vpack.c.bf16 %v7976, %v7975
  %v8016 = vpack.c.bf16 %v7978, %v7977
  %v8017 = vpack.c.bf16 %v7980, %v7979
  %v8018 = vpack.c.bf16 %v7982, %v7981
  %v8019 = vpack.c.bf16 %v7984, %v7983
  %v8020 = vpack.c.bf16 %v7986, %v7985
  %v8021 = vpack.c.bf16 %v7988, %v7987
  %v8022 = vpack.c.bf16 %v7990, %v7989
  %s8023 = scalar_lea.vmem %s4, 264
  %v8024 = vld [vmem:[%s8023] sm:$0xff]
  %v8025 = vld [vmem:[%s8023 + $0x8] sm:$0xff]
  %v8026 = vld [vmem:[%s8023 + $0x10] sm:$0xff]
  %v8027 = vld [vmem:[%s8023 + $0x18] sm:$0xff]
  %v8028 = vld [vmem:[%s8023 + $0x20] sm:$0xff]
  %v8029 = vld [vmem:[%s8023 + $0x28] sm:$0xff]
  %v8030 = vld [vmem:[%s8023 + $0x30] sm:$0xff]
  %v8031 = vld [vmem:[%s8023 + $0x38] sm:$0xff]
  %v8032 = vld [vmem:[%s8023 + $0x40] sm:$0xff]
  %v8033 = vld [vmem:[%s8023 + $0x48] sm:$0xff]
  %v8034 = vld [vmem:[%s8023 + $0x50] sm:$0x33]
  %v8046 = vunpack.c.l.b16 %v8024
  %v8047 = vunpack.c.h.b16 %v8024
  %v8048 = vunpack.c.l.b16 %v8025
  %v8049 = vunpack.c.h.b16 %v8025
  %v8050 = vunpack.c.l.b16 %v8026
  %v8051 = vunpack.c.h.b16 %v8026
  %v8052 = vunpack.c.l.b16 %v8027
  %v8053 = vunpack.c.h.b16 %v8027
  %v8054 = vunpack.c.l.b16 %v8028
  %v8055 = vunpack.c.h.b16 %v8028
  %v8056 = vunpack.c.l.b16 %v8029
  %v8057 = vunpack.c.h.b16 %v8029
  %v8058 = vunpack.c.l.b16 %v8030
  %v8059 = vunpack.c.h.b16 %v8030
  %v8060 = vunpack.c.l.b16 %v8031
  %v8061 = vunpack.c.h.b16 %v8031
  %v8062 = vunpack.c.l.b16 %v8032
  %v8063 = vunpack.c.h.b16 %v8032
  %v8064 = vunpack.c.l.b16 %v8033
  %v8065 = vunpack.c.h.b16 %v8033
  %v8066 = vunpack.c.l.b16 %v8034
  %v8067 = vunpack.c.h.b16 %v8034
  %v8068 = vpack.c.b16 %v8048, %v8046
  %v8069 = vpack.c.b16 %v8049, %v8047
  %v8070 = vpack.c.b16 %v8052, %v8050
  %v8071 = vpack.c.b16 %v8053, %v8051
  %v8072 = vpack.c.b16 %v8056, %v8054
  %v8073 = vpack.c.b16 %v8057, %v8055
  %v8074 = vpack.c.b16 %v8060, %v8058
  %v8075 = vpack.c.b16 %v8061, %v8059
  %v8076 = vpack.c.b16 %v8064, %v8062
  %v8077 = vpack.c.b16 %v8065, %v8063
  %v8078 = vpack.c.b16 %v8066, %v8066
  %v8079 = vpack.c.b16 %v8067, %v8067
  %v8091 = vsel %vm4581, %v7991, 0
  %v8094 = vsel %vm4581, %v7992, 0
  %v8097 = vsel %vm4581, %v7993, 0
  %v8100 = vsel %vm4581, %v7994, 0
  %v8103 = vsel %vm4581, %v7995, 0
  %v8106 = vsel %vm4581, %v7996, 0
  %v8109 = vsel %vm4581, %v7997, 0
  %v8112 = vsel %vm4581, %v7998, 0
  %v8115 = vsel %vm4581, %v7999, 0
  %v8118 = vsel %vm4581, %v8000, 0
  %v8121 = vsel %vm4581, %v8001, 0
  %v8124 = vsel %vm4581, %v8002, 0
  %v8127 = vsel %vm4581, %v8003, 0
  %v8130 = vsel %vm4581, %v8004, 0
  %v8133 = vsel %vm4581, %v8005, 0
  %v8136 = vsel %vm4581, %v8006, 0
  %v8139 = vsel %vm4581, %v8007, 0
  %v8142 = vsel %vm4581, %v8008, 0
  %v8145 = vsel %vm4581, %v8009, 0
  %v8148 = vsel %vm4581, %v8010, 0
  %v8151 = vsel %vm4581, %v8011, 0
  %v8154 = vsel %vm4581, %v8012, 0
  %v8157 = vsel %vm4581, %v8013, 0
  %v8160 = vsel %vm4581, %v8014, 0
  %v8163 = vsel %vm4581, %v8015, 0
  %v8166 = vsel %vm4581, %v8016, 0
  %v8169 = vsel %vm4581, %v8017, 0
  %v8172 = vsel %vm4581, %v8018, 0
  %v8175 = vsel %vm4581, %v8019, 0
  %v8178 = vsel %vm4581, %v8020, 0
  %v8181 = vsel %vm4581, %v8021, 0
  %v8184 = vsel %vm4581, %v8022, 0
  %v8187 = vsel %vm5352, %v8078, 0
  %v8190 = vsel %vm5352, %v8079, 0
  %8192 = vmatpush.bf16.msra.mxu0 0
  %8193 = vmatpush.bf16.msra.mxu0 0
  %8194 = vmatpush.bf16.msra.mxu0 %v8187
  %8195 = vmatpush.bf16.msra.mxu0 %v8076
  %8196 = vmatpush.bf16.msra.mxu0 %v8074
  %8197 = vmatpush.bf16.msra.mxu0 %v8072
  %8198 = vmatpush.bf16.msra.mxu0 %v8070
  %8199 = vmatpush.bf16.msra.mxu0 %v8068
  %8200 = vmatmul.bf16.gmra.mxu0 %v8091
  %v8201 = vpop.f32.mrf.mxu0
  %v8202 = vadd.f32 0.0, %v8201
  %v8203 = vpop.f32.mrf.mxu0
  %v8204 = vadd.f32 0.0, %v8203
  %8205 = vmatmul.bf16.gmra.mxu0 %v8094
  %v8206 = vpop.f32.mrf.mxu0
  %v8207 = vadd.f32 0.0, %v8206
  %v8208 = vpop.f32.mrf.mxu0
  %v8209 = vadd.f32 0.0, %v8208
  %8210 = vmatmul.bf16.gmra.mxu0 %v8097
  %v8211 = vpop.f32.mrf.mxu0
  %v8212 = vadd.f32 0.0, %v8211
  %v8213 = vpop.f32.mrf.mxu0
  %v8214 = vadd.f32 0.0, %v8213
  %8215 = vmatmul.bf16.gmra.mxu0 %v8100
  %v8216 = vpop.f32.mrf.mxu0
  %v8217 = vadd.f32 0.0, %v8216
  %v8218 = vpop.f32.mrf.mxu0
  %v8219 = vadd.f32 0.0, %v8218
  %8220 = vmatmul.bf16.gmra.mxu0 %v8103
  %v8221 = vpop.f32.mrf.mxu0
  %v8222 = vadd.f32 0.0, %v8221
  %v8223 = vpop.f32.mrf.mxu0
  %v8224 = vadd.f32 0.0, %v8223
  %8225 = vmatmul.bf16.gmra.mxu0 %v8106
  %v8226 = vpop.f32.mrf.mxu0
  %v8227 = vadd.f32 0.0, %v8226
  %v8228 = vpop.f32.mrf.mxu0
  %v8229 = vadd.f32 0.0, %v8228
  %8230 = vmatmul.bf16.gmra.mxu0 %v8109
  %v8231 = vpop.f32.mrf.mxu0
  %v8232 = vadd.f32 0.0, %v8231
  %v8233 = vpop.f32.mrf.mxu0
  %v8234 = vadd.f32 0.0, %v8233
  %8235 = vmatmul.bf16.gmra.mxu0 %v8112
  %v8236 = vpop.f32.mrf.mxu0
  %v8237 = vadd.f32 0.0, %v8236
  %v8238 = vpop.f32.mrf.mxu0
  %v8239 = vadd.f32 0.0, %v8238
  %8240 = vmatmul.bf16.gmra.mxu0 %v8115
  %v8241 = vpop.f32.mrf.mxu0
  %v8242 = vadd.f32 0.0, %v8241
  %v8243 = vpop.f32.mrf.mxu0
  %v8244 = vadd.f32 0.0, %v8243
  %8245 = vmatmul.bf16.gmra.mxu0 %v8118
  %v8246 = vpop.f32.mrf.mxu0
  %v8247 = vadd.f32 0.0, %v8246
  %v8248 = vpop.f32.mrf.mxu0
  %v8249 = vadd.f32 0.0, %v8248
  %8250 = vmatmul.bf16.gmra.mxu0 %v8121
  %v8251 = vpop.f32.mrf.mxu0
  %v8252 = vadd.f32 0.0, %v8251
  %v8253 = vpop.f32.mrf.mxu0
  %v8254 = vadd.f32 0.0, %v8253
  %8255 = vmatmul.bf16.gmra.mxu0 %v8124
  %v8256 = vpop.f32.mrf.mxu0
  %v8257 = vadd.f32 0.0, %v8256
  %v8258 = vpop.f32.mrf.mxu0
  %v8259 = vadd.f32 0.0, %v8258
  %8260 = vmatmul.bf16.gmra.mxu0 %v8127
  %v8261 = vpop.f32.mrf.mxu0
  %v8262 = vadd.f32 0.0, %v8261
  %v8263 = vpop.f32.mrf.mxu0
  %v8264 = vadd.f32 0.0, %v8263
  %8265 = vmatmul.bf16.gmra.mxu0 %v8130
  %v8266 = vpop.f32.mrf.mxu0
  %v8267 = vadd.f32 0.0, %v8266
  %v8268 = vpop.f32.mrf.mxu0
  %v8269 = vadd.f32 0.0, %v8268
  %8270 = vmatmul.bf16.gmra.mxu0 %v8133
  %v8271 = vpop.f32.mrf.mxu0
  %v8272 = vadd.f32 0.0, %v8271
  %v8273 = vpop.f32.mrf.mxu0
  %v8274 = vadd.f32 0.0, %v8273
  %8275 = vmatmul.bf16.gmra.mxu0 %v8136
  %v8276 = vpop.f32.mrf.mxu0
  %v8277 = vadd.f32 0.0, %v8276
  %v8278 = vpop.f32.mrf.mxu0
  %v8279 = vadd.f32 0.0, %v8278
  %8280 = vmatmul.bf16.gmra.mxu0 %v8139
  %v8281 = vpop.f32.mrf.mxu0
  %v8282 = vadd.f32 0.0, %v8281
  %v8283 = vpop.f32.mrf.mxu0
  %v8284 = vadd.f32 0.0, %v8283
  %8285 = vmatmul.bf16.gmra.mxu0 %v8142
  %v8286 = vpop.f32.mrf.mxu0
  %v8287 = vadd.f32 0.0, %v8286
  %v8288 = vpop.f32.mrf.mxu0
  %v8289 = vadd.f32 0.0, %v8288
  %8290 = vmatmul.bf16.gmra.mxu0 %v8145
  %v8291 = vpop.f32.mrf.mxu0
  %v8292 = vadd.f32 0.0, %v8291
  %v8293 = vpop.f32.mrf.mxu0
  %v8294 = vadd.f32 0.0, %v8293
  %8295 = vmatmul.bf16.gmra.mxu0 %v8148
  %v8296 = vpop.f32.mrf.mxu0
  %v8297 = vadd.f32 0.0, %v8296
  %v8298 = vpop.f32.mrf.mxu0
  %v8299 = vadd.f32 0.0, %v8298
  %8300 = vmatmul.bf16.gmra.mxu0 %v8151
  %v8301 = vpop.f32.mrf.mxu0
  %v8302 = vadd.f32 0.0, %v8301
  %v8303 = vpop.f32.mrf.mxu0
  %v8304 = vadd.f32 0.0, %v8303
  %8305 = vmatmul.bf16.gmra.mxu0 %v8154
  %v8306 = vpop.f32.mrf.mxu0
  %v8307 = vadd.f32 0.0, %v8306
  %v8308 = vpop.f32.mrf.mxu0
  %v8309 = vadd.f32 0.0, %v8308
  %8310 = vmatmul.bf16.gmra.mxu0 %v8157
  %v8311 = vpop.f32.mrf.mxu0
  %v8312 = vadd.f32 0.0, %v8311
  %v8313 = vpop.f32.mrf.mxu0
  %v8314 = vadd.f32 0.0, %v8313
  %8315 = vmatmul.bf16.gmra.mxu0 %v8160
  %v8316 = vpop.f32.mrf.mxu0
  %v8317 = vadd.f32 0.0, %v8316
  %v8318 = vpop.f32.mrf.mxu0
  %v8319 = vadd.f32 0.0, %v8318
  %8320 = vmatmul.bf16.gmra.mxu0 %v8163
  %v8321 = vpop.f32.mrf.mxu0
  %v8322 = vadd.f32 0.0, %v8321
  %v8323 = vpop.f32.mrf.mxu0
  %v8324 = vadd.f32 0.0, %v8323
  %8325 = vmatmul.bf16.gmra.mxu0 %v8166
  %v8326 = vpop.f32.mrf.mxu0
  %v8327 = vadd.f32 0.0, %v8326
  %v8328 = vpop.f32.mrf.mxu0
  %v8329 = vadd.f32 0.0, %v8328
  %8330 = vmatmul.bf16.gmra.mxu0 %v8169
  %v8331 = vpop.f32.mrf.mxu0
  %v8332 = vadd.f32 0.0, %v8331
  %v8333 = vpop.f32.mrf.mxu0
  %v8334 = vadd.f32 0.0, %v8333
  %8335 = vmatmul.bf16.gmra.mxu0 %v8172
  %v8336 = vpop.f32.mrf.mxu0
  %v8337 = vadd.f32 0.0, %v8336
  %v8338 = vpop.f32.mrf.mxu0
  %v8339 = vadd.f32 0.0, %v8338
  %8340 = vmatmul.bf16.gmra.mxu0 %v8175
  %v8341 = vpop.f32.mrf.mxu0
  %v8342 = vadd.f32 0.0, %v8341
  %v8343 = vpop.f32.mrf.mxu0
  %v8344 = vadd.f32 0.0, %v8343
  %8345 = vmatmul.bf16.gmra.mxu0 %v8178
  %v8346 = vpop.f32.mrf.mxu0
  %v8347 = vadd.f32 0.0, %v8346
  %v8348 = vpop.f32.mrf.mxu0
  %v8349 = vadd.f32 0.0, %v8348
  %8350 = vmatmul.bf16.gmra.mxu0 %v8181
  %v8351 = vpop.f32.mrf.mxu0
  %v8352 = vadd.f32 0.0, %v8351
  %v8353 = vpop.f32.mrf.mxu0
  %v8354 = vadd.f32 0.0, %v8353
  %8355 = vmatmul.bf16.gmra.mxu0 %v8184
  %v8356 = vpop.f32.mrf.mxu0
  %v8357 = vadd.f32 0.0, %v8356
  %v8358 = vpop.f32.mrf.mxu0
  %v8359 = vadd.f32 0.0, %v8358
  %8360 = vdwg.mxu0
  %8361 = vmatpush.bf16.msra.mxu0 0
  %8362 = vmatpush.bf16.msra.mxu0 0
  %8363 = vmatpush.bf16.msra.mxu0 %v8190
  %8364 = vmatpush.bf16.msra.mxu0 %v8077
  %8365 = vmatpush.bf16.msra.mxu0 %v8075
  %8366 = vmatpush.bf16.msra.mxu0 %v8073
  %8367 = vmatpush.bf16.msra.mxu0 %v8071
  %8368 = vmatpush.bf16.msra.mxu0 %v8069
  %8369 = vmatmul.bf16.gmra.mxu0 %v8091
  %v8370 = vpop.f32.mrf.mxu0
  %v8371 = vadd.f32 0.0, %v8370
  %v8372 = vpop.f32.mrf.mxu0
  %v8373 = vadd.f32 0.0, %v8372
  %8374 = vmatmul.bf16.gmra.mxu0 %v8094
  %v8375 = vpop.f32.mrf.mxu0
  %v8376 = vadd.f32 0.0, %v8375
  %v8377 = vpop.f32.mrf.mxu0
  %v8378 = vadd.f32 0.0, %v8377
  %8379 = vmatmul.bf16.gmra.mxu0 %v8097
  %v8380 = vpop.f32.mrf.mxu0
  %v8381 = vadd.f32 0.0, %v8380
  %v8382 = vpop.f32.mrf.mxu0
  %v8383 = vadd.f32 0.0, %v8382
  %8384 = vmatmul.bf16.gmra.mxu0 %v8100
  %v8385 = vpop.f32.mrf.mxu0
  %v8386 = vadd.f32 0.0, %v8385
  %v8387 = vpop.f32.mrf.mxu0
  %v8388 = vadd.f32 0.0, %v8387
  %8389 = vmatmul.bf16.gmra.mxu0 %v8103
  %v8390 = vpop.f32.mrf.mxu0
  %v8391 = vadd.f32 0.0, %v8390
  %v8392 = vpop.f32.mrf.mxu0
  %v8393 = vadd.f32 0.0, %v8392
  %8394 = vmatmul.bf16.gmra.mxu0 %v8106
  %v8395 = vpop.f32.mrf.mxu0
  %v8396 = vadd.f32 0.0, %v8395
  %v8397 = vpop.f32.mrf.mxu0
  %v8398 = vadd.f32 0.0, %v8397
  %8399 = vmatmul.bf16.gmra.mxu0 %v8109
  %v8400 = vpop.f32.mrf.mxu0
  %v8401 = vadd.f32 0.0, %v8400
  %v8402 = vpop.f32.mrf.mxu0
  %v8403 = vadd.f32 0.0, %v8402
  %8404 = vmatmul.bf16.gmra.mxu0 %v8112
  %v8405 = vpop.f32.mrf.mxu0
  %v8406 = vadd.f32 0.0, %v8405
  %v8407 = vpop.f32.mrf.mxu0
  %v8408 = vadd.f32 0.0, %v8407
  %8409 = vmatmul.bf16.gmra.mxu0 %v8115
  %v8410 = vpop.f32.mrf.mxu0
  %v8411 = vadd.f32 0.0, %v8410
  %v8412 = vpop.f32.mrf.mxu0
  %v8413 = vadd.f32 0.0, %v8412
  %8414 = vmatmul.bf16.gmra.mxu0 %v8118
  %v8415 = vpop.f32.mrf.mxu0
  %v8416 = vadd.f32 0.0, %v8415
  %v8417 = vpop.f32.mrf.mxu0
  %v8418 = vadd.f32 0.0, %v8417
  %8419 = vmatmul.bf16.gmra.mxu0 %v8121
  %v8420 = vpop.f32.mrf.mxu0
  %v8421 = vadd.f32 0.0, %v8420
  %v8422 = vpop.f32.mrf.mxu0
  %v8423 = vadd.f32 0.0, %v8422
  %8424 = vmatmul.bf16.gmra.mxu0 %v8124
  %v8425 = vpop.f32.mrf.mxu0
  %v8426 = vadd.f32 0.0, %v8425
  %v8427 = vpop.f32.mrf.mxu0
  %v8428 = vadd.f32 0.0, %v8427
  %8429 = vmatmul.bf16.gmra.mxu0 %v8127
  %v8430 = vpop.f32.mrf.mxu0
  %v8431 = vadd.f32 0.0, %v8430
  %v8432 = vpop.f32.mrf.mxu0
  %v8433 = vadd.f32 0.0, %v8432
  %8434 = vmatmul.bf16.gmra.mxu0 %v8130
  %v8435 = vpop.f32.mrf.mxu0
  %v8436 = vadd.f32 0.0, %v8435
  %v8437 = vpop.f32.mrf.mxu0
  %v8438 = vadd.f32 0.0, %v8437
  %8439 = vmatmul.bf16.gmra.mxu0 %v8133
  %v8440 = vpop.f32.mrf.mxu0
  %v8441 = vadd.f32 0.0, %v8440
  %v8442 = vpop.f32.mrf.mxu0
  %v8443 = vadd.f32 0.0, %v8442
  %8444 = vmatmul.bf16.gmra.mxu0 %v8136
  %v8445 = vpop.f32.mrf.mxu0
  %v8446 = vadd.f32 0.0, %v8445
  %v8447 = vpop.f32.mrf.mxu0
  %v8448 = vadd.f32 0.0, %v8447
  %8449 = vmatmul.bf16.gmra.mxu0 %v8139
  %v8450 = vpop.f32.mrf.mxu0
  %v8451 = vadd.f32 0.0, %v8450
  %v8452 = vpop.f32.mrf.mxu0
  %v8453 = vadd.f32 0.0, %v8452
  %8454 = vmatmul.bf16.gmra.mxu0 %v8142
  %v8455 = vpop.f32.mrf.mxu0
  %v8456 = vadd.f32 0.0, %v8455
  %v8457 = vpop.f32.mrf.mxu0
  %v8458 = vadd.f32 0.0, %v8457
  %8459 = vmatmul.bf16.gmra.mxu0 %v8145
  %v8460 = vpop.f32.mrf.mxu0
  %v8461 = vadd.f32 0.0, %v8460
  %v8462 = vpop.f32.mrf.mxu0
  %v8463 = vadd.f32 0.0, %v8462
  %8464 = vmatmul.bf16.gmra.mxu0 %v8148
  %v8465 = vpop.f32.mrf.mxu0
  %v8466 = vadd.f32 0.0, %v8465
  %v8467 = vpop.f32.mrf.mxu0
  %v8468 = vadd.f32 0.0, %v8467
  %8469 = vmatmul.bf16.gmra.mxu0 %v8151
  %v8470 = vpop.f32.mrf.mxu0
  %v8471 = vadd.f32 0.0, %v8470
  %v8472 = vpop.f32.mrf.mxu0
  %v8473 = vadd.f32 0.0, %v8472
  %8474 = vmatmul.bf16.gmra.mxu0 %v8154
  %v8475 = vpop.f32.mrf.mxu0
  %v8476 = vadd.f32 0.0, %v8475
  %v8477 = vpop.f32.mrf.mxu0
  %v8478 = vadd.f32 0.0, %v8477
  %8479 = vmatmul.bf16.gmra.mxu0 %v8157
  %v8480 = vpop.f32.mrf.mxu0
  %v8481 = vadd.f32 0.0, %v8480
  %v8482 = vpop.f32.mrf.mxu0
  %v8483 = vadd.f32 0.0, %v8482
  %8484 = vmatmul.bf16.gmra.mxu0 %v8160
  %v8485 = vpop.f32.mrf.mxu0
  %v8486 = vadd.f32 0.0, %v8485
  %v8487 = vpop.f32.mrf.mxu0
  %v8488 = vadd.f32 0.0, %v8487
  %8489 = vmatmul.bf16.gmra.mxu0 %v8163
  %v8490 = vpop.f32.mrf.mxu0
  %v8491 = vadd.f32 0.0, %v8490
  %v8492 = vpop.f32.mrf.mxu0
  %v8493 = vadd.f32 0.0, %v8492
  %8494 = vmatmul.bf16.gmra.mxu0 %v8166
  %v8495 = vpop.f32.mrf.mxu0
  %v8496 = vadd.f32 0.0, %v8495
  %v8497 = vpop.f32.mrf.mxu0
  %v8498 = vadd.f32 0.0, %v8497
  %8499 = vmatmul.bf16.gmra.mxu0 %v8169
  %v8500 = vpop.f32.mrf.mxu0
  %v8501 = vadd.f32 0.0, %v8500
  %v8502 = vpop.f32.mrf.mxu0
  %v8503 = vadd.f32 0.0, %v8502
  %8504 = vmatmul.bf16.gmra.mxu0 %v8172
  %v8505 = vpop.f32.mrf.mxu0
  %v8506 = vadd.f32 0.0, %v8505
  %v8507 = vpop.f32.mrf.mxu0
  %v8508 = vadd.f32 0.0, %v8507
  %8509 = vmatmul.bf16.gmra.mxu0 %v8175
  %v8510 = vpop.f32.mrf.mxu0
  %v8511 = vadd.f32 0.0, %v8510
  %v8512 = vpop.f32.mrf.mxu0
  %v8513 = vadd.f32 0.0, %v8512
  %8514 = vmatmul.bf16.gmra.mxu0 %v8178
  %v8515 = vpop.f32.mrf.mxu0
  %v8516 = vadd.f32 0.0, %v8515
  %v8517 = vpop.f32.mrf.mxu0
  %v8518 = vadd.f32 0.0, %v8517
  %8519 = vmatmul.bf16.gmra.mxu0 %v8181
  %v8520 = vpop.f32.mrf.mxu0
  %v8521 = vadd.f32 0.0, %v8520
  %v8522 = vpop.f32.mrf.mxu0
  %v8523 = vadd.f32 0.0, %v8522
  %8524 = vmatmul.bf16.gmra.mxu0 %v8184
  %v8525 = vpop.f32.mrf.mxu0
  %v8526 = vadd.f32 0.0, %v8525
  %v8527 = vpop.f32.mrf.mxu0
  %v8528 = vadd.f32 0.0, %v8527
  %8529 = vdwg.mxu0
  %v8530 = vadd.f32 %v7799, %v8202
  %v8531 = vadd.f32 %v7800, %v8371
  %v8532 = vadd.f32 %v7801, %v8204
  %v8533 = vadd.f32 %v7802, %v8373
  %v8534 = vadd.f32 %v7803, %v8207
  %v8535 = vadd.f32 %v7804, %v8376
  %v8536 = vadd.f32 %v7805, %v8209
  %v8537 = vadd.f32 %v7806, %v8378
  %v8538 = vadd.f32 %v7807, %v8212
  %v8539 = vadd.f32 %v7808, %v8381
  %v8540 = vadd.f32 %v7809, %v8214
  %v8541 = vadd.f32 %v7810, %v8383
  %v8542 = vadd.f32 %v7811, %v8217
  %v8543 = vadd.f32 %v7812, %v8386
  %v8544 = vadd.f32 %v7813, %v8219
  %v8545 = vadd.f32 %v7814, %v8388
  %v8546 = vadd.f32 %v7815, %v8222
  %v8547 = vadd.f32 %v7816, %v8391
  %v8548 = vadd.f32 %v7817, %v8224
  %v8549 = vadd.f32 %v7818, %v8393
  %v8550 = vadd.f32 %v7819, %v8227
  %v8551 = vadd.f32 %v7820, %v8396
  %v8552 = vadd.f32 %v7821, %v8229
  %v8553 = vadd.f32 %v7822, %v8398
  %v8554 = vadd.f32 %v7823, %v8232
  %v8555 = vadd.f32 %v7824, %v8401
  %v8556 = vadd.f32 %v7825, %v8234
  %v8557 = vadd.f32 %v7826, %v8403
  %v8558 = vadd.f32 %v7827, %v8237
  %v8559 = vadd.f32 %v7828, %v8406
  %v8560 = vadd.f32 %v7829, %v8239
  %v8561 = vadd.f32 %v7830, %v8408
  %v8562 = vadd.f32 %v7831, %v8242
  %v8563 = vadd.f32 %v7832, %v8411
  %v8564 = vadd.f32 %v7833, %v8244
  %v8565 = vadd.f32 %v7834, %v8413
  %v8566 = vadd.f32 %v7835, %v8247
  %v8567 = vadd.f32 %v7836, %v8416
  %v8568 = vadd.f32 %v7837, %v8249
  %v8569 = vadd.f32 %v7838, %v8418
  %v8570 = vadd.f32 %v7839, %v8252
  %v8571 = vadd.f32 %v7840, %v8421
  %v8572 = vadd.f32 %v7841, %v8254
  %v8573 = vadd.f32 %v7842, %v8423
  %v8574 = vadd.f32 %v7843, %v8257
  %v8575 = vadd.f32 %v7844, %v8426
  %v8576 = vadd.f32 %v7845, %v8259
  %v8577 = vadd.f32 %v7846, %v8428
  %v8578 = vadd.f32 %v7847, %v8262
  %v8579 = vadd.f32 %v7848, %v8431
  %v8580 = vadd.f32 %v7849, %v8264
  %v8581 = vadd.f32 %v7850, %v8433
  %v8582 = vadd.f32 %v7851, %v8267
  %v8583 = vadd.f32 %v7852, %v8436
  %v8584 = vadd.f32 %v7853, %v8269
  %v8585 = vadd.f32 %v7854, %v8438
  %v8586 = vadd.f32 %v7855, %v8272
  %v8587 = vadd.f32 %v7856, %v8441
  %v8588 = vadd.f32 %v7857, %v8274
  %v8589 = vadd.f32 %v7858, %v8443
  %v8590 = vadd.f32 %v7859, %v8277
  %v8591 = vadd.f32 %v7860, %v8446
  %v8592 = vadd.f32 %v7861, %v8279
  %v8593 = vadd.f32 %v7862, %v8448
  %v8594 = vadd.f32 %v7863, %v8282
  %v8595 = vadd.f32 %v7864, %v8451
  %v8596 = vadd.f32 %v7865, %v8284
  %v8597 = vadd.f32 %v7866, %v8453
  %v8598 = vadd.f32 %v7867, %v8287
  %v8599 = vadd.f32 %v7868, %v8456
  %v8600 = vadd.f32 %v7869, %v8289
  %v8601 = vadd.f32 %v7870, %v8458
  %v8602 = vadd.f32 %v7871, %v8292
  %v8603 = vadd.f32 %v7872, %v8461
  %v8604 = vadd.f32 %v7873, %v8294
  %v8605 = vadd.f32 %v7874, %v8463
  %v8606 = vadd.f32 %v7875, %v8297
  %v8607 = vadd.f32 %v7876, %v8466
  %v8608 = vadd.f32 %v7877, %v8299
  %v8609 = vadd.f32 %v7878, %v8468
  %v8610 = vadd.f32 %v7879, %v8302
  %v8611 = vadd.f32 %v7880, %v8471
  %v8612 = vadd.f32 %v7881, %v8304
  %v8613 = vadd.f32 %v7882, %v8473
  %v8614 = vadd.f32 %v7883, %v8307
  %v8615 = vadd.f32 %v7884, %v8476
  %v8616 = vadd.f32 %v7885, %v8309
  %v8617 = vadd.f32 %v7886, %v8478
  %v8618 = vadd.f32 %v7887, %v8312
  %v8619 = vadd.f32 %v7888, %v8481
  %v8620 = vadd.f32 %v7889, %v8314
  %v8621 = vadd.f32 %v7890, %v8483
  %v8622 = vadd.f32 %v7891, %v8317
  %v8623 = vadd.f32 %v7892, %v8486
  %v8624 = vadd.f32 %v7893, %v8319
  %v8625 = vadd.f32 %v7894, %v8488
  %v8626 = vadd.f32 %v7895, %v8322
  %v8627 = vadd.f32 %v7896, %v8491
  %v8628 = vadd.f32 %v7897, %v8324
  %v8629 = vadd.f32 %v7898, %v8493
  %v8630 = vadd.f32 %v7899, %v8327
  %v8631 = vadd.f32 %v7900, %v8496
  %v8632 = vadd.f32 %v7901, %v8329
  %v8633 = vadd.f32 %v7902, %v8498
  %v8634 = vadd.f32 %v7903, %v8332
  %v8635 = vadd.f32 %v7904, %v8501
  %v8636 = vadd.f32 %v7905, %v8334
  %v8637 = vadd.f32 %v7906, %v8503
  %v8638 = vadd.f32 %v7907, %v8337
  %v8639 = vadd.f32 %v7908, %v8506
  %v8640 = vadd.f32 %v7909, %v8339
  %v8641 = vadd.f32 %v7910, %v8508
  %v8642 = vadd.f32 %v7911, %v8342
  %v8643 = vadd.f32 %v7912, %v8511
  %v8644 = vadd.f32 %v7913, %v8344
  %v8645 = vadd.f32 %v7914, %v8513
  %v8646 = vadd.f32 %v7915, %v8347
  %v8647 = vadd.f32 %v7916, %v8516
  %v8648 = vadd.f32 %v7917, %v8349
  %v8649 = vadd.f32 %v7918, %v8518
  %v8650 = vadd.f32 %v7919, %v8352
  %v8651 = vadd.f32 %v7920, %v8521
  %v8652 = vadd.f32 %v7921, %v8354
  %v8653 = vadd.f32 %v7922, %v8523
  %v8654 = vadd.f32 %v7923, %v8357
  %v8655 = vadd.f32 %v7924, %v8526
  %v8656 = vadd.f32 %v7925, %v8359
  %v8657 = vadd.f32 %v7926, %v8528
  %8658 = vst [vmem:[#allocation4] sm:$0xff] %v8530
  %8659 = vst.msk [vmem:[#allocation4 + $0x8] sm:$0xff] %vm875, %v8531
  %8660 = vst [vmem:[#allocation4 + $0x10] sm:$0xff] %v8532
  %8661 = vst.msk [vmem:[#allocation4 + $0x18] sm:$0xff] %vm875, %v8533
  %8662 = vst [vmem:[#allocation4 + $0x20] sm:$0xff] %v8534
  %8663 = vst.msk [vmem:[#allocation4 + $0x28] sm:$0xff] %vm875, %v8535
  %8664 = vst [vmem:[#allocation4 + $0x30] sm:$0xff] %v8536
  %8665 = vst.msk [vmem:[#allocation4 + $0x38] sm:$0xff] %vm875, %v8537
  %8666 = vst [vmem:[#allocation4 + $0x40] sm:$0xff] %v8538
  %8667 = vst.msk [vmem:[#allocation4 + $0x48] sm:$0xff] %vm875, %v8539
  %8668 = vst [vmem:[#allocation4 + $0x50] sm:$0xff] %v8540
  %8669 = vst.msk [vmem:[#allocation4 + $0x58] sm:$0xff] %vm875, %v8541
  %8670 = vst [vmem:[#allocation4 + $0x60] sm:$0xff] %v8542
  %8671 = vst.msk [vmem:[#allocation4 + $0x68] sm:$0xff] %vm875, %v8543
  %8672 = vst [vmem:[#allocation4 + $0x70] sm:$0xff] %v8544
  %8673 = vst.msk [vmem:[#allocation4 + $0x78] sm:$0xff] %vm875, %v8545
  %8674 = vst [vmem:[#allocation4 + $0x80] sm:$0xff] %v8546
  %8675 = vst.msk [vmem:[#allocation4 + $0x88] sm:$0xff] %vm875, %v8547
  %8676 = vst [vmem:[#allocation4 + $0x90] sm:$0xff] %v8548
  %8677 = vst.msk [vmem:[#allocation4 + $0x98] sm:$0xff] %vm875, %v8549
  %8678 = vst [vmem:[#allocation4 + $0xa0] sm:$0xff] %v8550
  %8679 = vst.msk [vmem:[#allocation4 + $0xa8] sm:$0xff] %vm875, %v8551
  %8680 = vst [vmem:[#allocation4 + $0xb0] sm:$0xff] %v8552
  %8681 = vst.msk [vmem:[#allocation4 + $0xb8] sm:$0xff] %vm875, %v8553
  %8682 = vst [vmem:[#allocation4 + $0xc0] sm:$0xff] %v8554
  %8683 = vst.msk [vmem:[#allocation4 + $0xc8] sm:$0xff] %vm875, %v8555
  %8684 = vst [vmem:[#allocation4 + $0xd0] sm:$0xff] %v8556
  %8685 = vst.msk [vmem:[#allocation4 + $0xd8] sm:$0xff] %vm875, %v8557
  %8686 = vst [vmem:[#allocation4 + $0xe0] sm:$0xff] %v8558
  %8687 = vst.msk [vmem:[#allocation4 + $0xe8] sm:$0xff] %vm875, %v8559
  %8688 = vst [vmem:[#allocation4 + $0xf0] sm:$0xff] %v8560
  %8689 = vst.msk [vmem:[#allocation4 + $0xf8] sm:$0xff] %vm875, %v8561
  %8690 = vst [vmem:[#allocation4 + $0x100] sm:$0xff] %v8562
  %8691 = vst.msk [vmem:[#allocation4 + $0x108] sm:$0xff] %vm875, %v8563
  %8692 = vst [vmem:[#allocation4 + $0x110] sm:$0xff] %v8564
  %8693 = vst.msk [vmem:[#allocation4 + $0x118] sm:$0xff] %vm875, %v8565
  %8694 = vst [vmem:[#allocation4 + $0x120] sm:$0xff] %v8566
  %8695 = vst.msk [vmem:[#allocation4 + $0x128] sm:$0xff] %vm875, %v8567
  %8696 = vst [vmem:[#allocation4 + $0x130] sm:$0xff] %v8568
  %8697 = vst.msk [vmem:[#allocation4 + $0x138] sm:$0xff] %vm875, %v8569
  %8698 = vst [vmem:[#allocation4 + $0x140] sm:$0xff] %v8570
  %8699 = vst.msk [vmem:[#allocation4 + $0x148] sm:$0xff] %vm875, %v8571
  %8700 = vst [vmem:[#allocation4 + $0x150] sm:$0xff] %v8572
  %8701 = vst.msk [vmem:[#allocation4 + $0x158] sm:$0xff] %vm875, %v8573
  %8702 = vst [vmem:[#allocation4 + $0x160] sm:$0xff] %v8574
  %8703 = vst.msk [vmem:[#allocation4 + $0x168] sm:$0xff] %vm875, %v8575
  %8704 = vst [vmem:[#allocation4 + $0x170] sm:$0xff] %v8576
  %8705 = vst.msk [vmem:[#allocation4 + $0x178] sm:$0xff] %vm875, %v8577
  %8706 = vst [vmem:[#allocation4 + $0x180] sm:$0xff] %v8578
  %8707 = vst.msk [vmem:[#allocation4 + $0x188] sm:$0xff] %vm875, %v8579
  %8708 = vst [vmem:[#allocation4 + $0x190] sm:$0xff] %v8580
  %8709 = vst.msk [vmem:[#allocation4 + $0x198] sm:$0xff] %vm875, %v8581
  %8710 = vst [vmem:[#allocation4 + $0x1a0] sm:$0xff] %v8582
  %8711 = vst.msk [vmem:[#allocation4 + $0x1a8] sm:$0xff] %vm875, %v8583
  %8712 = vst [vmem:[#allocation4 + $0x1b0] sm:$0xff] %v8584
  %8713 = vst.msk [vmem:[#allocation4 + $0x1b8] sm:$0xff] %vm875, %v8585
  %8714 = vst [vmem:[#allocation4 + $0x1c0] sm:$0xff] %v8586
  %8715 = vst.msk [vmem:[#allocation4 + $0x1c8] sm:$0xff] %vm875, %v8587
  %8716 = vst [vmem:[#allocation4 + $0x1d0] sm:$0xff] %v8588
  %8717 = vst.msk [vmem:[#allocation4 + $0x1d8] sm:$0xff] %vm875, %v8589
  %8718 = vst [vmem:[#allocation4 + $0x1e0] sm:$0xff] %v8590
  %8719 = vst.msk [vmem:[#allocation4 + $0x1e8] sm:$0xff] %vm875, %v8591
  %8720 = vst [vmem:[#allocation4 + $0x1f0] sm:$0xff] %v8592
  %8721 = vst.msk [vmem:[#allocation4 + $0x1f8] sm:$0xff] %vm875, %v8593
  %8722 = vst [vmem:[#allocation4 + $0x200] sm:$0xff] %v8594
  %8723 = vst.msk [vmem:[#allocation4 + $0x208] sm:$0xff] %vm875, %v8595
  %8724 = vst [vmem:[#allocation4 + $0x210] sm:$0xff] %v8596
  %8725 = vst.msk [vmem:[#allocation4 + $0x218] sm:$0xff] %vm875, %v8597
  %8726 = vst [vmem:[#allocation4 + $0x220] sm:$0xff] %v8598
  %8727 = vst.msk [vmem:[#allocation4 + $0x228] sm:$0xff] %vm875, %v8599
  %8728 = vst [vmem:[#allocation4 + $0x230] sm:$0xff] %v8600
  %8729 = vst.msk [vmem:[#allocation4 + $0x238] sm:$0xff] %vm875, %v8601
  %8730 = vst [vmem:[#allocation4 + $0x240] sm:$0xff] %v8602
  %8731 = vst.msk [vmem:[#allocation4 + $0x248] sm:$0xff] %vm875, %v8603
  %8732 = vst [vmem:[#allocation4 + $0x250] sm:$0xff] %v8604
  %8733 = vst.msk [vmem:[#allocation4 + $0x258] sm:$0xff] %vm875, %v8605
  %8734 = vst [vmem:[#allocation4 + $0x260] sm:$0xff] %v8606
  %8735 = vst.msk [vmem:[#allocation4 + $0x268] sm:$0xff] %vm875, %v8607
  %8736 = vst [vmem:[#allocation4 + $0x270] sm:$0xff] %v8608
  %8737 = vst.msk [vmem:[#allocation4 + $0x278] sm:$0xff] %vm875, %v8609
  %8738 = vst [vmem:[#allocation4 + $0x280] sm:$0xff] %v8610
  %8739 = vst.msk [vmem:[#allocation4 + $0x288] sm:$0xff] %vm875, %v8611
  %8740 = vst [vmem:[#allocation4 + $0x290] sm:$0xff] %v8612
  %8741 = vst.msk [vmem:[#allocation4 + $0x298] sm:$0xff] %vm875, %v8613
  %8742 = vst [vmem:[#allocation4 + $0x2a0] sm:$0xff] %v8614
  %8743 = vst.msk [vmem:[#allocation4 + $0x2a8] sm:$0xff] %vm875, %v8615
  %8744 = vst [vmem:[#allocation4 + $0x2b0] sm:$0xff] %v8616
  %8745 = vst.msk [vmem:[#allocation4 + $0x2b8] sm:$0xff] %vm875, %v8617
  %8746 = vst [vmem:[#allocation4 + $0x2c0] sm:$0xff] %v8618
  %8747 = vst.msk [vmem:[#allocation4 + $0x2c8] sm:$0xff] %vm875, %v8619
  %8748 = vst [vmem:[#allocation4 + $0x2d0] sm:$0xff] %v8620
  %8749 = vst.msk [vmem:[#allocation4 + $0x2d8] sm:$0xff] %vm875, %v8621
  %8750 = vst [vmem:[#allocation4 + $0x2e0] sm:$0xff] %v8622
  %8751 = vst.msk [vmem:[#allocation4 + $0x2e8] sm:$0xff] %vm875, %v8623
  %8752 = vst [vmem:[#allocation4 + $0x2f0] sm:$0xff] %v8624
  %8753 = vst.msk [vmem:[#allocation4 + $0x2f8] sm:$0xff] %vm875, %v8625
  %8754 = vst [vmem:[#allocation4 + $0x300] sm:$0xff] %v8626
  %8755 = vst.msk [vmem:[#allocation4 + $0x308] sm:$0xff] %vm875, %v8627
  %8756 = vst [vmem:[#allocation4 + $0x310] sm:$0xff] %v8628
  %8757 = vst.msk [vmem:[#allocation4 + $0x318] sm:$0xff] %vm875, %v8629
  %8758 = vst [vmem:[#allocation4 + $0x320] sm:$0xff] %v8630
  %8759 = vst.msk [vmem:[#allocation4 + $0x328] sm:$0xff] %vm875, %v8631
  %8760 = vst [vmem:[#allocation4 + $0x330] sm:$0xff] %v8632
  %8761 = vst.msk [vmem:[#allocation4 + $0x338] sm:$0xff] %vm875, %v8633
  %8762 = vst [vmem:[#allocation4 + $0x340] sm:$0xff] %v8634
  %8763 = vst.msk [vmem:[#allocation4 + $0x348] sm:$0xff] %vm875, %v8635
  %8764 = vst [vmem:[#allocation4 + $0x350] sm:$0xff] %v8636
  %8765 = vst.msk [vmem:[#allocation4 + $0x358] sm:$0xff] %vm875, %v8637
  %8766 = vst [vmem:[#allocation4 + $0x360] sm:$0xff] %v8638
  %8767 = vst.msk [vmem:[#allocation4 + $0x368] sm:$0xff] %vm875, %v8639
  %8768 = vst [vmem:[#allocation4 + $0x370] sm:$0xff] %v8640
  %8769 = vst.msk [vmem:[#allocation4 + $0x378] sm:$0xff] %vm875, %v8641
  %8770 = vst [vmem:[#allocation4 + $0x380] sm:$0xff] %v8642
  %8771 = vst.msk [vmem:[#allocation4 + $0x388] sm:$0xff] %vm875, %v8643
  %8772 = vst [vmem:[#allocation4 + $0x390] sm:$0xff] %v8644
  %8773 = vst.msk [vmem:[#allocation4 + $0x398] sm:$0xff] %vm875, %v8645
  %8774 = vst [vmem:[#allocation4 + $0x3a0] sm:$0xff] %v8646
  %8775 = vst.msk [vmem:[#allocation4 + $0x3a8] sm:$0xff] %vm875, %v8647
  %8776 = vst [vmem:[#allocation4 + $0x3b0] sm:$0xff] %v8648
  %8777 = vst.msk [vmem:[#allocation4 + $0x3b8] sm:$0xff] %vm875, %v8649
  %8778 = vst [vmem:[#allocation4 + $0x3c0] sm:$0xff] %v8650
  %8779 = vst.msk [vmem:[#allocation4 + $0x3c8] sm:$0xff] %vm875, %v8651
  %8780 = vst [vmem:[#allocation4 + $0x3d0] sm:$0xff] %v8652
  %8781 = vst.msk [vmem:[#allocation4 + $0x3d8] sm:$0xff] %vm875, %v8653
  %8782 = vst [vmem:[#allocation4 + $0x3e0] sm:$0xff] %v8654
  %8783 = vst.msk [vmem:[#allocation4 + $0x3e8] sm:$0xff] %vm875, %v8655
  %8784 = vst [vmem:[#allocation4 + $0x3f0] sm:$0xff] %v8656
  %8785 = vst.msk [vmem:[#allocation4 + $0x3f8] sm:$0xff] %vm875, %v8657
  %v8786 = vld [vmem:[#allocation4] sm:$0xff]
  %v8787 = vld [vmem:[#allocation4 + $0x8] sm:$0xff]
  %v8788 = vld [vmem:[#allocation4 + $0x10] sm:$0xff]
  %v8789 = vld [vmem:[#allocation4 + $0x18] sm:$0xff]
  %v8790 = vld [vmem:[#allocation4 + $0x20] sm:$0xff]
  %v8791 = vld [vmem:[#allocation4 + $0x28] sm:$0xff]
  %v8792 = vld [vmem:[#allocation4 + $0x30] sm:$0xff]
  %v8793 = vld [vmem:[#allocation4 + $0x38] sm:$0xff]
  %v8794 = vld [vmem:[#allocation4 + $0x40] sm:$0xff]
  %v8795 = vld [vmem:[#allocation4 + $0x48] sm:$0xff]
  %v8796 = vld [vmem:[#allocation4 + $0x50] sm:$0xff]
  %v8797 = vld [vmem:[#allocation4 + $0x58] sm:$0xff]
  %v8798 = vld [vmem:[#allocation4 + $0x60] sm:$0xff]
  %v8799 = vld [vmem:[#allocation4 + $0x68] sm:$0xff]
  %v8800 = vld [vmem:[#allocation4 + $0x70] sm:$0xff]
  %v8801 = vld [vmem:[#allocation4 + $0x78] sm:$0xff]
  %v8802 = vld [vmem:[#allocation4 + $0x80] sm:$0xff]
  %v8803 = vld [vmem:[#allocation4 + $0x88] sm:$0xff]
  %v8804 = vld [vmem:[#allocation4 + $0x90] sm:$0xff]
  %v8805 = vld [vmem:[#allocation4 + $0x98] sm:$0xff]
  %v8806 = vld [vmem:[#allocation4 + $0xa0] sm:$0xff]
  %v8807 = vld [vmem:[#allocation4 + $0xa8] sm:$0xff]
  %v8808 = vld [vmem:[#allocation4 + $0xb0] sm:$0xff]
  %v8809 = vld [vmem:[#allocation4 + $0xb8] sm:$0xff]
  %v8810 = vld [vmem:[#allocation4 + $0xc0] sm:$0xff]
  %v8811 = vld [vmem:[#allocation4 + $0xc8] sm:$0xff]
  %v8812 = vld [vmem:[#allocation4 + $0xd0] sm:$0xff]
  %v8813 = vld [vmem:[#allocation4 + $0xd8] sm:$0xff]
  %v8814 = vld [vmem:[#allocation4 + $0xe0] sm:$0xff]
  %v8815 = vld [vmem:[#allocation4 + $0xe8] sm:$0xff]
  %v8816 = vld [vmem:[#allocation4 + $0xf0] sm:$0xff]
  %v8817 = vld [vmem:[#allocation4 + $0xf8] sm:$0xff]
  %v8818 = vld [vmem:[#allocation4 + $0x100] sm:$0xff]
  %v8819 = vld [vmem:[#allocation4 + $0x108] sm:$0xff]
  %v8820 = vld [vmem:[#allocation4 + $0x110] sm:$0xff]
  %v8821 = vld [vmem:[#allocation4 + $0x118] sm:$0xff]
  %v8822 = vld [vmem:[#allocation4 + $0x120] sm:$0xff]
  %v8823 = vld [vmem:[#allocation4 + $0x128] sm:$0xff]
  %v8824 = vld [vmem:[#allocation4 + $0x130] sm:$0xff]
  %v8825 = vld [vmem:[#allocation4 + $0x138] sm:$0xff]
  %v8826 = vld [vmem:[#allocation4 + $0x140] sm:$0xff]
  %v8827 = vld [vmem:[#allocation4 + $0x148] sm:$0xff]
  %v8828 = vld [vmem:[#allocation4 + $0x150] sm:$0xff]
  %v8829 = vld [vmem:[#allocation4 + $0x158] sm:$0xff]
  %v8830 = vld [vmem:[#allocation4 + $0x160] sm:$0xff]
  %v8831 = vld [vmem:[#allocation4 + $0x168] sm:$0xff]
  %v8832 = vld [vmem:[#allocation4 + $0x170] sm:$0xff]
  %v8833 = vld [vmem:[#allocation4 + $0x178] sm:$0xff]
  %v8834 = vld [vmem:[#allocation4 + $0x180] sm:$0xff]
  %v8835 = vld [vmem:[#allocation4 + $0x188] sm:$0xff]
  %v8836 = vld [vmem:[#allocation4 + $0x190] sm:$0xff]
  %v8837 = vld [vmem:[#allocation4 + $0x198] sm:$0xff]
  %v8838 = vld [vmem:[#allocation4 + $0x1a0] sm:$0xff]
  %v8839 = vld [vmem:[#allocation4 + $0x1a8] sm:$0xff]
  %v8840 = vld [vmem:[#allocation4 + $0x1b0] sm:$0xff]
  %v8841 = vld [vmem:[#allocation4 + $0x1b8] sm:$0xff]
  %v8842 = vld [vmem:[#allocation4 + $0x1c0] sm:$0xff]
  %v8843 = vld [vmem:[#allocation4 + $0x1c8] sm:$0xff]
  %v8844 = vld [vmem:[#allocation4 + $0x1d0] sm:$0xff]
  %v8845 = vld [vmem:[#allocation4 + $0x1d8] sm:$0xff]
  %v8846 = vld [vmem:[#allocation4 + $0x1e0] sm:$0xff]
  %v8847 = vld [vmem:[#allocation4 + $0x1e8] sm:$0xff]
  %v8848 = vld [vmem:[#allocation4 + $0x1f0] sm:$0xff]
  %v8849 = vld [vmem:[#allocation4 + $0x1f8] sm:$0xff]
  %v8850 = vld [vmem:[#allocation4 + $0x200] sm:$0xff]
  %v8851 = vld [vmem:[#allocation4 + $0x208] sm:$0xff]
  %v8852 = vld [vmem:[#allocation4 + $0x210] sm:$0xff]
  %v8853 = vld [vmem:[#allocation4 + $0x218] sm:$0xff]
  %v8854 = vld [vmem:[#allocation4 + $0x220] sm:$0xff]
  %v8855 = vld [vmem:[#allocation4 + $0x228] sm:$0xff]
  %v8856 = vld [vmem:[#allocation4 + $0x230] sm:$0xff]
  %v8857 = vld [vmem:[#allocation4 + $0x238] sm:$0xff]
  %v8858 = vld [vmem:[#allocation4 + $0x240] sm:$0xff]
  %v8859 = vld [vmem:[#allocation4 + $0x248] sm:$0xff]
  %v8860 = vld [vmem:[#allocation4 + $0x250] sm:$0xff]
  %v8861 = vld [vmem:[#allocation4 + $0x258] sm:$0xff]
  %v8862 = vld [vmem:[#allocation4 + $0x260] sm:$0xff]
  %v8863 = vld [vmem:[#allocation4 + $0x268] sm:$0xff]
  %v8864 = vld [vmem:[#allocation4 + $0x270] sm:$0xff]
  %v8865 = vld [vmem:[#allocation4 + $0x278] sm:$0xff]
  %v8866 = vld [vmem:[#allocation4 + $0x280] sm:$0xff]
  %v8867 = vld [vmem:[#allocation4 + $0x288] sm:$0xff]
  %v8868 = vld [vmem:[#allocation4 + $0x290] sm:$0xff]
  %v8869 = vld [vmem:[#allocation4 + $0x298] sm:$0xff]
  %v8870 = vld [vmem:[#allocation4 + $0x2a0] sm:$0xff]
  %v8871 = vld [vmem:[#allocation4 + $0x2a8] sm:$0xff]
  %v8872 = vld [vmem:[#allocation4 + $0x2b0] sm:$0xff]
  %v8873 = vld [vmem:[#allocation4 + $0x2b8] sm:$0xff]
  %v8874 = vld [vmem:[#allocation4 + $0x2c0] sm:$0xff]
  %v8875 = vld [vmem:[#allocation4 + $0x2c8] sm:$0xff]
  %v8876 = vld [vmem:[#allocation4 + $0x2d0] sm:$0xff]
  %v8877 = vld [vmem:[#allocation4 + $0x2d8] sm:$0xff]
  %v8878 = vld [vmem:[#allocation4 + $0x2e0] sm:$0xff]
  %v8879 = vld [vmem:[#allocation4 + $0x2e8] sm:$0xff]
  %v8880 = vld [vmem:[#allocation4 + $0x2f0] sm:$0xff]
  %v8881 = vld [vmem:[#allocation4 + $0x2f8] sm:$0xff]
  %v8882 = vld [vmem:[#allocation4 + $0x300] sm:$0xff]
  %v8883 = vld [vmem:[#allocation4 + $0x308] sm:$0xff]
  %v8884 = vld [vmem:[#allocation4 + $0x310] sm:$0xff]
  %v8885 = vld [vmem:[#allocation4 + $0x318] sm:$0xff]
  %v8886 = vld [vmem:[#allocation4 + $0x320] sm:$0xff]
  %v8887 = vld [vmem:[#allocation4 + $0x328] sm:$0xff]
  %v8888 = vld [vmem:[#allocation4 + $0x330] sm:$0xff]
  %v8889 = vld [vmem:[#allocation4 + $0x338] sm:$0xff]
  %v8890 = vld [vmem:[#allocation4 + $0x340] sm:$0xff]
  %v8891 = vld [vmem:[#allocation4 + $0x348] sm:$0xff]
  %v8892 = vld [vmem:[#allocation4 + $0x350] sm:$0xff]
  %v8893 = vld [vmem:[#allocation4 + $0x358] sm:$0xff]
  %v8894 = vld [vmem:[#allocation4 + $0x360] sm:$0xff]
  %v8895 = vld [vmem:[#allocation4 + $0x368] sm:$0xff]
  %v8896 = vld [vmem:[#allocation4 + $0x370] sm:$0xff]
  %v8897 = vld [vmem:[#allocation4 + $0x378] sm:$0xff]
  %v8898 = vld [vmem:[#allocation4 + $0x380] sm:$0xff]
  %v8899 = vld [vmem:[#allocation4 + $0x388] sm:$0xff]
  %v8900 = vld [vmem:[#allocation4 + $0x390] sm:$0xff]
  %v8901 = vld [vmem:[#allocation4 + $0x398] sm:$0xff]
  %v8902 = vld [vmem:[#allocation4 + $0x3a0] sm:$0xff]
  %v8903 = vld [vmem:[#allocation4 + $0x3a8] sm:$0xff]
  %v8904 = vld [vmem:[#allocation4 + $0x3b0] sm:$0xff]
  %v8905 = vld [vmem:[#allocation4 + $0x3b8] sm:$0xff]
  %v8906 = vld [vmem:[#allocation4 + $0x3c0] sm:$0xff]
  %v8907 = vld [vmem:[#allocation4 + $0x3c8] sm:$0xff]
  %v8908 = vld [vmem:[#allocation4 + $0x3d0] sm:$0xff]
  %v8909 = vld [vmem:[#allocation4 + $0x3d8] sm:$0xff]
  %v8910 = vld [vmem:[#allocation4 + $0x3e0] sm:$0xff]
  %v8911 = vld [vmem:[#allocation4 + $0x3e8] sm:$0xff]
  %v8912 = vld [vmem:[#allocation4 + $0x3f0] sm:$0xff]
  %v8913 = vld [vmem:[#allocation4 + $0x3f8] sm:$0xff]
  %v8914 = vld [vmem:[#allocation3 + $0x4] sm:$0xff]
  %v8915 = vld [vmem:[#allocation3 + $0xc] sm:$0xff]
  %v8916 = vld [vmem:[#allocation3 + $0x14] sm:$0xff]
  %v8917 = vld [vmem:[#allocation3 + $0x1c] sm:$0xff]
  %v8918 = vld [vmem:[#allocation3 + $0x24] sm:$0xff]
  %v8919 = vld [vmem:[#allocation3 + $0x2c] sm:$0xff]
  %v8920 = vld [vmem:[#allocation3 + $0x34] sm:$0xff]
  %v8921 = vld [vmem:[#allocation3 + $0x3c] sm:$0xff]
  %v8922 = vld [vmem:[#allocation3 + $0x44] sm:$0xff]
  %v8923 = vld [vmem:[#allocation3 + $0x4c] sm:$0xff]
  %v8924 = vld [vmem:[#allocation3 + $0x54] sm:$0xff]
  %v8925 = vld [vmem:[#allocation3 + $0x5c] sm:$0xff]
  %v8926 = vld [vmem:[#allocation3 + $0x64] sm:$0xff]
  %v8927 = vld [vmem:[#allocation3 + $0x6c] sm:$0xff]
  %v8928 = vld [vmem:[#allocation3 + $0x74] sm:$0xff]
  %v8929 = vld [vmem:[#allocation3 + $0x7c] sm:$0xff]
  %v8930 = vld [vmem:[#allocation3 + $0x84] sm:$0xff]
  %v8931 = vld [vmem:[#allocation3 + $0x8c] sm:$0xff]
  %v8932 = vld [vmem:[#allocation3 + $0x94] sm:$0xff]
  %v8933 = vld [vmem:[#allocation3 + $0x9c] sm:$0xff]
  %v8934 = vld [vmem:[#allocation3 + $0xa4] sm:$0xff]
  %v8935 = vld [vmem:[#allocation3 + $0xac] sm:$0xff]
  %v8936 = vld [vmem:[#allocation3 + $0xb4] sm:$0xff]
  %v8937 = vld [vmem:[#allocation3 + $0xbc] sm:$0xff]
  %v8938 = vld [vmem:[#allocation3 + $0xc4] sm:$0xff]
  %v8939 = vld [vmem:[#allocation3 + $0xcc] sm:$0xff]
  %v8940 = vld [vmem:[#allocation3 + $0xd4] sm:$0xff]
  %v8941 = vld [vmem:[#allocation3 + $0xdc] sm:$0xff]
  %v8942 = vld [vmem:[#allocation3 + $0xe4] sm:$0xff]
  %v8943 = vld [vmem:[#allocation3 + $0xec] sm:$0xff]
  %v8944 = vld [vmem:[#allocation3 + $0xf4] sm:$0xff]
  %v8945 = vld [vmem:[#allocation3 + $0xfc] sm:$0xff]
  %v8946 = vld [vmem:[#allocation3 + $0x104] sm:$0xff]
  %v8947 = vld [vmem:[#allocation3 + $0x10c] sm:$0xff]
  %v8948 = vld [vmem:[#allocation3 + $0x114] sm:$0xff]
  %v8949 = vld [vmem:[#allocation3 + $0x11c] sm:$0xff]
  %v8950 = vld [vmem:[#allocation3 + $0x124] sm:$0xff]
  %v8951 = vld [vmem:[#allocation3 + $0x12c] sm:$0xff]
  %v8952 = vld [vmem:[#allocation3 + $0x134] sm:$0xff]
  %v8953 = vld [vmem:[#allocation3 + $0x13c] sm:$0xff]
  %v8954 = vld [vmem:[#allocation3 + $0x144] sm:$0xff]
  %v8955 = vld [vmem:[#allocation3 + $0x14c] sm:$0xff]
  %v8956 = vld [vmem:[#allocation3 + $0x154] sm:$0xff]
  %v8957 = vld [vmem:[#allocation3 + $0x15c] sm:$0xff]
  %v8958 = vld [vmem:[#allocation3 + $0x164] sm:$0xff]
  %v8959 = vld [vmem:[#allocation3 + $0x16c] sm:$0xff]
  %v8960 = vld [vmem:[#allocation3 + $0x174] sm:$0xff]
  %v8961 = vld [vmem:[#allocation3 + $0x17c] sm:$0xff]
  %v8962 = vld [vmem:[#allocation3 + $0x184] sm:$0xff]
  %v8963 = vld [vmem:[#allocation3 + $0x18c] sm:$0xff]
  %v8964 = vld [vmem:[#allocation3 + $0x194] sm:$0xff]
  %v8965 = vld [vmem:[#allocation3 + $0x19c] sm:$0xff]
  %v8966 = vld [vmem:[#allocation3 + $0x1a4] sm:$0xff]
  %v8967 = vld [vmem:[#allocation3 + $0x1ac] sm:$0xff]
  %v8968 = vld [vmem:[#allocation3 + $0x1b4] sm:$0xff]
  %v8969 = vld [vmem:[#allocation3 + $0x1bc] sm:$0xff]
  %v8970 = vld [vmem:[#allocation3 + $0x1c4] sm:$0xff]
  %v8971 = vld [vmem:[#allocation3 + $0x1cc] sm:$0xff]
  %v8972 = vld [vmem:[#allocation3 + $0x1d4] sm:$0xff]
  %v8973 = vld [vmem:[#allocation3 + $0x1dc] sm:$0xff]
  %v8974 = vld [vmem:[#allocation3 + $0x1e4] sm:$0xff]
  %v8975 = vld [vmem:[#allocation3 + $0x1ec] sm:$0xff]
  %v8976 = vld [vmem:[#allocation3 + $0x1f4] sm:$0xff]
  %v8977 = vld [vmem:[#allocation3 + $0x1fc] sm:$0xff]
  %v8978 = vpack.c.bf16 %v8915, %v8914
  %v8979 = vpack.c.bf16 %v8917, %v8916
  %v8980 = vpack.c.bf16 %v8919, %v8918
  %v8981 = vpack.c.bf16 %v8921, %v8920
  %v8982 = vpack.c.bf16 %v8923, %v8922
  %v8983 = vpack.c.bf16 %v8925, %v8924
  %v8984 = vpack.c.bf16 %v8927, %v8926
  %v8985 = vpack.c.bf16 %v8929, %v8928
  %v8986 = vpack.c.bf16 %v8931, %v8930
  %v8987 = vpack.c.bf16 %v8933, %v8932
  %v8988 = vpack.c.bf16 %v8935, %v8934
  %v8989 = vpack.c.bf16 %v8937, %v8936
  %v8990 = vpack.c.bf16 %v8939, %v8938
  %v8991 = vpack.c.bf16 %v8941, %v8940
  %v8992 = vpack.c.bf16 %v8943, %v8942
  %v8993 = vpack.c.bf16 %v8945, %v8944
  %v8994 = vpack.c.bf16 %v8947, %v8946
  %v8995 = vpack.c.bf16 %v8949, %v8948
  %v8996 = vpack.c.bf16 %v8951, %v8950
  %v8997 = vpack.c.bf16 %v8953, %v8952
  %v8998 = vpack.c.bf16 %v8955, %v8954
  %v8999 = vpack.c.bf16 %v8957, %v8956
  %v9000 = vpack.c.bf16 %v8959, %v8958
  %v9001 = vpack.c.bf16 %v8961, %v8960
  %v9002 = vpack.c.bf16 %v8963, %v8962
  %v9003 = vpack.c.bf16 %v8965, %v8964
  %v9004 = vpack.c.bf16 %v8967, %v8966
  %v9005 = vpack.c.bf16 %v8969, %v8968
  %v9006 = vpack.c.bf16 %v8971, %v8970
  %v9007 = vpack.c.bf16 %v8973, %v8972
  %v9008 = vpack.c.bf16 %v8975, %v8974
  %v9009 = vpack.c.bf16 %v8977, %v8976
  %s9010 = scalar_lea.vmem %s4, 352
  %v9011 = vld [vmem:[%s9010] sm:$0xff]
  %v9012 = vld [vmem:[%s9010 + $0x8] sm:$0xff]
  %v9013 = vld [vmem:[%s9010 + $0x10] sm:$0xff]
  %v9014 = vld [vmem:[%s9010 + $0x18] sm:$0xff]
  %v9015 = vld [vmem:[%s9010 + $0x20] sm:$0xff]
  %v9016 = vld [vmem:[%s9010 + $0x28] sm:$0xff]
  %v9017 = vld [vmem:[%s9010 + $0x30] sm:$0xff]
  %v9018 = vld [vmem:[%s9010 + $0x38] sm:$0xff]
  %v9019 = vld [vmem:[%s9010 + $0x40] sm:$0xff]
  %v9020 = vld [vmem:[%s9010 + $0x48] sm:$0xff]
  %v9021 = vld [vmem:[%s9010 + $0x50] sm:$0x33]
  %v9033 = vunpack.c.l.b16 %v9011
  %v9034 = vunpack.c.h.b16 %v9011
  %v9035 = vunpack.c.l.b16 %v9012
  %v9036 = vunpack.c.h.b16 %v9012
  %v9037 = vunpack.c.l.b16 %v9013
  %v9038 = vunpack.c.h.b16 %v9013
  %v9039 = vunpack.c.l.b16 %v9014
  %v9040 = vunpack.c.h.b16 %v9014
  %v9041 = vunpack.c.l.b16 %v9015
  %v9042 = vunpack.c.h.b16 %v9015
  %v9043 = vunpack.c.l.b16 %v9016
  %v9044 = vunpack.c.h.b16 %v9016
  %v9045 = vunpack.c.l.b16 %v9017
  %v9046 = vunpack.c.h.b16 %v9017
  %v9047 = vunpack.c.l.b16 %v9018
  %v9048 = vunpack.c.h.b16 %v9018
  %v9049 = vunpack.c.l.b16 %v9019
  %v9050 = vunpack.c.h.b16 %v9019
  %v9051 = vunpack.c.l.b16 %v9020
  %v9052 = vunpack.c.h.b16 %v9020
  %v9053 = vunpack.c.l.b16 %v9021
  %v9054 = vunpack.c.h.b16 %v9021
  %v9055 = vpack.c.b16 %v9035, %v9033
  %v9056 = vpack.c.b16 %v9036, %v9034
  %v9057 = vpack.c.b16 %v9039, %v9037
  %v9058 = vpack.c.b16 %v9040, %v9038
  %v9059 = vpack.c.b16 %v9043, %v9041
  %v9060 = vpack.c.b16 %v9044, %v9042
  %v9061 = vpack.c.b16 %v9047, %v9045
  %v9062 = vpack.c.b16 %v9048, %v9046
  %v9063 = vpack.c.b16 %v9051, %v9049
  %v9064 = vpack.c.b16 %v9052, %v9050
  %v9065 = vpack.c.b16 %v9053, %v9053
  %v9066 = vpack.c.b16 %v9054, %v9054
  %v9078 = vsel %vm4581, %v8978, 0
  %v9081 = vsel %vm4581, %v8979, 0
  %v9084 = vsel %vm4581, %v8980, 0
  %v9087 = vsel %vm4581, %v8981, 0
  %v9090 = vsel %vm4581, %v8982, 0
  %v9093 = vsel %vm4581, %v8983, 0
  %v9096 = vsel %vm4581, %v8984, 0
  %v9099 = vsel %vm4581, %v8985, 0
  %v9102 = vsel %vm4581, %v8986, 0
  %v9105 = vsel %vm4581, %v8987, 0
  %v9108 = vsel %vm4581, %v8988, 0
  %v9111 = vsel %vm4581, %v8989, 0
  %v9114 = vsel %vm4581, %v8990, 0
  %v9117 = vsel %vm4581, %v8991, 0
  %v9120 = vsel %vm4581, %v8992, 0
  %v9123 = vsel %vm4581, %v8993, 0
  %v9126 = vsel %vm4581, %v8994, 0
  %v9129 = vsel %vm4581, %v8995, 0
  %v9132 = vsel %vm4581, %v8996, 0
  %v9135 = vsel %vm4581, %v8997, 0
  %v9138 = vsel %vm4581, %v8998, 0
  %v9141 = vsel %vm4581, %v8999, 0
  %v9144 = vsel %vm4581, %v9000, 0
  %v9147 = vsel %vm4581, %v9001, 0
  %v9150 = vsel %vm4581, %v9002, 0
  %v9153 = vsel %vm4581, %v9003, 0
  %v9156 = vsel %vm4581, %v9004, 0
  %v9159 = vsel %vm4581, %v9005, 0
  %v9162 = vsel %vm4581, %v9006, 0
  %v9165 = vsel %vm4581, %v9007, 0
  %v9168 = vsel %vm4581, %v9008, 0
  %v9171 = vsel %vm4581, %v9009, 0
  %v9174 = vsel %vm5352, %v9065, 0
  %v9177 = vsel %vm5352, %v9066, 0
  %9179 = vmatpush.bf16.msra.mxu0 0
  %9180 = vmatpush.bf16.msra.mxu0 0
  %9181 = vmatpush.bf16.msra.mxu0 %v9174
  %9182 = vmatpush.bf16.msra.mxu0 %v9063
  %9183 = vmatpush.bf16.msra.mxu0 %v9061
  %9184 = vmatpush.bf16.msra.mxu0 %v9059
  %9185 = vmatpush.bf16.msra.mxu0 %v9057
  %9186 = vmatpush.bf16.msra.mxu0 %v9055
  %9187 = vmatmul.bf16.gmra.mxu0 %v9078
  %v9188 = vpop.f32.mrf.mxu0
  %v9189 = vadd.f32 0.0, %v9188
  %v9190 = vpop.f32.mrf.mxu0
  %v9191 = vadd.f32 0.0, %v9190
  %9192 = vmatmul.bf16.gmra.mxu0 %v9081
  %v9193 = vpop.f32.mrf.mxu0
  %v9194 = vadd.f32 0.0, %v9193
  %v9195 = vpop.f32.mrf.mxu0
  %v9196 = vadd.f32 0.0, %v9195
  %9197 = vmatmul.bf16.gmra.mxu0 %v9084
  %v9198 = vpop.f32.mrf.mxu0
  %v9199 = vadd.f32 0.0, %v9198
  %v9200 = vpop.f32.mrf.mxu0
  %v9201 = vadd.f32 0.0, %v9200
  %9202 = vmatmul.bf16.gmra.mxu0 %v9087
  %v9203 = vpop.f32.mrf.mxu0
  %v9204 = vadd.f32 0.0, %v9203
  %v9205 = vpop.f32.mrf.mxu0
  %v9206 = vadd.f32 0.0, %v9205
  %9207 = vmatmul.bf16.gmra.mxu0 %v9090
  %v9208 = vpop.f32.mrf.mxu0
  %v9209 = vadd.f32 0.0, %v9208
  %v9210 = vpop.f32.mrf.mxu0
  %v9211 = vadd.f32 0.0, %v9210
  %9212 = vmatmul.bf16.gmra.mxu0 %v9093
  %v9213 = vpop.f32.mrf.mxu0
  %v9214 = vadd.f32 0.0, %v9213
  %v9215 = vpop.f32.mrf.mxu0
  %v9216 = vadd.f32 0.0, %v9215
  %9217 = vmatmul.bf16.gmra.mxu0 %v9096
  %v9218 = vpop.f32.mrf.mxu0
  %v9219 = vadd.f32 0.0, %v9218
  %v9220 = vpop.f32.mrf.mxu0
  %v9221 = vadd.f32 0.0, %v9220
  %9222 = vmatmul.bf16.gmra.mxu0 %v9099
  %v9223 = vpop.f32.mrf.mxu0
  %v9224 = vadd.f32 0.0, %v9223
  %v9225 = vpop.f32.mrf.mxu0
  %v9226 = vadd.f32 0.0, %v9225
  %9227 = vmatmul.bf16.gmra.mxu0 %v9102
  %v9228 = vpop.f32.mrf.mxu0
  %v9229 = vadd.f32 0.0, %v9228
  %v9230 = vpop.f32.mrf.mxu0
  %v9231 = vadd.f32 0.0, %v9230
  %9232 = vmatmul.bf16.gmra.mxu0 %v9105
  %v9233 = vpop.f32.mrf.mxu0
  %v9234 = vadd.f32 0.0, %v9233
  %v9235 = vpop.f32.mrf.mxu0
  %v9236 = vadd.f32 0.0, %v9235
  %9237 = vmatmul.bf16.gmra.mxu0 %v9108
  %v9238 = vpop.f32.mrf.mxu0
  %v9239 = vadd.f32 0.0, %v9238
  %v9240 = vpop.f32.mrf.mxu0
  %v9241 = vadd.f32 0.0, %v9240
  %9242 = vmatmul.bf16.gmra.mxu0 %v9111
  %v9243 = vpop.f32.mrf.mxu0
  %v9244 = vadd.f32 0.0, %v9243
  %v9245 = vpop.f32.mrf.mxu0
  %v9246 = vadd.f32 0.0, %v9245
  %9247 = vmatmul.bf16.gmra.mxu0 %v9114
  %v9248 = vpop.f32.mrf.mxu0
  %v9249 = vadd.f32 0.0, %v9248
  %v9250 = vpop.f32.mrf.mxu0
  %v9251 = vadd.f32 0.0, %v9250
  %9252 = vmatmul.bf16.gmra.mxu0 %v9117
  %v9253 = vpop.f32.mrf.mxu0
  %v9254 = vadd.f32 0.0, %v9253
  %v9255 = vpop.f32.mrf.mxu0
  %v9256 = vadd.f32 0.0, %v9255
  %9257 = vmatmul.bf16.gmra.mxu0 %v9120
  %v9258 = vpop.f32.mrf.mxu0
  %v9259 = vadd.f32 0.0, %v9258
  %v9260 = vpop.f32.mrf.mxu0
  %v9261 = vadd.f32 0.0, %v9260
  %9262 = vmatmul.bf16.gmra.mxu0 %v9123
  %v9263 = vpop.f32.mrf.mxu0
  %v9264 = vadd.f32 0.0, %v9263
  %v9265 = vpop.f32.mrf.mxu0
  %v9266 = vadd.f32 0.0, %v9265
  %9267 = vmatmul.bf16.gmra.mxu0 %v9126
  %v9268 = vpop.f32.mrf.mxu0
  %v9269 = vadd.f32 0.0, %v9268
  %v9270 = vpop.f32.mrf.mxu0
  %v9271 = vadd.f32 0.0, %v9270
  %9272 = vmatmul.bf16.gmra.mxu0 %v9129
  %v9273 = vpop.f32.mrf.mxu0
  %v9274 = vadd.f32 0.0, %v9273
  %v9275 = vpop.f32.mrf.mxu0
  %v9276 = vadd.f32 0.0, %v9275
  %9277 = vmatmul.bf16.gmra.mxu0 %v9132
  %v9278 = vpop.f32.mrf.mxu0
  %v9279 = vadd.f32 0.0, %v9278
  %v9280 = vpop.f32.mrf.mxu0
  %v9281 = vadd.f32 0.0, %v9280
  %9282 = vmatmul.bf16.gmra.mxu0 %v9135
  %v9283 = vpop.f32.mrf.mxu0
  %v9284 = vadd.f32 0.0, %v9283
  %v9285 = vpop.f32.mrf.mxu0
  %v9286 = vadd.f32 0.0, %v9285
  %9287 = vmatmul.bf16.gmra.mxu0 %v9138
  %v9288 = vpop.f32.mrf.mxu0
  %v9289 = vadd.f32 0.0, %v9288
  %v9290 = vpop.f32.mrf.mxu0
  %v9291 = vadd.f32 0.0, %v9290
  %9292 = vmatmul.bf16.gmra.mxu0 %v9141
  %v9293 = vpop.f32.mrf.mxu0
  %v9294 = vadd.f32 0.0, %v9293
  %v9295 = vpop.f32.mrf.mxu0
  %v9296 = vadd.f32 0.0, %v9295
  %9297 = vmatmul.bf16.gmra.mxu0 %v9144
  %v9298 = vpop.f32.mrf.mxu0
  %v9299 = vadd.f32 0.0, %v9298
  %v9300 = vpop.f32.mrf.mxu0
  %v9301 = vadd.f32 0.0, %v9300
  %9302 = vmatmul.bf16.gmra.mxu0 %v9147
  %v9303 = vpop.f32.mrf.mxu0
  %v9304 = vadd.f32 0.0, %v9303
  %v9305 = vpop.f32.mrf.mxu0
  %v9306 = vadd.f32 0.0, %v9305
  %9307 = vmatmul.bf16.gmra.mxu0 %v9150
  %v9308 = vpop.f32.mrf.mxu0
  %v9309 = vadd.f32 0.0, %v9308
  %v9310 = vpop.f32.mrf.mxu0
  %v9311 = vadd.f32 0.0, %v9310
  %9312 = vmatmul.bf16.gmra.mxu0 %v9153
  %v9313 = vpop.f32.mrf.mxu0
  %v9314 = vadd.f32 0.0, %v9313
  %v9315 = vpop.f32.mrf.mxu0
  %v9316 = vadd.f32 0.0, %v9315
  %9317 = vmatmul.bf16.gmra.mxu0 %v9156
  %v9318 = vpop.f32.mrf.mxu0
  %v9319 = vadd.f32 0.0, %v9318
  %v9320 = vpop.f32.mrf.mxu0
  %v9321 = vadd.f32 0.0, %v9320
  %9322 = vmatmul.bf16.gmra.mxu0 %v9159
  %v9323 = vpop.f32.mrf.mxu0
  %v9324 = vadd.f32 0.0, %v9323
  %v9325 = vpop.f32.mrf.mxu0
  %v9326 = vadd.f32 0.0, %v9325
  %9327 = vmatmul.bf16.gmra.mxu0 %v9162
  %v9328 = vpop.f32.mrf.mxu0
  %v9329 = vadd.f32 0.0, %v9328
  %v9330 = vpop.f32.mrf.mxu0
  %v9331 = vadd.f32 0.0, %v9330
  %9332 = vmatmul.bf16.gmra.mxu0 %v9165
  %v9333 = vpop.f32.mrf.mxu0
  %v9334 = vadd.f32 0.0, %v9333
  %v9335 = vpop.f32.mrf.mxu0
  %v9336 = vadd.f32 0.0, %v9335
  %9337 = vmatmul.bf16.gmra.mxu0 %v9168
  %v9338 = vpop.f32.mrf.mxu0
  %v9339 = vadd.f32 0.0, %v9338
  %v9340 = vpop.f32.mrf.mxu0
  %v9341 = vadd.f32 0.0, %v9340
  %9342 = vmatmul.bf16.gmra.mxu0 %v9171
  %v9343 = vpop.f32.mrf.mxu0
  %v9344 = vadd.f32 0.0, %v9343
  %v9345 = vpop.f32.mrf.mxu0
  %v9346 = vadd.f32 0.0, %v9345
  %9347 = vdwg.mxu0
  %9348 = vmatpush.bf16.msra.mxu0 0
  %9349 = vmatpush.bf16.msra.mxu0 0
  %9350 = vmatpush.bf16.msra.mxu0 %v9177
  %9351 = vmatpush.bf16.msra.mxu0 %v9064
  %9352 = vmatpush.bf16.msra.mxu0 %v9062
  %9353 = vmatpush.bf16.msra.mxu0 %v9060
  %9354 = vmatpush.bf16.msra.mxu0 %v9058
  %9355 = vmatpush.bf16.msra.mxu0 %v9056
  %9356 = vmatmul.bf16.gmra.mxu0 %v9078
  %v9357 = vpop.f32.mrf.mxu0
  %v9358 = vadd.f32 0.0, %v9357
  %v9359 = vpop.f32.mrf.mxu0
  %v9360 = vadd.f32 0.0, %v9359
  %9361 = vmatmul.bf16.gmra.mxu0 %v9081
  %v9362 = vpop.f32.mrf.mxu0
  %v9363 = vadd.f32 0.0, %v9362
  %v9364 = vpop.f32.mrf.mxu0
  %v9365 = vadd.f32 0.0, %v9364
  %9366 = vmatmul.bf16.gmra.mxu0 %v9084
  %v9367 = vpop.f32.mrf.mxu0
  %v9368 = vadd.f32 0.0, %v9367
  %v9369 = vpop.f32.mrf.mxu0
  %v9370 = vadd.f32 0.0, %v9369
  %9371 = vmatmul.bf16.gmra.mxu0 %v9087
  %v9372 = vpop.f32.mrf.mxu0
  %v9373 = vadd.f32 0.0, %v9372
  %v9374 = vpop.f32.mrf.mxu0
  %v9375 = vadd.f32 0.0, %v9374
  %9376 = vmatmul.bf16.gmra.mxu0 %v9090
  %v9377 = vpop.f32.mrf.mxu0
  %v9378 = vadd.f32 0.0, %v9377
  %v9379 = vpop.f32.mrf.mxu0
  %v9380 = vadd.f32 0.0, %v9379
  %9381 = vmatmul.bf16.gmra.mxu0 %v9093
  %v9382 = vpop.f32.mrf.mxu0
  %v9383 = vadd.f32 0.0, %v9382
  %v9384 = vpop.f32.mrf.mxu0
  %v9385 = vadd.f32 0.0, %v9384
  %9386 = vmatmul.bf16.gmra.mxu0 %v9096
  %v9387 = vpop.f32.mrf.mxu0
  %v9388 = vadd.f32 0.0, %v9387
  %v9389 = vpop.f32.mrf.mxu0
  %v9390 = vadd.f32 0.0, %v9389
  %9391 = vmatmul.bf16.gmra.mxu0 %v9099
  %v9392 = vpop.f32.mrf.mxu0
  %v9393 = vadd.f32 0.0, %v9392
  %v9394 = vpop.f32.mrf.mxu0
  %v9395 = vadd.f32 0.0, %v9394
  %9396 = vmatmul.bf16.gmra.mxu0 %v9102
  %v9397 = vpop.f32.mrf.mxu0
  %v9398 = vadd.f32 0.0, %v9397
  %v9399 = vpop.f32.mrf.mxu0
  %v9400 = vadd.f32 0.0, %v9399
  %9401 = vmatmul.bf16.gmra.mxu0 %v9105
  %v9402 = vpop.f32.mrf.mxu0
  %v9403 = vadd.f32 0.0, %v9402
  %v9404 = vpop.f32.mrf.mxu0
  %v9405 = vadd.f32 0.0, %v9404
  %9406 = vmatmul.bf16.gmra.mxu0 %v9108
  %v9407 = vpop.f32.mrf.mxu0
  %v9408 = vadd.f32 0.0, %v9407
  %v9409 = vpop.f32.mrf.mxu0
  %v9410 = vadd.f32 0.0, %v9409
  %9411 = vmatmul.bf16.gmra.mxu0 %v9111
  %v9412 = vpop.f32.mrf.mxu0
  %v9413 = vadd.f32 0.0, %v9412
  %v9414 = vpop.f32.mrf.mxu0
  %v9415 = vadd.f32 0.0, %v9414
  %9416 = vmatmul.bf16.gmra.mxu0 %v9114
  %v9417 = vpop.f32.mrf.mxu0
  %v9418 = vadd.f32 0.0, %v9417
  %v9419 = vpop.f32.mrf.mxu0
  %v9420 = vadd.f32 0.0, %v9419
  %9421 = vmatmul.bf16.gmra.mxu0 %v9117
  %v9422 = vpop.f32.mrf.mxu0
  %v9423 = vadd.f32 0.0, %v9422
  %v9424 = vpop.f32.mrf.mxu0
  %v9425 = vadd.f32 0.0, %v9424
  %9426 = vmatmul.bf16.gmra.mxu0 %v9120
  %v9427 = vpop.f32.mrf.mxu0
  %v9428 = vadd.f32 0.0, %v9427
  %v9429 = vpop.f32.mrf.mxu0
  %v9430 = vadd.f32 0.0, %v9429
  %9431 = vmatmul.bf16.gmra.mxu0 %v9123
  %v9432 = vpop.f32.mrf.mxu0
  %v9433 = vadd.f32 0.0, %v9432
  %v9434 = vpop.f32.mrf.mxu0
  %v9435 = vadd.f32 0.0, %v9434
  %9436 = vmatmul.bf16.gmra.mxu0 %v9126
  %v9437 = vpop.f32.mrf.mxu0
  %v9438 = vadd.f32 0.0, %v9437
  %v9439 = vpop.f32.mrf.mxu0
  %v9440 = vadd.f32 0.0, %v9439
  %9441 = vmatmul.bf16.gmra.mxu0 %v9129
  %v9442 = vpop.f32.mrf.mxu0
  %v9443 = vadd.f32 0.0, %v9442
  %v9444 = vpop.f32.mrf.mxu0
  %v9445 = vadd.f32 0.0, %v9444
  %9446 = vmatmul.bf16.gmra.mxu0 %v9132
  %v9447 = vpop.f32.mrf.mxu0
  %v9448 = vadd.f32 0.0, %v9447
  %v9449 = vpop.f32.mrf.mxu0
  %v9450 = vadd.f32 0.0, %v9449
  %9451 = vmatmul.bf16.gmra.mxu0 %v9135
  %v9452 = vpop.f32.mrf.mxu0
  %v9453 = vadd.f32 0.0, %v9452
  %v9454 = vpop.f32.mrf.mxu0
  %v9455 = vadd.f32 0.0, %v9454
  %9456 = vmatmul.bf16.gmra.mxu0 %v9138
  %v9457 = vpop.f32.mrf.mxu0
  %v9458 = vadd.f32 0.0, %v9457
  %v9459 = vpop.f32.mrf.mxu0
  %v9460 = vadd.f32 0.0, %v9459
  %9461 = vmatmul.bf16.gmra.mxu0 %v9141
  %v9462 = vpop.f32.mrf.mxu0
  %v9463 = vadd.f32 0.0, %v9462
  %v9464 = vpop.f32.mrf.mxu0
  %v9465 = vadd.f32 0.0, %v9464
  %9466 = vmatmul.bf16.gmra.mxu0 %v9144
  %v9467 = vpop.f32.mrf.mxu0
  %v9468 = vadd.f32 0.0, %v9467
  %v9469 = vpop.f32.mrf.mxu0
  %v9470 = vadd.f32 0.0, %v9469
  %9471 = vmatmul.bf16.gmra.mxu0 %v9147
  %v9472 = vpop.f32.mrf.mxu0
  %v9473 = vadd.f32 0.0, %v9472
  %v9474 = vpop.f32.mrf.mxu0
  %v9475 = vadd.f32 0.0, %v9474
  %9476 = vmatmul.bf16.gmra.mxu0 %v9150
  %v9477 = vpop.f32.mrf.mxu0
  %v9478 = vadd.f32 0.0, %v9477
  %v9479 = vpop.f32.mrf.mxu0
  %v9480 = vadd.f32 0.0, %v9479
  %9481 = vmatmul.bf16.gmra.mxu0 %v9153
  %v9482 = vpop.f32.mrf.mxu0
  %v9483 = vadd.f32 0.0, %v9482
  %v9484 = vpop.f32.mrf.mxu0
  %v9485 = vadd.f32 0.0, %v9484
  %9486 = vmatmul.bf16.gmra.mxu0 %v9156
  %v9487 = vpop.f32.mrf.mxu0
  %v9488 = vadd.f32 0.0, %v9487
  %v9489 = vpop.f32.mrf.mxu0
  %v9490 = vadd.f32 0.0, %v9489
  %9491 = vmatmul.bf16.gmra.mxu0 %v9159
  %v9492 = vpop.f32.mrf.mxu0
  %v9493 = vadd.f32 0.0, %v9492
  %v9494 = vpop.f32.mrf.mxu0
  %v9495 = vadd.f32 0.0, %v9494
  %9496 = vmatmul.bf16.gmra.mxu0 %v9162
  %v9497 = vpop.f32.mrf.mxu0
  %v9498 = vadd.f32 0.0, %v9497
  %v9499 = vpop.f32.mrf.mxu0
  %v9500 = vadd.f32 0.0, %v9499
  %9501 = vmatmul.bf16.gmra.mxu0 %v9165
  %v9502 = vpop.f32.mrf.mxu0
  %v9503 = vadd.f32 0.0, %v9502
  %v9504 = vpop.f32.mrf.mxu0
  %v9505 = vadd.f32 0.0, %v9504
  %9506 = vmatmul.bf16.gmra.mxu0 %v9168
  %v9507 = vpop.f32.mrf.mxu0
  %v9508 = vadd.f32 0.0, %v9507
  %v9509 = vpop.f32.mrf.mxu0
  %v9510 = vadd.f32 0.0, %v9509
  %9511 = vmatmul.bf16.gmra.mxu0 %v9171
  %v9512 = vpop.f32.mrf.mxu0
  %v9513 = vadd.f32 0.0, %v9512
  %v9514 = vpop.f32.mrf.mxu0
  %v9515 = vadd.f32 0.0, %v9514
  %9516 = vdwg.mxu0
  %v9517 = vadd.f32 %v8786, %v9189
  %v9518 = vadd.f32 %v8787, %v9358
  %v9519 = vadd.f32 %v8788, %v9191
  %v9520 = vadd.f32 %v8789, %v9360
  %v9521 = vadd.f32 %v8790, %v9194
  %v9522 = vadd.f32 %v8791, %v9363
  %v9523 = vadd.f32 %v8792, %v9196
  %v9524 = vadd.f32 %v8793, %v9365
  %v9525 = vadd.f32 %v8794, %v9199
  %v9526 = vadd.f32 %v8795, %v9368
  %v9527 = vadd.f32 %v8796, %v9201
  %v9528 = vadd.f32 %v8797, %v9370
  %v9529 = vadd.f32 %v8798, %v9204
  %v9530 = vadd.f32 %v8799, %v9373
  %v9531 = vadd.f32 %v8800, %v9206
  %v9532 = vadd.f32 %v8801, %v9375
  %v9533 = vadd.f32 %v8802, %v9209
  %v9534 = vadd.f32 %v8803, %v9378
  %v9535 = vadd.f32 %v8804, %v9211
  %v9536 = vadd.f32 %v8805, %v9380
  %v9537 = vadd.f32 %v8806, %v9214
  %v9538 = vadd.f32 %v8807, %v9383
  %v9539 = vadd.f32 %v8808, %v9216
  %v9540 = vadd.f32 %v8809, %v9385
  %v9541 = vadd.f32 %v8810, %v9219
  %v9542 = vadd.f32 %v8811, %v9388
  %v9543 = vadd.f32 %v8812, %v9221
  %v9544 = vadd.f32 %v8813, %v9390
  %v9545 = vadd.f32 %v8814, %v9224
  %v9546 = vadd.f32 %v8815, %v9393
  %v9547 = vadd.f32 %v8816, %v9226
  %v9548 = vadd.f32 %v8817, %v9395
  %v9549 = vadd.f32 %v8818, %v9229
  %v9550 = vadd.f32 %v8819, %v9398
  %v9551 = vadd.f32 %v8820, %v9231
  %v9552 = vadd.f32 %v8821, %v9400
  %v9553 = vadd.f32 %v8822, %v9234
  %v9554 = vadd.f32 %v8823, %v9403
  %v9555 = vadd.f32 %v8824, %v9236
  %v9556 = vadd.f32 %v8825, %v9405
  %v9557 = vadd.f32 %v8826, %v9239
  %v9558 = vadd.f32 %v8827, %v9408
  %v9559 = vadd.f32 %v8828, %v9241
  %v9560 = vadd.f32 %v8829, %v9410
  %v9561 = vadd.f32 %v8830, %v9244
  %v9562 = vadd.f32 %v8831, %v9413
  %v9563 = vadd.f32 %v8832, %v9246
  %v9564 = vadd.f32 %v8833, %v9415
  %v9565 = vadd.f32 %v8834, %v9249
  %v9566 = vadd.f32 %v8835, %v9418
  %v9567 = vadd.f32 %v8836, %v9251
  %v9568 = vadd.f32 %v8837, %v9420
  %v9569 = vadd.f32 %v8838, %v9254
  %v9570 = vadd.f32 %v8839, %v9423
  %v9571 = vadd.f32 %v8840, %v9256
  %v9572 = vadd.f32 %v8841, %v9425
  %v9573 = vadd.f32 %v8842, %v9259
  %v9574 = vadd.f32 %v8843, %v9428
  %v9575 = vadd.f32 %v8844, %v9261
  %v9576 = vadd.f32 %v8845, %v9430
  %v9577 = vadd.f32 %v8846, %v9264
  %v9578 = vadd.f32 %v8847, %v9433
  %v9579 = vadd.f32 %v8848, %v9266
  %v9580 = vadd.f32 %v8849, %v9435
  %v9581 = vadd.f32 %v8850, %v9269
  %v9582 = vadd.f32 %v8851, %v9438
  %v9583 = vadd.f32 %v8852, %v9271
  %v9584 = vadd.f32 %v8853, %v9440
  %v9585 = vadd.f32 %v8854, %v9274
  %v9586 = vadd.f32 %v8855, %v9443
  %v9587 = vadd.f32 %v8856, %v9276
  %v9588 = vadd.f32 %v8857, %v9445
  %v9589 = vadd.f32 %v8858, %v9279
  %v9590 = vadd.f32 %v8859, %v9448
  %v9591 = vadd.f32 %v8860, %v9281
  %v9592 = vadd.f32 %v8861, %v9450
  %v9593 = vadd.f32 %v8862, %v9284
  %v9594 = vadd.f32 %v8863, %v9453
  %v9595 = vadd.f32 %v8864, %v9286
  %v9596 = vadd.f32 %v8865, %v9455
  %v9597 = vadd.f32 %v8866, %v9289
  %v9598 = vadd.f32 %v8867, %v9458
  %v9599 = vadd.f32 %v8868, %v9291
  %v9600 = vadd.f32 %v8869, %v9460
  %v9601 = vadd.f32 %v8870, %v9294
  %v9602 = vadd.f32 %v8871, %v9463
  %v9603 = vadd.f32 %v8872, %v9296
  %v9604 = vadd.f32 %v8873, %v9465
  %v9605 = vadd.f32 %v8874, %v9299
  %v9606 = vadd.f32 %v8875, %v9468
  %v9607 = vadd.f32 %v8876, %v9301
  %v9608 = vadd.f32 %v8877, %v9470
  %v9609 = vadd.f32 %v8878, %v9304
  %v9610 = vadd.f32 %v8879, %v9473
  %v9611 = vadd.f32 %v8880, %v9306
  %v9612 = vadd.f32 %v8881, %v9475
  %v9613 = vadd.f32 %v8882, %v9309
  %v9614 = vadd.f32 %v8883, %v9478
  %v9615 = vadd.f32 %v8884, %v9311
  %v9616 = vadd.f32 %v8885, %v9480
  %v9617 = vadd.f32 %v8886, %v9314
  %v9618 = vadd.f32 %v8887, %v9483
  %v9619 = vadd.f32 %v8888, %v9316
  %v9620 = vadd.f32 %v8889, %v9485
  %v9621 = vadd.f32 %v8890, %v9319
  %v9622 = vadd.f32 %v8891, %v9488
  %v9623 = vadd.f32 %v8892, %v9321
  %v9624 = vadd.f32 %v8893, %v9490
  %v9625 = vadd.f32 %v8894, %v9324
  %v9626 = vadd.f32 %v8895, %v9493
  %v9627 = vadd.f32 %v8896, %v9326
  %v9628 = vadd.f32 %v8897, %v9495
  %v9629 = vadd.f32 %v8898, %v9329
  %v9630 = vadd.f32 %v8899, %v9498
  %v9631 = vadd.f32 %v8900, %v9331
  %v9632 = vadd.f32 %v8901, %v9500
  %v9633 = vadd.f32 %v8902, %v9334
  %v9634 = vadd.f32 %v8903, %v9503
  %v9635 = vadd.f32 %v8904, %v9336
  %v9636 = vadd.f32 %v8905, %v9505
  %v9637 = vadd.f32 %v8906, %v9339
  %v9638 = vadd.f32 %v8907, %v9508
  %v9639 = vadd.f32 %v8908, %v9341
  %v9640 = vadd.f32 %v8909, %v9510
  %v9641 = vadd.f32 %v8910, %v9344
  %v9642 = vadd.f32 %v8911, %v9513
  %v9643 = vadd.f32 %v8912, %v9346
  %v9644 = vadd.f32 %v8913, %v9515
  %9645 = vst [vmem:[#allocation4] sm:$0xff] %v9517
  %9646 = vst.msk [vmem:[#allocation4 + $0x8] sm:$0xff] %vm875, %v9518
  %9647 = vst [vmem:[#allocation4 + $0x10] sm:$0xff] %v9519
  %9648 = vst.msk [vmem:[#allocation4 + $0x18] sm:$0xff] %vm875, %v9520
  %9649 = vst [vmem:[#allocation4 + $0x20] sm:$0xff] %v9521
  %9650 = vst.msk [vmem:[#allocation4 + $0x28] sm:$0xff] %vm875, %v9522
  %9651 = vst [vmem:[#allocation4 + $0x30] sm:$0xff] %v9523
  %9652 = vst.msk [vmem:[#allocation4 + $0x38] sm:$0xff] %vm875, %v9524
  %9653 = vst [vmem:[#allocation4 + $0x40] sm:$0xff] %v9525
  %9654 = vst.msk [vmem:[#allocation4 + $0x48] sm:$0xff] %vm875, %v9526
  %9655 = vst [vmem:[#allocation4 + $0x50] sm:$0xff] %v9527
  %9656 = vst.msk [vmem:[#allocation4 + $0x58] sm:$0xff] %vm875, %v9528
  %9657 = vst [vmem:[#allocation4 + $0x60] sm:$0xff] %v9529
  %9658 = vst.msk [vmem:[#allocation4 + $0x68] sm:$0xff] %vm875, %v9530
  %9659 = vst [vmem:[#allocation4 + $0x70] sm:$0xff] %v9531
  %9660 = vst.msk [vmem:[#allocation4 + $0x78] sm:$0xff] %vm875, %v9532
  %9661 = vst [vmem:[#allocation4 + $0x80] sm:$0xff] %v9533
  %9662 = vst.msk [vmem:[#allocation4 + $0x88] sm:$0xff] %vm875, %v9534
  %9663 = vst [vmem:[#allocation4 + $0x90] sm:$0xff] %v9535
  %9664 = vst.msk [vmem:[#allocation4 + $0x98] sm:$0xff] %vm875, %v9536
  %9665 = vst [vmem:[#allocation4 + $0xa0] sm:$0xff] %v9537
  %9666 = vst.msk [vmem:[#allocation4 + $0xa8] sm:$0xff] %vm875, %v9538
  %9667 = vst [vmem:[#allocation4 + $0xb0] sm:$0xff] %v9539
  %9668 = vst.msk [vmem:[#allocation4 + $0xb8] sm:$0xff] %vm875, %v9540
  %9669 = vst [vmem:[#allocation4 + $0xc0] sm:$0xff] %v9541
  %9670 = vst.msk [vmem:[#allocation4 + $0xc8] sm:$0xff] %vm875, %v9542
  %9671 = vst [vmem:[#allocation4 + $0xd0] sm:$0xff] %v9543
  %9672 = vst.msk [vmem:[#allocation4 + $0xd8] sm:$0xff] %vm875, %v9544
  %9673 = vst [vmem:[#allocation4 + $0xe0] sm:$0xff] %v9545
  %9674 = vst.msk [vmem:[#allocation4 + $0xe8] sm:$0xff] %vm875, %v9546
  %9675 = vst [vmem:[#allocation4 + $0xf0] sm:$0xff] %v9547
  %9676 = vst.msk [vmem:[#allocation4 + $0xf8] sm:$0xff] %vm875, %v9548
  %9677 = vst [vmem:[#allocation4 + $0x100] sm:$0xff] %v9549
  %9678 = vst.msk [vmem:[#allocation4 + $0x108] sm:$0xff] %vm875, %v9550
  %9679 = vst [vmem:[#allocation4 + $0x110] sm:$0xff] %v9551
  %9680 = vst.msk [vmem:[#allocation4 + $0x118] sm:$0xff] %vm875, %v9552
  %9681 = vst [vmem:[#allocation4 + $0x120] sm:$0xff] %v9553
  %9682 = vst.msk [vmem:[#allocation4 + $0x128] sm:$0xff] %vm875, %v9554
  %9683 = vst [vmem:[#allocation4 + $0x130] sm:$0xff] %v9555
  %9684 = vst.msk [vmem:[#allocation4 + $0x138] sm:$0xff] %vm875, %v9556
  %9685 = vst [vmem:[#allocation4 + $0x140] sm:$0xff] %v9557
  %9686 = vst.msk [vmem:[#allocation4 + $0x148] sm:$0xff] %vm875, %v9558
  %9687 = vst [vmem:[#allocation4 + $0x150] sm:$0xff] %v9559
  %9688 = vst.msk [vmem:[#allocation4 + $0x158] sm:$0xff] %vm875, %v9560
  %9689 = vst [vmem:[#allocation4 + $0x160] sm:$0xff] %v9561
  %9690 = vst.msk [vmem:[#allocation4 + $0x168] sm:$0xff] %vm875, %v9562
  %9691 = vst [vmem:[#allocation4 + $0x170] sm:$0xff] %v9563
  %9692 = vst.msk [vmem:[#allocation4 + $0x178] sm:$0xff] %vm875, %v9564
  %9693 = vst [vmem:[#allocation4 + $0x180] sm:$0xff] %v9565
  %9694 = vst.msk [vmem:[#allocation4 + $0x188] sm:$0xff] %vm875, %v9566
  %9695 = vst [vmem:[#allocation4 + $0x190] sm:$0xff] %v9567
  %9696 = vst.msk [vmem:[#allocation4 + $0x198] sm:$0xff] %vm875, %v9568
  %9697 = vst [vmem:[#allocation4 + $0x1a0] sm:$0xff] %v9569
  %9698 = vst.msk [vmem:[#allocation4 + $0x1a8] sm:$0xff] %vm875, %v9570
  %9699 = vst [vmem:[#allocation4 + $0x1b0] sm:$0xff] %v9571
  %9700 = vst.msk [vmem:[#allocation4 + $0x1b8] sm:$0xff] %vm875, %v9572
  %9701 = vst [vmem:[#allocation4 + $0x1c0] sm:$0xff] %v9573
  %9702 = vst.msk [vmem:[#allocation4 + $0x1c8] sm:$0xff] %vm875, %v9574
  %9703 = vst [vmem:[#allocation4 + $0x1d0] sm:$0xff] %v9575
  %9704 = vst.msk [vmem:[#allocation4 + $0x1d8] sm:$0xff] %vm875, %v9576
  %9705 = vst [vmem:[#allocation4 + $0x1e0] sm:$0xff] %v9577
  %9706 = vst.msk [vmem:[#allocation4 + $0x1e8] sm:$0xff] %vm875, %v9578
  %9707 = vst [vmem:[#allocation4 + $0x1f0] sm:$0xff] %v9579
  %9708 = vst.msk [vmem:[#allocation4 + $0x1f8] sm:$0xff] %vm875, %v9580
  %9709 = vst [vmem:[#allocation4 + $0x200] sm:$0xff] %v9581
  %9710 = vst.msk [vmem:[#allocation4 + $0x208] sm:$0xff] %vm875, %v9582
  %9711 = vst [vmem:[#allocation4 + $0x210] sm:$0xff] %v9583
  %9712 = vst.msk [vmem:[#allocation4 + $0x218] sm:$0xff] %vm875, %v9584
  %9713 = vst [vmem:[#allocation4 + $0x220] sm:$0xff] %v9585
  %9714 = vst.msk [vmem:[#allocation4 + $0x228] sm:$0xff] %vm875, %v9586
  %9715 = vst [vmem:[#allocation4 + $0x230] sm:$0xff] %v9587
  %9716 = vst.msk [vmem:[#allocation4 + $0x238] sm:$0xff] %vm875, %v9588
  %9717 = vst [vmem:[#allocation4 + $0x240] sm:$0xff] %v9589
  %9718 = vst.msk [vmem:[#allocation4 + $0x248] sm:$0xff] %vm875, %v9590
  %9719 = vst [vmem:[#allocation4 + $0x250] sm:$0xff] %v9591
  %9720 = vst.msk [vmem:[#allocation4 + $0x258] sm:$0xff] %vm875, %v9592
  %9721 = vst [vmem:[#allocation4 + $0x260] sm:$0xff] %v9593
  %9722 = vst.msk [vmem:[#allocation4 + $0x268] sm:$0xff] %vm875, %v9594
  %9723 = vst [vmem:[#allocation4 + $0x270] sm:$0xff] %v9595
  %9724 = vst.msk [vmem:[#allocation4 + $0x278] sm:$0xff] %vm875, %v9596
  %9725 = vst [vmem:[#allocation4 + $0x280] sm:$0xff] %v9597
  %9726 = vst.msk [vmem:[#allocation4 + $0x288] sm:$0xff] %vm875, %v9598
  %9727 = vst [vmem:[#allocation4 + $0x290] sm:$0xff] %v9599
  %9728 = vst.msk [vmem:[#allocation4 + $0x298] sm:$0xff] %vm875, %v9600
  %9729 = vst [vmem:[#allocation4 + $0x2a0] sm:$0xff] %v9601
  %9730 = vst.msk [vmem:[#allocation4 + $0x2a8] sm:$0xff] %vm875, %v9602
  %9731 = vst [vmem:[#allocation4 + $0x2b0] sm:$0xff] %v9603
  %9732 = vst.msk [vmem:[#allocation4 + $0x2b8] sm:$0xff] %vm875, %v9604
  %9733 = vst [vmem:[#allocation4 + $0x2c0] sm:$0xff] %v9605
  %9734 = vst.msk [vmem:[#allocation4 + $0x2c8] sm:$0xff] %vm875, %v9606
  %9735 = vst [vmem:[#allocation4 + $0x2d0] sm:$0xff] %v9607
  %9736 = vst.msk [vmem:[#allocation4 + $0x2d8] sm:$0xff] %vm875, %v9608
  %9737 = vst [vmem:[#allocation4 + $0x2e0] sm:$0xff] %v9609
  %9738 = vst.msk [vmem:[#allocation4 + $0x2e8] sm:$0xff] %vm875, %v9610
  %9739 = vst [vmem:[#allocation4 + $0x2f0] sm:$0xff] %v9611
  %9740 = vst.msk [vmem:[#allocation4 + $0x2f8] sm:$0xff] %vm875, %v9612
  %9741 = vst [vmem:[#allocation4 + $0x300] sm:$0xff] %v9613
  %9742 = vst.msk [vmem:[#allocation4 + $0x308] sm:$0xff] %vm875, %v9614
  %9743 = vst [vmem:[#allocation4 + $0x310] sm:$0xff] %v9615
  %9744 = vst.msk [vmem:[#allocation4 + $0x318] sm:$0xff] %vm875, %v9616
  %9745 = vst [vmem:[#allocation4 + $0x320] sm:$0xff] %v9617
  %9746 = vst.msk [vmem:[#allocation4 + $0x328] sm:$0xff] %vm875, %v9618
  %9747 = vst [vmem:[#allocation4 + $0x330] sm:$0xff] %v9619
  %9748 = vst.msk [vmem:[#allocation4 + $0x338] sm:$0xff] %vm875, %v9620
  %9749 = vst [vmem:[#allocation4 + $0x340] sm:$0xff] %v9621
  %9750 = vst.msk [vmem:[#allocation4 + $0x348] sm:$0xff] %vm875, %v9622
  %9751 = vst [vmem:[#allocation4 + $0x350] sm:$0xff] %v9623
  %9752 = vst.msk [vmem:[#allocation4 + $0x358] sm:$0xff] %vm875, %v9624
  %9753 = vst [vmem:[#allocation4 + $0x360] sm:$0xff] %v9625
  %9754 = vst.msk [vmem:[#allocation4 + $0x368] sm:$0xff] %vm875, %v9626
  %9755 = vst [vmem:[#allocation4 + $0x370] sm:$0xff] %v9627
  %9756 = vst.msk [vmem:[#allocation4 + $0x378] sm:$0xff] %vm875, %v9628
  %9757 = vst [vmem:[#allocation4 + $0x380] sm:$0xff] %v9629
  %9758 = vst.msk [vmem:[#allocation4 + $0x388] sm:$0xff] %vm875, %v9630
  %9759 = vst [vmem:[#allocation4 + $0x390] sm:$0xff] %v9631
  %9760 = vst.msk [vmem:[#allocation4 + $0x398] sm:$0xff] %vm875, %v9632
  %9761 = vst [vmem:[#allocation4 + $0x3a0] sm:$0xff] %v9633
  %9762 = vst.msk [vmem:[#allocation4 + $0x3a8] sm:$0xff] %vm875, %v9634
  %9763 = vst [vmem:[#allocation4 + $0x3b0] sm:$0xff] %v9635
  %9764 = vst.msk [vmem:[#allocation4 + $0x3b8] sm:$0xff] %vm875, %v9636
  %9765 = vst [vmem:[#allocation4 + $0x3c0] sm:$0xff] %v9637
  %9766 = vst.msk [vmem:[#allocation4 + $0x3c8] sm:$0xff] %vm875, %v9638
  %9767 = vst [vmem:[#allocation4 + $0x3d0] sm:$0xff] %v9639
  %9768 = vst.msk [vmem:[#allocation4 + $0x3d8] sm:$0xff] %vm875, %v9640
  %9769 = vst [vmem:[#allocation4 + $0x3e0] sm:$0xff] %v9641
  %9770 = vst.msk [vmem:[#allocation4 + $0x3e8] sm:$0xff] %vm875, %v9642
  %9771 = vst [vmem:[#allocation4 + $0x3f0] sm:$0xff] %v9643
  %9772 = vst.msk [vmem:[#allocation4 + $0x3f8] sm:$0xff] %vm875, %v9644
  %v9773 = vld [vmem:[#allocation4] sm:$0xff]
  %v9774 = vld [vmem:[#allocation4 + $0x8] sm:$0xff]
  %v9775 = vld [vmem:[#allocation4 + $0x10] sm:$0xff]
  %v9776 = vld [vmem:[#allocation4 + $0x18] sm:$0xff]
  %v9777 = vld [vmem:[#allocation4 + $0x20] sm:$0xff]
  %v9778 = vld [vmem:[#allocation4 + $0x28] sm:$0xff]
  %v9779 = vld [vmem:[#allocation4 + $0x30] sm:$0xff]
  %v9780 = vld [vmem:[#allocation4 + $0x38] sm:$0xff]
  %v9781 = vld [vmem:[#allocation4 + $0x40] sm:$0xff]
  %v9782 = vld [vmem:[#allocation4 + $0x48] sm:$0xff]
  %v9783 = vld [vmem:[#allocation4 + $0x50] sm:$0xff]
  %v9784 = vld [vmem:[#allocation4 + $0x58] sm:$0xff]
  %v9785 = vld [vmem:[#allocation4 + $0x60] sm:$0xff]
  %v9786 = vld [vmem:[#allocation4 + $0x68] sm:$0xff]
  %v9787 = vld [vmem:[#allocation4 + $0x70] sm:$0xff]
  %v9788 = vld [vmem:[#allocation4 + $0x78] sm:$0xff]
  %v9789 = vld [vmem:[#allocation4 + $0x80] sm:$0xff]
  %v9790 = vld [vmem:[#allocation4 + $0x88] sm:$0xff]
  %v9791 = vld [vmem:[#allocation4 + $0x90] sm:$0xff]
  %v9792 = vld [vmem:[#allocation4 + $0x98] sm:$0xff]
  %v9793 = vld [vmem:[#allocation4 + $0xa0] sm:$0xff]
  %v9794 = vld [vmem:[#allocation4 + $0xa8] sm:$0xff]
  %v9795 = vld [vmem:[#allocation4 + $0xb0] sm:$0xff]
  %v9796 = vld [vmem:[#allocation4 + $0xb8] sm:$0xff]
  %v9797 = vld [vmem:[#allocation4 + $0xc0] sm:$0xff]
  %v9798 = vld [vmem:[#allocation4 + $0xc8] sm:$0xff]
  %v9799 = vld [vmem:[#allocation4 + $0xd0] sm:$0xff]
  %v9800 = vld [vmem:[#allocation4 + $0xd8] sm:$0xff]
  %v9801 = vld [vmem:[#allocation4 + $0xe0] sm:$0xff]
  %v9802 = vld [vmem:[#allocation4 + $0xe8] sm:$0xff]
  %v9803 = vld [vmem:[#allocation4 + $0xf0] sm:$0xff]
  %v9804 = vld [vmem:[#allocation4 + $0xf8] sm:$0xff]
  %v9805 = vld [vmem:[#allocation4 + $0x100] sm:$0xff]
  %v9806 = vld [vmem:[#allocation4 + $0x108] sm:$0xff]
  %v9807 = vld [vmem:[#allocation4 + $0x110] sm:$0xff]
  %v9808 = vld [vmem:[#allocation4 + $0x118] sm:$0xff]
  %v9809 = vld [vmem:[#allocation4 + $0x120] sm:$0xff]
  %v9810 = vld [vmem:[#allocation4 + $0x128] sm:$0xff]
  %v9811 = vld [vmem:[#allocation4 + $0x130] sm:$0xff]
  %v9812 = vld [vmem:[#allocation4 + $0x138] sm:$0xff]
  %v9813 = vld [vmem:[#allocation4 + $0x140] sm:$0xff]
  %v9814 = vld [vmem:[#allocation4 + $0x148] sm:$0xff]
  %v9815 = vld [vmem:[#allocation4 + $0x150] sm:$0xff]
  %v9816 = vld [vmem:[#allocation4 + $0x158] sm:$0xff]
  %v9817 = vld [vmem:[#allocation4 + $0x160] sm:$0xff]
  %v9818 = vld [vmem:[#allocation4 + $0x168] sm:$0xff]
  %v9819 = vld [vmem:[#allocation4 + $0x170] sm:$0xff]
  %v9820 = vld [vmem:[#allocation4 + $0x178] sm:$0xff]
  %v9821 = vld [vmem:[#allocation4 + $0x180] sm:$0xff]
  %v9822 = vld [vmem:[#allocation4 + $0x188] sm:$0xff]
  %v9823 = vld [vmem:[#allocation4 + $0x190] sm:$0xff]
  %v9824 = vld [vmem:[#allocation4 + $0x198] sm:$0xff]
  %v9825 = vld [vmem:[#allocation4 + $0x1a0] sm:$0xff]
  %v9826 = vld [vmem:[#allocation4 + $0x1a8] sm:$0xff]
  %v9827 = vld [vmem:[#allocation4 + $0x1b0] sm:$0xff]
  %v9828 = vld [vmem:[#allocation4 + $0x1b8] sm:$0xff]
  %v9829 = vld [vmem:[#allocation4 + $0x1c0] sm:$0xff]
  %v9830 = vld [vmem:[#allocation4 + $0x1c8] sm:$0xff]
  %v9831 = vld [vmem:[#allocation4 + $0x1d0] sm:$0xff]
  %v9832 = vld [vmem:[#allocation4 + $0x1d8] sm:$0xff]
  %v9833 = vld [vmem:[#allocation4 + $0x1e0] sm:$0xff]
  %v9834 = vld [vmem:[#allocation4 + $0x1e8] sm:$0xff]
  %v9835 = vld [vmem:[#allocation4 + $0x1f0] sm:$0xff]
  %v9836 = vld [vmem:[#allocation4 + $0x1f8] sm:$0xff]
  %v9837 = vld [vmem:[#allocation4 + $0x200] sm:$0xff]
  %v9838 = vld [vmem:[#allocation4 + $0x208] sm:$0xff]
  %v9839 = vld [vmem:[#allocation4 + $0x210] sm:$0xff]
  %v9840 = vld [vmem:[#allocation4 + $0x218] sm:$0xff]
  %v9841 = vld [vmem:[#allocation4 + $0x220] sm:$0xff]
  %v9842 = vld [vmem:[#allocation4 + $0x228] sm:$0xff]
  %v9843 = vld [vmem:[#allocation4 + $0x230] sm:$0xff]
  %v9844 = vld [vmem:[#allocation4 + $0x238] sm:$0xff]
  %v9845 = vld [vmem:[#allocation4 + $0x240] sm:$0xff]
  %v9846 = vld [vmem:[#allocation4 + $0x248] sm:$0xff]
  %v9847 = vld [vmem:[#allocation4 + $0x250] sm:$0xff]
  %v9848 = vld [vmem:[#allocation4 + $0x258] sm:$0xff]
  %v9849 = vld [vmem:[#allocation4 + $0x260] sm:$0xff]
  %v9850 = vld [vmem:[#allocation4 + $0x268] sm:$0xff]
  %v9851 = vld [vmem:[#allocation4 + $0x270] sm:$0xff]
  %v9852 = vld [vmem:[#allocation4 + $0x278] sm:$0xff]
  %v9853 = vld [vmem:[#allocation4 + $0x280] sm:$0xff]
  %v9854 = vld [vmem:[#allocation4 + $0x288] sm:$0xff]
  %v9855 = vld [vmem:[#allocation4 + $0x290] sm:$0xff]
  %v9856 = vld [vmem:[#allocation4 + $0x298] sm:$0xff]
  %v9857 = vld [vmem:[#allocation4 + $0x2a0] sm:$0xff]
  %v9858 = vld [vmem:[#allocation4 + $0x2a8] sm:$0xff]
  %v9859 = vld [vmem:[#allocation4 + $0x2b0] sm:$0xff]
  %v9860 = vld [vmem:[#allocation4 + $0x2b8] sm:$0xff]
  %v9861 = vld [vmem:[#allocation4 + $0x2c0] sm:$0xff]
  %v9862 = vld [vmem:[#allocation4 + $0x2c8] sm:$0xff]
  %v9863 = vld [vmem:[#allocation4 + $0x2d0] sm:$0xff]
  %v9864 = vld [vmem:[#allocation4 + $0x2d8] sm:$0xff]
  %v9865 = vld [vmem:[#allocation4 + $0x2e0] sm:$0xff]
  %v9866 = vld [vmem:[#allocation4 + $0x2e8] sm:$0xff]
  %v9867 = vld [vmem:[#allocation4 + $0x2f0] sm:$0xff]
  %v9868 = vld [vmem:[#allocation4 + $0x2f8] sm:$0xff]
  %v9869 = vld [vmem:[#allocation4 + $0x300] sm:$0xff]
  %v9870 = vld [vmem:[#allocation4 + $0x308] sm:$0xff]
  %v9871 = vld [vmem:[#allocation4 + $0x310] sm:$0xff]
  %v9872 = vld [vmem:[#allocation4 + $0x318] sm:$0xff]
  %v9873 = vld [vmem:[#allocation4 + $0x320] sm:$0xff]
  %v9874 = vld [vmem:[#allocation4 + $0x328] sm:$0xff]
  %v9875 = vld [vmem:[#allocation4 + $0x330] sm:$0xff]
  %v9876 = vld [vmem:[#allocation4 + $0x338] sm:$0xff]
  %v9877 = vld [vmem:[#allocation4 + $0x340] sm:$0xff]
  %v9878 = vld [vmem:[#allocation4 + $0x348] sm:$0xff]
  %v9879 = vld [vmem:[#allocation4 + $0x350] sm:$0xff]
  %v9880 = vld [vmem:[#allocation4 + $0x358] sm:$0xff]
  %v9881 = vld [vmem:[#allocation4 + $0x360] sm:$0xff]
  %v9882 = vld [vmem:[#allocation4 + $0x368] sm:$0xff]
  %v9883 = vld [vmem:[#allocation4 + $0x370] sm:$0xff]
  %v9884 = vld [vmem:[#allocation4 + $0x378] sm:$0xff]
  %v9885 = vld [vmem:[#allocation4 + $0x380] sm:$0xff]
  %v9886 = vld [vmem:[#allocation4 + $0x388] sm:$0xff]
  %v9887 = vld [vmem:[#allocation4 + $0x390] sm:$0xff]
  %v9888 = vld [vmem:[#allocation4 + $0x398] sm:$0xff]
  %v9889 = vld [vmem:[#allocation4 + $0x3a0] sm:$0xff]
  %v9890 = vld [vmem:[#allocation4 + $0x3a8] sm:$0xff]
  %v9891 = vld [vmem:[#allocation4 + $0x3b0] sm:$0xff]
  %v9892 = vld [vmem:[#allocation4 + $0x3b8] sm:$0xff]
  %v9893 = vld [vmem:[#allocation4 + $0x3c0] sm:$0xff]
  %v9894 = vld [vmem:[#allocation4 + $0x3c8] sm:$0xff]
  %v9895 = vld [vmem:[#allocation4 + $0x3d0] sm:$0xff]
  %v9896 = vld [vmem:[#allocation4 + $0x3d8] sm:$0xff]
  %v9897 = vld [vmem:[#allocation4 + $0x3e0] sm:$0xff]
  %v9898 = vld [vmem:[#allocation4 + $0x3e8] sm:$0xff]
  %v9899 = vld [vmem:[#allocation4 + $0x3f0] sm:$0xff]
  %v9900 = vld [vmem:[#allocation4 + $0x3f8] sm:$0xff]
  %v9901 = vld [vmem:[%s5] sm:$0x3]
  %v9903 = vperm.slane %v9901, 0
  %v9904 = vperm.slane %v9901, 1
  %v9907 = vadd.f32 %v9773, %v9903
  %v9908 = vadd.f32 %v9774, %v9904
  %v9909 = vadd.f32 %v9775, %v9903
  %v9910 = vadd.f32 %v9776, %v9904
  %v9911 = vadd.f32 %v9777, %v9903
  %v9912 = vadd.f32 %v9778, %v9904
  %v9913 = vadd.f32 %v9779, %v9903
  %v9914 = vadd.f32 %v9780, %v9904
  %v9915 = vadd.f32 %v9781, %v9903
  %v9916 = vadd.f32 %v9782, %v9904
  %v9917 = vadd.f32 %v9783, %v9903
  %v9918 = vadd.f32 %v9784, %v9904
  %v9919 = vadd.f32 %v9785, %v9903
  %v9920 = vadd.f32 %v9786, %v9904
  %v9921 = vadd.f32 %v9787, %v9903
  %v9922 = vadd.f32 %v9788, %v9904
  %v9923 = vadd.f32 %v9789, %v9903
  %v9924 = vadd.f32 %v9790, %v9904
  %v9925 = vadd.f32 %v9791, %v9903
  %v9926 = vadd.f32 %v9792, %v9904
  %v9927 = vadd.f32 %v9793, %v9903
  %v9928 = vadd.f32 %v9794, %v9904
  %v9929 = vadd.f32 %v9795, %v9903
  %v9930 = vadd.f32 %v9796, %v9904
  %v9931 = vadd.f32 %v9797, %v9903
  %v9932 = vadd.f32 %v9798, %v9904
  %v9933 = vadd.f32 %v9799, %v9903
  %v9934 = vadd.f32 %v9800, %v9904
  %v9935 = vadd.f32 %v9801, %v9903
  %v9936 = vadd.f32 %v9802, %v9904
  %v9937 = vadd.f32 %v9803, %v9903
  %v9938 = vadd.f32 %v9804, %v9904
  %v9939 = vadd.f32 %v9805, %v9903
  %v9940 = vadd.f32 %v9806, %v9904
  %v9941 = vadd.f32 %v9807, %v9903
  %v9942 = vadd.f32 %v9808, %v9904
  %v9943 = vadd.f32 %v9809, %v9903
  %v9944 = vadd.f32 %v9810, %v9904
  %v9945 = vadd.f32 %v9811, %v9903
  %v9946 = vadd.f32 %v9812, %v9904
  %v9947 = vadd.f32 %v9813, %v9903
  %v9948 = vadd.f32 %v9814, %v9904
  %v9949 = vadd.f32 %v9815, %v9903
  %v9950 = vadd.f32 %v9816, %v9904
  %v9951 = vadd.f32 %v9817, %v9903
  %v9952 = vadd.f32 %v9818, %v9904
  %v9953 = vadd.f32 %v9819, %v9903
  %v9954 = vadd.f32 %v9820, %v9904
  %v9955 = vadd.f32 %v9821, %v9903
  %v9956 = vadd.f32 %v9822, %v9904
  %v9957 = vadd.f32 %v9823, %v9903
  %v9958 = vadd.f32 %v9824, %v9904
  %v9959 = vadd.f32 %v9825, %v9903
  %v9960 = vadd.f32 %v9826, %v9904
  %v9961 = vadd.f32 %v9827, %v9903
  %v9962 = vadd.f32 %v9828, %v9904
  %v9963 = vadd.f32 %v9829, %v9903
  %v9964 = vadd.f32 %v9830, %v9904
  %v9965 = vadd.f32 %v9831, %v9903
  %v9966 = vadd.f32 %v9832, %v9904
  %v9967 = vadd.f32 %v9833, %v9903
  %v9968 = vadd.f32 %v9834, %v9904
  %v9969 = vadd.f32 %v9835, %v9903
  %v9970 = vadd.f32 %v9836, %v9904
  %v9971 = vadd.f32 %v9837, %v9903
  %v9972 = vadd.f32 %v9838, %v9904
  %v9973 = vadd.f32 %v9839, %v9903
  %v9974 = vadd.f32 %v9840, %v9904
  %v9975 = vadd.f32 %v9841, %v9903
  %v9976 = vadd.f32 %v9842, %v9904
  %v9977 = vadd.f32 %v9843, %v9903
  %v9978 = vadd.f32 %v9844, %v9904
  %v9979 = vadd.f32 %v9845, %v9903
  %v9980 = vadd.f32 %v9846, %v9904
  %v9981 = vadd.f32 %v9847, %v9903
  %v9982 = vadd.f32 %v9848, %v9904
  %v9983 = vadd.f32 %v9849, %v9903
  %v9984 = vadd.f32 %v9850, %v9904
  %v9985 = vadd.f32 %v9851, %v9903
  %v9986 = vadd.f32 %v9852, %v9904
  %v9987 = vadd.f32 %v9853, %v9903
  %v9988 = vadd.f32 %v9854, %v9904
  %v9989 = vadd.f32 %v9855, %v9903
  %v9990 = vadd.f32 %v9856, %v9904
  %v9991 = vadd.f32 %v9857, %v9903
  %v9992 = vadd.f32 %v9858, %v9904
  %v9993 = vadd.f32 %v9859, %v9903
  %v9994 = vadd.f32 %v9860, %v9904
  %v9995 = vadd.f32 %v9861, %v9903
  %v9996 = vadd.f32 %v9862, %v9904
  %v9997 = vadd.f32 %v9863, %v9903
  %v9998 = vadd.f32 %v9864, %v9904
  %v9999 = vadd.f32 %v9865, %v9903
  %v10000 = vadd.f32 %v9866, %v9904
  %v10001 = vadd.f32 %v9867, %v9903
  %v10002 = vadd.f32 %v9868, %v9904
  %v10003 = vadd.f32 %v9869, %v9903
  %v10004 = vadd.f32 %v9870, %v9904
  %v10005 = vadd.f32 %v9871, %v9903
  %v10006 = vadd.f32 %v9872, %v9904
  %v10007 = vadd.f32 %v9873, %v9903
  %v10008 = vadd.f32 %v9874, %v9904
  %v10009 = vadd.f32 %v9875, %v9903
  %v10010 = vadd.f32 %v9876, %v9904
  %v10011 = vadd.f32 %v9877, %v9903
  %v10012 = vadd.f32 %v9878, %v9904
  %v10013 = vadd.f32 %v9879, %v9903
  %v10014 = vadd.f32 %v9880, %v9904
  %v10015 = vadd.f32 %v9881, %v9903
  %v10016 = vadd.f32 %v9882, %v9904
  %v10017 = vadd.f32 %v9883, %v9903
  %v10018 = vadd.f32 %v9884, %v9904
  %v10019 = vadd.f32 %v9885, %v9903
  %v10020 = vadd.f32 %v9886, %v9904
  %v10021 = vadd.f32 %v9887, %v9903
  %v10022 = vadd.f32 %v9888, %v9904
  %v10023 = vadd.f32 %v9889, %v9903
  %v10024 = vadd.f32 %v9890, %v9904
  %v10025 = vadd.f32 %v9891, %v9903
  %v10026 = vadd.f32 %v9892, %v9904
  %v10027 = vadd.f32 %v9893, %v9903
  %v10028 = vadd.f32 %v9894, %v9904
  %v10029 = vadd.f32 %v9895, %v9903
  %v10030 = vadd.f32 %v9896, %v9904
  %v10031 = vadd.f32 %v9897, %v9903
  %v10032 = vadd.f32 %v9898, %v9904
  %v10033 = vadd.f32 %v9899, %v9903
  %v10034 = vadd.f32 %v9900, %v9904
  %v10035 = vmax.f32 %v9907, 0.0
  %v10036 = vmax.f32 %v9908, 0.0
  %v10037 = vmax.f32 %v9909, 0.0
  %v10038 = vmax.f32 %v9910, 0.0
  %v10039 = vmax.f32 %v9911, 0.0
  %v10040 = vmax.f32 %v9912, 0.0
  %v10041 = vmax.f32 %v9913, 0.0
  %v10042 = vmax.f32 %v9914, 0.0
  %v10043 = vmax.f32 %v9915, 0.0
  %v10044 = vmax.f32 %v9916, 0.0
  %v10045 = vmax.f32 %v9917, 0.0
  %v10046 = vmax.f32 %v9918, 0.0
  %v10047 = vmax.f32 %v9919, 0.0
  %v10048 = vmax.f32 %v9920, 0.0
  %v10049 = vmax.f32 %v9921, 0.0
  %v10050 = vmax.f32 %v9922, 0.0
  %v10051 = vmax.f32 %v9923, 0.0
  %v10052 = vmax.f32 %v9924, 0.0
  %v10053 = vmax.f32 %v9925, 0.0
  %v10054 = vmax.f32 %v9926, 0.0
  %v10055 = vmax.f32 %v9927, 0.0
  %v10056 = vmax.f32 %v9928, 0.0
  %v10057 = vmax.f32 %v9929, 0.0
  %v10058 = vmax.f32 %v9930, 0.0
  %v10059 = vmax.f32 %v9931, 0.0
  %v10060 = vmax.f32 %v9932, 0.0
  %v10061 = vmax.f32 %v9933, 0.0
  %v10062 = vmax.f32 %v9934, 0.0
  %v10063 = vmax.f32 %v9935, 0.0
  %v10064 = vmax.f32 %v9936, 0.0
  %v10065 = vmax.f32 %v9937, 0.0
  %v10066 = vmax.f32 %v9938, 0.0
  %v10067 = vmax.f32 %v9939, 0.0
  %v10068 = vmax.f32 %v9940, 0.0
  %v10069 = vmax.f32 %v9941, 0.0
  %v10070 = vmax.f32 %v9942, 0.0
  %v10071 = vmax.f32 %v9943, 0.0
  %v10072 = vmax.f32 %v9944, 0.0
  %v10073 = vmax.f32 %v9945, 0.0
  %v10074 = vmax.f32 %v9946, 0.0
  %v10075 = vmax.f32 %v9947, 0.0
  %v10076 = vmax.f32 %v9948, 0.0
  %v10077 = vmax.f32 %v9949, 0.0
  %v10078 = vmax.f32 %v9950, 0.0
  %v10079 = vmax.f32 %v9951, 0.0
  %v10080 = vmax.f32 %v9952, 0.0
  %v10081 = vmax.f32 %v9953, 0.0
  %v10082 = vmax.f32 %v9954, 0.0
  %v10083 = vmax.f32 %v9955, 0.0
  %v10084 = vmax.f32 %v9956, 0.0
  %v10085 = vmax.f32 %v9957, 0.0
  %v10086 = vmax.f32 %v9958, 0.0
  %v10087 = vmax.f32 %v9959, 0.0
  %v10088 = vmax.f32 %v9960, 0.0
  %v10089 = vmax.f32 %v9961, 0.0
  %v10090 = vmax.f32 %v9962, 0.0
  %v10091 = vmax.f32 %v9963, 0.0
  %v10092 = vmax.f32 %v9964, 0.0
  %v10093 = vmax.f32 %v9965, 0.0
  %v10094 = vmax.f32 %v9966, 0.0
  %v10095 = vmax.f32 %v9967, 0.0
  %v10096 = vmax.f32 %v9968, 0.0
  %v10097 = vmax.f32 %v9969, 0.0
  %v10098 = vmax.f32 %v9970, 0.0
  %v10099 = vmax.f32 %v9971, 0.0
  %v10100 = vmax.f32 %v9972, 0.0
  %v10101 = vmax.f32 %v9973, 0.0
  %v10102 = vmax.f32 %v9974, 0.0
  %v10103 = vmax.f32 %v9975, 0.0
  %v10104 = vmax.f32 %v9976, 0.0
  %v10105 = vmax.f32 %v9977, 0.0
  %v10106 = vmax.f32 %v9978, 0.0
  %v10107 = vmax.f32 %v9979, 0.0
  %v10108 = vmax.f32 %v9980, 0.0
  %v10109 = vmax.f32 %v9981, 0.0
  %v10110 = vmax.f32 %v9982, 0.0
  %v10111 = vmax.f32 %v9983, 0.0
  %v10112 = vmax.f32 %v9984, 0.0
  %v10113 = vmax.f32 %v9985, 0.0
  %v10114 = vmax.f32 %v9986, 0.0
  %v10115 = vmax.f32 %v9987, 0.0
  %v10116 = vmax.f32 %v9988, 0.0
  %v10117 = vmax.f32 %v9989, 0.0
  %v10118 = vmax.f32 %v9990, 0.0
  %v10119 = vmax.f32 %v9991, 0.0
  %v10120 = vmax.f32 %v9992, 0.0
  %v10121 = vmax.f32 %v9993, 0.0
  %v10122 = vmax.f32 %v9994, 0.0
  %v10123 = vmax.f32 %v9995, 0.0
  %v10124 = vmax.f32 %v9996, 0.0
  %v10125 = vmax.f32 %v9997, 0.0
  %v10126 = vmax.f32 %v9998, 0.0
  %v10127 = vmax.f32 %v9999, 0.0
  %v10128 = vmax.f32 %v10000, 0.0
  %v10129 = vmax.f32 %v10001, 0.0
  %v10130 = vmax.f32 %v10002, 0.0
  %v10131 = vmax.f32 %v10003, 0.0
  %v10132 = vmax.f32 %v10004, 0.0
  %v10133 = vmax.f32 %v10005, 0.0
  %v10134 = vmax.f32 %v10006, 0.0
  %v10135 = vmax.f32 %v10007, 0.0
  %v10136 = vmax.f32 %v10008, 0.0
  %v10137 = vmax.f32 %v10009, 0.0
  %v10138 = vmax.f32 %v10010, 0.0
  %v10139 = vmax.f32 %v10011, 0.0
  %v10140 = vmax.f32 %v10012, 0.0
  %v10141 = vmax.f32 %v10013, 0.0
  %v10142 = vmax.f32 %v10014, 0.0
  %v10143 = vmax.f32 %v10015, 0.0
  %v10144 = vmax.f32 %v10016, 0.0
  %v10145 = vmax.f32 %v10017, 0.0
  %v10146 = vmax.f32 %v10018, 0.0
  %v10147 = vmax.f32 %v10019, 0.0
  %v10148 = vmax.f32 %v10020, 0.0
  %v10149 = vmax.f32 %v10021, 0.0
  %v10150 = vmax.f32 %v10022, 0.0
  %v10151 = vmax.f32 %v10023, 0.0
  %v10152 = vmax.f32 %v10024, 0.0
  %v10153 = vmax.f32 %v10025, 0.0
  %v10154 = vmax.f32 %v10026, 0.0
  %v10155 = vmax.f32 %v10027, 0.0
  %v10156 = vmax.f32 %v10028, 0.0
  %v10157 = vmax.f32 %v10029, 0.0
  %v10158 = vmax.f32 %v10030, 0.0
  %v10159 = vmax.f32 %v10031, 0.0
  %v10160 = vmax.f32 %v10032, 0.0
  %v10161 = vmax.f32 %v10033, 0.0
  %v10162 = vmax.f32 %v10034, 0.0
  %v10163 = vpack.c.bf16 %v10037, %v10035
  %v10164 = vpack.c.bf16 %v10038, %v10036
  %v10165 = vpack.c.bf16 %v10041, %v10039
  %v10166 = vpack.c.bf16 %v10042, %v10040
  %v10167 = vpack.c.bf16 %v10045, %v10043
  %v10168 = vpack.c.bf16 %v10046, %v10044
  %v10169 = vpack.c.bf16 %v10049, %v10047
  %v10170 = vpack.c.bf16 %v10050, %v10048
  %v10171 = vpack.c.bf16 %v10053, %v10051
  %v10172 = vpack.c.bf16 %v10054, %v10052
  %v10173 = vpack.c.bf16 %v10057, %v10055
  %v10174 = vpack.c.bf16 %v10058, %v10056
  %v10175 = vpack.c.bf16 %v10061, %v10059
  %v10176 = vpack.c.bf16 %v10062, %v10060
  %v10177 = vpack.c.bf16 %v10065, %v10063
  %v10178 = vpack.c.bf16 %v10066, %v10064
  %v10179 = vpack.c.bf16 %v10069, %v10067
  %v10180 = vpack.c.bf16 %v10070, %v10068
  %v10181 = vpack.c.bf16 %v10073, %v10071
  %v10182 = vpack.c.bf16 %v10074, %v10072
  %v10183 = vpack.c.bf16 %v10077, %v10075
  %v10184 = vpack.c.bf16 %v10078, %v10076
  %v10185 = vpack.c.bf16 %v10081, %v10079
  %v10186 = vpack.c.bf16 %v10082, %v10080
  %v10187 = vpack.c.bf16 %v10085, %v10083
  %v10188 = vpack.c.bf16 %v10086, %v10084
  %v10189 = vpack.c.bf16 %v10089, %v10087
  %v10190 = vpack.c.bf16 %v10090, %v10088
  %v10191 = vpack.c.bf16 %v10093, %v10091
  %v10192 = vpack.c.bf16 %v10094, %v10092
  %v10193 = vpack.c.bf16 %v10097, %v10095
  %v10194 = vpack.c.bf16 %v10098, %v10096
  %v10195 = vpack.c.bf16 %v10101, %v10099
  %v10196 = vpack.c.bf16 %v10102, %v10100
  %v10197 = vpack.c.bf16 %v10105, %v10103
  %v10198 = vpack.c.bf16 %v10106, %v10104
  %v10199 = vpack.c.bf16 %v10109, %v10107
  %v10200 = vpack.c.bf16 %v10110, %v10108
  %v10201 = vpack.c.bf16 %v10113, %v10111
  %v10202 = vpack.c.bf16 %v10114, %v10112
  %v10203 = vpack.c.bf16 %v10117, %v10115
  %v10204 = vpack.c.bf16 %v10118, %v10116
  %v10205 = vpack.c.bf16 %v10121, %v10119
  %v10206 = vpack.c.bf16 %v10122, %v10120
  %v10207 = vpack.c.bf16 %v10125, %v10123
  %v10208 = vpack.c.bf16 %v10126, %v10124
  %v10209 = vpack.c.bf16 %v10129, %v10127
  %v10210 = vpack.c.bf16 %v10130, %v10128
  %v10211 = vpack.c.bf16 %v10133, %v10131
  %v10212 = vpack.c.bf16 %v10134, %v10132
  %v10213 = vpack.c.bf16 %v10137, %v10135
  %v10214 = vpack.c.bf16 %v10138, %v10136
  %v10215 = vpack.c.bf16 %v10141, %v10139
  %v10216 = vpack.c.bf16 %v10142, %v10140
  %v10217 = vpack.c.bf16 %v10145, %v10143
  %v10218 = vpack.c.bf16 %v10146, %v10144
  %v10219 = vpack.c.bf16 %v10149, %v10147
  %v10220 = vpack.c.bf16 %v10150, %v10148
  %v10221 = vpack.c.bf16 %v10153, %v10151
  %v10222 = vpack.c.bf16 %v10154, %v10152
  %v10223 = vpack.c.bf16 %v10157, %v10155
  %v10224 = vpack.c.bf16 %v10158, %v10156
  %v10225 = vpack.c.bf16 %v10161, %v10159
  %v10226 = vpack.c.bf16 %v10162, %v10160
  %v10227 = vld [vmem:[%s6] sm:$0xf]
  %v10228 = vld [vmem:[%s6 + $0x4] sm:$0xf]
  %v10229 = vld [vmem:[%s6 + $0x8] sm:$0xf]
  %v10230 = vld [vmem:[%s6 + $0xc] sm:$0xf]
  %v10231 = vld [vmem:[%s6 + $0x10] sm:$0xf]
  %v10232 = vld [vmem:[%s6 + $0x14] sm:$0xf]
  %v10233 = vld [vmem:[%s6 + $0x18] sm:$0xf]
  %v10234 = vld [vmem:[%s6 + $0x1c] sm:$0xf]
  %v10235 = vld [vmem:[%s6 + $0x20] sm:$0xf]
  %v10236 = vld [vmem:[%s6 + $0x24] sm:$0xf]
  %v10237 = vld [vmem:[%s6 + $0x28] sm:$0xf]
  %v10238 = vld [vmem:[%s6 + $0x2c] sm:$0xf]
  %v10239 = vld [vmem:[%s6 + $0x30] sm:$0xf]
  %v10240 = vld [vmem:[%s6 + $0x34] sm:$0xf]
  %v10241 = vld [vmem:[%s6 + $0x38] sm:$0xf]
  %v10242 = vld [vmem:[%s6 + $0x3c] sm:$0xf]
  %v10243 = vld [vmem:[%s6 + $0x40] sm:$0xf]
  %v10244 = vld [vmem:[%s6 + $0x44] sm:$0xf]
  %v10245 = vld [vmem:[%s6 + $0x48] sm:$0xf]
  %v10246 = vld [vmem:[%s6 + $0x4c] sm:$0xf]
  %v10267 = vunpack.c.l.b16 %v10227
  %v10268 = vunpack.c.l.b16 %v10228
  %v10269 = vunpack.c.l.b16 %v10229
  %v10270 = vunpack.c.l.b16 %v10230
  %v10271 = vunpack.c.l.b16 %v10231
  %v10272 = vunpack.c.l.b16 %v10232
  %v10273 = vunpack.c.l.b16 %v10233
  %v10274 = vunpack.c.l.b16 %v10234
  %v10275 = vunpack.c.l.b16 %v10235
  %v10276 = vunpack.c.l.b16 %v10236
  %v10277 = vunpack.c.l.b16 %v10237
  %v10278 = vunpack.c.l.b16 %v10238
  %v10279 = vunpack.c.l.b16 %v10239
  %v10280 = vunpack.c.l.b16 %v10240
  %v10281 = vunpack.c.l.b16 %v10241
  %v10282 = vunpack.c.l.b16 %v10242
  %v10283 = vunpack.c.l.b16 %v10243
  %v10284 = vunpack.c.l.b16 %v10244
  %v10285 = vunpack.c.l.b16 %v10245
  %v10286 = vunpack.c.l.b16 %v10246
  %v10287 = vpack.c.b16 %v10268, %v10267
  %v10288 = vpack.c.b16 %v10270, %v10269
  %v10289 = vpack.c.b16 %v10272, %v10271
  %v10290 = vpack.c.b16 %v10274, %v10273
  %v10291 = vpack.c.b16 %v10276, %v10275
  %v10292 = vpack.c.b16 %v10278, %v10277
  %v10293 = vpack.c.b16 %v10280, %v10279
  %v10294 = vpack.c.b16 %v10282, %v10281
  %v10295 = vpack.c.b16 %v10284, %v10283
  %v10296 = vpack.c.b16 %v10286, %v10285
  %v10308 = vsel %vm875, %v10164, 0
  %v10311 = vsel %vm875, %v10166, 0
  %v10314 = vsel %vm875, %v10168, 0
  %v10317 = vsel %vm875, %v10170, 0
  %v10320 = vsel %vm875, %v10172, 0
  %v10323 = vsel %vm875, %v10174, 0
  %v10326 = vsel %vm875, %v10176, 0
  %v10329 = vsel %vm875, %v10178, 0
  %v10332 = vsel %vm875, %v10180, 0
  %v10335 = vsel %vm875, %v10182, 0
  %v10338 = vsel %vm875, %v10184, 0
  %v10341 = vsel %vm875, %v10186, 0
  %v10344 = vsel %vm875, %v10188, 0
  %v10347 = vsel %vm875, %v10190, 0
  %v10350 = vsel %vm875, %v10192, 0
  %v10353 = vsel %vm875, %v10194, 0
  %v10356 = vsel %vm875, %v10196, 0
  %v10359 = vsel %vm875, %v10198, 0
  %v10362 = vsel %vm875, %v10200, 0
  %v10365 = vsel %vm875, %v10202, 0
  %v10368 = vsel %vm875, %v10204, 0
  %v10371 = vsel %vm875, %v10206, 0
  %v10374 = vsel %vm875, %v10208, 0
  %v10377 = vsel %vm875, %v10210, 0
  %v10380 = vsel %vm875, %v10212, 0
  %v10383 = vsel %vm875, %v10214, 0
  %v10386 = vsel %vm875, %v10216, 0
  %v10389 = vsel %vm875, %v10218, 0
  %v10392 = vsel %vm875, %v10220, 0
  %v10395 = vsel %vm875, %v10222, 0
  %v10398 = vsel %vm875, %v10224, 0
  %v10401 = vsel %vm875, %v10226, 0
  %10403 = vmatpush.bf16.msra.mxu0 %v10294
  %10404 = vmatpush.bf16.msra.mxu0 %v10293
  %10405 = vmatpush.bf16.msra.mxu0 %v10292
  %10406 = vmatpush.bf16.msra.mxu0 %v10291
  %10407 = vmatpush.bf16.msra.mxu0 %v10290
  %10408 = vmatpush.bf16.msra.mxu0 %v10289
  %10409 = vmatpush.bf16.msra.mxu0 %v10288
  %10410 = vmatpush.bf16.msra.mxu0 %v10287
  %10411 = vmatmul.bf16.gmra.mxu0 %v10163
  %v10412 = vpop.f32.mrf.mxu0
  %v10413 = vadd.f32 0.0, %v10412
  %v10414 = vpop.f32.mrf.mxu0
  %v10415 = vadd.f32 0.0, %v10414
  %10416 = vmatmul.bf16.gmra.mxu0 %v10165
  %v10417 = vpop.f32.mrf.mxu0
  %v10418 = vadd.f32 0.0, %v10417
  %v10419 = vpop.f32.mrf.mxu0
  %v10420 = vadd.f32 0.0, %v10419
  %10421 = vmatmul.bf16.gmra.mxu0 %v10167
  %v10422 = vpop.f32.mrf.mxu0
  %v10423 = vadd.f32 0.0, %v10422
  %v10424 = vpop.f32.mrf.mxu0
  %v10425 = vadd.f32 0.0, %v10424
  %10426 = vmatmul.bf16.gmra.mxu0 %v10169
  %v10427 = vpop.f32.mrf.mxu0
  %v10428 = vadd.f32 0.0, %v10427
  %v10429 = vpop.f32.mrf.mxu0
  %v10430 = vadd.f32 0.0, %v10429
  %10431 = vmatmul.bf16.gmra.mxu0 %v10171
  %v10432 = vpop.f32.mrf.mxu0
  %v10433 = vadd.f32 0.0, %v10432
  %v10434 = vpop.f32.mrf.mxu0
  %v10435 = vadd.f32 0.0, %v10434
  %10436 = vmatmul.bf16.gmra.mxu0 %v10173
  %v10437 = vpop.f32.mrf.mxu0
  %v10438 = vadd.f32 0.0, %v10437
  %v10439 = vpop.f32.mrf.mxu0
  %v10440 = vadd.f32 0.0, %v10439
  %10441 = vmatmul.bf16.gmra.mxu0 %v10175
  %v10442 = vpop.f32.mrf.mxu0
  %v10443 = vadd.f32 0.0, %v10442
  %v10444 = vpop.f32.mrf.mxu0
  %v10445 = vadd.f32 0.0, %v10444
  %10446 = vmatmul.bf16.gmra.mxu0 %v10177
  %v10447 = vpop.f32.mrf.mxu0
  %v10448 = vadd.f32 0.0, %v10447
  %v10449 = vpop.f32.mrf.mxu0
  %v10450 = vadd.f32 0.0, %v10449
  %10451 = vmatmul.bf16.gmra.mxu0 %v10179
  %v10452 = vpop.f32.mrf.mxu0
  %v10453 = vadd.f32 0.0, %v10452
  %v10454 = vpop.f32.mrf.mxu0
  %v10455 = vadd.f32 0.0, %v10454
  %10456 = vmatmul.bf16.gmra.mxu0 %v10181
  %v10457 = vpop.f32.mrf.mxu0
  %v10458 = vadd.f32 0.0, %v10457
  %v10459 = vpop.f32.mrf.mxu0
  %v10460 = vadd.f32 0.0, %v10459
  %10461 = vmatmul.bf16.gmra.mxu0 %v10183
  %v10462 = vpop.f32.mrf.mxu0
  %v10463 = vadd.f32 0.0, %v10462
  %v10464 = vpop.f32.mrf.mxu0
  %v10465 = vadd.f32 0.0, %v10464
  %10466 = vmatmul.bf16.gmra.mxu0 %v10185
  %v10467 = vpop.f32.mrf.mxu0
  %v10468 = vadd.f32 0.0, %v10467
  %v10469 = vpop.f32.mrf.mxu0
  %v10470 = vadd.f32 0.0, %v10469
  %10471 = vmatmul.bf16.gmra.mxu0 %v10187
  %v10472 = vpop.f32.mrf.mxu0
  %v10473 = vadd.f32 0.0, %v10472
  %v10474 = vpop.f32.mrf.mxu0
  %v10475 = vadd.f32 0.0, %v10474
  %10476 = vmatmul.bf16.gmra.mxu0 %v10189
  %v10477 = vpop.f32.mrf.mxu0
  %v10478 = vadd.f32 0.0, %v10477
  %v10479 = vpop.f32.mrf.mxu0
  %v10480 = vadd.f32 0.0, %v10479
  %10481 = vmatmul.bf16.gmra.mxu0 %v10191
  %v10482 = vpop.f32.mrf.mxu0
  %v10483 = vadd.f32 0.0, %v10482
  %v10484 = vpop.f32.mrf.mxu0
  %v10485 = vadd.f32 0.0, %v10484
  %10486 = vmatmul.bf16.gmra.mxu0 %v10193
  %v10487 = vpop.f32.mrf.mxu0
  %v10488 = vadd.f32 0.0, %v10487
  %v10489 = vpop.f32.mrf.mxu0
  %v10490 = vadd.f32 0.0, %v10489
  %10491 = vmatmul.bf16.gmra.mxu0 %v10195
  %v10492 = vpop.f32.mrf.mxu0
  %v10493 = vadd.f32 0.0, %v10492
  %v10494 = vpop.f32.mrf.mxu0
  %v10495 = vadd.f32 0.0, %v10494
  %10496 = vmatmul.bf16.gmra.mxu0 %v10197
  %v10497 = vpop.f32.mrf.mxu0
  %v10498 = vadd.f32 0.0, %v10497
  %v10499 = vpop.f32.mrf.mxu0
  %v10500 = vadd.f32 0.0, %v10499
  %10501 = vmatmul.bf16.gmra.mxu0 %v10199
  %v10502 = vpop.f32.mrf.mxu0
  %v10503 = vadd.f32 0.0, %v10502
  %v10504 = vpop.f32.mrf.mxu0
  %v10505 = vadd.f32 0.0, %v10504
  %10506 = vmatmul.bf16.gmra.mxu0 %v10201
  %v10507 = vpop.f32.mrf.mxu0
  %v10508 = vadd.f32 0.0, %v10507
  %v10509 = vpop.f32.mrf.mxu0
  %v10510 = vadd.f32 0.0, %v10509
  %10511 = vmatmul.bf16.gmra.mxu0 %v10203
  %v10512 = vpop.f32.mrf.mxu0
  %v10513 = vadd.f32 0.0, %v10512
  %v10514 = vpop.f32.mrf.mxu0
  %v10515 = vadd.f32 0.0, %v10514
  %10516 = vmatmul.bf16.gmra.mxu0 %v10205
  %v10517 = vpop.f32.mrf.mxu0
  %v10518 = vadd.f32 0.0, %v10517
  %v10519 = vpop.f32.mrf.mxu0
  %v10520 = vadd.f32 0.0, %v10519
  %10521 = vmatmul.bf16.gmra.mxu0 %v10207
  %v10522 = vpop.f32.mrf.mxu0
  %v10523 = vadd.f32 0.0, %v10522
  %v10524 = vpop.f32.mrf.mxu0
  %v10525 = vadd.f32 0.0, %v10524
  %10526 = vmatmul.bf16.gmra.mxu0 %v10209
  %v10527 = vpop.f32.mrf.mxu0
  %v10528 = vadd.f32 0.0, %v10527
  %v10529 = vpop.f32.mrf.mxu0
  %v10530 = vadd.f32 0.0, %v10529
  %10531 = vmatmul.bf16.gmra.mxu0 %v10211
  %v10532 = vpop.f32.mrf.mxu0
  %v10533 = vadd.f32 0.0, %v10532
  %v10534 = vpop.f32.mrf.mxu0
  %v10535 = vadd.f32 0.0, %v10534
  %10536 = vmatmul.bf16.gmra.mxu0 %v10213
  %v10537 = vpop.f32.mrf.mxu0
  %v10538 = vadd.f32 0.0, %v10537
  %v10539 = vpop.f32.mrf.mxu0
  %v10540 = vadd.f32 0.0, %v10539
  %10541 = vmatmul.bf16.gmra.mxu0 %v10215
  %v10542 = vpop.f32.mrf.mxu0
  %v10543 = vadd.f32 0.0, %v10542
  %v10544 = vpop.f32.mrf.mxu0
  %v10545 = vadd.f32 0.0, %v10544
  %10546 = vmatmul.bf16.gmra.mxu0 %v10217
  %v10547 = vpop.f32.mrf.mxu0
  %v10548 = vadd.f32 0.0, %v10547
  %v10549 = vpop.f32.mrf.mxu0
  %v10550 = vadd.f32 0.0, %v10549
  %10551 = vmatmul.bf16.gmra.mxu0 %v10219
  %v10552 = vpop.f32.mrf.mxu0
  %v10553 = vadd.f32 0.0, %v10552
  %v10554 = vpop.f32.mrf.mxu0
  %v10555 = vadd.f32 0.0, %v10554
  %10556 = vmatmul.bf16.gmra.mxu0 %v10221
  %v10557 = vpop.f32.mrf.mxu0
  %v10558 = vadd.f32 0.0, %v10557
  %v10559 = vpop.f32.mrf.mxu0
  %v10560 = vadd.f32 0.0, %v10559
  %10561 = vmatmul.bf16.gmra.mxu0 %v10223
  %v10562 = vpop.f32.mrf.mxu0
  %v10563 = vadd.f32 0.0, %v10562
  %v10564 = vpop.f32.mrf.mxu0
  %v10565 = vadd.f32 0.0, %v10564
  %10566 = vmatmul.bf16.gmra.mxu0 %v10225
  %v10567 = vpop.f32.mrf.mxu0
  %v10568 = vadd.f32 0.0, %v10567
  %v10569 = vpop.f32.mrf.mxu0
  %v10570 = vadd.f32 0.0, %v10569
  %10571 = vdwg.mxu0
  %10572 = vmatpush.bf16.msra.mxu0 0
  %10573 = vmatpush.bf16.msra.mxu0 0
  %10574 = vmatpush.bf16.msra.mxu0 0
  %10575 = vmatpush.bf16.msra.mxu0 0
  %10576 = vmatpush.bf16.msra.mxu0 0
  %10577 = vmatpush.bf16.msra.mxu0 0
  %10578 = vmatpush.bf16.msra.mxu0 %v10296
  %10579 = vmatpush.bf16.msra.mxu0 %v10295
  %10580 = vmatmul.bf16.gmra.mxu0 %v10308
  %v10581 = vpop.f32.mrf.mxu0
  %v10582 = vadd.f32 %v10413, %v10581
  %v10583 = vpop.f32.mrf.mxu0
  %v10584 = vadd.f32 %v10415, %v10583
  %10585 = vmatmul.bf16.gmra.mxu0 %v10311
  %v10586 = vpop.f32.mrf.mxu0
  %v10587 = vadd.f32 %v10418, %v10586
  %v10588 = vpop.f32.mrf.mxu0
  %v10589 = vadd.f32 %v10420, %v10588
  %10590 = vmatmul.bf16.gmra.mxu0 %v10314
  %v10591 = vpop.f32.mrf.mxu0
  %v10592 = vadd.f32 %v10423, %v10591
  %v10593 = vpop.f32.mrf.mxu0
  %v10594 = vadd.f32 %v10425, %v10593
  %10595 = vmatmul.bf16.gmra.mxu0 %v10317
  %v10596 = vpop.f32.mrf.mxu0
  %v10597 = vadd.f32 %v10428, %v10596
  %v10598 = vpop.f32.mrf.mxu0
  %v10599 = vadd.f32 %v10430, %v10598
  %10600 = vmatmul.bf16.gmra.mxu0 %v10320
  %v10601 = vpop.f32.mrf.mxu0
  %v10602 = vadd.f32 %v10433, %v10601
  %v10603 = vpop.f32.mrf.mxu0
  %v10604 = vadd.f32 %v10435, %v10603
  %10605 = vmatmul.bf16.gmra.mxu0 %v10323
  %v10606 = vpop.f32.mrf.mxu0
  %v10607 = vadd.f32 %v10438, %v10606
  %v10608 = vpop.f32.mrf.mxu0
  %v10609 = vadd.f32 %v10440, %v10608
  %10610 = vmatmul.bf16.gmra.mxu0 %v10326
  %v10611 = vpop.f32.mrf.mxu0
  %v10612 = vadd.f32 %v10443, %v10611
  %v10613 = vpop.f32.mrf.mxu0
  %v10614 = vadd.f32 %v10445, %v10613
  %10615 = vmatmul.bf16.gmra.mxu0 %v10329
  %v10616 = vpop.f32.mrf.mxu0
  %v10617 = vadd.f32 %v10448, %v10616
  %v10618 = vpop.f32.mrf.mxu0
  %v10619 = vadd.f32 %v10450, %v10618
  %10620 = vmatmul.bf16.gmra.mxu0 %v10332
  %v10621 = vpop.f32.mrf.mxu0
  %v10622 = vadd.f32 %v10453, %v10621
  %v10623 = vpop.f32.mrf.mxu0
  %v10624 = vadd.f32 %v10455, %v10623
  %10625 = vmatmul.bf16.gmra.mxu0 %v10335
  %v10626 = vpop.f32.mrf.mxu0
  %v10627 = vadd.f32 %v10458, %v10626
  %v10628 = vpop.f32.mrf.mxu0
  %v10629 = vadd.f32 %v10460, %v10628
  %10630 = vmatmul.bf16.gmra.mxu0 %v10338
  %v10631 = vpop.f32.mrf.mxu0
  %v10632 = vadd.f32 %v10463, %v10631
  %v10633 = vpop.f32.mrf.mxu0
  %v10634 = vadd.f32 %v10465, %v10633
  %10635 = vmatmul.bf16.gmra.mxu0 %v10341
  %v10636 = vpop.f32.mrf.mxu0
  %v10637 = vadd.f32 %v10468, %v10636
  %v10638 = vpop.f32.mrf.mxu0
  %v10639 = vadd.f32 %v10470, %v10638
  %10640 = vmatmul.bf16.gmra.mxu0 %v10344
  %v10641 = vpop.f32.mrf.mxu0
  %v10642 = vadd.f32 %v10473, %v10641
  %v10643 = vpop.f32.mrf.mxu0
  %v10644 = vadd.f32 %v10475, %v10643
  %10645 = vmatmul.bf16.gmra.mxu0 %v10347
  %v10646 = vpop.f32.mrf.mxu0
  %v10647 = vadd.f32 %v10478, %v10646
  %v10648 = vpop.f32.mrf.mxu0
  %v10649 = vadd.f32 %v10480, %v10648
  %10650 = vmatmul.bf16.gmra.mxu0 %v10350
  %v10651 = vpop.f32.mrf.mxu0
  %v10652 = vadd.f32 %v10483, %v10651
  %v10653 = vpop.f32.mrf.mxu0
  %v10654 = vadd.f32 %v10485, %v10653
  %10655 = vmatmul.bf16.gmra.mxu0 %v10353
  %v10656 = vpop.f32.mrf.mxu0
  %v10657 = vadd.f32 %v10488, %v10656
  %v10658 = vpop.f32.mrf.mxu0
  %v10659 = vadd.f32 %v10490, %v10658
  %10660 = vmatmul.bf16.gmra.mxu0 %v10356
  %v10661 = vpop.f32.mrf.mxu0
  %v10662 = vadd.f32 %v10493, %v10661
  %v10663 = vpop.f32.mrf.mxu0
  %v10664 = vadd.f32 %v10495, %v10663
  %10665 = vmatmul.bf16.gmra.mxu0 %v10359
  %v10666 = vpop.f32.mrf.mxu0
  %v10667 = vadd.f32 %v10498, %v10666
  %v10668 = vpop.f32.mrf.mxu0
  %v10669 = vadd.f32 %v10500, %v10668
  %10670 = vmatmul.bf16.gmra.mxu0 %v10362
  %v10671 = vpop.f32.mrf.mxu0
  %v10672 = vadd.f32 %v10503, %v10671
  %v10673 = vpop.f32.mrf.mxu0
  %v10674 = vadd.f32 %v10505, %v10673
  %10675 = vmatmul.bf16.gmra.mxu0 %v10365
  %v10676 = vpop.f32.mrf.mxu0
  %v10677 = vadd.f32 %v10508, %v10676
  %v10678 = vpop.f32.mrf.mxu0
  %v10679 = vadd.f32 %v10510, %v10678
  %10680 = vmatmul.bf16.gmra.mxu0 %v10368
  %v10681 = vpop.f32.mrf.mxu0
  %v10682 = vadd.f32 %v10513, %v10681
  %v10683 = vpop.f32.mrf.mxu0
  %v10684 = vadd.f32 %v10515, %v10683
  %10685 = vmatmul.bf16.gmra.mxu0 %v10371
  %v10686 = vpop.f32.mrf.mxu0
  %v10687 = vadd.f32 %v10518, %v10686
  %v10688 = vpop.f32.mrf.mxu0
  %v10689 = vadd.f32 %v10520, %v10688
  %10690 = vmatmul.bf16.gmra.mxu0 %v10374
  %v10691 = vpop.f32.mrf.mxu0
  %v10692 = vadd.f32 %v10523, %v10691
  %v10693 = vpop.f32.mrf.mxu0
  %v10694 = vadd.f32 %v10525, %v10693
  %10695 = vmatmul.bf16.gmra.mxu0 %v10377
  %v10696 = vpop.f32.mrf.mxu0
  %v10697 = vadd.f32 %v10528, %v10696
  %v10698 = vpop.f32.mrf.mxu0
  %v10699 = vadd.f32 %v10530, %v10698
  %10700 = vmatmul.bf16.gmra.mxu0 %v10380
  %v10701 = vpop.f32.mrf.mxu0
  %v10702 = vadd.f32 %v10533, %v10701
  %v10703 = vpop.f32.mrf.mxu0
  %v10704 = vadd.f32 %v10535, %v10703
  %10705 = vmatmul.bf16.gmra.mxu0 %v10383
  %v10706 = vpop.f32.mrf.mxu0
  %v10707 = vadd.f32 %v10538, %v10706
  %v10708 = vpop.f32.mrf.mxu0
  %v10709 = vadd.f32 %v10540, %v10708
  %10710 = vmatmul.bf16.gmra.mxu0 %v10386
  %v10711 = vpop.f32.mrf.mxu0
  %v10712 = vadd.f32 %v10543, %v10711
  %v10713 = vpop.f32.mrf.mxu0
  %v10714 = vadd.f32 %v10545, %v10713
  %10715 = vmatmul.bf16.gmra.mxu0 %v10389
  %v10716 = vpop.f32.mrf.mxu0
  %v10717 = vadd.f32 %v10548, %v10716
  %v10718 = vpop.f32.mrf.mxu0
  %v10719 = vadd.f32 %v10550, %v10718
  %10720 = vmatmul.bf16.gmra.mxu0 %v10392
  %v10721 = vpop.f32.mrf.mxu0
  %v10722 = vadd.f32 %v10553, %v10721
  %v10723 = vpop.f32.mrf.mxu0
  %v10724 = vadd.f32 %v10555, %v10723
  %10725 = vmatmul.bf16.gmra.mxu0 %v10395
  %v10726 = vpop.f32.mrf.mxu0
  %v10727 = vadd.f32 %v10558, %v10726
  %v10728 = vpop.f32.mrf.mxu0
  %v10729 = vadd.f32 %v10560, %v10728
  %10730 = vmatmul.bf16.gmra.mxu0 %v10398
  %v10731 = vpop.f32.mrf.mxu0
  %v10732 = vadd.f32 %v10563, %v10731
  %v10733 = vpop.f32.mrf.mxu0
  %v10734 = vadd.f32 %v10565, %v10733
  %10735 = vmatmul.bf16.gmra.mxu0 %v10401
  %v10736 = vpop.f32.mrf.mxu0
  %v10737 = vadd.f32 %v10568, %v10736
  %v10738 = vpop.f32.mrf.mxu0
  %v10739 = vadd.f32 %v10570, %v10738
  %10740 = vdwg.mxu0
  %s10741 = scalar_lea.vmem %s6, 80
  %v10742 = vld [vmem:[%s10741] sm:$0xf]
  %v10743 = vld [vmem:[%s10741 + $0x4] sm:$0xf]
  %v10744 = vld [vmem:[%s10741 + $0x8] sm:$0xf]
  %v10745 = vld [vmem:[%s10741 + $0xc] sm:$0xf]
  %v10746 = vld [vmem:[%s10741 + $0x10] sm:$0xf]
  %v10747 = vld [vmem:[%s10741 + $0x14] sm:$0xf]
  %v10748 = vld [vmem:[%s10741 + $0x18] sm:$0xf]
  %v10749 = vld [vmem:[%s10741 + $0x1c] sm:$0xf]
  %v10750 = vld [vmem:[%s10741 + $0x20] sm:$0xf]
  %v10751 = vld [vmem:[%s10741 + $0x24] sm:$0xf]
  %v10752 = vld [vmem:[%s10741 + $0x28] sm:$0xf]
  %v10753 = vld [vmem:[%s10741 + $0x2c] sm:$0xf]
  %v10754 = vld [vmem:[%s10741 + $0x30] sm:$0xf]
  %v10755 = vld [vmem:[%s10741 + $0x34] sm:$0xf]
  %v10756 = vld [vmem:[%s10741 + $0x38] sm:$0xf]
  %v10757 = vld [vmem:[%s10741 + $0x3c] sm:$0xf]
  %v10758 = vld [vmem:[%s10741 + $0x40] sm:$0xf]
  %v10759 = vld [vmem:[%s10741 + $0x44] sm:$0xf]
  %v10760 = vld [vmem:[%s10741 + $0x48] sm:$0xf]
  %v10761 = vld [vmem:[%s10741 + $0x4c] sm:$0xf]
  %v10782 = vunpack.c.l.b16 %v10742
  %v10783 = vunpack.c.l.b16 %v10743
  %v10784 = vunpack.c.l.b16 %v10744
  %v10785 = vunpack.c.l.b16 %v10745
  %v10786 = vunpack.c.l.b16 %v10746
  %v10787 = vunpack.c.l.b16 %v10747
  %v10788 = vunpack.c.l.b16 %v10748
  %v10789 = vunpack.c.l.b16 %v10749
  %v10790 = vunpack.c.l.b16 %v10750
  %v10791 = vunpack.c.l.b16 %v10751
  %v10792 = vunpack.c.l.b16 %v10752
  %v10793 = vunpack.c.l.b16 %v10753
  %v10794 = vunpack.c.l.b16 %v10754
  %v10795 = vunpack.c.l.b16 %v10755
  %v10796 = vunpack.c.l.b16 %v10756
  %v10797 = vunpack.c.l.b16 %v10757
  %v10798 = vunpack.c.l.b16 %v10758
  %v10799 = vunpack.c.l.b16 %v10759
  %v10800 = vunpack.c.l.b16 %v10760
  %v10801 = vunpack.c.l.b16 %v10761
  %v10802 = vpack.c.b16 %v10783, %v10782
  %v10803 = vpack.c.b16 %v10785, %v10784
  %v10804 = vpack.c.b16 %v10787, %v10786
  %v10805 = vpack.c.b16 %v10789, %v10788
  %v10806 = vpack.c.b16 %v10791, %v10790
  %v10807 = vpack.c.b16 %v10793, %v10792
  %v10808 = vpack.c.b16 %v10795, %v10794
  %v10809 = vpack.c.b16 %v10797, %v10796
  %v10810 = vpack.c.b16 %v10799, %v10798
  %v10811 = vpack.c.b16 %v10801, %v10800
  %10822 = vmatpush.bf16.msra.mxu0 %v10809
  %10823 = vmatpush.bf16.msra.mxu0 %v10808
  %10824 = vmatpush.bf16.msra.mxu0 %v10807
  %10825 = vmatpush.bf16.msra.mxu0 %v10806
  %10826 = vmatpush.bf16.msra.mxu0 %v10805
  %10827 = vmatpush.bf16.msra.mxu0 %v10804
  %10828 = vmatpush.bf16.msra.mxu0 %v10803
  %10829 = vmatpush.bf16.msra.mxu0 %v10802
  %10830 = vmatmul.bf16.gmra.mxu0 %v10163
  %v10831 = vpop.f32.mrf.mxu0
  %v10832 = vadd.f32 0.0, %v10831
  %v10833 = vpop.f32.mrf.mxu0
  %v10834 = vadd.f32 0.0, %v10833
  %10835 = vmatmul.bf16.gmra.mxu0 %v10165
  %v10836 = vpop.f32.mrf.mxu0
  %v10837 = vadd.f32 0.0, %v10836
  %v10838 = vpop.f32.mrf.mxu0
  %v10839 = vadd.f32 0.0, %v10838
  %10840 = vmatmul.bf16.gmra.mxu0 %v10167
  %v10841 = vpop.f32.mrf.mxu0
  %v10842 = vadd.f32 0.0, %v10841
  %v10843 = vpop.f32.mrf.mxu0
  %v10844 = vadd.f32 0.0, %v10843
  %10845 = vmatmul.bf16.gmra.mxu0 %v10169
  %v10846 = vpop.f32.mrf.mxu0
  %v10847 = vadd.f32 0.0, %v10846
  %v10848 = vpop.f32.mrf.mxu0
  %v10849 = vadd.f32 0.0, %v10848
  %10850 = vmatmul.bf16.gmra.mxu0 %v10171
  %v10851 = vpop.f32.mrf.mxu0
  %v10852 = vadd.f32 0.0, %v10851
  %v10853 = vpop.f32.mrf.mxu0
  %v10854 = vadd.f32 0.0, %v10853
  %10855 = vmatmul.bf16.gmra.mxu0 %v10173
  %v10856 = vpop.f32.mrf.mxu0
  %v10857 = vadd.f32 0.0, %v10856
  %v10858 = vpop.f32.mrf.mxu0
  %v10859 = vadd.f32 0.0, %v10858
  %10860 = vmatmul.bf16.gmra.mxu0 %v10175
  %v10861 = vpop.f32.mrf.mxu0
  %v10862 = vadd.f32 0.0, %v10861
  %v10863 = vpop.f32.mrf.mxu0
  %v10864 = vadd.f32 0.0, %v10863
  %10865 = vmatmul.bf16.gmra.mxu0 %v10177
  %v10866 = vpop.f32.mrf.mxu0
  %v10867 = vadd.f32 0.0, %v10866
  %v10868 = vpop.f32.mrf.mxu0
  %v10869 = vadd.f32 0.0, %v10868
  %10870 = vmatmul.bf16.gmra.mxu0 %v10179
  %v10871 = vpop.f32.mrf.mxu0
  %v10872 = vadd.f32 0.0, %v10871
  %v10873 = vpop.f32.mrf.mxu0
  %v10874 = vadd.f32 0.0, %v10873
  %10875 = vmatmul.bf16.gmra.mxu0 %v10181
  %v10876 = vpop.f32.mrf.mxu0
  %v10877 = vadd.f32 0.0, %v10876
  %v10878 = vpop.f32.mrf.mxu0
  %v10879 = vadd.f32 0.0, %v10878
  %10880 = vmatmul.bf16.gmra.mxu0 %v10183
  %v10881 = vpop.f32.mrf.mxu0
  %v10882 = vadd.f32 0.0, %v10881
  %v10883 = vpop.f32.mrf.mxu0
  %v10884 = vadd.f32 0.0, %v10883
  %10885 = vmatmul.bf16.gmra.mxu0 %v10185
  %v10886 = vpop.f32.mrf.mxu0
  %v10887 = vadd.f32 0.0, %v10886
  %v10888 = vpop.f32.mrf.mxu0
  %v10889 = vadd.f32 0.0, %v10888
  %10890 = vmatmul.bf16.gmra.mxu0 %v10187
  %v10891 = vpop.f32.mrf.mxu0
  %v10892 = vadd.f32 0.0, %v10891
  %v10893 = vpop.f32.mrf.mxu0
  %v10894 = vadd.f32 0.0, %v10893
  %10895 = vmatmul.bf16.gmra.mxu0 %v10189
  %v10896 = vpop.f32.mrf.mxu0
  %v10897 = vadd.f32 0.0, %v10896
  %v10898 = vpop.f32.mrf.mxu0
  %v10899 = vadd.f32 0.0, %v10898
  %10900 = vmatmul.bf16.gmra.mxu0 %v10191
  %v10901 = vpop.f32.mrf.mxu0
  %v10902 = vadd.f32 0.0, %v10901
  %v10903 = vpop.f32.mrf.mxu0
  %v10904 = vadd.f32 0.0, %v10903
  %10905 = vmatmul.bf16.gmra.mxu0 %v10193
  %v10906 = vpop.f32.mrf.mxu0
  %v10907 = vadd.f32 0.0, %v10906
  %v10908 = vpop.f32.mrf.mxu0
  %v10909 = vadd.f32 0.0, %v10908
  %10910 = vmatmul.bf16.gmra.mxu0 %v10195
  %v10911 = vpop.f32.mrf.mxu0
  %v10912 = vadd.f32 0.0, %v10911
  %v10913 = vpop.f32.mrf.mxu0
  %v10914 = vadd.f32 0.0, %v10913
  %10915 = vmatmul.bf16.gmra.mxu0 %v10197
  %v10916 = vpop.f32.mrf.mxu0
  %v10917 = vadd.f32 0.0, %v10916
  %v10918 = vpop.f32.mrf.mxu0
  %v10919 = vadd.f32 0.0, %v10918
  %10920 = vmatmul.bf16.gmra.mxu0 %v10199
  %v10921 = vpop.f32.mrf.mxu0
  %v10922 = vadd.f32 0.0, %v10921
  %v10923 = vpop.f32.mrf.mxu0
  %v10924 = vadd.f32 0.0, %v10923
  %10925 = vmatmul.bf16.gmra.mxu0 %v10201
  %v10926 = vpop.f32.mrf.mxu0
  %v10927 = vadd.f32 0.0, %v10926
  %v10928 = vpop.f32.mrf.mxu0
  %v10929 = vadd.f32 0.0, %v10928
  %10930 = vmatmul.bf16.gmra.mxu0 %v10203
  %v10931 = vpop.f32.mrf.mxu0
  %v10932 = vadd.f32 0.0, %v10931
  %v10933 = vpop.f32.mrf.mxu0
  %v10934 = vadd.f32 0.0, %v10933
  %10935 = vmatmul.bf16.gmra.mxu0 %v10205
  %v10936 = vpop.f32.mrf.mxu0
  %v10937 = vadd.f32 0.0, %v10936
  %v10938 = vpop.f32.mrf.mxu0
  %v10939 = vadd.f32 0.0, %v10938
  %10940 = vmatmul.bf16.gmra.mxu0 %v10207
  %v10941 = vpop.f32.mrf.mxu0
  %v10942 = vadd.f32 0.0, %v10941
  %v10943 = vpop.f32.mrf.mxu0
  %v10944 = vadd.f32 0.0, %v10943
  %10945 = vmatmul.bf16.gmra.mxu0 %v10209
  %v10946 = vpop.f32.mrf.mxu0
  %v10947 = vadd.f32 0.0, %v10946
  %v10948 = vpop.f32.mrf.mxu0
  %v10949 = vadd.f32 0.0, %v10948
  %10950 = vmatmul.bf16.gmra.mxu0 %v10211
  %v10951 = vpop.f32.mrf.mxu0
  %v10952 = vadd.f32 0.0, %v10951
  %v10953 = vpop.f32.mrf.mxu0
  %v10954 = vadd.f32 0.0, %v10953
  %10955 = vmatmul.bf16.gmra.mxu0 %v10213
  %v10956 = vpop.f32.mrf.mxu0
  %v10957 = vadd.f32 0.0, %v10956
  %v10958 = vpop.f32.mrf.mxu0
  %v10959 = vadd.f32 0.0, %v10958
  %10960 = vmatmul.bf16.gmra.mxu0 %v10215
  %v10961 = vpop.f32.mrf.mxu0
  %v10962 = vadd.f32 0.0, %v10961
  %v10963 = vpop.f32.mrf.mxu0
  %v10964 = vadd.f32 0.0, %v10963
  %10965 = vmatmul.bf16.gmra.mxu0 %v10217
  %v10966 = vpop.f32.mrf.mxu0
  %v10967 = vadd.f32 0.0, %v10966
  %v10968 = vpop.f32.mrf.mxu0
  %v10969 = vadd.f32 0.0, %v10968
  %10970 = vmatmul.bf16.gmra.mxu0 %v10219
  %v10971 = vpop.f32.mrf.mxu0
  %v10972 = vadd.f32 0.0, %v10971
  %v10973 = vpop.f32.mrf.mxu0
  %v10974 = vadd.f32 0.0, %v10973
  %10975 = vmatmul.bf16.gmra.mxu0 %v10221
  %v10976 = vpop.f32.mrf.mxu0
  %v10977 = vadd.f32 0.0, %v10976
  %v10978 = vpop.f32.mrf.mxu0
  %v10979 = vadd.f32 0.0, %v10978
  %10980 = vmatmul.bf16.gmra.mxu0 %v10223
  %v10981 = vpop.f32.mrf.mxu0
  %v10982 = vadd.f32 0.0, %v10981
  %v10983 = vpop.f32.mrf.mxu0
  %v10984 = vadd.f32 0.0, %v10983
  %10985 = vmatmul.bf16.gmra.mxu0 %v10225
  %v10986 = vpop.f32.mrf.mxu0
  %v10987 = vadd.f32 0.0, %v10986
  %v10988 = vpop.f32.mrf.mxu0
  %v10989 = vadd.f32 0.0, %v10988
  %10990 = vdwg.mxu0
  %10991 = vmatpush.bf16.msra.mxu0 0
  %10992 = vmatpush.bf16.msra.mxu0 0
  %10993 = vmatpush.bf16.msra.mxu0 0
  %10994 = vmatpush.bf16.msra.mxu0 0
  %10995 = vmatpush.bf16.msra.mxu0 0
  %10996 = vmatpush.bf16.msra.mxu0 0
  %10997 = vmatpush.bf16.msra.mxu0 %v10811
  %10998 = vmatpush.bf16.msra.mxu0 %v10810
  %10999 = vmatmul.bf16.gmra.mxu0 %v10308
  %v11000 = vpop.f32.mrf.mxu0
  %v11001 = vadd.f32 %v10832, %v11000
  %v11002 = vpop.f32.mrf.mxu0
  %v11003 = vadd.f32 %v10834, %v11002
  %11004 = vmatmul.bf16.gmra.mxu0 %v10311
  %v11005 = vpop.f32.mrf.mxu0
  %v11006 = vadd.f32 %v10837, %v11005
  %v11007 = vpop.f32.mrf.mxu0
  %v11008 = vadd.f32 %v10839, %v11007
  %11009 = vmatmul.bf16.gmra.mxu0 %v10314
  %v11010 = vpop.f32.mrf.mxu0
  %v11011 = vadd.f32 %v10842, %v11010
  %v11012 = vpop.f32.mrf.mxu0
  %v11013 = vadd.f32 %v10844, %v11012
  %11014 = vmatmul.bf16.gmra.mxu0 %v10317
  %v11015 = vpop.f32.mrf.mxu0
  %v11016 = vadd.f32 %v10847, %v11015
  %v11017 = vpop.f32.mrf.mxu0
  %v11018 = vadd.f32 %v10849, %v11017
  %11019 = vmatmul.bf16.gmra.mxu0 %v10320
  %v11020 = vpop.f32.mrf.mxu0
  %v11021 = vadd.f32 %v10852, %v11020
  %v11022 = vpop.f32.mrf.mxu0
  %v11023 = vadd.f32 %v10854, %v11022
  %11024 = vmatmul.bf16.gmra.mxu0 %v10323
  %v11025 = vpop.f32.mrf.mxu0
  %v11026 = vadd.f32 %v10857, %v11025
  %v11027 = vpop.f32.mrf.mxu0
  %v11028 = vadd.f32 %v10859, %v11027
  %11029 = vmatmul.bf16.gmra.mxu0 %v10326
  %v11030 = vpop.f32.mrf.mxu0
  %v11031 = vadd.f32 %v10862, %v11030
  %v11032 = vpop.f32.mrf.mxu0
  %v11033 = vadd.f32 %v10864, %v11032
  %11034 = vmatmul.bf16.gmra.mxu0 %v10329
  %v11035 = vpop.f32.mrf.mxu0
  %v11036 = vadd.f32 %v10867, %v11035
  %v11037 = vpop.f32.mrf.mxu0
  %v11038 = vadd.f32 %v10869, %v11037
  %11039 = vmatmul.bf16.gmra.mxu0 %v10332
  %v11040 = vpop.f32.mrf.mxu0
  %v11041 = vadd.f32 %v10872, %v11040
  %v11042 = vpop.f32.mrf.mxu0
  %v11043 = vadd.f32 %v10874, %v11042
  %11044 = vmatmul.bf16.gmra.mxu0 %v10335
  %v11045 = vpop.f32.mrf.mxu0
  %v11046 = vadd.f32 %v10877, %v11045
  %v11047 = vpop.f32.mrf.mxu0
  %v11048 = vadd.f32 %v10879, %v11047
  %11049 = vmatmul.bf16.gmra.mxu0 %v10338
  %v11050 = vpop.f32.mrf.mxu0
  %v11051 = vadd.f32 %v10882, %v11050
  %v11052 = vpop.f32.mrf.mxu0
  %v11053 = vadd.f32 %v10884, %v11052
  %11054 = vmatmul.bf16.gmra.mxu0 %v10341
  %v11055 = vpop.f32.mrf.mxu0
  %v11056 = vadd.f32 %v10887, %v11055
  %v11057 = vpop.f32.mrf.mxu0
  %v11058 = vadd.f32 %v10889, %v11057
  %11059 = vmatmul.bf16.gmra.mxu0 %v10344
  %v11060 = vpop.f32.mrf.mxu0
  %v11061 = vadd.f32 %v10892, %v11060
  %v11062 = vpop.f32.mrf.mxu0
  %v11063 = vadd.f32 %v10894, %v11062
  %11064 = vmatmul.bf16.gmra.mxu0 %v10347
  %v11065 = vpop.f32.mrf.mxu0
  %v11066 = vadd.f32 %v10897, %v11065
  %v11067 = vpop.f32.mrf.mxu0
  %v11068 = vadd.f32 %v10899, %v11067
  %11069 = vmatmul.bf16.gmra.mxu0 %v10350
  %v11070 = vpop.f32.mrf.mxu0
  %v11071 = vadd.f32 %v10902, %v11070
  %v11072 = vpop.f32.mrf.mxu0
  %v11073 = vadd.f32 %v10904, %v11072
  %11074 = vmatmul.bf16.gmra.mxu0 %v10353
  %v11075 = vpop.f32.mrf.mxu0
  %v11076 = vadd.f32 %v10907, %v11075
  %v11077 = vpop.f32.mrf.mxu0
  %v11078 = vadd.f32 %v10909, %v11077
  %11079 = vmatmul.bf16.gmra.mxu0 %v10356
  %v11080 = vpop.f32.mrf.mxu0
  %v11081 = vadd.f32 %v10912, %v11080
  %v11082 = vpop.f32.mrf.mxu0
  %v11083 = vadd.f32 %v10914, %v11082
  %11084 = vmatmul.bf16.gmra.mxu0 %v10359
  %v11085 = vpop.f32.mrf.mxu0
  %v11086 = vadd.f32 %v10917, %v11085
  %v11087 = vpop.f32.mrf.mxu0
  %v11088 = vadd.f32 %v10919, %v11087
  %11089 = vmatmul.bf16.gmra.mxu0 %v10362
  %v11090 = vpop.f32.mrf.mxu0
  %v11091 = vadd.f32 %v10922, %v11090
  %v11092 = vpop.f32.mrf.mxu0
  %v11093 = vadd.f32 %v10924, %v11092
  %11094 = vmatmul.bf16.gmra.mxu0 %v10365
  %v11095 = vpop.f32.mrf.mxu0
  %v11096 = vadd.f32 %v10927, %v11095
  %v11097 = vpop.f32.mrf.mxu0
  %v11098 = vadd.f32 %v10929, %v11097
  %11099 = vmatmul.bf16.gmra.mxu0 %v10368
  %v11100 = vpop.f32.mrf.mxu0
  %v11101 = vadd.f32 %v10932, %v11100
  %v11102 = vpop.f32.mrf.mxu0
  %v11103 = vadd.f32 %v10934, %v11102
  %11104 = vmatmul.bf16.gmra.mxu0 %v10371
  %v11105 = vpop.f32.mrf.mxu0
  %v11106 = vadd.f32 %v10937, %v11105
  %v11107 = vpop.f32.mrf.mxu0
  %v11108 = vadd.f32 %v10939, %v11107
  %11109 = vmatmul.bf16.gmra.mxu0 %v10374
  %v11110 = vpop.f32.mrf.mxu0
  %v11111 = vadd.f32 %v10942, %v11110
  %v11112 = vpop.f32.mrf.mxu0
  %v11113 = vadd.f32 %v10944, %v11112
  %11114 = vmatmul.bf16.gmra.mxu0 %v10377
  %v11115 = vpop.f32.mrf.mxu0
  %v11116 = vadd.f32 %v10947, %v11115
  %v11117 = vpop.f32.mrf.mxu0
  %v11118 = vadd.f32 %v10949, %v11117
  %11119 = vmatmul.bf16.gmra.mxu0 %v10380
  %v11120 = vpop.f32.mrf.mxu0
  %v11121 = vadd.f32 %v10952, %v11120
  %v11122 = vpop.f32.mrf.mxu0
  %v11123 = vadd.f32 %v10954, %v11122
  %11124 = vmatmul.bf16.gmra.mxu0 %v10383
  %v11125 = vpop.f32.mrf.mxu0
  %v11126 = vadd.f32 %v10957, %v11125
  %v11127 = vpop.f32.mrf.mxu0
  %v11128 = vadd.f32 %v10959, %v11127
  %11129 = vmatmul.bf16.gmra.mxu0 %v10386
  %v11130 = vpop.f32.mrf.mxu0
  %v11131 = vadd.f32 %v10962, %v11130
  %v11132 = vpop.f32.mrf.mxu0
  %v11133 = vadd.f32 %v10964, %v11132
  %11134 = vmatmul.bf16.gmra.mxu0 %v10389
  %v11135 = vpop.f32.mrf.mxu0
  %v11136 = vadd.f32 %v10967, %v11135
  %v11137 = vpop.f32.mrf.mxu0
  %v11138 = vadd.f32 %v10969, %v11137
  %11139 = vmatmul.bf16.gmra.mxu0 %v10392
  %v11140 = vpop.f32.mrf.mxu0
  %v11141 = vadd.f32 %v10972, %v11140
  %v11142 = vpop.f32.mrf.mxu0
  %v11143 = vadd.f32 %v10974, %v11142
  %11144 = vmatmul.bf16.gmra.mxu0 %v10395
  %v11145 = vpop.f32.mrf.mxu0
  %v11146 = vadd.f32 %v10977, %v11145
  %v11147 = vpop.f32.mrf.mxu0
  %v11148 = vadd.f32 %v10979, %v11147
  %11149 = vmatmul.bf16.gmra.mxu0 %v10398
  %v11150 = vpop.f32.mrf.mxu0
  %v11151 = vadd.f32 %v10982, %v11150
  %v11152 = vpop.f32.mrf.mxu0
  %v11153 = vadd.f32 %v10984, %v11152
  %11154 = vmatmul.bf16.gmra.mxu0 %v10401
  %v11155 = vpop.f32.mrf.mxu0
  %v11156 = vadd.f32 %v10987, %v11155
  %v11157 = vpop.f32.mrf.mxu0
  %v11158 = vadd.f32 %v10989, %v11157
  %11159 = vdwg.mxu0
  %v11160 = vmax.f32 %v10582, %v11001
  %v11161 = vmax.f32 %v10584, %v11003
  %v11162 = vmax.f32 %v10587, %v11006
  %v11163 = vmax.f32 %v10589, %v11008
  %v11164 = vmax.f32 %v10592, %v11011
  %v11165 = vmax.f32 %v10594, %v11013
  %v11166 = vmax.f32 %v10597, %v11016
  %v11167 = vmax.f32 %v10599, %v11018
  %v11168 = vmax.f32 %v10602, %v11021
  %v11169 = vmax.f32 %v10604, %v11023
  %v11170 = vmax.f32 %v10607, %v11026
  %v11171 = vmax.f32 %v10609, %v11028
  %v11172 = vmax.f32 %v10612, %v11031
  %v11173 = vmax.f32 %v10614, %v11033
  %v11174 = vmax.f32 %v10617, %v11036
  %v11175 = vmax.f32 %v10619, %v11038
  %v11176 = vmax.f32 %v10622, %v11041
  %v11177 = vmax.f32 %v10624, %v11043
  %v11178 = vmax.f32 %v10627, %v11046
  %v11179 = vmax.f32 %v10629, %v11048
  %v11180 = vmax.f32 %v10632, %v11051
  %v11181 = vmax.f32 %v10634, %v11053
  %v11182 = vmax.f32 %v10637, %v11056
  %v11183 = vmax.f32 %v10639, %v11058
  %v11184 = vmax.f32 %v10642, %v11061
  %v11185 = vmax.f32 %v10644, %v11063
  %v11186 = vmax.f32 %v10647, %v11066
  %v11187 = vmax.f32 %v10649, %v11068
  %v11188 = vmax.f32 %v10652, %v11071
  %v11189 = vmax.f32 %v10654, %v11073
  %v11190 = vmax.f32 %v10657, %v11076
  %v11191 = vmax.f32 %v10659, %v11078
  %v11192 = vmax.f32 %v10662, %v11081
  %v11193 = vmax.f32 %v10664, %v11083
  %v11194 = vmax.f32 %v10667, %v11086
  %v11195 = vmax.f32 %v10669, %v11088
  %v11196 = vmax.f32 %v10672, %v11091
  %v11197 = vmax.f32 %v10674, %v11093
  %v11198 = vmax.f32 %v10677, %v11096
  %v11199 = vmax.f32 %v10679, %v11098
  %v11200 = vmax.f32 %v10682, %v11101
  %v11201 = vmax.f32 %v10684, %v11103
  %v11202 = vmax.f32 %v10687, %v11106
  %v11203 = vmax.f32 %v10689, %v11108
  %v11204 = vmax.f32 %v10692, %v11111
  %v11205 = vmax.f32 %v10694, %v11113
  %v11206 = vmax.f32 %v10697, %v11116
  %v11207 = vmax.f32 %v10699, %v11118
  %v11208 = vmax.f32 %v10702, %v11121
  %v11209 = vmax.f32 %v10704, %v11123
  %v11210 = vmax.f32 %v10707, %v11126
  %v11211 = vmax.f32 %v10709, %v11128
  %v11212 = vmax.f32 %v10712, %v11131
  %v11213 = vmax.f32 %v10714, %v11133
  %v11214 = vmax.f32 %v10717, %v11136
  %v11215 = vmax.f32 %v10719, %v11138
  %v11216 = vmax.f32 %v10722, %v11141
  %v11217 = vmax.f32 %v10724, %v11143
  %v11218 = vmax.f32 %v10727, %v11146
  %v11219 = vmax.f32 %v10729, %v11148
  %v11220 = vmax.f32 %v10732, %v11151
  %v11221 = vmax.f32 %v10734, %v11153
  %v11222 = vmax.f32 %v10737, %v11156
  %v11223 = vmax.f32 %v10739, %v11158
  %vm11224 = vcmask 654336
  %11225 = vst.msk [vmem:[#allocation5] sm:$0xff] %vm11224, %v11160
  %11226 = vst.msk [vmem:[#allocation5 + $0x8] sm:$0xff] %vm11224, %v11161
  %11227 = vst.msk [vmem:[#allocation5 + $0x10] sm:$0xff] %vm11224, %v11162
  %11228 = vst.msk [vmem:[#allocation5 + $0x18] sm:$0xff] %vm11224, %v11163
  %11229 = vst.msk [vmem:[#allocation5 + $0x20] sm:$0xff] %vm11224, %v11164
  %11230 = vst.msk [vmem:[#allocation5 + $0x28] sm:$0xff] %vm11224, %v11165
  %11231 = vst.msk [vmem:[#allocation5 + $0x30] sm:$0xff] %vm11224, %v11166
  %11232 = vst.msk [vmem:[#allocation5 + $0x38] sm:$0xff] %vm11224, %v11167
  %11233 = vst.msk [vmem:[#allocation5 + $0x40] sm:$0xff] %vm11224, %v11168
  %11234 = vst.msk [vmem:[#allocation5 + $0x48] sm:$0xff] %vm11224, %v11169
  %11235 = vst.msk [vmem:[#allocation5 + $0x50] sm:$0xff] %vm11224, %v11170
  %11236 = vst.msk [vmem:[#allocation5 + $0x58] sm:$0xff] %vm11224, %v11171
  %11237 = vst.msk [vmem:[#allocation5 + $0x60] sm:$0xff] %vm11224, %v11172
  %11238 = vst.msk [vmem:[#allocation5 + $0x68] sm:$0xff] %vm11224, %v11173
  %11239 = vst.msk [vmem:[#allocation5 + $0x70] sm:$0xff] %vm11224, %v11174
  %11240 = vst.msk [vmem:[#allocation5 + $0x78] sm:$0xff] %vm11224, %v11175
  %11241 = vst.msk [vmem:[#allocation5 + $0x80] sm:$0xff] %vm11224, %v11176
  %11242 = vst.msk [vmem:[#allocation5 + $0x88] sm:$0xff] %vm11224, %v11177
  %11243 = vst.msk [vmem:[#allocation5 + $0x90] sm:$0xff] %vm11224, %v11178
  %11244 = vst.msk [vmem:[#allocation5 + $0x98] sm:$0xff] %vm11224, %v11179
  %11245 = vst.msk [vmem:[#allocation5 + $0xa0] sm:$0xff] %vm11224, %v11180
  %11246 = vst.msk [vmem:[#allocation5 + $0xa8] sm:$0xff] %vm11224, %v11181
  %11247 = vst.msk [vmem:[#allocation5 + $0xb0] sm:$0xff] %vm11224, %v11182
  %11248 = vst.msk [vmem:[#allocation5 + $0xb8] sm:$0xff] %vm11224, %v11183
  %11249 = vst.msk [vmem:[#allocation5 + $0xc0] sm:$0xff] %vm11224, %v11184
  %11250 = vst.msk [vmem:[#allocation5 + $0xc8] sm:$0xff] %vm11224, %v11185
  %11251 = vst.msk [vmem:[#allocation5 + $0xd0] sm:$0xff] %vm11224, %v11186
  %11252 = vst.msk [vmem:[#allocation5 + $0xd8] sm:$0xff] %vm11224, %v11187
  %11253 = vst.msk [vmem:[#allocation5 + $0xe0] sm:$0xff] %vm11224, %v11188
  %11254 = vst.msk [vmem:[#allocation5 + $0xe8] sm:$0xff] %vm11224, %v11189
  %11255 = vst.msk [vmem:[#allocation5 + $0xf0] sm:$0xff] %vm11224, %v11190
  %11256 = vst.msk [vmem:[#allocation5 + $0xf8] sm:$0xff] %vm11224, %v11191
  %11257 = vst.msk [vmem:[#allocation5 + $0x100] sm:$0xff] %vm11224, %v11192
  %11258 = vst.msk [vmem:[#allocation5 + $0x108] sm:$0xff] %vm11224, %v11193
  %11259 = vst.msk [vmem:[#allocation5 + $0x110] sm:$0xff] %vm11224, %v11194
  %11260 = vst.msk [vmem:[#allocation5 + $0x118] sm:$0xff] %vm11224, %v11195
  %11261 = vst.msk [vmem:[#allocation5 + $0x120] sm:$0xff] %vm11224, %v11196
  %11262 = vst.msk [vmem:[#allocation5 + $0x128] sm:$0xff] %vm11224, %v11197
  %11263 = vst.msk [vmem:[#allocation5 + $0x130] sm:$0xff] %vm11224, %v11198
  %11264 = vst.msk [vmem:[#allocation5 + $0x138] sm:$0xff] %vm11224, %v11199
  %11265 = vst.msk [vmem:[#allocation5 + $0x140] sm:$0xff] %vm11224, %v11200
  %11266 = vst.msk [vmem:[#allocation5 + $0x148] sm:$0xff] %vm11224, %v11201
  %11267 = vst.msk [vmem:[#allocation5 + $0x150] sm:$0xff] %vm11224, %v11202
  %11268 = vst.msk [vmem:[#allocation5 + $0x158] sm:$0xff] %vm11224, %v11203
  %11269 = vst.msk [vmem:[#allocation5 + $0x160] sm:$0xff] %vm11224, %v11204
  %11270 = vst.msk [vmem:[#allocation5 + $0x168] sm:$0xff] %vm11224, %v11205
  %11271 = vst.msk [vmem:[#allocation5 + $0x170] sm:$0xff] %vm11224, %v11206
  %11272 = vst.msk [vmem:[#allocation5 + $0x178] sm:$0xff] %vm11224, %v11207
  %11273 = vst.msk [vmem:[#allocation5 + $0x180] sm:$0xff] %vm11224, %v11208
  %11274 = vst.msk [vmem:[#allocation5 + $0x188] sm:$0xff] %vm11224, %v11209
  %11275 = vst.msk [vmem:[#allocation5 + $0x190] sm:$0xff] %vm11224, %v11210
  %11276 = vst.msk [vmem:[#allocation5 + $0x198] sm:$0xff] %vm11224, %v11211
  %11277 = vst.msk [vmem:[#allocation5 + $0x1a0] sm:$0xff] %vm11224, %v11212
  %11278 = vst.msk [vmem:[#allocation5 + $0x1a8] sm:$0xff] %vm11224, %v11213
  %11279 = vst.msk [vmem:[#allocation5 + $0x1b0] sm:$0xff] %vm11224, %v11214
  %11280 = vst.msk [vmem:[#allocation5 + $0x1b8] sm:$0xff] %vm11224, %v11215
  %11281 = vst.msk [vmem:[#allocation5 + $0x1c0] sm:$0xff] %vm11224, %v11216
  %11282 = vst.msk [vmem:[#allocation5 + $0x1c8] sm:$0xff] %vm11224, %v11217
  %11283 = vst.msk [vmem:[#allocation5 + $0x1d0] sm:$0xff] %vm11224, %v11218
  %11284 = vst.msk [vmem:[#allocation5 + $0x1d8] sm:$0xff] %vm11224, %v11219
  %11285 = vst.msk [vmem:[#allocation5 + $0x1e0] sm:$0xff] %vm11224, %v11220
  %11286 = vst.msk [vmem:[#allocation5 + $0x1e8] sm:$0xff] %vm11224, %v11221
  %11287 = vst.msk [vmem:[#allocation5 + $0x1f0] sm:$0xff] %vm11224, %v11222
  %11288 = vst.msk [vmem:[#allocation5 + $0x1f8] sm:$0xff] %vm11224, %v11223
  %v11289 = vld [vmem:[#allocation5] ss:$16 sm:$0x3]
  %v11290 = vld [vmem:[#allocation5] ss:$16 sm:$0xc]
  %v11291 = vor.u32 %v11289, %v11290
  %v11292 = vld [vmem:[#allocation5] ss:$16 sm:$0x30]
  %v11293 = vor.u32 %v11291, %v11292
  %v11294 = vld [vmem:[#allocation5] ss:$16 sm:$0xc0]
  %v11295 = vor.u32 %v11293, %v11294
  %s11296 = scalar_lea.vmem [#allocation5], 128
  %v11297 = vld [vmem:[%s11296] ss:$16 sm:$0x3]
  %v11298 = vld [vmem:[%s11296] ss:$16 sm:$0xc]
  %v11299 = vor.u32 %v11297, %v11298
  %v11300 = vld [vmem:[%s11296] ss:$16 sm:$0x30]
  %v11301 = vor.u32 %v11299, %v11300
  %v11302 = vld [vmem:[%s11296] ss:$16 sm:$0xc0]
  %v11303 = vor.u32 %v11301, %v11302
  %s11304 = scalar_lea.vmem [#allocation5], 256
  %v11305 = vld [vmem:[%s11304] ss:$16 sm:$0x3]
  %v11306 = vld [vmem:[%s11304] ss:$16 sm:$0xc]
  %v11307 = vor.u32 %v11305, %v11306
  %v11308 = vld [vmem:[%s11304] ss:$16 sm:$0x30]
  %v11309 = vor.u32 %v11307, %v11308
  %v11310 = vld [vmem:[%s11304] ss:$16 sm:$0xc0]
  %v11311 = vor.u32 %v11309, %v11310
  %s11312 = scalar_lea.vmem [#allocation5], 384
  %v11313 = vld [vmem:[%s11312] ss:$16 sm:$0x3]
  %v11314 = vld [vmem:[%s11312] ss:$16 sm:$0xc]
  %v11315 = vor.u32 %v11313, %v11314
  %v11316 = vld [vmem:[%s11312] ss:$16 sm:$0x30]
  %v11317 = vor.u32 %v11315, %v11316
  %v11318 = vld [vmem:[%s11312] ss:$16 sm:$0xc0]
  %v11319 = vor.u32 %v11317, %v11318
  %s11320 = scalar_lea.vmem [#allocation5], 1
  %v11321 = vld [vmem:[%s11320] ss:$16 sm:$0x3]
  %v11322 = vld [vmem:[%s11320] ss:$16 sm:$0xc]
  %v11323 = vor.u32 %v11321, %v11322
  %v11324 = vld [vmem:[%s11320] ss:$16 sm:$0x30]
  %v11325 = vor.u32 %v11323, %v11324
  %v11326 = vld [vmem:[%s11320] ss:$16 sm:$0xc0]
  %v11327 = vor.u32 %v11325, %v11326
  %s11328 = scalar_lea.vmem [#allocation5], 129
  %v11329 = vld [vmem:[%s11328] ss:$16 sm:$0x3]
  %v11330 = vld [vmem:[%s11328] ss:$16 sm:$0xc]
  %v11331 = vor.u32 %v11329, %v11330
  %v11332 = vld [vmem:[%s11328] ss:$16 sm:$0x30]
  %v11333 = vor.u32 %v11331, %v11332
  %v11334 = vld [vmem:[%s11328] ss:$16 sm:$0xc0]
  %v11335 = vor.u32 %v11333, %v11334
  %s11336 = scalar_lea.vmem [#allocation5], 257
  %v11337 = vld [vmem:[%s11336] ss:$16 sm:$0x3]
  %v11338 = vld [vmem:[%s11336] ss:$16 sm:$0xc]
  %v11339 = vor.u32 %v11337, %v11338
  %v11340 = vld [vmem:[%s11336] ss:$16 sm:$0x30]
  %v11341 = vor.u32 %v11339, %v11340
  %v11342 = vld [vmem:[%s11336] ss:$16 sm:$0xc0]
  %v11343 = vor.u32 %v11341, %v11342
  %s11344 = scalar_lea.vmem [#allocation5], 385
  %v11345 = vld [vmem:[%s11344] ss:$16 sm:$0x3]
  %v11346 = vld [vmem:[%s11344] ss:$16 sm:$0xc]
  %v11347 = vor.u32 %v11345, %v11346
  %v11348 = vld [vmem:[%s11344] ss:$16 sm:$0x30]
  %v11349 = vor.u32 %v11347, %v11348
  %v11350 = vld [vmem:[%s11344] ss:$16 sm:$0xc0]
  %v11351 = vor.u32 %v11349, %v11350
  %v11352 = vmax.f32 %v11295, %v11327
  %v11353 = vmax.f32 %v11303, %v11335
  %v11354 = vmax.f32 %v11311, %v11343
  %v11355 = vmax.f32 %v11319, %v11351
  %v11356 = vpack.c.bf16 %v11353, %v11352
  %v11357 = vpack.c.bf16 %v11355, %v11354
  %v11358 = vld [vmem:[%s7] sm:$0xf]
  %v11359 = vld [vmem:[%s7 + $0x4] sm:$0xf]
  %v11360 = vld [vmem:[%s7 + $0x8] sm:$0xf]
  %v11361 = vld [vmem:[%s7 + $0xc] sm:$0xf]
  %v11362 = vld [vmem:[%s7 + $0x10] sm:$0xf]
  %v11363 = vld [vmem:[%s7 + $0x14] sm:$0xf]
  %v11364 = vld [vmem:[%s7 + $0x18] sm:$0xf]
  %v11365 = vld [vmem:[%s7 + $0x1c] sm:$0xf]
  %v11366 = vld [vmem:[%s7 + $0x20] sm:$0xf]
  %v11367 = vld [vmem:[%s7 + $0x24] sm:$0xf]
  %s11368 = scalar_lea.vmem [#allocation5], 2
  %v11369 = vld [vmem:[%s11368] ss:$16 sm:$0x3]
  %v11370 = vld [vmem:[%s11368] ss:$16 sm:$0xc]
  %v11371 = vor.u32 %v11369, %v11370
  %v11372 = vld [vmem:[%s11368] ss:$16 sm:$0x30]
  %v11373 = vor.u32 %v11371, %v11372
  %v11374 = vld [vmem:[%s11368] ss:$16 sm:$0xc0]
  %v11375 = vor.u32 %v11373, %v11374
  %s11376 = scalar_lea.vmem [#allocation5], 130
  %v11377 = vld [vmem:[%s11376] ss:$16 sm:$0x3]
  %v11378 = vld [vmem:[%s11376] ss:$16 sm:$0xc]
  %v11379 = vor.u32 %v11377, %v11378
  %v11380 = vld [vmem:[%s11376] ss:$16 sm:$0x30]
  %v11381 = vor.u32 %v11379, %v11380
  %v11382 = vld [vmem:[%s11376] ss:$16 sm:$0xc0]
  %v11383 = vor.u32 %v11381, %v11382
  %s11384 = scalar_lea.vmem [#allocation5], 258
  %v11385 = vld [vmem:[%s11384] ss:$16 sm:$0x3]
  %v11386 = vld [vmem:[%s11384] ss:$16 sm:$0xc]
  %v11387 = vor.u32 %v11385, %v11386
  %v11388 = vld [vmem:[%s11384] ss:$16 sm:$0x30]
  %v11389 = vor.u32 %v11387, %v11388
  %v11390 = vld [vmem:[%s11384] ss:$16 sm:$0xc0]
  %v11391 = vor.u32 %v11389, %v11390
  %s11392 = scalar_lea.vmem [#allocation5], 386
  %v11393 = vld [vmem:[%s11392] ss:$16 sm:$0x3]
  %v11394 = vld [vmem:[%s11392] ss:$16 sm:$0xc]
  %v11395 = vor.u32 %v11393, %v11394
  %v11396 = vld [vmem:[%s11392] ss:$16 sm:$0x30]
  %v11397 = vor.u32 %v11395, %v11396
  %v11398 = vld [vmem:[%s11392] ss:$16 sm:$0xc0]
  %v11399 = vor.u32 %v11397, %v11398
  %s11400 = scalar_lea.vmem [#allocation5], 3
  %v11401 = vld [vmem:[%s11400] ss:$16 sm:$0x3]
  %v11402 = vld [vmem:[%s11400] ss:$16 sm:$0xc]
  %v11403 = vor.u32 %v11401, %v11402
  %v11404 = vld [vmem:[%s11400] ss:$16 sm:$0x30]
  %v11405 = vor.u32 %v11403, %v11404
  %v11406 = vld [vmem:[%s11400] ss:$16 sm:$0xc0]
  %v11407 = vor.u32 %v11405, %v11406
  %s11408 = scalar_lea.vmem [#allocation5], 131
  %v11409 = vld [vmem:[%s11408] ss:$16 sm:$0x3]
  %v11410 = vld [vmem:[%s11408] ss:$16 sm:$0xc]
  %v11411 = vor.u32 %v11409, %v11410
  %v11412 = vld [vmem:[%s11408] ss:$16 sm:$0x30]
  %v11413 = vor.u32 %v11411, %v11412
  %v11414 = vld [vmem:[%s11408] ss:$16 sm:$0xc0]
  %v11415 = vor.u32 %v11413, %v11414
  %s11416 = scalar_lea.vmem [#allocation5], 259
  %v11417 = vld [vmem:[%s11416] ss:$16 sm:$0x3]
  %v11418 = vld [vmem:[%s11416] ss:$16 sm:$0xc]
  %v11419 = vor.u32 %v11417, %v11418
  %v11420 = vld [vmem:[%s11416] ss:$16 sm:$0x30]
  %v11421 = vor.u32 %v11419, %v11420
  %v11422 = vld [vmem:[%s11416] ss:$16 sm:$0xc0]
  %v11423 = vor.u32 %v11421, %v11422
  %s11424 = scalar_lea.vmem [#allocation5], 387
  %v11425 = vld [vmem:[%s11424] ss:$16 sm:$0x3]
  %v11426 = vld [vmem:[%s11424] ss:$16 sm:$0xc]
  %v11427 = vor.u32 %v11425, %v11426
  %v11428 = vld [vmem:[%s11424] ss:$16 sm:$0x30]
  %v11429 = vor.u32 %v11427, %v11428
  %v11430 = vld [vmem:[%s11424] ss:$16 sm:$0xc0]
  %v11431 = vor.u32 %v11429, %v11430
  %v11432 = vmax.f32 %v11375, %v11407
  %v11433 = vmax.f32 %v11383, %v11415
  %v11434 = vmax.f32 %v11391, %v11423
  %v11435 = vmax.f32 %v11399, %v11431
  %v11436 = vpack.c.bf16 %v11433, %v11432
  %v11437 = vpack.c.bf16 %v11435, %v11434
  %s11438 = scalar_lea.vmem %s7, 40
  %v11439 = vld [vmem:[%s11438] sm:$0xf]
  %v11440 = vld [vmem:[%s11438 + $0x4] sm:$0xf]
  %v11441 = vld [vmem:[%s11438 + $0x8] sm:$0xf]
  %v11442 = vld [vmem:[%s11438 + $0xc] sm:$0xf]
  %v11443 = vld [vmem:[%s11438 + $0x10] sm:$0xf]
  %v11444 = vld [vmem:[%s11438 + $0x14] sm:$0xf]
  %v11445 = vld [vmem:[%s11438 + $0x18] sm:$0xf]
  %v11446 = vld [vmem:[%s11438 + $0x1c] sm:$0xf]
  %v11447 = vld [vmem:[%s11438 + $0x20] sm:$0xf]
  %v11448 = vld [vmem:[%s11438 + $0x24] sm:$0xf]
  %v11459 = vunpack.c.l.b16 %v11439
  %v11460 = vunpack.c.l.b16 %v11440
  %v11461 = vunpack.c.l.b16 %v11441
  %v11462 = vunpack.c.l.b16 %v11442
  %v11463 = vunpack.c.l.b16 %v11443
  %v11464 = vunpack.c.l.b16 %v11444
  %v11465 = vunpack.c.l.b16 %v11445
  %v11466 = vunpack.c.l.b16 %v11446
  %v11467 = vunpack.c.l.b16 %v11447
  %v11468 = vunpack.c.l.b16 %v11448
  %v11469 = vpack.c.b16 %v11460, %v11459
  %v11470 = vpack.c.b16 %v11462, %v11461
  %v11471 = vpack.c.b16 %v11464, %v11463
  %v11472 = vpack.c.b16 %v11466, %v11465
  %v11473 = vpack.c.b16 %v11468, %v11467
  %v11480 = vsel %vm11224, %v11436, 0
  %v11483 = vsel %vm11224, %v11437, 0
  %11485 = vmatpush.bf16.msra.mxu0 0
  %11486 = vmatpush.bf16.msra.mxu0 0
  %11487 = vmatpush.bf16.msra.mxu0 0
  %11488 = vmatpush.bf16.msra.mxu0 %v11473
  %11489 = vmatpush.bf16.msra.mxu0 %v11472
  %11490 = vmatpush.bf16.msra.mxu0 %v11471
  %11491 = vmatpush.bf16.msra.mxu0 %v11470
  %11492 = vmatpush.bf16.msra.mxu0 %v11469
  %11493 = vmatmul.bf16.gmra.mxu0 %v11480
  %v11494 = vpop.f32.mrf.mxu0
  %v11495 = vadd.f32 0.0, %v11494
  %v11496 = vpop.f32.mrf.mxu0
  %v11497 = vadd.f32 0.0, %v11496
  %11498 = vmatmul.bf16.gmra.mxu0 %v11483
  %v11499 = vpop.f32.mrf.mxu0
  %v11500 = vadd.f32 0.0, %v11499
  %v11501 = vpop.f32.mrf.mxu0
  %v11502 = vadd.f32 0.0, %v11501
  %11503 = vdwg.mxu0
  %v11514 = vunpack.c.l.b16 %v11358
  %v11515 = vunpack.c.l.b16 %v11359
  %v11516 = vunpack.c.l.b16 %v11360
  %v11517 = vunpack.c.l.b16 %v11361
  %v11518 = vunpack.c.l.b16 %v11362
  %v11519 = vunpack.c.l.b16 %v11363
  %v11520 = vunpack.c.l.b16 %v11364
  %v11521 = vunpack.c.l.b16 %v11365
  %v11522 = vunpack.c.l.b16 %v11366
  %v11523 = vunpack.c.l.b16 %v11367
  %v11524 = vpack.c.b16 %v11515, %v11514
  %v11525 = vpack.c.b16 %v11517, %v11516
  %v11526 = vpack.c.b16 %v11519, %v11518
  %v11527 = vpack.c.b16 %v11521, %v11520
  %v11528 = vpack.c.b16 %v11523, %v11522
  %v11535 = vsel %vm11224, %v11356, 0
  %v11538 = vsel %vm11224, %v11357, 0
  %11540 = vmatpush.bf16.msra.mxu0 0
  %11541 = vmatpush.bf16.msra.mxu0 0
  %11542 = vmatpush.bf16.msra.mxu0 0
  %11543 = vmatpush.bf16.msra.mxu0 %v11528
  %11544 = vmatpush.bf16.msra.mxu0 %v11527
  %11545 = vmatpush.bf16.msra.mxu0 %v11526
  %11546 = vmatpush.bf16.msra.mxu0 %v11525
  %11547 = vmatpush.bf16.msra.mxu0 %v11524
  %11548 = vmatmul.bf16.gmra.mxu0 %v11535
  %v11549 = vpop.f32.mrf.mxu0
  %v11550 = vadd.f32 %v11495, %v11549
  %v11551 = vpop.f32.mrf.mxu0
  %v11552 = vadd.f32 %v11497, %v11551
  %11553 = vmatmul.bf16.gmra.mxu0 %v11538
  %v11554 = vpop.f32.mrf.mxu0
  %v11555 = vadd.f32 %v11500, %v11554
  %v11556 = vpop.f32.mrf.mxu0
  %v11557 = vadd.f32 %v11502, %v11556
  %11558 = vdwg.mxu0
  %s11559 = scalar_lea.vmem [#allocation5], 4
  %v11560 = vld [vmem:[%s11559] ss:$16 sm:$0x3]
  %v11561 = vld [vmem:[%s11559] ss:$16 sm:$0xc]
  %v11562 = vor.u32 %v11560, %v11561
  %v11563 = vld [vmem:[%s11559] ss:$16 sm:$0x30]
  %v11564 = vor.u32 %v11562, %v11563
  %v11565 = vld [vmem:[%s11559] ss:$16 sm:$0xc0]
  %v11566 = vor.u32 %v11564, %v11565
  %s11567 = scalar_lea.vmem [#allocation5], 132
  %v11568 = vld [vmem:[%s11567] ss:$16 sm:$0x3]
  %v11569 = vld [vmem:[%s11567] ss:$16 sm:$0xc]
  %v11570 = vor.u32 %v11568, %v11569
  %v11571 = vld [vmem:[%s11567] ss:$16 sm:$0x30]
  %v11572 = vor.u32 %v11570, %v11571
  %v11573 = vld [vmem:[%s11567] ss:$16 sm:$0xc0]
  %v11574 = vor.u32 %v11572, %v11573
  %s11575 = scalar_lea.vmem [#allocation5], 260
  %v11576 = vld [vmem:[%s11575] ss:$16 sm:$0x3]
  %v11577 = vld [vmem:[%s11575] ss:$16 sm:$0xc]
  %v11578 = vor.u32 %v11576, %v11577
  %v11579 = vld [vmem:[%s11575] ss:$16 sm:$0x30]
  %v11580 = vor.u32 %v11578, %v11579
  %v11581 = vld [vmem:[%s11575] ss:$16 sm:$0xc0]
  %v11582 = vor.u32 %v11580, %v11581
  %s11583 = scalar_lea.vmem [#allocation5], 388
  %v11584 = vld [vmem:[%s11583] ss:$16 sm:$0x3]
  %v11585 = vld [vmem:[%s11583] ss:$16 sm:$0xc]
  %v11586 = vor.u32 %v11584, %v11585
  %v11587 = vld [vmem:[%s11583] ss:$16 sm:$0x30]
  %v11588 = vor.u32 %v11586, %v11587
  %v11589 = vld [vmem:[%s11583] ss:$16 sm:$0xc0]
  %v11590 = vor.u32 %v11588, %v11589
  %s11591 = scalar_lea.vmem [#allocation5], 5
  %v11592 = vld [vmem:[%s11591] ss:$16 sm:$0x3]
  %v11593 = vld [vmem:[%s11591] ss:$16 sm:$0xc]
  %v11594 = vor.u32 %v11592, %v11593
  %v11595 = vld [vmem:[%s11591] ss:$16 sm:$0x30]
  %v11596 = vor.u32 %v11594, %v11595
  %v11597 = vld [vmem:[%s11591] ss:$16 sm:$0xc0]
  %v11598 = vor.u32 %v11596, %v11597
  %s11599 = scalar_lea.vmem [#allocation5], 133
  %v11600 = vld [vmem:[%s11599] ss:$16 sm:$0x3]
  %v11601 = vld [vmem:[%s11599] ss:$16 sm:$0xc]
  %v11602 = vor.u32 %v11600, %v11601
  %v11603 = vld [vmem:[%s11599] ss:$16 sm:$0x30]
  %v11604 = vor.u32 %v11602, %v11603
  %v11605 = vld [vmem:[%s11599] ss:$16 sm:$0xc0]
  %v11606 = vor.u32 %v11604, %v11605
  %s11607 = scalar_lea.vmem [#allocation5], 261
  %v11608 = vld [vmem:[%s11607] ss:$16 sm:$0x3]
  %v11609 = vld [vmem:[%s11607] ss:$16 sm:$0xc]
  %v11610 = vor.u32 %v11608, %v11609
  %v11611 = vld [vmem:[%s11607] ss:$16 sm:$0x30]
  %v11612 = vor.u32 %v11610, %v11611
  %v11613 = vld [vmem:[%s11607] ss:$16 sm:$0xc0]
  %v11614 = vor.u32 %v11612, %v11613
  %s11615 = scalar_lea.vmem [#allocation5], 389
  %v11616 = vld [vmem:[%s11615] ss:$16 sm:$0x3]
  %v11617 = vld [vmem:[%s11615] ss:$16 sm:$0xc]
  %v11618 = vor.u32 %v11616, %v11617
  %v11619 = vld [vmem:[%s11615] ss:$16 sm:$0x30]
  %v11620 = vor.u32 %v11618, %v11619
  %v11621 = vld [vmem:[%s11615] ss:$16 sm:$0xc0]
  %v11622 = vor.u32 %v11620, %v11621
  %v11623 = vmax.f32 %v11566, %v11598
  %v11624 = vmax.f32 %v11574, %v11606
  %v11625 = vmax.f32 %v11582, %v11614
  %v11626 = vmax.f32 %v11590, %v11622
  %v11627 = vpack.c.bf16 %v11624, %v11623
  %v11628 = vpack.c.bf16 %v11626, %v11625
  %s11629 = scalar_lea.vmem %s7, 80
  %v11630 = vld [vmem:[%s11629] sm:$0xf]
  %v11631 = vld [vmem:[%s11629 + $0x4] sm:$0xf]
  %v11632 = vld [vmem:[%s11629 + $0x8] sm:$0xf]
  %v11633 = vld [vmem:[%s11629 + $0xc] sm:$0xf]
  %v11634 = vld [vmem:[%s11629 + $0x10] sm:$0xf]
  %v11635 = vld [vmem:[%s11629 + $0x14] sm:$0xf]
  %v11636 = vld [vmem:[%s11629 + $0x18] sm:$0xf]
  %v11637 = vld [vmem:[%s11629 + $0x1c] sm:$0xf]
  %v11638 = vld [vmem:[%s11629 + $0x20] sm:$0xf]
  %v11639 = vld [vmem:[%s11629 + $0x24] sm:$0xf]
  %v11650 = vunpack.c.l.b16 %v11630
  %v11651 = vunpack.c.l.b16 %v11631
  %v11652 = vunpack.c.l.b16 %v11632
  %v11653 = vunpack.c.l.b16 %v11633
  %v11654 = vunpack.c.l.b16 %v11634
  %v11655 = vunpack.c.l.b16 %v11635
  %v11656 = vunpack.c.l.b16 %v11636
  %v11657 = vunpack.c.l.b16 %v11637
  %v11658 = vunpack.c.l.b16 %v11638
  %v11659 = vunpack.c.l.b16 %v11639
  %v11660 = vpack.c.b16 %v11651, %v11650
  %v11661 = vpack.c.b16 %v11653, %v11652
  %v11662 = vpack.c.b16 %v11655, %v11654
  %v11663 = vpack.c.b16 %v11657, %v11656
  %v11664 = vpack.c.b16 %v11659, %v11658
  %v11671 = vsel %vm11224, %v11627, 0
  %v11674 = vsel %vm11224, %v11628, 0
  %11676 = vmatpush.bf16.msra.mxu0 0
  %11677 = vmatpush.bf16.msra.mxu0 0
  %11678 = vmatpush.bf16.msra.mxu0 0
  %11679 = vmatpush.bf16.msra.mxu0 %v11664
  %11680 = vmatpush.bf16.msra.mxu0 %v11663
  %11681 = vmatpush.bf16.msra.mxu0 %v11662
  %11682 = vmatpush.bf16.msra.mxu0 %v11661
  %11683 = vmatpush.bf16.msra.mxu0 %v11660
  %11684 = vmatmul.bf16.gmra.mxu0 %v11671
  %v11685 = vpop.f32.mrf.mxu0
  %v11686 = vadd.f32 0.0, %v11685
  %v11687 = vpop.f32.mrf.mxu0
  %v11688 = vadd.f32 0.0, %v11687
  %11689 = vmatmul.bf16.gmra.mxu0 %v11674
  %v11690 = vpop.f32.mrf.mxu0
  %v11691 = vadd.f32 0.0, %v11690
  %v11692 = vpop.f32.mrf.mxu0
  %v11693 = vadd.f32 0.0, %v11692
  %11694 = vdwg.mxu0
  %v11695 = vadd.f32 %v11550, %v11686
  %v11696 = vadd.f32 %v11552, %v11688
  %v11697 = vadd.f32 %v11555, %v11691
  %v11698 = vadd.f32 %v11557, %v11693
  %s11699 = scalar_lea.vmem [#allocation5], 6
  %v11700 = vld [vmem:[%s11699] ss:$16 sm:$0x3]
  %v11701 = vld [vmem:[%s11699] ss:$16 sm:$0xc]
  %v11702 = vor.u32 %v11700, %v11701
  %v11703 = vld [vmem:[%s11699] ss:$16 sm:$0x30]
  %v11704 = vor.u32 %v11702, %v11703
  %v11705 = vld [vmem:[%s11699] ss:$16 sm:$0xc0]
  %v11706 = vor.u32 %v11704, %v11705
  %s11707 = scalar_lea.vmem [#allocation5], 134
  %v11708 = vld [vmem:[%s11707] ss:$16 sm:$0x3]
  %v11709 = vld [vmem:[%s11707] ss:$16 sm:$0xc]
  %v11710 = vor.u32 %v11708, %v11709
  %v11711 = vld [vmem:[%s11707] ss:$16 sm:$0x30]
  %v11712 = vor.u32 %v11710, %v11711
  %v11713 = vld [vmem:[%s11707] ss:$16 sm:$0xc0]
  %v11714 = vor.u32 %v11712, %v11713
  %s11715 = scalar_lea.vmem [#allocation5], 262
  %v11716 = vld [vmem:[%s11715] ss:$16 sm:$0x3]
  %v11717 = vld [vmem:[%s11715] ss:$16 sm:$0xc]
  %v11718 = vor.u32 %v11716, %v11717
  %v11719 = vld [vmem:[%s11715] ss:$16 sm:$0x30]
  %v11720 = vor.u32 %v11718, %v11719
  %v11721 = vld [vmem:[%s11715] ss:$16 sm:$0xc0]
  %v11722 = vor.u32 %v11720, %v11721
  %s11723 = scalar_lea.vmem [#allocation5], 390
  %v11724 = vld [vmem:[%s11723] ss:$16 sm:$0x3]
  %v11725 = vld [vmem:[%s11723] ss:$16 sm:$0xc]
  %v11726 = vor.u32 %v11724, %v11725
  %v11727 = vld [vmem:[%s11723] ss:$16 sm:$0x30]
  %v11728 = vor.u32 %v11726, %v11727
  %v11729 = vld [vmem:[%s11723] ss:$16 sm:$0xc0]
  %v11730 = vor.u32 %v11728, %v11729
  %s11731 = scalar_lea.vmem [#allocation5], 7
  %v11732 = vld [vmem:[%s11731] ss:$16 sm:$0x3]
  %v11733 = vld [vmem:[%s11731] ss:$16 sm:$0xc]
  %v11734 = vor.u32 %v11732, %v11733
  %v11735 = vld [vmem:[%s11731] ss:$16 sm:$0x30]
  %v11736 = vor.u32 %v11734, %v11735
  %v11737 = vld [vmem:[%s11731] ss:$16 sm:$0xc0]
  %v11738 = vor.u32 %v11736, %v11737
  %s11739 = scalar_lea.vmem [#allocation5], 135
  %v11740 = vld [vmem:[%s11739] ss:$16 sm:$0x3]
  %v11741 = vld [vmem:[%s11739] ss:$16 sm:$0xc]
  %v11742 = vor.u32 %v11740, %v11741
  %v11743 = vld [vmem:[%s11739] ss:$16 sm:$0x30]
  %v11744 = vor.u32 %v11742, %v11743
  %v11745 = vld [vmem:[%s11739] ss:$16 sm:$0xc0]
  %v11746 = vor.u32 %v11744, %v11745
  %s11747 = scalar_lea.vmem [#allocation5], 263
  %v11748 = vld [vmem:[%s11747] ss:$16 sm:$0x3]
  %v11749 = vld [vmem:[%s11747] ss:$16 sm:$0xc]
  %v11750 = vor.u32 %v11748, %v11749
  %v11751 = vld [vmem:[%s11747] ss:$16 sm:$0x30]
  %v11752 = vor.u32 %v11750, %v11751
  %v11753 = vld [vmem:[%s11747] ss:$16 sm:$0xc0]
  %v11754 = vor.u32 %v11752, %v11753
  %s11755 = scalar_lea.vmem [#allocation5], 391
  %v11756 = vld [vmem:[%s11755] ss:$16 sm:$0x3]
  %v11757 = vld [vmem:[%s11755] ss:$16 sm:$0xc]
  %v11758 = vor.u32 %v11756, %v11757
  %v11759 = vld [vmem:[%s11755] ss:$16 sm:$0x30]
  %v11760 = vor.u32 %v11758, %v11759
  %v11761 = vld [vmem:[%s11755] ss:$16 sm:$0xc0]
  %v11762 = vor.u32 %v11760, %v11761
  %v11763 = vmax.f32 %v11706, %v11738
  %v11764 = vmax.f32 %v11714, %v11746
  %v11765 = vmax.f32 %v11722, %v11754
  %v11766 = vmax.f32 %v11730, %v11762
  %v11767 = vpack.c.bf16 %v11764, %v11763
  %v11768 = vpack.c.bf16 %v11766, %v11765
  %s11769 = scalar_lea.vmem %s7, 120
  %v11770 = vld [vmem:[%s11769] sm:$0xf]
  %v11771 = vld [vmem:[%s11769 + $0x4] sm:$0xf]
  %v11772 = vld [vmem:[%s11769 + $0x8] sm:$0xf]
  %v11773 = vld [vmem:[%s11769 + $0xc] sm:$0xf]
  %v11774 = vld [vmem:[%s11769 + $0x10] sm:$0xf]
  %v11775 = vld [vmem:[%s11769 + $0x14] sm:$0xf]
  %v11776 = vld [vmem:[%s11769 + $0x18] sm:$0xf]
  %v11777 = vld [vmem:[%s11769 + $0x1c] sm:$0xf]
  %v11778 = vld [vmem:[%s11769 + $0x20] sm:$0xf]
  %v11779 = vld [vmem:[%s11769 + $0x24] sm:$0xf]
  %v11790 = vunpack.c.l.b16 %v11770
  %v11791 = vunpack.c.l.b16 %v11771
  %v11792 = vunpack.c.l.b16 %v11772
  %v11793 = vunpack.c.l.b16 %v11773
  %v11794 = vunpack.c.l.b16 %v11774
  %v11795 = vunpack.c.l.b16 %v11775
  %v11796 = vunpack.c.l.b16 %v11776
  %v11797 = vunpack.c.l.b16 %v11777
  %v11798 = vunpack.c.l.b16 %v11778
  %v11799 = vunpack.c.l.b16 %v11779
  %v11800 = vpack.c.b16 %v11791, %v11790
  %v11801 = vpack.c.b16 %v11793, %v11792
  %v11802 = vpack.c.b16 %v11795, %v11794
  %v11803 = vpack.c.b16 %v11797, %v11796
  %v11804 = vpack.c.b16 %v11799, %v11798
  %v11811 = vsel %vm11224, %v11767, 0
  %v11814 = vsel %vm11224, %v11768, 0
  %11816 = vmatpush.bf16.msra.mxu0 0
  %11817 = vmatpush.bf16.msra.mxu0 0
  %11818 = vmatpush.bf16.msra.mxu0 0
  %11819 = vmatpush.bf16.msra.mxu0 %v11804
  %11820 = vmatpush.bf16.msra.mxu0 %v11803
  %11821 = vmatpush.bf16.msra.mxu0 %v11802
  %11822 = vmatpush.bf16.msra.mxu0 %v11801
  %11823 = vmatpush.bf16.msra.mxu0 %v11800
  %11824 = vmatmul.bf16.gmra.mxu0 %v11811
  %v11825 = vpop.f32.mrf.mxu0
  %v11826 = vadd.f32 0.0, %v11825
  %v11827 = vpop.f32.mrf.mxu0
  %v11828 = vadd.f32 0.0, %v11827
  %11829 = vmatmul.bf16.gmra.mxu0 %v11814
  %v11830 = vpop.f32.mrf.mxu0
  %v11831 = vadd.f32 0.0, %v11830
  %v11832 = vpop.f32.mrf.mxu0
  %v11833 = vadd.f32 0.0, %v11832
  %11834 = vdwg.mxu0
  %v11835 = vadd.f32 %v11695, %v11826
  %v11836 = vadd.f32 %v11696, %v11828
  %v11837 = vadd.f32 %v11697, %v11831
  %v11838 = vadd.f32 %v11698, %v11833
  %s11839 = scalar_lea.vmem [#allocation5], 8
  %v11840 = vld [vmem:[%s11839] ss:$16 sm:$0x3]
  %v11841 = vld [vmem:[%s11839] ss:$16 sm:$0xc]
  %v11842 = vor.u32 %v11840, %v11841
  %v11843 = vld [vmem:[%s11839] ss:$16 sm:$0x30]
  %v11844 = vor.u32 %v11842, %v11843
  %v11845 = vld [vmem:[%s11839] ss:$16 sm:$0xc0]
  %v11846 = vor.u32 %v11844, %v11845
  %s11847 = scalar_lea.vmem [#allocation5], 136
  %v11848 = vld [vmem:[%s11847] ss:$16 sm:$0x3]
  %v11849 = vld [vmem:[%s11847] ss:$16 sm:$0xc]
  %v11850 = vor.u32 %v11848, %v11849
  %v11851 = vld [vmem:[%s11847] ss:$16 sm:$0x30]
  %v11852 = vor.u32 %v11850, %v11851
  %v11853 = vld [vmem:[%s11847] ss:$16 sm:$0xc0]
  %v11854 = vor.u32 %v11852, %v11853
  %s11855 = scalar_lea.vmem [#allocation5], 264
  %v11856 = vld [vmem:[%s11855] ss:$16 sm:$0x3]
  %v11857 = vld [vmem:[%s11855] ss:$16 sm:$0xc]
  %v11858 = vor.u32 %v11856, %v11857
  %v11859 = vld [vmem:[%s11855] ss:$16 sm:$0x30]
  %v11860 = vor.u32 %v11858, %v11859
  %v11861 = vld [vmem:[%s11855] ss:$16 sm:$0xc0]
  %v11862 = vor.u32 %v11860, %v11861
  %s11863 = scalar_lea.vmem [#allocation5], 392
  %v11864 = vld [vmem:[%s11863] ss:$16 sm:$0x3]
  %v11865 = vld [vmem:[%s11863] ss:$16 sm:$0xc]
  %v11866 = vor.u32 %v11864, %v11865
  %v11867 = vld [vmem:[%s11863] ss:$16 sm:$0x30]
  %v11868 = vor.u32 %v11866, %v11867
  %v11869 = vld [vmem:[%s11863] ss:$16 sm:$0xc0]
  %v11870 = vor.u32 %v11868, %v11869
  %s11871 = scalar_lea.vmem [#allocation5], 9
  %v11872 = vld [vmem:[%s11871] ss:$16 sm:$0x3]
  %v11873 = vld [vmem:[%s11871] ss:$16 sm:$0xc]
  %v11874 = vor.u32 %v11872, %v11873
  %v11875 = vld [vmem:[%s11871] ss:$16 sm:$0x30]
  %v11876 = vor.u32 %v11874, %v11875
  %v11877 = vld [vmem:[%s11871] ss:$16 sm:$0xc0]
  %v11878 = vor.u32 %v11876, %v11877
  %s11879 = scalar_lea.vmem [#allocation5], 137
  %v11880 = vld [vmem:[%s11879] ss:$16 sm:$0x3]
  %v11881 = vld [vmem:[%s11879] ss:$16 sm:$0xc]
  %v11882 = vor.u32 %v11880, %v11881
  %v11883 = vld [vmem:[%s11879] ss:$16 sm:$0x30]
  %v11884 = vor.u32 %v11882, %v11883
  %v11885 = vld [vmem:[%s11879] ss:$16 sm:$0xc0]
  %v11886 = vor.u32 %v11884, %v11885
  %s11887 = scalar_lea.vmem [#allocation5], 265
  %v11888 = vld [vmem:[%s11887] ss:$16 sm:$0x3]
  %v11889 = vld [vmem:[%s11887] ss:$16 sm:$0xc]
  %v11890 = vor.u32 %v11888, %v11889
  %v11891 = vld [vmem:[%s11887] ss:$16 sm:$0x30]
  %v11892 = vor.u32 %v11890, %v11891
  %v11893 = vld [vmem:[%s11887] ss:$16 sm:$0xc0]
  %v11894 = vor.u32 %v11892, %v11893
  %s11895 = scalar_lea.vmem [#allocation5], 393
  %v11896 = vld [vmem:[%s11895] ss:$16 sm:$0x3]
  %v11897 = vld [vmem:[%s11895] ss:$16 sm:$0xc]
  %v11898 = vor.u32 %v11896, %v11897
  %v11899 = vld [vmem:[%s11895] ss:$16 sm:$0x30]
  %v11900 = vor.u32 %v11898, %v11899
  %v11901 = vld [vmem:[%s11895] ss:$16 sm:$0xc0]
  %v11902 = vor.u32 %v11900, %v11901
  %v11903 = vmax.f32 %v11846, %v11878
  %v11904 = vmax.f32 %v11854, %v11886
  %v11905 = vmax.f32 %v11862, %v11894
  %v11906 = vmax.f32 %v11870, %v11902
  %v11907 = vpack.c.bf16 %v11904, %v11903
  %v11908 = vpack.c.bf16 %v11906, %v11905
  %s11909 = scalar_lea.vmem %s7, 160
  %v11910 = vld [vmem:[%s11909] sm:$0xf]
  %v11911 = vld [vmem:[%s11909 + $0x4] sm:$0xf]
  %v11912 = vld [vmem:[%s11909 + $0x8] sm:$0xf]
  %v11913 = vld [vmem:[%s11909 + $0xc] sm:$0xf]
  %v11914 = vld [vmem:[%s11909 + $0x10] sm:$0xf]
  %v11915 = vld [vmem:[%s11909 + $0x14] sm:$0xf]
  %v11916 = vld [vmem:[%s11909 + $0x18] sm:$0xf]
  %v11917 = vld [vmem:[%s11909 + $0x1c] sm:$0xf]
  %v11918 = vld [vmem:[%s11909 + $0x20] sm:$0xf]
  %v11919 = vld [vmem:[%s11909 + $0x24] sm:$0xf]
  %v11930 = vunpack.c.l.b16 %v11910
  %v11931 = vunpack.c.l.b16 %v11911
  %v11932 = vunpack.c.l.b16 %v11912
  %v11933 = vunpack.c.l.b16 %v11913
  %v11934 = vunpack.c.l.b16 %v11914
  %v11935 = vunpack.c.l.b16 %v11915
  %v11936 = vunpack.c.l.b16 %v11916
  %v11937 = vunpack.c.l.b16 %v11917
  %v11938 = vunpack.c.l.b16 %v11918
  %v11939 = vunpack.c.l.b16 %v11919
  %v11940 = vpack.c.b16 %v11931, %v11930
  %v11941 = vpack.c.b16 %v11933, %v11932
  %v11942 = vpack.c.b16 %v11935, %v11934
  %v11943 = vpack.c.b16 %v11937, %v11936
  %v11944 = vpack.c.b16 %v11939, %v11938
  %v11951 = vsel %vm11224, %v11907, 0
  %v11954 = vsel %vm11224, %v11908, 0
  %11956 = vmatpush.bf16.msra.mxu0 0
  %11957 = vmatpush.bf16.msra.mxu0 0
  %11958 = vmatpush.bf16.msra.mxu0 0
  %11959 = vmatpush.bf16.msra.mxu0 %v11944
  %11960 = vmatpush.bf16.msra.mxu0 %v11943
  %11961 = vmatpush.bf16.msra.mxu0 %v11942
  %11962 = vmatpush.bf16.msra.mxu0 %v11941
  %11963 = vmatpush.bf16.msra.mxu0 %v11940
  %11964 = vmatmul.bf16.gmra.mxu0 %v11951
  %v11965 = vpop.f32.mrf.mxu0
  %v11966 = vadd.f32 0.0, %v11965
  %v11967 = vpop.f32.mrf.mxu0
  %v11968 = vadd.f32 0.0, %v11967
  %11969 = vmatmul.bf16.gmra.mxu0 %v11954
  %v11970 = vpop.f32.mrf.mxu0
  %v11971 = vadd.f32 0.0, %v11970
  %v11972 = vpop.f32.mrf.mxu0
  %v11973 = vadd.f32 0.0, %v11972
  %11974 = vdwg.mxu0
  %v11975 = vadd.f32 %v11835, %v11966
  %v11976 = vadd.f32 %v11836, %v11968
  %v11977 = vadd.f32 %v11837, %v11971
  %v11978 = vadd.f32 %v11838, %v11973
  %v11979 = vld [vmem:[%s8] sm:$0x1]
  %v11981 = vperm.slane %v11979, 0
  %v11983 = vadd.f32 %v11975, %v11981
  %v11984 = vadd.f32 %v11976, %v11981
  %v11985 = vadd.f32 %v11977, %v11981
  %v11986 = vadd.f32 %v11978, %v11981
  %v11987 = vmax.f32 %v11983, 0.0
  %v11988 = vmax.f32 %v11984, 0.0
  %v11989 = vmax.f32 %v11985, 0.0
  %v11990 = vmax.f32 %v11986, 0.0
  %v11991 = vpack.c.bf16 %v11988, %v11987
  %v11992 = vpack.c.bf16 %v11990, %v11989
  %v11993 = vld [vmem:[%s9] sm:$0xf]
  %v11994 = vld [vmem:[%s9 + $0x4] sm:$0xf]
  %v11995 = vld [vmem:[%s9 + $0x8] sm:$0xf]
  %v11996 = vld [vmem:[%s9 + $0xc] sm:$0xf]
  %v11997 = vld [vmem:[%s9 + $0x10] sm:$0xf]
  %v11998 = vld [vmem:[%s9 + $0x14] sm:$0xf]
  %v11999 = vld [vmem:[%s9 + $0x18] sm:$0xf]
  %v12000 = vld [vmem:[%s9 + $0x1c] sm:$0xf]
  %v12001 = vld [vmem:[%s9 + $0x20] sm:$0xf]
  %v12002 = vld [vmem:[%s9 + $0x24] sm:$0xf]
  %v12003 = vld [vmem:[%s9 + $0x28] sm:$0xf]
  %v12004 = vld [vmem:[%s9 + $0x2c] sm:$0xf]
  %v12005 = vld [vmem:[%s9 + $0x30] sm:$0xf]
  %v12006 = vld [vmem:[%s9 + $0x34] sm:$0xf]
  %v12007 = vld [vmem:[%s9 + $0x38] sm:$0xf]
  %v12008 = vld [vmem:[%s10] sm:$0x1]
  %v12010 = vperm.slane %v12008, 0
  %v12027 = vunpack.c.l.b16 %v11993
  %v12028 = vunpack.c.l.b16 %v11994
  %v12029 = vunpack.c.l.b16 %v11995
  %v12030 = vunpack.c.l.b16 %v11996
  %v12031 = vunpack.c.l.b16 %v11997
  %v12032 = vunpack.c.l.b16 %v11998
  %v12033 = vunpack.c.l.b16 %v11999
  %v12034 = vunpack.c.l.b16 %v12000
  %v12035 = vunpack.c.l.b16 %v12001
  %v12036 = vunpack.c.l.b16 %v12002
  %v12037 = vunpack.c.l.b16 %v12003
  %v12038 = vunpack.c.l.b16 %v12004
  %v12039 = vunpack.c.l.b16 %v12005
  %v12040 = vunpack.c.l.b16 %v12006
  %v12041 = vunpack.c.l.b16 %v12007
  %v12042 = vpack.c.b16 %v12028, %v12027
  %v12043 = vpack.c.b16 %v12030, %v12029
  %v12044 = vpack.c.b16 %v12032, %v12031
  %v12045 = vpack.c.b16 %v12034, %v12033
  %v12046 = vpack.c.b16 %v12036, %v12035
  %v12047 = vpack.c.b16 %v12038, %v12037
  %v12048 = vpack.c.b16 %v12040, %v12039
  %v12049 = vpack.c.b16 %v12041, %v12041
  %vm12057 = vcmask 982016
  %v12059 = vsel %vm12057, %v11991, 0
  %v12062 = vsel %vm12057, %v11992, 0
  %v12065 = vsel %vm3045, %v12049, 0
  %12067 = vmatpush.bf16.msra.mxu0 %v12065
  %12068 = vmatpush.bf16.msra.mxu0 %v12048
  %12069 = vmatpush.bf16.msra.mxu0 %v12047
  %12070 = vmatpush.bf16.msra.mxu0 %v12046
  %12071 = vmatpush.bf16.msra.mxu0 %v12045
  %12072 = vmatpush.bf16.msra.mxu0 %v12044
  %12073 = vmatpush.bf16.msra.mxu0 %v12043
  %12074 = vmatpush.bf16.msra.mxu0 %v12042
  %12075 = vmatmul.bf16.gmra.mxu0 %v12059
  %v12076 = vpop.f32.mrf.mxu0
  %v12077 = vadd.f32 %v12010, %v12076
  %v12078 = vpop.f32.mrf.mxu0
  %v12079 = vadd.f32 %v12010, %v12078
  %12080 = vmatmul.bf16.gmra.mxu0 %v12062
  %v12081 = vpop.f32.mrf.mxu0
  %v12082 = vadd.f32 %v12010, %v12081
  %v12083 = vpop.f32.mrf.mxu0
  %v12084 = vadd.f32 %v12010, %v12083
  %12085 = vdwg.mxu0
  %v12086 = vmax.f32 %v12077, 0.0
  %v12087 = vmax.f32 %v12079, 0.0
  %v12088 = vmax.f32 %v12082, 0.0
  %v12089 = vmax.f32 %v12084, 0.0
  %v12090 = vpack.c.bf16 %v12087, %v12086
  %v12091 = vpack.c.bf16 %v12089, %v12088
  %v12092 = vld [vmem:[%s11] sm:$0xf]
  %v12093 = vld [vmem:[%s11 + $0x4] sm:$0xf]
  %v12094 = vld [vmem:[%s11 + $0x8] sm:$0xf]
  %v12095 = vld [vmem:[%s11 + $0xc] sm:$0xf]
  %v12096 = vld [vmem:[%s11 + $0x10] sm:$0xf]
  %v12097 = vld [vmem:[%s11 + $0x14] sm:$0xf]
  %v12098 = vld [vmem:[%s11 + $0x18] sm:$0xf]
  %v12099 = vld [vmem:[%s11 + $0x1c] sm:$0xf]
  %v12100 = vld [vmem:[%s11 + $0x20] sm:$0xf]
  %v12101 = vld [vmem:[%s11 + $0x24] sm:$0xf]
  %v12102 = vld [vmem:[%s11 + $0x28] sm:$0x3]
  %v12103 = vld [vmem:[%s12] sm:$0x1]
  %v12105 = vperm.slane %v12103, 0
  %v12118 = vunpack.c.l.b16 %v12092
  %v12119 = vunpack.c.l.b16 %v12093
  %v12120 = vunpack.c.l.b16 %v12094
  %v12121 = vunpack.c.l.b16 %v12095
  %v12122 = vunpack.c.l.b16 %v12096
  %v12123 = vunpack.c.l.b16 %v12097
  %v12124 = vunpack.c.l.b16 %v12098
  %v12125 = vunpack.c.l.b16 %v12099
  %v12126 = vunpack.c.l.b16 %v12100
  %v12127 = vunpack.c.l.b16 %v12101
  %v12128 = vunpack.c.l.b16 %v12102
  %v12129 = vpack.c.b16 %v12119, %v12118
  %v12130 = vpack.c.b16 %v12121, %v12120
  %v12131 = vpack.c.b16 %v12123, %v12122
  %v12132 = vpack.c.b16 %v12125, %v12124
  %v12133 = vpack.c.b16 %v12127, %v12126
  %v12134 = vpack.c.b16 %v12128, %v12128
  %v12141 = vsel %vm4581, %v12090, 0
  %v12144 = vsel %vm4581, %v12091, 0
  %v12147 = vsel %vm5352, %v12134, 0
  %12149 = vmatpush.bf16.msra.mxu0 0
  %12150 = vmatpush.bf16.msra.mxu0 0
  %12151 = vmatpush.bf16.msra.mxu0 %v12147
  %12152 = vmatpush.bf16.msra.mxu0 %v12133
  %12153 = vmatpush.bf16.msra.mxu0 %v12132
  %12154 = vmatpush.bf16.msra.mxu0 %v12131
  %12155 = vmatpush.bf16.msra.mxu0 %v12130
  %12156 = vmatpush.bf16.msra.mxu0 %v12129
  %12157 = vmatmul.bf16.gmra.mxu0 %v12141
  %v12158 = vpop.f32.mrf.mxu0
  %v12159 = vadd.f32 %v12105, %v12158
  %v12160 = vpop.f32.mrf.mxu0
  %v12161 = vadd.f32 %v12105, %v12160
  %12162 = vmatmul.bf16.gmra.mxu0 %v12144
  %v12163 = vpop.f32.mrf.mxu0
  %v12164 = vadd.f32 %v12105, %v12163
  %v12165 = vpop.f32.mrf.mxu0
  %v12166 = vadd.f32 %v12105, %v12165
  %12167 = vdwg.mxu0
  %12168 = vst [vmem:[%s13] sm:$0xff] %v12159
  %12169 = vst [vmem:[%s13 + $0x8] sm:$0xff] %v12161
  %12170 = vst [vmem:[%s13 + $0x10] sm:$0xff] %v12164
  %12171 = vst [vmem:[%s13 + $0x18] sm:$0xff] %v12166
  // Predicated region
  $region54: #{lenet5_forward.1} parent=0 // pred_check
    _
  $region55: #{lenet5_forward.1} parent=0 // pred_check_branch
    %12173 = sbr.rel (0) target = $region57
  $region56: #{lenet5_forward.1} parent=0 // pred_region
    _
  $region57: #{lenet5_forward.1} parent=0 // pred_fallthru
    _
  // Predicated region
  $region58: #{lenet5_forward.1} parent=0 // pred_check
    _
  $region59: #{lenet5_forward.1} parent=0 // pred_check_branch
    %12175 = sbr.rel (0) target = $region61
  $region60: #{lenet5_forward.1} parent=0 // pred_region
    _
  $region61: #{lenet5_forward.1} parent=0 // pred_fallthru
    _

</llo_original>
